<compile_context>
chip_gen: v7x
topology: tpu7x:2x2x1
jax: 0.10.0
libtpu: 0.0.40
codegen_flags: <defaults>
</compile_context>

<pallas_src>
import numpy as np
import jax
import jax.numpy as jnp
from jax.experimental import pallas as pl
from jax.experimental.pallas import tpu as pltpu


def _gelu(v):
    # tanh-approximate GELU (tanh lowers to the EUP on TPU).
    # TODO(synk): PyTorch F.gelu default is the exact erf form; erf lowering is
    # not guaranteed in Mosaic, so the tanh approximation is used here.
    c = 0.7978845608028654  # sqrt(2/pi)
    return 0.5 * v * (1.0 + jnp.tanh(c * (v + 0.044715 * v * v * v)))


def meshno_kernel(x_ref,
                  fc0_w, fc0_b,
                  fcat, gcat0,
                  p0, q0, ww0, bw0,
                  p1, q1, ww1, bw1,
                  lbo_invT, lboT,
                  wm2, ww2, bw2,
                  wm3, ww3, bw3,
                  fc1_w, fc1_b, fc2_w, fc2_b,
                  o_ref):
    f32 = jnp.float32
    width = fc0_w.shape[0]
    m = p0.shape[-1] // 2          # kept rFFT modes (modes // 2)

    xg = x_ref[0]                                                      # (7, S)

    # ---- fc0: lift 7 -> width channels; channels-first (width, S) ----
    h = jnp.dot(fc0_w[...], xg, preferred_element_type=f32) + fc0_b[...]

    def complex_mix(hb, p_ref, q_ref):
        """Truncated rFFT + per-mode complex channel mixing, concatenated layout.

        Returns (W, 2m) = [out_r | out_i].
        """
        xcat = jnp.dot(hb, fcat[...], preferred_element_type=f32)     # (W, 2m) = [xr|xi]
        xswap = jnp.concatenate([xcat[:, m:], xcat[:, :m]], axis=-1)  # [xi|xr]
        out = xcat[0:1, :] * p_ref[0] + xswap[0:1, :] * q_ref[0]
        for i in range(1, width):                                     # static unroll
            out = out + xcat[i:i + 1, :] * p_ref[i] + xswap[i:i + 1, :] * q_ref[i]
        return out

    def real_mix(z, wm_ref):
        """out[o, k] = sum_i z[i, k] * wm[i, o, k]."""
        out = z[0:1, :] * wm_ref[0]                                    # (W, modes)
        for i in range(1, width):
            out = out + z[i:i + 1, :] * wm_ref[i]
        return out

    # ---- layer 0: SpectralF1d (rfft -> mix -> irfft) + w0, GELU ----
    oc0 = complex_mix(h, p0, q0)                                       # (W, 2m)
    x1 = jnp.dot(oc0, gcat0[...], preferred_element_type=f32)          # (W, S)
    x2 = jnp.dot(ww0[...], h, preferred_element_type=f32) + bw0[...]
    h = _gelu(x1 + x2)

    # ---- layer 1: SpectralM1d (rfft -> mix -> (re|im) @ basis.T) + w1(x1), GELU ----
    oc1 = complex_mix(h, p1, q1)                                       # (W, 2m=modes)
    x1 = jnp.dot(oc1, lboT[...], preferred_element_type=f32)           # (W, S)
    x2 = jnp.dot(ww1[...], x1, preferred_element_type=f32) + bw1[...]  # w1 acts on x1
    h = _gelu(x1 + x2)

    # ---- layers 2 & 3: SpectralConv1d (LBO transform) + w2/w3 ----
    def lbo_layer(hb, wm_ref, ww_ref, bw_ref, apply_gelu):
        z = jnp.dot(hb, lbo_invT[...], preferred_element_type=f32)     # (W, modes)
        mixed = real_mix(z, wm_ref)                                    # (W, modes)
        y1 = jnp.dot(mixed, lboT[...], preferred_element_type=f32)     # (W, S)
        y2 = jnp.dot(ww_ref[...], hb, preferred_element_type=f32) + bw_ref[...]
        y = y1 + y2
        return _gelu(y) if apply_gelu else y

    h = lbo_layer(h, wm2, ww2, bw2, True)
    h = lbo_layer(h, wm3, ww3, bw3, False)

    # ---- head: fc1 -> GELU -> fc2 ----
    t = _gelu(jnp.dot(fc1_w[...], h, preferred_element_type=f32) + fc1_b[...])  # (modes, S)
    o = jnp.dot(fc2_w[...], t, preferred_element_type=f32) + fc2_b[...]         # (1, S)
    o_ref[0] = o


def _dft_matrices(S, m):
    """Truncated rFFT / irFFT as real matmul operands (exact for kept modes)."""
    n = np.arange(S, dtype=np.float64)
    k = np.arange(m, dtype=np.float64)
    ang = 2.0 * np.pi * np.outer(n, k) / S                     # (S, m) : 2*pi*k*n/S
    frT = np.cos(ang)                                          # rfft real part
    fiT = -np.sin(ang)                                         # rfft imag part
    ck = np.where((k == 0) | (2.0 * k == S), 1.0, 2.0) / S     # irfft weights
    gr = ck[:, None] * np.cos(ang.T)                           # (m, S)
    gi = -ck[:, None] * np.sin(ang.T)                          # (m, S)
    asf = lambda a: jnp.asarray(a, dtype=jnp.float32)
    return asf(frT), asf(fiT), asf(gr), asf(gi)


def meshno_forward(x, p, *, width, modes):
    """x: (B, S, 6) f32 -> (B, S, 1) f32.  Mirrors MeshNO.forward."""
    B, S, _ = x.shape
    m = modes // 2
    assert modes % 2 == 0 and m <= S // 2 + 1

    # Grid channel + channels-first layout (layout plumbing in plain JAX).
    gridx = jnp.linspace(0.0, 1.0, S, dtype=jnp.float32)
    xg = jnp.concatenate(
        [x, jnp.broadcast_to(gridx[None, :, None], (B, S, 1))], axis=-1)
    xgT = jnp.transpose(xg, (0, 2, 1))                         # (B, 7, S)

    frT, fiT, gr, gi = _dft_matrices(S, m)
    fcat = jnp.concatenate([frT, fiT], axis=1)                 # (S, 2m)  [cos | -sin]
    gcat0 = jnp.concatenate([gr, gi], axis=0)                  # (2m, S)  irfft rows
    lboT = p["lbo"].T                                          # (modes, S)
    lbo_invT = p["lbo_inv"].T                                  # (S, modes)

    def pq(wr, wi):                                            # concatenated mix weights
        return (jnp.concatenate([wr, wr], axis=-1),            # (W, W, 2m)
                jnp.concatenate([-wi, wi], axis=-1))
    p0, q0 = pq(p["w0_r"], p["w0_i"])
    p1, q1 = pq(p["w1_r"], p["w1_i"])

    col = lambda v: v[:, None]                                 # (C,) -> (C, 1)
    weights = [
        p["fc0_w"], col(p["fc0_b"]),
        fcat, gcat0,
        p0, q0, p["ww0"], col(p["bw0"]),
        p1, q1, p["ww1"], col(p["bw1"]),
        lbo_invT, lboT,
        p["wm2"], p["ww2"], col(p["bw2"]),
        p["wm3"], p["ww3"], col(p["bw3"]),
        p["fc1_w"], col(p["fc1_b"]), p["fc2_w"], col(p["fc2_b"]),
    ]

    def const_spec(a):
        nd = a.ndim
        return pl.BlockSpec(a.shape, lambda b: (0,) * nd)

    in_specs = ([pl.BlockSpec((1, 7, S), lambda b: (b, 0, 0))]
                + [const_spec(a) for a in weights])
    out_specs = pl.BlockSpec((1, 1, S), lambda b: (b, 0, 0))

    out = pl.pallas_call(
        meshno_kernel,
        out_shape=jax.ShapeDtypeStruct((B, 1, S), jnp.float32),
        grid=(B,),
        in_specs=in_specs,
        out_specs=out_specs,
        compiler_params=pltpu.CompilerParams(
            dimension_semantics=("parallel",),       # v7x: shard batch over 2 TCs
            vmem_limit_bytes=32 * 1024 * 1024),
    )(xgT, *weights)

    return jnp.transpose(out, (0, 2, 1))                       # (B, S, 1)


def init_params(key, *, width, modes, S):
    m = modes // 2
    ks = iter(jax.random.split(key, 24))

    def nrm(shape, scale):
        return scale * jax.random.normal(next(ks), shape, dtype=jnp.float32)

    return {
        "lbo": nrm((S, modes), 1.0 / np.sqrt(S)),              # LBO_MATRIX
        "lbo_inv": nrm((modes, S), 1.0 / np.sqrt(S)),          # LBO_INVERSE
        "fc0_w": nrm((width, 7), 1.0 / np.sqrt(7.0)),
        "fc0_b": nrm((width,), 0.1),
        "w0_r": nrm((width, width, m), 1.0 / width),
        "w0_i": nrm((width, width, m), 1.0 / width),
        "w1_r": nrm((width, width, m), 1.0 / width),
        "w1_i": nrm((width, width, m), 1.0 / width),
        "wm2": nrm((width, width, modes), 1.0 / width),
        "wm3": nrm((width, width, modes), 1.0 / width),
        "ww0": nrm((width, width), 1.0 / np.sqrt(width)),
        "bw0": nrm((width,), 0.1),
        "ww1": nrm((width, width), 1.0 / np.sqrt(width)),
        "bw1": nrm((width,), 0.1),
        "ww2": nrm((width, width), 1.0 / np.sqrt(width)),
        "bw2": nrm((width,), 0.1),
        "ww3": nrm((width, width), 1.0 / np.sqrt(width)),
        "bw3": nrm((width,), 0.1),
        "fc1_w": nrm((modes, width), 1.0 / np.sqrt(width)),
        "fc1_b": nrm((modes,), 0.1),
        "fc2_w": nrm((1, modes), 1.0 / np.sqrt(modes)),
        "fc2_b": nrm((1,), 0.1),
    }


def reference_forward(x, p, *, width, modes):
    """Plain-JAX mirror of MeshNO.forward (FFT path uses jnp.fft)."""
    HI = jax.lax.Precision.HIGHEST
    B, S, _ = x.shape
    m = modes // 2

    gridx = jnp.linspace(0.0, 1.0, S, dtype=jnp.float32)
    xg = jnp.concatenate(
        [x, jnp.broadcast_to(gridx[None, :, None], (B, S, 1))], axis=-1)
    h = jnp.einsum("bsc,wc->bsw", xg, p["fc0_w"], precision=HI) + p["fc0_b"]
    h = jnp.transpose(h, (0, 2, 1))                                  # (B, W, S)

    def pw(wmat, bias, v):                                           # Conv1d(k=1)
        return jnp.einsum("oi,bis->bos", wmat, v, precision=HI) + bias[None, :, None]

    # layer 0: SpectralF1d + w0
    x_ft = jnp.fft.rfft(h, axis=-1)
    wc = (p["w0_r"] + 1j * p["w0_i"]).astype(jnp.complex64)
    prod = jnp.einsum("bix,iox->box", x_ft[:, :, :m], wc, precision=HI)
    full = jnp.zeros((B, width, S // 2 + 1), jnp.complex64).at[:, :, :m].set(prod)
    x1 = jnp.fft.irfft(full, n=S, axis=-1)
    h = _gelu(x1 + pw(p["ww0"], p["bw0"], h))

    # layer 1: SpectralM1d + w1(x1)
    x_ft = jnp.fft.rfft(h, axis=-1)
    wc = (p["w1_r"] + 1j * p["w1_i"]).astype(jnp.complex64)
    prod = jnp.einsum("bix,iox->box", x_ft[:, :, :m], wc, precision=HI)
    out = jnp.concatenate([jnp.real(prod), jnp.imag(prod)], axis=2)  # (B, W, modes)
    x1 = jnp.einsum("bwm,sm->bws", out, p["lbo"], precision=HI)
    h = _gelu(x1 + pw(p["ww1"], p["bw1"], x1))

    # layers 2 & 3: SpectralConv1d + w2/w3
    def lbo_layer(v, wm, ww, bw, act):
        z = jnp.einsum("ks,bis->bik", p["lbo_inv"], v, precision=HI)  # (B, W, modes)
        mixed = jnp.einsum("bix,iox->box", z, wm, precision=HI)
        y = jnp.einsum("bwm,sm->bws", mixed, p["lbo"], precision=HI) + pw(ww, bw, v)
        return _gelu(y) if act else y

    h = lbo_layer(h, p["wm2"], p["ww2"], p["bw2"], True)
    h = lbo_layer(h, p["wm3"], p["ww3"], p["bw3"], False)

    h = jnp.transpose(h, (0, 2, 1))                                   # (B, S, W)
    t = _gelu(jnp.einsum("bsw,mw->bsm", h, p["fc1_w"], precision=HI) + p["fc1_b"])
    return jnp.einsum("bsm,om->bso", t, p["fc2_w"], precision=HI) + p["fc2_b"]


if __name__ == "__main__":
    B, S, C_IN = 2, 16, 6          # batch, mesh nodes, input channels (6 + grid -> 7)
    WIDTH, MODES = 32, 8           # hidden width, spectral modes (LBO_MATRIX: (S, MODES))

    key = jax.random.PRNGKey(0)
    kx, kp = jax.random.split(key)
    x = jax.random.normal(kx, (B, S, C_IN), dtype=jnp.float32)
    params = init_params(kp, width=WIDTH, modes=MODES, S=S)

    out = jax.block_until_ready(meshno_forward(x, params, width=WIDTH, modes=MODES))
    assert out.shape == (B, S, 1), out.shape

    ref = jax.block_until_ready(reference_forward(x, params, width=WIDTH, modes=MODES))
    np.testing.assert_allclose(np.asarray(out), np.asarray(ref), rtol=5e-3, atol=1e-3)

    print("KERNEL_OK")
</pallas_src>

<mosaic_0001>
module attributes {stable_mosaic.version = 11 : i64} {
  func.func @meshno_kernel(%arg0: i32, %arg1: memref<1x7x16xf32, #tpu.memory_space<vmem>>, %arg2: memref<32x7xf32, #tpu.memory_space<vmem>>, %arg3: memref<32x1xf32, #tpu.memory_space<vmem>>, %arg4: memref<16x8xf32, #tpu.memory_space<vmem>>, %arg5: memref<8x16xf32, #tpu.memory_space<vmem>>, %arg6: memref<32x32x8xf32, #tpu.memory_space<vmem>>, %arg7: memref<32x32x8xf32, #tpu.memory_space<vmem>>, %arg8: memref<32x32xf32, #tpu.memory_space<vmem>>, %arg9: memref<32x1xf32, #tpu.memory_space<vmem>>, %arg10: memref<32x32x8xf32, #tpu.memory_space<vmem>>, %arg11: memref<32x32x8xf32, #tpu.memory_space<vmem>>, %arg12: memref<32x32xf32, #tpu.memory_space<vmem>>, %arg13: memref<32x1xf32, #tpu.memory_space<vmem>>, %arg14: memref<16x8xf32, #tpu.memory_space<vmem>>, %arg15: memref<8x16xf32, #tpu.memory_space<vmem>>, %arg16: memref<32x32x8xf32, #tpu.memory_space<vmem>>, %arg17: memref<32x32xf32, #tpu.memory_space<vmem>>, %arg18: memref<32x1xf32, #tpu.memory_space<vmem>>, %arg19: memref<32x32x8xf32, #tpu.memory_space<vmem>>, %arg20: memref<32x32xf32, #tpu.memory_space<vmem>>, %arg21: memref<32x1xf32, #tpu.memory_space<vmem>>, %arg22: memref<8x32xf32, #tpu.memory_space<vmem>>, %arg23: memref<8x1xf32, #tpu.memory_space<vmem>>, %arg24: memref<1x8xf32, #tpu.memory_space<vmem>>, %arg25: memref<1x1xf32, #tpu.memory_space<vmem>>, %arg26: memref<1x1x16xf32, #tpu.memory_space<vmem>>) attributes {dimension_semantics = [#tpu.dimension_semantics<parallel>], iteration_bounds = array<i64: 2>, scalar_prefetch = 0 : i64, scratch_operands = 0 : i64, tpu.core_type = #tpu.core_type<tc>, window_params = [{transform_indices = @transform_0, window_bounds = array<i64: 1, 7, 16>}, {pipeline_mode = #tpu.pipeline_mode<synchronous>, transform_indices = @transform_1, window_bounds = array<i64: 32, 7>}, {pipeline_mode = #tpu.pipeline_mode<synchronous>, transform_indices = @transform_2, window_bounds = array<i64: 32, 1>}, {pipeline_mode = #tpu.pipeline_mode<synchronous>, transform_indices = @transform_3, window_bounds = array<i64: 16, 8>}, {pipeline_mode = #tpu.pipeline_mode<synchronous>, transform_indices = @transform_4, window_bounds = array<i64: 8, 16>}, {pipeline_mode = #tpu.pipeline_mode<synchronous>, transform_indices = @transform_5, window_bounds = array<i64: 32, 32, 8>}, {pipeline_mode = #tpu.pipeline_mode<synchronous>, transform_indices = @transform_6, window_bounds = array<i64: 32, 32, 8>}, {pipeline_mode = #tpu.pipeline_mode<synchronous>, transform_indices = @transform_7, window_bounds = array<i64: 32, 32>}, {pipeline_mode = #tpu.pipeline_mode<synchronous>, transform_indices = @transform_8, window_bounds = array<i64: 32, 1>}, {pipeline_mode = #tpu.pipeline_mode<synchronous>, transform_indices = @transform_9, window_bounds = array<i64: 32, 32, 8>}, {pipeline_mode = #tpu.pipeline_mode<synchronous>, transform_indices = @transform_10, window_bounds = array<i64: 32, 32, 8>}, {pipeline_mode = #tpu.pipeline_mode<synchronous>, transform_indices = @transform_11, window_bounds = array<i64: 32, 32>}, {pipeline_mode = #tpu.pipeline_mode<synchronous>, transform_indices = @transform_12, window_bounds = array<i64: 32, 1>}, {pipeline_mode = #tpu.pipeline_mode<synchronous>, transform_indices = @transform_13, window_bounds = array<i64: 16, 8>}, {pipeline_mode = #tpu.pipeline_mode<synchronous>, transform_indices = @transform_14, window_bounds = array<i64: 8, 16>}, {pipeline_mode = #tpu.pipeline_mode<synchronous>, transform_indices = @transform_15, window_bounds = array<i64: 32, 32, 8>}, {pipeline_mode = #tpu.pipeline_mode<synchronous>, transform_indices = @transform_16, window_bounds = array<i64: 32, 32>}, {pipeline_mode = #tpu.pipeline_mode<synchronous>, transform_indices = @transform_17, window_bounds = array<i64: 32, 1>}, {pipeline_mode = #tpu.pipeline_mode<synchronous>, transform_indices = @transform_18, window_bounds = array<i64: 32, 32, 8>}, {pipeline_mode = #tpu.pipeline_mode<synchronous>, transform_indices = @transform_19, window_bounds = array<i64: 32, 32>}, {pipeline_mode = #tpu.pipeline_mode<synchronous>, transform_indices = @transform_20, window_bounds = array<i64: 32, 1>}, {pipeline_mode = #tpu.pipeline_mode<synchronous>, transform_indices = @transform_21, window_bounds = array<i64: 8, 32>}, {pipeline_mode = #tpu.pipeline_mode<synchronous>, transform_indices = @transform_22, window_bounds = array<i64: 8, 1>}, {pipeline_mode = #tpu.pipeline_mode<synchronous>, transform_indices = @transform_23, window_bounds = array<i64: 1, 8>}, {pipeline_mode = #tpu.pipeline_mode<synchronous>, transform_indices = @transform_24, window_bounds = array<i64: 1, 1>}, {transform_indices = @transform_25, window_bounds = array<i64: 1, 1, 16>}]} {
    %c0 = arith.constant 0 : index
    %c0_0 = arith.constant 0 : index
    %c0_1 = arith.constant 0 : index
    %0 = vector.load %arg1[%c0, %c0_0, %c0_1] : memref<1x7x16xf32, #tpu.memory_space<vmem>>, vector<1x7x16xf32>
    %1 = vector.shape_cast %0 : vector<1x7x16xf32> to vector<7x16xf32>
    %c0_2 = arith.constant 0 : index
    %c0_3 = arith.constant 0 : index
    %2 = vector.load %arg2[%c0_2, %c0_3] : memref<32x7xf32, #tpu.memory_space<vmem>>, vector<32x7xf32>
    %cst = arith.constant dense<0.000000e+00> : vector<32x16xf32>
    %3 = tpu.matmul %2, %1, %cst {dimension_numbers = #tpu.dot_dimension_numbers<[1], [0], [0], [1], [0, 0, 1, 1], [], []>} : vector<32x7xf32>, vector<7x16xf32>, vector<32x16xf32> -> vector<32x16xf32>
    %c0_4 = arith.constant 0 : index
    %c0_5 = arith.constant 0 : index
    %4 = vector.load %arg3[%c0_4, %c0_5] : memref<32x1xf32, #tpu.memory_space<vmem>>, vector<32x1xf32>
    %5 = vector.broadcast %4 : vector<32x1xf32> to vector<32x16xf32>
    %6 = arith.addf %3, %5 : vector<32x16xf32>
    %c0_6 = arith.constant 0 : index
    %c0_7 = arith.constant 0 : index
    %7 = vector.load %arg4[%c0_6, %c0_7] : memref<16x8xf32, #tpu.memory_space<vmem>>, vector<16x8xf32>
    %cst_8 = arith.constant dense<0.000000e+00> : vector<32x8xf32>
    %8 = tpu.matmul %6, %7, %cst_8 {dimension_numbers = #tpu.dot_dimension_numbers<[1], [0], [0], [1], [0, 0, 1, 1], [], []>} : vector<32x16xf32>, vector<16x8xf32>, vector<32x8xf32> -> vector<32x8xf32>
    %9 = vector.extract_strided_slice %8 {offsets = [0, 4], sizes = [32, 4], strides = [1, 1]} : vector<32x8xf32> to vector<32x4xf32>
    %10 = vector.extract_strided_slice %8 {offsets = [0, 0], sizes = [32, 4], strides = [1, 1]} : vector<32x8xf32> to vector<32x4xf32>
    %11 = tpu.concatenate %9, %10 in 1 : vector<32x4xf32>, vector<32x4xf32> -> vector<32x8xf32>
    %12 = vector.extract_strided_slice %8 {offsets = [0, 0], sizes = [1, 8], strides = [1, 1]} : vector<32x8xf32> to vector<1x8xf32>
    %c0_9 = arith.constant 0 : index
    %c0_10 = arith.constant 0 : index
    %c0_11 = arith.constant 0 : index
    %13 = vector.load %arg6[%c0_9, %c0_10, %c0_11] : memref<32x32x8xf32, #tpu.memory_space<vmem>>, vector<1x32x8xf32>
    %14 = vector.shape_cast %13 : vector<1x32x8xf32> to vector<32x8xf32>
    %15 = vector.broadcast %12 : vector<1x8xf32> to vector<32x8xf32>
    %16 = arith.mulf %15, %14 : vector<32x8xf32>
    %17 = vector.extract_strided_slice %11 {offsets = [0, 0], sizes = [1, 8], strides = [1, 1]} : vector<32x8xf32> to vector<1x8xf32>
    %c0_12 = arith.constant 0 : index
    %c0_13 = arith.constant 0 : index
    %c0_14 = arith.constant 0 : index
    %18 = vector.load %arg7[%c0_12, %c0_13, %c0_14] : memref<32x32x8xf32, #tpu.memory_space<vmem>>, vector<1x32x8xf32>
    %19 = vector.shape_cast %18 : vector<1x32x8xf32> to vector<32x8xf32>
    %20 = vector.broadcast %17 : vector<1x8xf32> to vector<32x8xf32>
    %21 = arith.mulf %20, %19 : vector<32x8xf32>
    %22 = arith.addf %16, %21 : vector<32x8xf32>
    %23 = vector.extract_strided_slice %8 {offsets = [1, 0], sizes = [1, 8], strides = [1, 1]} : vector<32x8xf32> to vector<1x8xf32>
    %c1 = arith.constant 1 : index
    %c0_15 = arith.constant 0 : index
    %c0_16 = arith.constant 0 : index
    %24 = vector.load %arg6[%c1, %c0_15, %c0_16] : memref<32x32x8xf32, #tpu.memory_space<vmem>>, vector<1x32x8xf32>
    %25 = vector.shape_cast %24 : vector<1x32x8xf32> to vector<32x8xf32>
    %26 = vector.broadcast %23 : vector<1x8xf32> to vector<32x8xf32>
    %27 = arith.mulf %26, %25 : vector<32x8xf32>
    %28 = arith.addf %22, %27 : vector<32x8xf32>
    %29 = vector.extract_strided_slice %11 {offsets = [1, 0], sizes = [1, 8], strides = [1, 1]} : vector<32x8xf32> to vector<1x8xf32>
    %c1_17 = arith.constant 1 : index
    %c0_18 = arith.constant 0 : index
    %c0_19 = arith.constant 0 : index
    %30 = vector.load %arg7[%c1_17, %c0_18, %c0_19] : memref<32x32x8xf32, #tpu.memory_space<vmem>>, vector<1x32x8xf32>
    %31 = vector.shape_cast %30 : vector<1x32x8xf32> to vector<32x8xf32>
    %32 = vector.broadcast %29 : vector<1x8xf32> to vector<32x8xf32>
    %33 = arith.mulf %32, %31 : vector<32x8xf32>
    %34 = arith.addf %28, %33 : vector<32x8xf32>
    %35 = vector.extract_strided_slice %8 {offsets = [2, 0], sizes = [1, 8], strides = [1, 1]} : vector<32x8xf32> to vector<1x8xf32>
    %c2 = arith.constant 2 : index
    %c0_20 = arith.constant 0 : index
    %c0_21 = arith.constant 0 : index
    %36 = vector.load %arg6[%c2, %c0_20, %c0_21] : memref<32x32x8xf32, #tpu.memory_space<vmem>>, vector<1x32x8xf32>
    %37 = vector.shape_cast %36 : vector<1x32x8xf32> to vector<32x8xf32>
    %38 = vector.broadcast %35 : vector<1x8xf32> to vector<32x8xf32>
    %39 = arith.mulf %38, %37 : vector<32x8xf32>
    %40 = arith.addf %34, %39 : vector<32x8xf32>
    %41 = vector.extract_strided_slice %11 {offsets = [2, 0], sizes = [1, 8], strides = [1, 1]} : vector<32x8xf32> to vector<1x8xf32>
    %c2_22 = arith.constant 2 : index
    %c0_23 = arith.constant 0 : index
    %c0_24 = arith.constant 0 : index
    %42 = vector.load %arg7[%c2_22, %c0_23, %c0_24] : memref<32x32x8xf32, #tpu.memory_space<vmem>>, vector<1x32x8xf32>
    %43 = vector.shape_cast %42 : vector<1x32x8xf32> to vector<32x8xf32>
    %44 = vector.broadcast %41 : vector<1x8xf32> to vector<32x8xf32>
    %45 = arith.mulf %44, %43 : vector<32x8xf32>
    %46 = arith.addf %40, %45 : vector<32x8xf32>
    %47 = vector.extract_strided_slice %8 {offsets = [3, 0], sizes = [1, 8], strides = [1, 1]} : vector<32x8xf32> to vector<1x8xf32>
    %c3 = arith.constant 3 : index
    %c0_25 = arith.constant 0 : index
    %c0_26 = arith.constant 0 : index
    %48 = vector.load %arg6[%c3, %c0_25, %c0_26] : memref<32x32x8xf32, #tpu.memory_space<vmem>>, vector<1x32x8xf32>
    %49 = vector.shape_cast %48 : vector<1x32x8xf32> to vector<32x8xf32>
    %50 = vector.broadcast %47 : vector<1x8xf32> to vector<32x8xf32>
    %51 = arith.mulf %50, %49 : vector<32x8xf32>
    %52 = arith.addf %46, %51 : vector<32x8xf32>
    %53 = vector.extract_strided_slice %11 {offsets = [3, 0], sizes = [1, 8], strides = [1, 1]} : vector<32x8xf32> to vector<1x8xf32>
    %c3_27 = arith.constant 3 : index
    %c0_28 = arith.constant 0 : index
    %c0_29 = arith.constant 0 : index
    %54 = vector.load %arg7[%c3_27, %c0_28, %c0_29] : memref<32x32x8xf32, #tpu.memory_space<vmem>>, vector<1x32x8xf32>
    %55 = vector.shape_cast %54 : vector<1x32x8xf32> to vector<32x8xf32>
    %56 = vector.broadcast %53 : vector<1x8xf32> to vector<32x8xf32>
    %57 = arith.mulf %56, %55 : vector<32x8xf32>
    %58 = arith.addf %52, %57 : vector<32x8xf32>
    %59 = vector.extract_strided_slice %8 {offsets = [4, 0], sizes = [1, 8], strides = [1, 1]} : vector<32x8xf32> to vector<1x8xf32>
    %c4 = arith.constant 4 : index
    %c0_30 = arith.constant 0 : index
    %c0_31 = arith.constant 0 : index
    %60 = vector.load %arg6[%c4, %c0_30, %c0_31] : memref<32x32x8xf32, #tpu.memory_space<vmem>>, vector<1x32x8xf32>
    %61 = vector.shape_cast %60 : vector<1x32x8xf32> to vector<32x8xf32>
    %62 = vector.broadcast %59 : vector<1x8xf32> to vector<32x8xf32>
    %63 = arith.mulf %62, %61 : vector<32x8xf32>
    %64 = arith.addf %58, %63 : vector<32x8xf32>
    %65 = vector.extract_strided_slice %11 {offsets = [4, 0], sizes = [1, 8], strides = [1, 1]} : vector<32x8xf32> to vector<1x8xf32>
    %c4_32 = arith.constant 4 : index
    %c0_33 = arith.constant 0 : index
    %c0_34 = arith.constant 0 : index
    %66 = vector.load %arg7[%c4_32, %c0_33, %c0_34] : memref<32x32x8xf32, #tpu.memory_space<vmem>>, vector<1x32x8xf32>
    %67 = vector.shape_cast %66 : vector<1x32x8xf32> to vector<32x8xf32>
    %68 = vector.broadcast %65 : vector<1x8xf32> to vector<32x8xf32>
    %69 = arith.mulf %68, %67 : vector<32x8xf32>
    %70 = arith.addf %64, %69 : vector<32x8xf32>
    %71 = vector.extract_strided_slice %8 {offsets = [5, 0], sizes = [1, 8], strides = [1, 1]} : vector<32x8xf32> to vector<1x8xf32>
    %c5 = arith.constant 5 : index
    %c0_35 = arith.constant 0 : index
    %c0_36 = arith.constant 0 : index
    %72 = vector.load %arg6[%c5, %c0_35, %c0_36] : memref<32x32x8xf32, #tpu.memory_space<vmem>>, vector<1x32x8xf32>
    %73 = vector.shape_cast %72 : vector<1x32x8xf32> to vector<32x8xf32>
    %74 = vector.broadcast %71 : vector<1x8xf32> to vector<32x8xf32>
    %75 = arith.mulf %74, %73 : vector<32x8xf32>
    %76 = arith.addf %70, %75 : vector<32x8xf32>
    %77 = vector.extract_strided_slice %11 {offsets = [5, 0], sizes = [1, 8], strides = [1, 1]} : vector<32x8xf32> to vector<1x8xf32>
    %c5_37 = arith.constant 5 : index
    %c0_38 = arith.constant 0 : index
    %c0_39 = arith.constant 0 : index
    %78 = vector.load %arg7[%c5_37, %c0_38, %c0_39] : memref<32x32x8xf32, #tpu.memory_space<vmem>>, vector<1x32x8xf32>
    %79 = vector.shape_cast %78 : vector<1x32x8xf32> to vector<32x8xf32>
    %80 = vector.broadcast %77 : vector<1x8xf32> to vector<32x8xf32>
    %81 = arith.mulf %80, %79 : vector<32x8xf32>
    %82 = arith.addf %76, %81 : vector<32x8xf32>
    %83 = vector.extract_strided_slice %8 {offsets = [6, 0], sizes = [1, 8], strides = [1, 1]} : vector<32x8xf32> to vector<1x8xf32>
    %c6 = arith.constant 6 : index
    %c0_40 = arith.constant 0 : index
    %c0_41 = arith.constant 0 : index
    %84 = vector.load %arg6[%c6, %c0_40, %c0_41] : memref<32x32x8xf32, #tpu.memory_space<vmem>>, vector<1x32x8xf32>
    %85 = vector.shape_cast %84 : vector<1x32x8xf32> to vector<32x8xf32>
    %86 = vector.broadcast %83 : vector<1x8xf32> to vector<32x8xf32>
    %87 = arith.mulf %86, %85 : vector<32x8xf32>
    %88 = arith.addf %82, %87 : vector<32x8xf32>
    %89 = vector.extract_strided_slice %11 {offsets = [6, 0], sizes = [1, 8], strides = [1, 1]} : vector<32x8xf32> to vector<1x8xf32>
    %c6_42 = arith.constant 6 : index
    %c0_43 = arith.constant 0 : index
    %c0_44 = arith.constant 0 : index
    %90 = vector.load %arg7[%c6_42, %c0_43, %c0_44] : memref<32x32x8xf32, #tpu.memory_space<vmem>>, vector<1x32x8xf32>
    %91 = vector.shape_cast %90 : vector<1x32x8xf32> to vector<32x8xf32>
    %92 = vector.broadcast %89 : vector<1x8xf32> to vector<32x8xf32>
    %93 = arith.mulf %92, %91 : vector<32x8xf32>
    %94 = arith.addf %88, %93 : vector<32x8xf32>
    %95 = vector.extract_strided_slice %8 {offsets = [7, 0], sizes = [1, 8], strides = [1, 1]} : vector<32x8xf32> to vector<1x8xf32>
    %c7 = arith.constant 7 : index
    %c0_45 = arith.constant 0 : index
    %c0_46 = arith.constant 0 : index
    %96 = vector.load %arg6[%c7, %c0_45, %c0_46] : memref<32x32x8xf32, #tpu.memory_space<vmem>>, vector<1x32x8xf32>
    %97 = vector.shape_cast %96 : vector<1x32x8xf32> to vector<32x8xf32>
    %98 = vector.broadcast %95 : vector<1x8xf32> to vector<32x8xf32>
    %99 = arith.mulf %98, %97 : vector<32x8xf32>
    %100 = arith.addf %94, %99 : vector<32x8xf32>
    %101 = vector.extract_strided_slice %11 {offsets = [7, 0], sizes = [1, 8], strides = [1, 1]} : vector<32x8xf32> to vector<1x8xf32>
    %c7_47 = arith.constant 7 : index
    %c0_48 = arith.constant 0 : index
    %c0_49 = arith.constant 0 : index
    %102 = vector.load %arg7[%c7_47, %c0_48, %c0_49] : memref<32x32x8xf32, #tpu.memory_space<vmem>>, vector<1x32x8xf32>
    %103 = vector.shape_cast %102 : vector<1x32x8xf32> to vector<32x8xf32>
    %104 = vector.broadcast %101 : vector<1x8xf32> to vector<32x8xf32>
    %105 = arith.mulf %104, %103 : vector<32x8xf32>
    %106 = arith.addf %100, %105 : vector<32x8xf32>
    %107 = vector.extract_strided_slice %8 {offsets = [8, 0], sizes = [1, 8], strides = [1, 1]} : vector<32x8xf32> to vector<1x8xf32>
    %c8 = arith.constant 8 : index
    %c0_50 = arith.constant 0 : index
    %c0_51 = arith.constant 0 : index
    %108 = vector.load %arg6[%c8, %c0_50, %c0_51] : memref<32x32x8xf32, #tpu.memory_space<vmem>>, vector<1x32x8xf32>
    %109 = vector.shape_cast %108 : vector<1x32x8xf32> to vector<32x8xf32>
    %110 = vector.broadcast %107 : vector<1x8xf32> to vector<32x8xf32>
    %111 = arith.mulf %110, %109 : vector<32x8xf32>
    %112 = arith.addf %106, %111 : vector<32x8xf32>
    %113 = vector.extract_strided_slice %11 {offsets = [8, 0], sizes = [1, 8], strides = [1, 1]} : vector<32x8xf32> to vector<1x8xf32>
    %c8_52 = arith.constant 8 : index
    %c0_53 = arith.constant 0 : index
    %c0_54 = arith.constant 0 : index
    %114 = vector.load %arg7[%c8_52, %c0_53, %c0_54] : memref<32x32x8xf32, #tpu.memory_space<vmem>>, vector<1x32x8xf32>
    %115 = vector.shape_cast %114 : vector<1x32x8xf32> to vector<32x8xf32>
    %116 = vector.broadcast %113 : vector<1x8xf32> to vector<32x8xf32>
    %117 = arith.mulf %116, %115 : vector<32x8xf32>
    %118 = arith.addf %112, %117 : vector<32x8xf32>
    %119 = vector.extract_strided_slice %8 {offsets = [9, 0], sizes = [1, 8], strides = [1, 1]} : vector<32x8xf32> to vector<1x8xf32>
    %c9 = arith.constant 9 : index
    %c0_55 = arith.constant 0 : index
    %c0_56 = arith.constant 0 : index
    %120 = vector.load %arg6[%c9, %c0_55, %c0_56] : memref<32x32x8xf32, #tpu.memory_space<vmem>>, vector<1x32x8xf32>
    %121 = vector.shape_cast %120 : vector<1x32x8xf32> to vector<32x8xf32>
    %122 = vector.broadcast %119 : vector<1x8xf32> to vector<32x8xf32>
    %123 = arith.mulf %122, %121 : vector<32x8xf32>
    %124 = arith.addf %118, %123 : vector<32x8xf32>
    %125 = vector.extract_strided_slice %11 {offsets = [9, 0], sizes = [1, 8], strides = [1, 1]} : vector<32x8xf32> to vector<1x8xf32>
    %c9_57 = arith.constant 9 : index
    %c0_58 = arith.constant 0 : index
    %c0_59 = arith.constant 0 : index
    %126 = vector.load %arg7[%c9_57, %c0_58, %c0_59] : memref<32x32x8xf32, #tpu.memory_space<vmem>>, vector<1x32x8xf32>
    %127 = vector.shape_cast %126 : vector<1x32x8xf32> to vector<32x8xf32>
    %128 = vector.broadcast %125 : vector<1x8xf32> to vector<32x8xf32>
    %129 = arith.mulf %128, %127 : vector<32x8xf32>
    %130 = arith.addf %124, %129 : vector<32x8xf32>
    %131 = vector.extract_strided_slice %8 {offsets = [10, 0], sizes = [1, 8], strides = [1, 1]} : vector<32x8xf32> to vector<1x8xf32>
    %c10 = arith.constant 10 : index
    %c0_60 = arith.constant 0 : index
    %c0_61 = arith.constant 0 : index
    %132 = vector.load %arg6[%c10, %c0_60, %c0_61] : memref<32x32x8xf32, #tpu.memory_space<vmem>>, vector<1x32x8xf32>
    %133 = vector.shape_cast %132 : vector<1x32x8xf32> to vector<32x8xf32>
    %134 = vector.broadcast %131 : vector<1x8xf32> to vector<32x8xf32>
    %135 = arith.mulf %134, %133 : vector<32x8xf32>
    %136 = arith.addf %130, %135 : vector<32x8xf32>
    %137 = vector.extract_strided_slice %11 {offsets = [10, 0], sizes = [1, 8], strides = [1, 1]} : vector<32x8xf32> to vector<1x8xf32>
    %c10_62 = arith.constant 10 : index
    %c0_63 = arith.constant 0 : index
    %c0_64 = arith.constant 0 : index
    %138 = vector.load %arg7[%c10_62, %c0_63, %c0_64] : memref<32x32x8xf32, #tpu.memory_space<vmem>>, vector<1x32x8xf32>
    %139 = vector.shape_cast %138 : vector<1x32x8xf32> to vector<32x8xf32>
    %140 = vector.broadcast %137 : vector<1x8xf32> to vector<32x8xf32>
    %141 = arith.mulf %140, %139 : vector<32x8xf32>
    %142 = arith.addf %136, %141 : vector<32x8xf32>
    %143 = vector.extract_strided_slice %8 {offsets = [11, 0], sizes = [1, 8], strides = [1, 1]} : vector<32x8xf32> to vector<1x8xf32>
    %c11 = arith.constant 11 : index
    %c0_65 = arith.constant 0 : index
    %c0_66 = arith.constant 0 : index
    %144 = vector.load %arg6[%c11, %c0_65, %c0_66] : memref<32x32x8xf32, #tpu.memory_space<vmem>>, vector<1x32x8xf32>
    %145 = vector.shape_cast %144 : vector<1x32x8xf32> to vector<32x8xf32>
    %146 = vector.broadcast %143 : vector<1x8xf32> to vector<32x8xf32>
    %147 = arith.mulf %146, %145 : vector<32x8xf32>
    %148 = arith.addf %142, %147 : vector<32x8xf32>
    %149 = vector.extract_strided_slice %11 {offsets = [11, 0], sizes = [1, 8], strides = [1, 1]} : vector<32x8xf32> to vector<1x8xf32>
    %c11_67 = arith.constant 11 : index
    %c0_68 = arith.constant 0 : index
    %c0_69 = arith.constant 0 : index
    %150 = vector.load %arg7[%c11_67, %c0_68, %c0_69] : memref<32x32x8xf32, #tpu.memory_space<vmem>>, vector<1x32x8xf32>
    %151 = vector.shape_cast %150 : vector<1x32x8xf32> to vector<32x8xf32>
    %152 = vector.broadcast %149 : vector<1x8xf32> to vector<32x8xf32>
    %153 = arith.mulf %152, %151 : vector<32x8xf32>
    %154 = arith.addf %148, %153 : vector<32x8xf32>
    %155 = vector.extract_strided_slice %8 {offsets = [12, 0], sizes = [1, 8], strides = [1, 1]} : vector<32x8xf32> to vector<1x8xf32>
    %c12 = arith.constant 12 : index
    %c0_70 = arith.constant 0 : index
    %c0_71 = arith.constant 0 : index
    %156 = vector.load %arg6[%c12, %c0_70, %c0_71] : memref<32x32x8xf32, #tpu.memory_space<vmem>>, vector<1x32x8xf32>
    %157 = vector.shape_cast %156 : vector<1x32x8xf32> to vector<32x8xf32>
    %158 = vector.broadcast %155 : vector<1x8xf32> to vector<32x8xf32>
    %159 = arith.mulf %158, %157 : vector<32x8xf32>
    %160 = arith.addf %154, %159 : vector<32x8xf32>
    %161 = vector.extract_strided_slice %11 {offsets = [12, 0], sizes = [1, 8], strides = [1, 1]} : vector<32x8xf32> to vector<1x8xf32>
    %c12_72 = arith.constant 12 : index
    %c0_73 = arith.constant 0 : index
    %c0_74 = arith.constant 0 : index
    %162 = vector.load %arg7[%c12_72, %c0_73, %c0_74] : memref<32x32x8xf32, #tpu.memory_space<vmem>>, vector<1x32x8xf32>
    %163 = vector.shape_cast %162 : vector<1x32x8xf32> to vector<32x8xf32>
    %164 = vector.broadcast %161 : vector<1x8xf32> to vector<32x8xf32>
    %165 = arith.mulf %164, %163 : vector<32x8xf32>
    %166 = arith.addf %160, %165 : vector<32x8xf32>
    %167 = vector.extract_strided_slice %8 {offsets = [13, 0], sizes = [1, 8], strides = [1, 1]} : vector<32x8xf32> to vector<1x8xf32>
    %c13 = arith.constant 13 : index
    %c0_75 = arith.constant 0 : index
    %c0_76 = arith.constant 0 : index
    %168 = vector.load %arg6[%c13, %c0_75, %c0_76] : memref<32x32x8xf32, #tpu.memory_space<vmem>>, vector<1x32x8xf32>
    %169 = vector.shape_cast %168 : vector<1x32x8xf32> to vector<32x8xf32>
    %170 = vector.broadcast %167 : vector<1x8xf32> to vector<32x8xf32>
    %171 = arith.mulf %170, %169 : vector<32x8xf32>
    %172 = arith.addf %166, %171 : vector<32x8xf32>
    %173 = vector.extract_strided_slice %11 {offsets = [13, 0], sizes = [1, 8], strides = [1, 1]} : vector<32x8xf32> to vector<1x8xf32>
    %c13_77 = arith.constant 13 : index
    %c0_78 = arith.constant 0 : index
    %c0_79 = arith.constant 0 : index
    %174 = vector.load %arg7[%c13_77, %c0_78, %c0_79] : memref<32x32x8xf32, #tpu.memory_space<vmem>>, vector<1x32x8xf32>
    %175 = vector.shape_cast %174 : vector<1x32x8xf32> to vector<32x8xf32>
    %176 = vector.broadcast %173 : vector<1x8xf32> to vector<32x8xf32>
    %177 = arith.mulf %176, %175 : vector<32x8xf32>
    %178 = arith.addf %172, %177 : vector<32x8xf32>
    %179 = vector.extract_strided_slice %8 {offsets = [14, 0], sizes = [1, 8], strides = [1, 1]} : vector<32x8xf32> to vector<1x8xf32>
    %c14 = arith.constant 14 : index
    %c0_80 = arith.constant 0 : index
    %c0_81 = arith.constant 0 : index
    %180 = vector.load %arg6[%c14, %c0_80, %c0_81] : memref<32x32x8xf32, #tpu.memory_space<vmem>>, vector<1x32x8xf32>
    %181 = vector.shape_cast %180 : vector<1x32x8xf32> to vector<32x8xf32>
    %182 = vector.broadcast %179 : vector<1x8xf32> to vector<32x8xf32>
    %183 = arith.mulf %182, %181 : vector<32x8xf32>
    %184 = arith.addf %178, %183 : vector<32x8xf32>
    %185 = vector.extract_strided_slice %11 {offsets = [14, 0], sizes = [1, 8], strides = [1, 1]} : vector<32x8xf32> to vector<1x8xf32>
    %c14_82 = arith.constant 14 : index
    %c0_83 = arith.constant 0 : index
    %c0_84 = arith.constant 0 : index
    %186 = vector.load %arg7[%c14_82, %c0_83, %c0_84] : memref<32x32x8xf32, #tpu.memory_space<vmem>>, vector<1x32x8xf32>
    %187 = vector.shape_cast %186 : vector<1x32x8xf32> to vector<32x8xf32>
    %188 = vector.broadcast %185 : vector<1x8xf32> to vector<32x8xf32>
    %189 = arith.mulf %188, %187 : vector<32x8xf32>
    %190 = arith.addf %184, %189 : vector<32x8xf32>
    %191 = vector.extract_strided_slice %8 {offsets = [15, 0], sizes = [1, 8], strides = [1, 1]} : vector<32x8xf32> to vector<1x8xf32>
    %c15 = arith.constant 15 : index
    %c0_85 = arith.constant 0 : index
    %c0_86 = arith.constant 0 : index
    %192 = vector.load %arg6[%c15, %c0_85, %c0_86] : memref<32x32x8xf32, #tpu.memory_space<vmem>>, vector<1x32x8xf32>
    %193 = vector.shape_cast %192 : vector<1x32x8xf32> to vector<32x8xf32>
    %194 = vector.broadcast %191 : vector<1x8xf32> to vector<32x8xf32>
    %195 = arith.mulf %194, %193 : vector<32x8xf32>
    %196 = arith.addf %190, %195 : vector<32x8xf32>
    %197 = vector.extract_strided_slice %11 {offsets = [15, 0], sizes = [1, 8], strides = [1, 1]} : vector<32x8xf32> to vector<1x8xf32>
    %c15_87 = arith.constant 15 : index
    %c0_88 = arith.constant 0 : index
    %c0_89 = arith.constant 0 : index
    %198 = vector.load %arg7[%c15_87, %c0_88, %c0_89] : memref<32x32x8xf32, #tpu.memory_space<vmem>>, vector<1x32x8xf32>
    %199 = vector.shape_cast %198 : vector<1x32x8xf32> to vector<32x8xf32>
    %200 = vector.broadcast %197 : vector<1x8xf32> to vector<32x8xf32>
    %201 = arith.mulf %200, %199 : vector<32x8xf32>
    %202 = arith.addf %196, %201 : vector<32x8xf32>
    %203 = vector.extract_strided_slice %8 {offsets = [16, 0], sizes = [1, 8], strides = [1, 1]} : vector<32x8xf32> to vector<1x8xf32>
    %c16 = arith.constant 16 : index
    %c0_90 = arith.constant 0 : index
    %c0_91 = arith.constant 0 : index
    %204 = vector.load %arg6[%c16, %c0_90, %c0_91] : memref<32x32x8xf32, #tpu.memory_space<vmem>>, vector<1x32x8xf32>
    %205 = vector.shape_cast %204 : vector<1x32x8xf32> to vector<32x8xf32>
    %206 = vector.broadcast %203 : vector<1x8xf32> to vector<32x8xf32>
    %207 = arith.mulf %206, %205 : vector<32x8xf32>
    %208 = arith.addf %202, %207 : vector<32x8xf32>
    %209 = vector.extract_strided_slice %11 {offsets = [16, 0], sizes = [1, 8], strides = [1, 1]} : vector<32x8xf32> to vector<1x8xf32>
    %c16_92 = arith.constant 16 : index
    %c0_93 = arith.constant 0 : index
    %c0_94 = arith.constant 0 : index
    %210 = vector.load %arg7[%c16_92, %c0_93, %c0_94] : memref<32x32x8xf32, #tpu.memory_space<vmem>>, vector<1x32x8xf32>
    %211 = vector.shape_cast %210 : vector<1x32x8xf32> to vector<32x8xf32>
    %212 = vector.broadcast %209 : vector<1x8xf32> to vector<32x8xf32>
    %213 = arith.mulf %212, %211 : vector<32x8xf32>
    %214 = arith.addf %208, %213 : vector<32x8xf32>
    %215 = vector.extract_strided_slice %8 {offsets = [17, 0], sizes = [1, 8], strides = [1, 1]} : vector<32x8xf32> to vector<1x8xf32>
    %c17 = arith.constant 17 : index
    %c0_95 = arith.constant 0 : index
    %c0_96 = arith.constant 0 : index
    %216 = vector.load %arg6[%c17, %c0_95, %c0_96] : memref<32x32x8xf32, #tpu.memory_space<vmem>>, vector<1x32x8xf32>
    %217 = vector.shape_cast %216 : vector<1x32x8xf32> to vector<32x8xf32>
    %218 = vector.broadcast %215 : vector<1x8xf32> to vector<32x8xf32>
    %219 = arith.mulf %218, %217 : vector<32x8xf32>
    %220 = arith.addf %214, %219 : vector<32x8xf32>
    %221 = vector.extract_strided_slice %11 {offsets = [17, 0], sizes = [1, 8], strides = [1, 1]} : vector<32x8xf32> to vector<1x8xf32>
    %c17_97 = arith.constant 17 : index
    %c0_98 = arith.constant 0 : index
    %c0_99 = arith.constant 0 : index
    %222 = vector.load %arg7[%c17_97, %c0_98, %c0_99] : memref<32x32x8xf32, #tpu.memory_space<vmem>>, vector<1x32x8xf32>
    %223 = vector.shape_cast %222 : vector<1x32x8xf32> to vector<32x8xf32>
    %224 = vector.broadcast %221 : vector<1x8xf32> to vector<32x8xf32>
    %225 = arith.mulf %224, %223 : vector<32x8xf32>
    %226 = arith.addf %220, %225 : vector<32x8xf32>
    %227 = vector.extract_strided_slice %8 {offsets = [18, 0], sizes = [1, 8], strides = [1, 1]} : vector<32x8xf32> to vector<1x8xf32>
    %c18 = arith.constant 18 : index
    %c0_100 = arith.constant 0 : index
    %c0_101 = arith.constant 0 : index
    %228 = vector.load %arg6[%c18, %c0_100, %c0_101] : memref<32x32x8xf32, #tpu.memory_space<vmem>>, vector<1x32x8xf32>
    %229 = vector.shape_cast %228 : vector<1x32x8xf32> to vector<32x8xf32>
    %230 = vector.broadcast %227 : vector<1x8xf32> to vector<32x8xf32>
    %231 = arith.mulf %230, %229 : vector<32x8xf32>
    %232 = arith.addf %226, %231 : vector<32x8xf32>
    %233 = vector.extract_strided_slice %11 {offsets = [18, 0], sizes = [1, 8], strides = [1, 1]} : vector<32x8xf32> to vector<1x8xf32>
    %c18_102 = arith.constant 18 : index
    %c0_103 = arith.constant 0 : index
    %c0_104 = arith.constant 0 : index
    %234 = vector.load %arg7[%c18_102, %c0_103, %c0_104] : memref<32x32x8xf32, #tpu.memory_space<vmem>>, vector<1x32x8xf32>
    %235 = vector.shape_cast %234 : vector<1x32x8xf32> to vector<32x8xf32>
    %236 = vector.broadcast %233 : vector<1x8xf32> to vector<32x8xf32>
    %237 = arith.mulf %236, %235 : vector<32x8xf32>
    %238 = arith.addf %232, %237 : vector<32x8xf32>
    %239 = vector.extract_strided_slice %8 {offsets = [19, 0], sizes = [1, 8], strides = [1, 1]} : vector<32x8xf32> to vector<1x8xf32>
    %c19 = arith.constant 19 : index
    %c0_105 = arith.constant 0 : index
    %c0_106 = arith.constant 0 : index
    %240 = vector.load %arg6[%c19, %c0_105, %c0_106] : memref<32x32x8xf32, #tpu.memory_space<vmem>>, vector<1x32x8xf32>
    %241 = vector.shape_cast %240 : vector<1x32x8xf32> to vector<32x8xf32>
    %242 = vector.broadcast %239 : vector<1x8xf32> to vector<32x8xf32>
    %243 = arith.mulf %242, %241 : vector<32x8xf32>
    %244 = arith.addf %238, %243 : vector<32x8xf32>
    %245 = vector.extract_strided_slice %11 {offsets = [19, 0], sizes = [1, 8], strides = [1, 1]} : vector<32x8xf32> to vector<1x8xf32>
    %c19_107 = arith.constant 19 : index
    %c0_108 = arith.constant 0 : index
    %c0_109 = arith.constant 0 : index
    %246 = vector.load %arg7[%c19_107, %c0_108, %c0_109] : memref<32x32x8xf32, #tpu.memory_space<vmem>>, vector<1x32x8xf32>
    %247 = vector.shape_cast %246 : vector<1x32x8xf32> to vector<32x8xf32>
    %248 = vector.broadcast %245 : vector<1x8xf32> to vector<32x8xf32>
    %249 = arith.mulf %248, %247 : vector<32x8xf32>
    %250 = arith.addf %244, %249 : vector<32x8xf32>
    %251 = vector.extract_strided_slice %8 {offsets = [20, 0], sizes = [1, 8], strides = [1, 1]} : vector<32x8xf32> to vector<1x8xf32>
    %c20 = arith.constant 20 : index
    %c0_110 = arith.constant 0 : index
    %c0_111 = arith.constant 0 : index
    %252 = vector.load %arg6[%c20, %c0_110, %c0_111] : memref<32x32x8xf32, #tpu.memory_space<vmem>>, vector<1x32x8xf32>
    %253 = vector.shape_cast %252 : vector<1x32x8xf32> to vector<32x8xf32>
    %254 = vector.broadcast %251 : vector<1x8xf32> to vector<32x8xf32>
    %255 = arith.mulf %254, %253 : vector<32x8xf32>
    %256 = arith.addf %250, %255 : vector<32x8xf32>
    %257 = vector.extract_strided_slice %11 {offsets = [20, 0], sizes = [1, 8], strides = [1, 1]} : vector<32x8xf32> to vector<1x8xf32>
    %c20_112 = arith.constant 20 : index
    %c0_113 = arith.constant 0 : index
    %c0_114 = arith.constant 0 : index
    %258 = vector.load %arg7[%c20_112, %c0_113, %c0_114] : memref<32x32x8xf32, #tpu.memory_space<vmem>>, vector<1x32x8xf32>
    %259 = vector.shape_cast %258 : vector<1x32x8xf32> to vector<32x8xf32>
    %260 = vector.broadcast %257 : vector<1x8xf32> to vector<32x8xf32>
    %261 = arith.mulf %260, %259 : vector<32x8xf32>
    %262 = arith.addf %256, %261 : vector<32x8xf32>
    %263 = vector.extract_strided_slice %8 {offsets = [21, 0], sizes = [1, 8], strides = [1, 1]} : vector<32x8xf32> to vector<1x8xf32>
    %c21 = arith.constant 21 : index
    %c0_115 = arith.constant 0 : index
    %c0_116 = arith.constant 0 : index
    %264 = vector.load %arg6[%c21, %c0_115, %c0_116] : memref<32x32x8xf32, #tpu.memory_space<vmem>>, vector<1x32x8xf32>
    %265 = vector.shape_cast %264 : vector<1x32x8xf32> to vector<32x8xf32>
    %266 = vector.broadcast %263 : vector<1x8xf32> to vector<32x8xf32>
    %267 = arith.mulf %266, %265 : vector<32x8xf32>
    %268 = arith.addf %262, %267 : vector<32x8xf32>
    %269 = vector.extract_strided_slice %11 {offsets = [21, 0], sizes = [1, 8], strides = [1, 1]} : vector<32x8xf32> to vector<1x8xf32>
    %c21_117 = arith.constant 21 : index
    %c0_118 = arith.constant 0 : index
    %c0_119 = arith.constant 0 : index
    %270 = vector.load %arg7[%c21_117, %c0_118, %c0_119] : memref<32x32x8xf32, #tpu.memory_space<vmem>>, vector<1x32x8xf32>
    %271 = vector.shape_cast %270 : vector<1x32x8xf32> to vector<32x8xf32>
    %272 = vector.broadcast %269 : vector<1x8xf32> to vector<32x8xf32>
    %273 = arith.mulf %272, %271 : vector<32x8xf32>
    %274 = arith.addf %268, %273 : vector<32x8xf32>
    %275 = vector.extract_strided_slice %8 {offsets = [22, 0], sizes = [1, 8], strides = [1, 1]} : vector<32x8xf32> to vector<1x8xf32>
    %c22 = arith.constant 22 : index
    %c0_120 = arith.constant 0 : index
    %c0_121 = arith.constant 0 : index
    %276 = vector.load %arg6[%c22, %c0_120, %c0_121] : memref<32x32x8xf32, #tpu.memory_space<vmem>>, vector<1x32x8xf32>
    %277 = vector.shape_cast %276 : vector<1x32x8xf32> to vector<32x8xf32>
    %278 = vector.broadcast %275 : vector<1x8xf32> to vector<32x8xf32>
    %279 = arith.mulf %278, %277 : vector<32x8xf32>
    %280 = arith.addf %274, %279 : vector<32x8xf32>
    %281 = vector.extract_strided_slice %11 {offsets = [22, 0], sizes = [1, 8], strides = [1, 1]} : vector<32x8xf32> to vector<1x8xf32>
    %c22_122 = arith.constant 22 : index
    %c0_123 = arith.constant 0 : index
    %c0_124 = arith.constant 0 : index
    %282 = vector.load %arg7[%c22_122, %c0_123, %c0_124] : memref<32x32x8xf32, #tpu.memory_space<vmem>>, vector<1x32x8xf32>
    %283 = vector.shape_cast %282 : vector<1x32x8xf32> to vector<32x8xf32>
    %284 = vector.broadcast %281 : vector<1x8xf32> to vector<32x8xf32>
    %285 = arith.mulf %284, %283 : vector<32x8xf32>
    %286 = arith.addf %280, %285 : vector<32x8xf32>
    %287 = vector.extract_strided_slice %8 {offsets = [23, 0], sizes = [1, 8], strides = [1, 1]} : vector<32x8xf32> to vector<1x8xf32>
    %c23 = arith.constant 23 : index
    %c0_125 = arith.constant 0 : index
    %c0_126 = arith.constant 0 : index
    %288 = vector.load %arg6[%c23, %c0_125, %c0_126] : memref<32x32x8xf32, #tpu.memory_space<vmem>>, vector<1x32x8xf32>
    %289 = vector.shape_cast %288 : vector<1x32x8xf32> to vector<32x8xf32>
    %290 = vector.broadcast %287 : vector<1x8xf32> to vector<32x8xf32>
    %291 = arith.mulf %290, %289 : vector<32x8xf32>
    %292 = arith.addf %286, %291 : vector<32x8xf32>
    %293 = vector.extract_strided_slice %11 {offsets = [23, 0], sizes = [1, 8], strides = [1, 1]} : vector<32x8xf32> to vector<1x8xf32>
    %c23_127 = arith.constant 23 : index
    %c0_128 = arith.constant 0 : index
    %c0_129 = arith.constant 0 : index
    %294 = vector.load %arg7[%c23_127, %c0_128, %c0_129] : memref<32x32x8xf32, #tpu.memory_space<vmem>>, vector<1x32x8xf32>
    %295 = vector.shape_cast %294 : vector<1x32x8xf32> to vector<32x8xf32>
    %296 = vector.broadcast %293 : vector<1x8xf32> to vector<32x8xf32>
    %297 = arith.mulf %296, %295 : vector<32x8xf32>
    %298 = arith.addf %292, %297 : vector<32x8xf32>
    %299 = vector.extract_strided_slice %8 {offsets = [24, 0], sizes = [1, 8], strides = [1, 1]} : vector<32x8xf32> to vector<1x8xf32>
    %c24 = arith.constant 24 : index
    %c0_130 = arith.constant 0 : index
    %c0_131 = arith.constant 0 : index
    %300 = vector.load %arg6[%c24, %c0_130, %c0_131] : memref<32x32x8xf32, #tpu.memory_space<vmem>>, vector<1x32x8xf32>
    %301 = vector.shape_cast %300 : vector<1x32x8xf32> to vector<32x8xf32>
    %302 = vector.broadcast %299 : vector<1x8xf32> to vector<32x8xf32>
    %303 = arith.mulf %302, %301 : vector<32x8xf32>
    %304 = arith.addf %298, %303 : vector<32x8xf32>
    %305 = vector.extract_strided_slice %11 {offsets = [24, 0], sizes = [1, 8], strides = [1, 1]} : vector<32x8xf32> to vector<1x8xf32>
    %c24_132 = arith.constant 24 : index
    %c0_133 = arith.constant 0 : index
    %c0_134 = arith.constant 0 : index
    %306 = vector.load %arg7[%c24_132, %c0_133, %c0_134] : memref<32x32x8xf32, #tpu.memory_space<vmem>>, vector<1x32x8xf32>
    %307 = vector.shape_cast %306 : vector<1x32x8xf32> to vector<32x8xf32>
    %308 = vector.broadcast %305 : vector<1x8xf32> to vector<32x8xf32>
    %309 = arith.mulf %308, %307 : vector<32x8xf32>
    %310 = arith.addf %304, %309 : vector<32x8xf32>
    %311 = vector.extract_strided_slice %8 {offsets = [25, 0], sizes = [1, 8], strides = [1, 1]} : vector<32x8xf32> to vector<1x8xf32>
    %c25 = arith.constant 25 : index
    %c0_135 = arith.constant 0 : index
    %c0_136 = arith.constant 0 : index
    %312 = vector.load %arg6[%c25, %c0_135, %c0_136] : memref<32x32x8xf32, #tpu.memory_space<vmem>>, vector<1x32x8xf32>
    %313 = vector.shape_cast %312 : vector<1x32x8xf32> to vector<32x8xf32>
    %314 = vector.broadcast %311 : vector<1x8xf32> to vector<32x8xf32>
    %315 = arith.mulf %314, %313 : vector<32x8xf32>
    %316 = arith.addf %310, %315 : vector<32x8xf32>
    %317 = vector.extract_strided_slice %11 {offsets = [25, 0], sizes = [1, 8], strides = [1, 1]} : vector<32x8xf32> to vector<1x8xf32>
    %c25_137 = arith.constant 25 : index
    %c0_138 = arith.constant 0 : index
    %c0_139 = arith.constant 0 : index
    %318 = vector.load %arg7[%c25_137, %c0_138, %c0_139] : memref<32x32x8xf32, #tpu.memory_space<vmem>>, vector<1x32x8xf32>
    %319 = vector.shape_cast %318 : vector<1x32x8xf32> to vector<32x8xf32>
    %320 = vector.broadcast %317 : vector<1x8xf32> to vector<32x8xf32>
    %321 = arith.mulf %320, %319 : vector<32x8xf32>
    %322 = arith.addf %316, %321 : vector<32x8xf32>
    %323 = vector.extract_strided_slice %8 {offsets = [26, 0], sizes = [1, 8], strides = [1, 1]} : vector<32x8xf32> to vector<1x8xf32>
    %c26 = arith.constant 26 : index
    %c0_140 = arith.constant 0 : index
    %c0_141 = arith.constant 0 : index
    %324 = vector.load %arg6[%c26, %c0_140, %c0_141] : memref<32x32x8xf32, #tpu.memory_space<vmem>>, vector<1x32x8xf32>
    %325 = vector.shape_cast %324 : vector<1x32x8xf32> to vector<32x8xf32>
    %326 = vector.broadcast %323 : vector<1x8xf32> to vector<32x8xf32>
    %327 = arith.mulf %326, %325 : vector<32x8xf32>
    %328 = arith.addf %322, %327 : vector<32x8xf32>
    %329 = vector.extract_strided_slice %11 {offsets = [26, 0], sizes = [1, 8], strides = [1, 1]} : vector<32x8xf32> to vector<1x8xf32>
    %c26_142 = arith.constant 26 : index
    %c0_143 = arith.constant 0 : index
    %c0_144 = arith.constant 0 : index
    %330 = vector.load %arg7[%c26_142, %c0_143, %c0_144] : memref<32x32x8xf32, #tpu.memory_space<vmem>>, vector<1x32x8xf32>
    %331 = vector.shape_cast %330 : vector<1x32x8xf32> to vector<32x8xf32>
    %332 = vector.broadcast %329 : vector<1x8xf32> to vector<32x8xf32>
    %333 = arith.mulf %332, %331 : vector<32x8xf32>
    %334 = arith.addf %328, %333 : vector<32x8xf32>
    %335 = vector.extract_strided_slice %8 {offsets = [27, 0], sizes = [1, 8], strides = [1, 1]} : vector<32x8xf32> to vector<1x8xf32>
    %c27 = arith.constant 27 : index
    %c0_145 = arith.constant 0 : index
    %c0_146 = arith.constant 0 : index
    %336 = vector.load %arg6[%c27, %c0_145, %c0_146] : memref<32x32x8xf32, #tpu.memory_space<vmem>>, vector<1x32x8xf32>
    %337 = vector.shape_cast %336 : vector<1x32x8xf32> to vector<32x8xf32>
    %338 = vector.broadcast %335 : vector<1x8xf32> to vector<32x8xf32>
    %339 = arith.mulf %338, %337 : vector<32x8xf32>
    %340 = arith.addf %334, %339 : vector<32x8xf32>
    %341 = vector.extract_strided_slice %11 {offsets = [27, 0], sizes = [1, 8], strides = [1, 1]} : vector<32x8xf32> to vector<1x8xf32>
    %c27_147 = arith.constant 27 : index
    %c0_148 = arith.constant 0 : index
    %c0_149 = arith.constant 0 : index
    %342 = vector.load %arg7[%c27_147, %c0_148, %c0_149] : memref<32x32x8xf32, #tpu.memory_space<vmem>>, vector<1x32x8xf32>
    %343 = vector.shape_cast %342 : vector<1x32x8xf32> to vector<32x8xf32>
    %344 = vector.broadcast %341 : vector<1x8xf32> to vector<32x8xf32>
    %345 = arith.mulf %344, %343 : vector<32x8xf32>
    %346 = arith.addf %340, %345 : vector<32x8xf32>
    %347 = vector.extract_strided_slice %8 {offsets = [28, 0], sizes = [1, 8], strides = [1, 1]} : vector<32x8xf32> to vector<1x8xf32>
    %c28 = arith.constant 28 : index
    %c0_150 = arith.constant 0 : index
    %c0_151 = arith.constant 0 : index
    %348 = vector.load %arg6[%c28, %c0_150, %c0_151] : memref<32x32x8xf32, #tpu.memory_space<vmem>>, vector<1x32x8xf32>
    %349 = vector.shape_cast %348 : vector<1x32x8xf32> to vector<32x8xf32>
    %350 = vector.broadcast %347 : vector<1x8xf32> to vector<32x8xf32>
    %351 = arith.mulf %350, %349 : vector<32x8xf32>
    %352 = arith.addf %346, %351 : vector<32x8xf32>
    %353 = vector.extract_strided_slice %11 {offsets = [28, 0], sizes = [1, 8], strides = [1, 1]} : vector<32x8xf32> to vector<1x8xf32>
    %c28_152 = arith.constant 28 : index
    %c0_153 = arith.constant 0 : index
    %c0_154 = arith.constant 0 : index
    %354 = vector.load %arg7[%c28_152, %c0_153, %c0_154] : memref<32x32x8xf32, #tpu.memory_space<vmem>>, vector<1x32x8xf32>
    %355 = vector.shape_cast %354 : vector<1x32x8xf32> to vector<32x8xf32>
    %356 = vector.broadcast %353 : vector<1x8xf32> to vector<32x8xf32>
    %357 = arith.mulf %356, %355 : vector<32x8xf32>
    %358 = arith.addf %352, %357 : vector<32x8xf32>
    %359 = vector.extract_strided_slice %8 {offsets = [29, 0], sizes = [1, 8], strides = [1, 1]} : vector<32x8xf32> to vector<1x8xf32>
    %c29 = arith.constant 29 : index
    %c0_155 = arith.constant 0 : index
    %c0_156 = arith.constant 0 : index
    %360 = vector.load %arg6[%c29, %c0_155, %c0_156] : memref<32x32x8xf32, #tpu.memory_space<vmem>>, vector<1x32x8xf32>
    %361 = vector.shape_cast %360 : vector<1x32x8xf32> to vector<32x8xf32>
    %362 = vector.broadcast %359 : vector<1x8xf32> to vector<32x8xf32>
    %363 = arith.mulf %362, %361 : vector<32x8xf32>
    %364 = arith.addf %358, %363 : vector<32x8xf32>
    %365 = vector.extract_strided_slice %11 {offsets = [29, 0], sizes = [1, 8], strides = [1, 1]} : vector<32x8xf32> to vector<1x8xf32>
    %c29_157 = arith.constant 29 : index
    %c0_158 = arith.constant 0 : index
    %c0_159 = arith.constant 0 : index
    %366 = vector.load %arg7[%c29_157, %c0_158, %c0_159] : memref<32x32x8xf32, #tpu.memory_space<vmem>>, vector<1x32x8xf32>
    %367 = vector.shape_cast %366 : vector<1x32x8xf32> to vector<32x8xf32>
    %368 = vector.broadcast %365 : vector<1x8xf32> to vector<32x8xf32>
    %369 = arith.mulf %368, %367 : vector<32x8xf32>
    %370 = arith.addf %364, %369 : vector<32x8xf32>
    %371 = vector.extract_strided_slice %8 {offsets = [30, 0], sizes = [1, 8], strides = [1, 1]} : vector<32x8xf32> to vector<1x8xf32>
    %c30 = arith.constant 30 : index
    %c0_160 = arith.constant 0 : index
    %c0_161 = arith.constant 0 : index
    %372 = vector.load %arg6[%c30, %c0_160, %c0_161] : memref<32x32x8xf32, #tpu.memory_space<vmem>>, vector<1x32x8xf32>
    %373 = vector.shape_cast %372 : vector<1x32x8xf32> to vector<32x8xf32>
    %374 = vector.broadcast %371 : vector<1x8xf32> to vector<32x8xf32>
    %375 = arith.mulf %374, %373 : vector<32x8xf32>
    %376 = arith.addf %370, %375 : vector<32x8xf32>
    %377 = vector.extract_strided_slice %11 {offsets = [30, 0], sizes = [1, 8], strides = [1, 1]} : vector<32x8xf32> to vector<1x8xf32>
    %c30_162 = arith.constant 30 : index
    %c0_163 = arith.constant 0 : index
    %c0_164 = arith.constant 0 : index
    %378 = vector.load %arg7[%c30_162, %c0_163, %c0_164] : memref<32x32x8xf32, #tpu.memory_space<vmem>>, vector<1x32x8xf32>
    %379 = vector.shape_cast %378 : vector<1x32x8xf32> to vector<32x8xf32>
    %380 = vector.broadcast %377 : vector<1x8xf32> to vector<32x8xf32>
    %381 = arith.mulf %380, %379 : vector<32x8xf32>
    %382 = arith.addf %376, %381 : vector<32x8xf32>
    %383 = vector.extract_strided_slice %8 {offsets = [31, 0], sizes = [1, 8], strides = [1, 1]} : vector<32x8xf32> to vector<1x8xf32>
    %c31 = arith.constant 31 : index
    %c0_165 = arith.constant 0 : index
    %c0_166 = arith.constant 0 : index
    %384 = vector.load %arg6[%c31, %c0_165, %c0_166] : memref<32x32x8xf32, #tpu.memory_space<vmem>>, vector<1x32x8xf32>
    %385 = vector.shape_cast %384 : vector<1x32x8xf32> to vector<32x8xf32>
    %386 = vector.broadcast %383 : vector<1x8xf32> to vector<32x8xf32>
    %387 = arith.mulf %386, %385 : vector<32x8xf32>
    %388 = arith.addf %382, %387 : vector<32x8xf32>
    %389 = vector.extract_strided_slice %11 {offsets = [31, 0], sizes = [1, 8], strides = [1, 1]} : vector<32x8xf32> to vector<1x8xf32>
    %c31_167 = arith.constant 31 : index
    %c0_168 = arith.constant 0 : index
    %c0_169 = arith.constant 0 : index
    %390 = vector.load %arg7[%c31_167, %c0_168, %c0_169] : memref<32x32x8xf32, #tpu.memory_space<vmem>>, vector<1x32x8xf32>
    %391 = vector.shape_cast %390 : vector<1x32x8xf32> to vector<32x8xf32>
    %392 = vector.broadcast %389 : vector<1x8xf32> to vector<32x8xf32>
    %393 = arith.mulf %392, %391 : vector<32x8xf32>
    %394 = arith.addf %388, %393 : vector<32x8xf32>
    %c0_170 = arith.constant 0 : index
    %c0_171 = arith.constant 0 : index
    %395 = vector.load %arg5[%c0_170, %c0_171] : memref<8x16xf32, #tpu.memory_space<vmem>>, vector<8x16xf32>
    %cst_172 = arith.constant dense<0.000000e+00> : vector<32x16xf32>
    %396 = tpu.matmul %394, %395, %cst_172 {dimension_numbers = #tpu.dot_dimension_numbers<[1], [0], [0], [1], [0, 0, 1, 1], [], []>} : vector<32x8xf32>, vector<8x16xf32>, vector<32x16xf32> -> vector<32x16xf32>
    %c0_173 = arith.constant 0 : index
    %c0_174 = arith.constant 0 : index
    %397 = vector.load %arg8[%c0_173, %c0_174] : memref<32x32xf32, #tpu.memory_space<vmem>>, vector<32x32xf32>
    %cst_175 = arith.constant dense<0.000000e+00> : vector<32x16xf32>
    %398 = tpu.matmul %397, %6, %cst_175 {dimension_numbers = #tpu.dot_dimension_numbers<[1], [0], [0], [1], [0, 0, 1, 1], [], []>} : vector<32x32xf32>, vector<32x16xf32>, vector<32x16xf32> -> vector<32x16xf32>
    %c0_176 = arith.constant 0 : index
    %c0_177 = arith.constant 0 : index
    %399 = vector.load %arg9[%c0_176, %c0_177] : memref<32x1xf32, #tpu.memory_space<vmem>>, vector<32x1xf32>
    %400 = vector.broadcast %399 : vector<32x1xf32> to vector<32x16xf32>
    %401 = arith.addf %398, %400 : vector<32x16xf32>
    %402 = arith.addf %396, %401 : vector<32x16xf32>
    %cst_178 = arith.constant 5.000000e-01 : f32
    %403 = vector.broadcast %cst_178 : f32 to vector<32x16xf32>
    %404 = arith.mulf %403, %402 : vector<32x16xf32>
    %cst_179 = arith.constant 4.471500e-02 : f32
    %405 = vector.broadcast %cst_179 : f32 to vector<32x16xf32>
    %406 = arith.mulf %405, %402 : vector<32x16xf32>
    %407 = arith.mulf %406, %402 : vector<32x16xf32>
    %408 = arith.mulf %407, %402 : vector<32x16xf32>
    %409 = arith.addf %402, %408 : vector<32x16xf32>
    %cst_180 = arith.constant 0.797884583 : f32
    %410 = vector.broadcast %cst_180 : f32 to vector<32x16xf32>
    %411 = arith.mulf %410, %409 : vector<32x16xf32>
    %412 = math.tanh %411 : vector<32x16xf32>
    %cst_181 = arith.constant 1.000000e+00 : f32
    %413 = vector.broadcast %cst_181 : f32 to vector<32x16xf32>
    %414 = arith.addf %413, %412 : vector<32x16xf32>
    %415 = arith.mulf %404, %414 : vector<32x16xf32>
    %c0_182 = arith.constant 0 : index
    %c0_183 = arith.constant 0 : index
    %416 = vector.load %arg4[%c0_182, %c0_183] : memref<16x8xf32, #tpu.memory_space<vmem>>, vector<16x8xf32>
    %cst_184 = arith.constant dense<0.000000e+00> : vector<32x8xf32>
    %417 = tpu.matmul %415, %416, %cst_184 {dimension_numbers = #tpu.dot_dimension_numbers<[1], [0], [0], [1], [0, 0, 1, 1], [], []>} : vector<32x16xf32>, vector<16x8xf32>, vector<32x8xf32> -> vector<32x8xf32>
    %418 = vector.extract_strided_slice %417 {offsets = [0, 4], sizes = [32, 4], strides = [1, 1]} : vector<32x8xf32> to vector<32x4xf32>
    %419 = vector.extract_strided_slice %417 {offsets = [0, 0], sizes = [32, 4], strides = [1, 1]} : vector<32x8xf32> to vector<32x4xf32>
    %420 = tpu.concatenate %418, %419 in 1 : vector<32x4xf32>, vector<32x4xf32> -> vector<32x8xf32>
    %421 = vector.extract_strided_slice %417 {offsets = [0, 0], sizes = [1, 8], strides = [1, 1]} : vector<32x8xf32> to vector<1x8xf32>
    %c0_185 = arith.constant 0 : index
    %c0_186 = arith.constant 0 : index
    %c0_187 = arith.constant 0 : index
    %422 = vector.load %arg10[%c0_185, %c0_186, %c0_187] : memref<32x32x8xf32, #tpu.memory_space<vmem>>, vector<1x32x8xf32>
    %423 = vector.shape_cast %422 : vector<1x32x8xf32> to vector<32x8xf32>
    %424 = vector.broadcast %421 : vector<1x8xf32> to vector<32x8xf32>
    %425 = arith.mulf %424, %423 : vector<32x8xf32>
    %426 = vector.extract_strided_slice %420 {offsets = [0, 0], sizes = [1, 8], strides = [1, 1]} : vector<32x8xf32> to vector<1x8xf32>
    %c0_188 = arith.constant 0 : index
    %c0_189 = arith.constant 0 : index
    %c0_190 = arith.constant 0 : index
    %427 = vector.load %arg11[%c0_188, %c0_189, %c0_190] : memref<32x32x8xf32, #tpu.memory_space<vmem>>, vector<1x32x8xf32>
    %428 = vector.shape_cast %427 : vector<1x32x8xf32> to vector<32x8xf32>
    %429 = vector.broadcast %426 : vector<1x8xf32> to vector<32x8xf32>
    %430 = arith.mulf %429, %428 : vector<32x8xf32>
    %431 = arith.addf %425, %430 : vector<32x8xf32>
    %432 = vector.extract_strided_slice %417 {offsets = [1, 0], sizes = [1, 8], strides = [1, 1]} : vector<32x8xf32> to vector<1x8xf32>
    %c1_191 = arith.constant 1 : index
    %c0_192 = arith.constant 0 : index
    %c0_193 = arith.constant 0 : index
    %433 = vector.load %arg10[%c1_191, %c0_192, %c0_193] : memref<32x32x8xf32, #tpu.memory_space<vmem>>, vector<1x32x8xf32>
    %434 = vector.shape_cast %433 : vector<1x32x8xf32> to vector<32x8xf32>
    %435 = vector.broadcast %432 : vector<1x8xf32> to vector<32x8xf32>
    %436 = arith.mulf %435, %434 : vector<32x8xf32>
    %437 = arith.addf %431, %436 : vector<32x8xf32>
    %438 = vector.extract_strided_slice %420 {offsets = [1, 0], sizes = [1, 8], strides = [1, 1]} : vector<32x8xf32> to vector<1x8xf32>
    %c1_194 = arith.constant 1 : index
    %c0_195 = arith.constant 0 : index
    %c0_196 = arith.constant 0 : index
    %439 = vector.load %arg11[%c1_194, %c0_195, %c0_196] : memref<32x32x8xf32, #tpu.memory_space<vmem>>, vector<1x32x8xf32>
    %440 = vector.shape_cast %439 : vector<1x32x8xf32> to vector<32x8xf32>
    %441 = vector.broadcast %438 : vector<1x8xf32> to vector<32x8xf32>
    %442 = arith.mulf %441, %440 : vector<32x8xf32>
    %443 = arith.addf %437, %442 : vector<32x8xf32>
    %444 = vector.extract_strided_slice %417 {offsets = [2, 0], sizes = [1, 8], strides = [1, 1]} : vector<32x8xf32> to vector<1x8xf32>
    %c2_197 = arith.constant 2 : index
    %c0_198 = arith.constant 0 : index
    %c0_199 = arith.constant 0 : index
    %445 = vector.load %arg10[%c2_197, %c0_198, %c0_199] : memref<32x32x8xf32, #tpu.memory_space<vmem>>, vector<1x32x8xf32>
    %446 = vector.shape_cast %445 : vector<1x32x8xf32> to vector<32x8xf32>
    %447 = vector.broadcast %444 : vector<1x8xf32> to vector<32x8xf32>
    %448 = arith.mulf %447, %446 : vector<32x8xf32>
    %449 = arith.addf %443, %448 : vector<32x8xf32>
    %450 = vector.extract_strided_slice %420 {offsets = [2, 0], sizes = [1, 8], strides = [1, 1]} : vector<32x8xf32> to vector<1x8xf32>
    %c2_200 = arith.constant 2 : index
    %c0_201 = arith.constant 0 : index
    %c0_202 = arith.constant 0 : index
    %451 = vector.load %arg11[%c2_200, %c0_201, %c0_202] : memref<32x32x8xf32, #tpu.memory_space<vmem>>, vector<1x32x8xf32>
    %452 = vector.shape_cast %451 : vector<1x32x8xf32> to vector<32x8xf32>
    %453 = vector.broadcast %450 : vector<1x8xf32> to vector<32x8xf32>
    %454 = arith.mulf %453, %452 : vector<32x8xf32>
    %455 = arith.addf %449, %454 : vector<32x8xf32>
    %456 = vector.extract_strided_slice %417 {offsets = [3, 0], sizes = [1, 8], strides = [1, 1]} : vector<32x8xf32> to vector<1x8xf32>
    %c3_203 = arith.constant 3 : index
    %c0_204 = arith.constant 0 : index
    %c0_205 = arith.constant 0 : index
    %457 = vector.load %arg10[%c3_203, %c0_204, %c0_205] : memref<32x32x8xf32, #tpu.memory_space<vmem>>, vector<1x32x8xf32>
    %458 = vector.shape_cast %457 : vector<1x32x8xf32> to vector<32x8xf32>
    %459 = vector.broadcast %456 : vector<1x8xf32> to vector<32x8xf32>
    %460 = arith.mulf %459, %458 : vector<32x8xf32>
    %461 = arith.addf %455, %460 : vector<32x8xf32>
    %462 = vector.extract_strided_slice %420 {offsets = [3, 0], sizes = [1, 8], strides = [1, 1]} : vector<32x8xf32> to vector<1x8xf32>
    %c3_206 = arith.constant 3 : index
    %c0_207 = arith.constant 0 : index
    %c0_208 = arith.constant 0 : index
    %463 = vector.load %arg11[%c3_206, %c0_207, %c0_208] : memref<32x32x8xf32, #tpu.memory_space<vmem>>, vector<1x32x8xf32>
    %464 = vector.shape_cast %463 : vector<1x32x8xf32> to vector<32x8xf32>
    %465 = vector.broadcast %462 : vector<1x8xf32> to vector<32x8xf32>
    %466 = arith.mulf %465, %464 : vector<32x8xf32>
    %467 = arith.addf %461, %466 : vector<32x8xf32>
    %468 = vector.extract_strided_slice %417 {offsets = [4, 0], sizes = [1, 8], strides = [1, 1]} : vector<32x8xf32> to vector<1x8xf32>
    %c4_209 = arith.constant 4 : index
    %c0_210 = arith.constant 0 : index
    %c0_211 = arith.constant 0 : index
    %469 = vector.load %arg10[%c4_209, %c0_210, %c0_211] : memref<32x32x8xf32, #tpu.memory_space<vmem>>, vector<1x32x8xf32>
    %470 = vector.shape_cast %469 : vector<1x32x8xf32> to vector<32x8xf32>
    %471 = vector.broadcast %468 : vector<1x8xf32> to vector<32x8xf32>
    %472 = arith.mulf %471, %470 : vector<32x8xf32>
    %473 = arith.addf %467, %472 : vector<32x8xf32>
    %474 = vector.extract_strided_slice %420 {offsets = [4, 0], sizes = [1, 8], strides = [1, 1]} : vector<32x8xf32> to vector<1x8xf32>
    %c4_212 = arith.constant 4 : index
    %c0_213 = arith.constant 0 : index
    %c0_214 = arith.constant 0 : index
    %475 = vector.load %arg11[%c4_212, %c0_213, %c0_214] : memref<32x32x8xf32, #tpu.memory_space<vmem>>, vector<1x32x8xf32>
    %476 = vector.shape_cast %475 : vector<1x32x8xf32> to vector<32x8xf32>
    %477 = vector.broadcast %474 : vector<1x8xf32> to vector<32x8xf32>
    %478 = arith.mulf %477, %476 : vector<32x8xf32>
    %479 = arith.addf %473, %478 : vector<32x8xf32>
    %480 = vector.extract_strided_slice %417 {offsets = [5, 0], sizes = [1, 8], strides = [1, 1]} : vector<32x8xf32> to vector<1x8xf32>
    %c5_215 = arith.constant 5 : index
    %c0_216 = arith.constant 0 : index
    %c0_217 = arith.constant 0 : index
    %481 = vector.load %arg10[%c5_215, %c0_216, %c0_217] : memref<32x32x8xf32, #tpu.memory_space<vmem>>, vector<1x32x8xf32>
    %482 = vector.shape_cast %481 : vector<1x32x8xf32> to vector<32x8xf32>
    %483 = vector.broadcast %480 : vector<1x8xf32> to vector<32x8xf32>
    %484 = arith.mulf %483, %482 : vector<32x8xf32>
    %485 = arith.addf %479, %484 : vector<32x8xf32>
    %486 = vector.extract_strided_slice %420 {offsets = [5, 0], sizes = [1, 8], strides = [1, 1]} : vector<32x8xf32> to vector<1x8xf32>
    %c5_218 = arith.constant 5 : index
    %c0_219 = arith.constant 0 : index
    %c0_220 = arith.constant 0 : index
    %487 = vector.load %arg11[%c5_218, %c0_219, %c0_220] : memref<32x32x8xf32, #tpu.memory_space<vmem>>, vector<1x32x8xf32>
    %488 = vector.shape_cast %487 : vector<1x32x8xf32> to vector<32x8xf32>
    %489 = vector.broadcast %486 : vector<1x8xf32> to vector<32x8xf32>
    %490 = arith.mulf %489, %488 : vector<32x8xf32>
    %491 = arith.addf %485, %490 : vector<32x8xf32>
    %492 = vector.extract_strided_slice %417 {offsets = [6, 0], sizes = [1, 8], strides = [1, 1]} : vector<32x8xf32> to vector<1x8xf32>
    %c6_221 = arith.constant 6 : index
    %c0_222 = arith.constant 0 : index
    %c0_223 = arith.constant 0 : index
    %493 = vector.load %arg10[%c6_221, %c0_222, %c0_223] : memref<32x32x8xf32, #tpu.memory_space<vmem>>, vector<1x32x8xf32>
    %494 = vector.shape_cast %493 : vector<1x32x8xf32> to vector<32x8xf32>
    %495 = vector.broadcast %492 : vector<1x8xf32> to vector<32x8xf32>
    %496 = arith.mulf %495, %494 : vector<32x8xf32>
    %497 = arith.addf %491, %496 : vector<32x8xf32>
    %498 = vector.extract_strided_slice %420 {offsets = [6, 0], sizes = [1, 8], strides = [1, 1]} : vector<32x8xf32> to vector<1x8xf32>
    %c6_224 = arith.constant 6 : index
    %c0_225 = arith.constant 0 : index
    %c0_226 = arith.constant 0 : index
    %499 = vector.load %arg11[%c6_224, %c0_225, %c0_226] : memref<32x32x8xf32, #tpu.memory_space<vmem>>, vector<1x32x8xf32>
    %500 = vector.shape_cast %499 : vector<1x32x8xf32> to vector<32x8xf32>
    %501 = vector.broadcast %498 : vector<1x8xf32> to vector<32x8xf32>
    %502 = arith.mulf %501, %500 : vector<32x8xf32>
    %503 = arith.addf %497, %502 : vector<32x8xf32>
    %504 = vector.extract_strided_slice %417 {offsets = [7, 0], sizes = [1, 8], strides = [1, 1]} : vector<32x8xf32> to vector<1x8xf32>
    %c7_227 = arith.constant 7 : index
    %c0_228 = arith.constant 0 : index
    %c0_229 = arith.constant 0 : index
    %505 = vector.load %arg10[%c7_227, %c0_228, %c0_229] : memref<32x32x8xf32, #tpu.memory_space<vmem>>, vector<1x32x8xf32>
    %506 = vector.shape_cast %505 : vector<1x32x8xf32> to vector<32x8xf32>
    %507 = vector.broadcast %504 : vector<1x8xf32> to vector<32x8xf32>
    %508 = arith.mulf %507, %506 : vector<32x8xf32>
    %509 = arith.addf %503, %508 : vector<32x8xf32>
    %510 = vector.extract_strided_slice %420 {offsets = [7, 0], sizes = [1, 8], strides = [1, 1]} : vector<32x8xf32> to vector<1x8xf32>
    %c7_230 = arith.constant 7 : index
    %c0_231 = arith.constant 0 : index
    %c0_232 = arith.constant 0 : index
    %511 = vector.load %arg11[%c7_230, %c0_231, %c0_232] : memref<32x32x8xf32, #tpu.memory_space<vmem>>, vector<1x32x8xf32>
    %512 = vector.shape_cast %511 : vector<1x32x8xf32> to vector<32x8xf32>
    %513 = vector.broadcast %510 : vector<1x8xf32> to vector<32x8xf32>
    %514 = arith.mulf %513, %512 : vector<32x8xf32>
    %515 = arith.addf %509, %514 : vector<32x8xf32>
    %516 = vector.extract_strided_slice %417 {offsets = [8, 0], sizes = [1, 8], strides = [1, 1]} : vector<32x8xf32> to vector<1x8xf32>
    %c8_233 = arith.constant 8 : index
    %c0_234 = arith.constant 0 : index
    %c0_235 = arith.constant 0 : index
    %517 = vector.load %arg10[%c8_233, %c0_234, %c0_235] : memref<32x32x8xf32, #tpu.memory_space<vmem>>, vector<1x32x8xf32>
    %518 = vector.shape_cast %517 : vector<1x32x8xf32> to vector<32x8xf32>
    %519 = vector.broadcast %516 : vector<1x8xf32> to vector<32x8xf32>
    %520 = arith.mulf %519, %518 : vector<32x8xf32>
    %521 = arith.addf %515, %520 : vector<32x8xf32>
    %522 = vector.extract_strided_slice %420 {offsets = [8, 0], sizes = [1, 8], strides = [1, 1]} : vector<32x8xf32> to vector<1x8xf32>
    %c8_236 = arith.constant 8 : index
    %c0_237 = arith.constant 0 : index
    %c0_238 = arith.constant 0 : index
    %523 = vector.load %arg11[%c8_236, %c0_237, %c0_238] : memref<32x32x8xf32, #tpu.memory_space<vmem>>, vector<1x32x8xf32>
    %524 = vector.shape_cast %523 : vector<1x32x8xf32> to vector<32x8xf32>
    %525 = vector.broadcast %522 : vector<1x8xf32> to vector<32x8xf32>
    %526 = arith.mulf %525, %524 : vector<32x8xf32>
    %527 = arith.addf %521, %526 : vector<32x8xf32>
    %528 = vector.extract_strided_slice %417 {offsets = [9, 0], sizes = [1, 8], strides = [1, 1]} : vector<32x8xf32> to vector<1x8xf32>
    %c9_239 = arith.constant 9 : index
    %c0_240 = arith.constant 0 : index
    %c0_241 = arith.constant 0 : index
    %529 = vector.load %arg10[%c9_239, %c0_240, %c0_241] : memref<32x32x8xf32, #tpu.memory_space<vmem>>, vector<1x32x8xf32>
    %530 = vector.shape_cast %529 : vector<1x32x8xf32> to vector<32x8xf32>
    %531 = vector.broadcast %528 : vector<1x8xf32> to vector<32x8xf32>
    %532 = arith.mulf %531, %530 : vector<32x8xf32>
    %533 = arith.addf %527, %532 : vector<32x8xf32>
    %534 = vector.extract_strided_slice %420 {offsets = [9, 0], sizes = [1, 8], strides = [1, 1]} : vector<32x8xf32> to vector<1x8xf32>
    %c9_242 = arith.constant 9 : index
    %c0_243 = arith.constant 0 : index
    %c0_244 = arith.constant 0 : index
    %535 = vector.load %arg11[%c9_242, %c0_243, %c0_244] : memref<32x32x8xf32, #tpu.memory_space<vmem>>, vector<1x32x8xf32>
    %536 = vector.shape_cast %535 : vector<1x32x8xf32> to vector<32x8xf32>
    %537 = vector.broadcast %534 : vector<1x8xf32> to vector<32x8xf32>
    %538 = arith.mulf %537, %536 : vector<32x8xf32>
    %539 = arith.addf %533, %538 : vector<32x8xf32>
    %540 = vector.extract_strided_slice %417 {offsets = [10, 0], sizes = [1, 8], strides = [1, 1]} : vector<32x8xf32> to vector<1x8xf32>
    %c10_245 = arith.constant 10 : index
    %c0_246 = arith.constant 0 : index
    %c0_247 = arith.constant 0 : index
    %541 = vector.load %arg10[%c10_245, %c0_246, %c0_247] : memref<32x32x8xf32, #tpu.memory_space<vmem>>, vector<1x32x8xf32>
    %542 = vector.shape_cast %541 : vector<1x32x8xf32> to vector<32x8xf32>
    %543 = vector.broadcast %540 : vector<1x8xf32> to vector<32x8xf32>
    %544 = arith.mulf %543, %542 : vector<32x8xf32>
    %545 = arith.addf %539, %544 : vector<32x8xf32>
    %546 = vector.extract_strided_slice %420 {offsets = [10, 0], sizes = [1, 8], strides = [1, 1]} : vector<32x8xf32> to vector<1x8xf32>
    %c10_248 = arith.constant 10 : index
    %c0_249 = arith.constant 0 : index
    %c0_250 = arith.constant 0 : index
    %547 = vector.load %arg11[%c10_248, %c0_249, %c0_250] : memref<32x32x8xf32, #tpu.memory_space<vmem>>, vector<1x32x8xf32>
    %548 = vector.shape_cast %547 : vector<1x32x8xf32> to vector<32x8xf32>
    %549 = vector.broadcast %546 : vector<1x8xf32> to vector<32x8xf32>
    %550 = arith.mulf %549, %548 : vector<32x8xf32>
    %551 = arith.addf %545, %550 : vector<32x8xf32>
    %552 = vector.extract_strided_slice %417 {offsets = [11, 0], sizes = [1, 8], strides = [1, 1]} : vector<32x8xf32> to vector<1x8xf32>
    %c11_251 = arith.constant 11 : index
    %c0_252 = arith.constant 0 : index
    %c0_253 = arith.constant 0 : index
    %553 = vector.load %arg10[%c11_251, %c0_252, %c0_253] : memref<32x32x8xf32, #tpu.memory_space<vmem>>, vector<1x32x8xf32>
    %554 = vector.shape_cast %553 : vector<1x32x8xf32> to vector<32x8xf32>
    %555 = vector.broadcast %552 : vector<1x8xf32> to vector<32x8xf32>
    %556 = arith.mulf %555, %554 : vector<32x8xf32>
    %557 = arith.addf %551, %556 : vector<32x8xf32>
    %558 = vector.extract_strided_slice %420 {offsets = [11, 0], sizes = [1, 8], strides = [1, 1]} : vector<32x8xf32> to vector<1x8xf32>
    %c11_254 = arith.constant 11 : index
    %c0_255 = arith.constant 0 : index
    %c0_256 = arith.constant 0 : index
    %559 = vector.load %arg11[%c11_254, %c0_255, %c0_256] : memref<32x32x8xf32, #tpu.memory_space<vmem>>, vector<1x32x8xf32>
    %560 = vector.shape_cast %559 : vector<1x32x8xf32> to vector<32x8xf32>
    %561 = vector.broadcast %558 : vector<1x8xf32> to vector<32x8xf32>
    %562 = arith.mulf %561, %560 : vector<32x8xf32>
    %563 = arith.addf %557, %562 : vector<32x8xf32>
    %564 = vector.extract_strided_slice %417 {offsets = [12, 0], sizes = [1, 8], strides = [1, 1]} : vector<32x8xf32> to vector<1x8xf32>
    %c12_257 = arith.constant 12 : index
    %c0_258 = arith.constant 0 : index
    %c0_259 = arith.constant 0 : index
    %565 = vector.load %arg10[%c12_257, %c0_258, %c0_259] : memref<32x32x8xf32, #tpu.memory_space<vmem>>, vector<1x32x8xf32>
    %566 = vector.shape_cast %565 : vector<1x32x8xf32> to vector<32x8xf32>
    %567 = vector.broadcast %564 : vector<1x8xf32> to vector<32x8xf32>
    %568 = arith.mulf %567, %566 : vector<32x8xf32>
    %569 = arith.addf %563, %568 : vector<32x8xf32>
    %570 = vector.extract_strided_slice %420 {offsets = [12, 0], sizes = [1, 8], strides = [1, 1]} : vector<32x8xf32> to vector<1x8xf32>
    %c12_260 = arith.constant 12 : index
    %c0_261 = arith.constant 0 : index
    %c0_262 = arith.constant 0 : index
    %571 = vector.load %arg11[%c12_260, %c0_261, %c0_262] : memref<32x32x8xf32, #tpu.memory_space<vmem>>, vector<1x32x8xf32>
    %572 = vector.shape_cast %571 : vector<1x32x8xf32> to vector<32x8xf32>
    %573 = vector.broadcast %570 : vector<1x8xf32> to vector<32x8xf32>
    %574 = arith.mulf %573, %572 : vector<32x8xf32>
    %575 = arith.addf %569, %574 : vector<32x8xf32>
    %576 = vector.extract_strided_slice %417 {offsets = [13, 0], sizes = [1, 8], strides = [1, 1]} : vector<32x8xf32> to vector<1x8xf32>
    %c13_263 = arith.constant 13 : index
    %c0_264 = arith.constant 0 : index
    %c0_265 = arith.constant 0 : index
    %577 = vector.load %arg10[%c13_263, %c0_264, %c0_265] : memref<32x32x8xf32, #tpu.memory_space<vmem>>, vector<1x32x8xf32>
    %578 = vector.shape_cast %577 : vector<1x32x8xf32> to vector<32x8xf32>
    %579 = vector.broadcast %576 : vector<1x8xf32> to vector<32x8xf32>
    %580 = arith.mulf %579, %578 : vector<32x8xf32>
    %581 = arith.addf %575, %580 : vector<32x8xf32>
    %582 = vector.extract_strided_slice %420 {offsets = [13, 0], sizes = [1, 8], strides = [1, 1]} : vector<32x8xf32> to vector<1x8xf32>
    %c13_266 = arith.constant 13 : index
    %c0_267 = arith.constant 0 : index
    %c0_268 = arith.constant 0 : index
    %583 = vector.load %arg11[%c13_266, %c0_267, %c0_268] : memref<32x32x8xf32, #tpu.memory_space<vmem>>, vector<1x32x8xf32>
    %584 = vector.shape_cast %583 : vector<1x32x8xf32> to vector<32x8xf32>
    %585 = vector.broadcast %582 : vector<1x8xf32> to vector<32x8xf32>
    %586 = arith.mulf %585, %584 : vector<32x8xf32>
    %587 = arith.addf %581, %586 : vector<32x8xf32>
    %588 = vector.extract_strided_slice %417 {offsets = [14, 0], sizes = [1, 8], strides = [1, 1]} : vector<32x8xf32> to vector<1x8xf32>
    %c14_269 = arith.constant 14 : index
    %c0_270 = arith.constant 0 : index
    %c0_271 = arith.constant 0 : index
    %589 = vector.load %arg10[%c14_269, %c0_270, %c0_271] : memref<32x32x8xf32, #tpu.memory_space<vmem>>, vector<1x32x8xf32>
    %590 = vector.shape_cast %589 : vector<1x32x8xf32> to vector<32x8xf32>
    %591 = vector.broadcast %588 : vector<1x8xf32> to vector<32x8xf32>
    %592 = arith.mulf %591, %590 : vector<32x8xf32>
    %593 = arith.addf %587, %592 : vector<32x8xf32>
    %594 = vector.extract_strided_slice %420 {offsets = [14, 0], sizes = [1, 8], strides = [1, 1]} : vector<32x8xf32> to vector<1x8xf32>
    %c14_272 = arith.constant 14 : index
    %c0_273 = arith.constant 0 : index
    %c0_274 = arith.constant 0 : index
    %595 = vector.load %arg11[%c14_272, %c0_273, %c0_274] : memref<32x32x8xf32, #tpu.memory_space<vmem>>, vector<1x32x8xf32>
    %596 = vector.shape_cast %595 : vector<1x32x8xf32> to vector<32x8xf32>
    %597 = vector.broadcast %594 : vector<1x8xf32> to vector<32x8xf32>
    %598 = arith.mulf %597, %596 : vector<32x8xf32>
    %599 = arith.addf %593, %598 : vector<32x8xf32>
    %600 = vector.extract_strided_slice %417 {offsets = [15, 0], sizes = [1, 8], strides = [1, 1]} : vector<32x8xf32> to vector<1x8xf32>
    %c15_275 = arith.constant 15 : index
    %c0_276 = arith.constant 0 : index
    %c0_277 = arith.constant 0 : index
    %601 = vector.load %arg10[%c15_275, %c0_276, %c0_277] : memref<32x32x8xf32, #tpu.memory_space<vmem>>, vector<1x32x8xf32>
    %602 = vector.shape_cast %601 : vector<1x32x8xf32> to vector<32x8xf32>
    %603 = vector.broadcast %600 : vector<1x8xf32> to vector<32x8xf32>
    %604 = arith.mulf %603, %602 : vector<32x8xf32>
    %605 = arith.addf %599, %604 : vector<32x8xf32>
    %606 = vector.extract_strided_slice %420 {offsets = [15, 0], sizes = [1, 8], strides = [1, 1]} : vector<32x8xf32> to vector<1x8xf32>
    %c15_278 = arith.constant 15 : index
    %c0_279 = arith.constant 0 : index
    %c0_280 = arith.constant 0 : index
    %607 = vector.load %arg11[%c15_278, %c0_279, %c0_280] : memref<32x32x8xf32, #tpu.memory_space<vmem>>, vector<1x32x8xf32>
    %608 = vector.shape_cast %607 : vector<1x32x8xf32> to vector<32x8xf32>
    %609 = vector.broadcast %606 : vector<1x8xf32> to vector<32x8xf32>
    %610 = arith.mulf %609, %608 : vector<32x8xf32>
    %611 = arith.addf %605, %610 : vector<32x8xf32>
    %612 = vector.extract_strided_slice %417 {offsets = [16, 0], sizes = [1, 8], strides = [1, 1]} : vector<32x8xf32> to vector<1x8xf32>
    %c16_281 = arith.constant 16 : index
    %c0_282 = arith.constant 0 : index
    %c0_283 = arith.constant 0 : index
    %613 = vector.load %arg10[%c16_281, %c0_282, %c0_283] : memref<32x32x8xf32, #tpu.memory_space<vmem>>, vector<1x32x8xf32>
    %614 = vector.shape_cast %613 : vector<1x32x8xf32> to vector<32x8xf32>
    %615 = vector.broadcast %612 : vector<1x8xf32> to vector<32x8xf32>
    %616 = arith.mulf %615, %614 : vector<32x8xf32>
    %617 = arith.addf %611, %616 : vector<32x8xf32>
    %618 = vector.extract_strided_slice %420 {offsets = [16, 0], sizes = [1, 8], strides = [1, 1]} : vector<32x8xf32> to vector<1x8xf32>
    %c16_284 = arith.constant 16 : index
    %c0_285 = arith.constant 0 : index
    %c0_286 = arith.constant 0 : index
    %619 = vector.load %arg11[%c16_284, %c0_285, %c0_286] : memref<32x32x8xf32, #tpu.memory_space<vmem>>, vector<1x32x8xf32>
    %620 = vector.shape_cast %619 : vector<1x32x8xf32> to vector<32x8xf32>
    %621 = vector.broadcast %618 : vector<1x8xf32> to vector<32x8xf32>
    %622 = arith.mulf %621, %620 : vector<32x8xf32>
    %623 = arith.addf %617, %622 : vector<32x8xf32>
    %624 = vector.extract_strided_slice %417 {offsets = [17, 0], sizes = [1, 8], strides = [1, 1]} : vector<32x8xf32> to vector<1x8xf32>
    %c17_287 = arith.constant 17 : index
    %c0_288 = arith.constant 0 : index
    %c0_289 = arith.constant 0 : index
    %625 = vector.load %arg10[%c17_287, %c0_288, %c0_289] : memref<32x32x8xf32, #tpu.memory_space<vmem>>, vector<1x32x8xf32>
    %626 = vector.shape_cast %625 : vector<1x32x8xf32> to vector<32x8xf32>
    %627 = vector.broadcast %624 : vector<1x8xf32> to vector<32x8xf32>
    %628 = arith.mulf %627, %626 : vector<32x8xf32>
    %629 = arith.addf %623, %628 : vector<32x8xf32>
    %630 = vector.extract_strided_slice %420 {offsets = [17, 0], sizes = [1, 8], strides = [1, 1]} : vector<32x8xf32> to vector<1x8xf32>
    %c17_290 = arith.constant 17 : index
    %c0_291 = arith.constant 0 : index
    %c0_292 = arith.constant 0 : index
    %631 = vector.load %arg11[%c17_290, %c0_291, %c0_292] : memref<32x32x8xf32, #tpu.memory_space<vmem>>, vector<1x32x8xf32>
    %632 = vector.shape_cast %631 : vector<1x32x8xf32> to vector<32x8xf32>
    %633 = vector.broadcast %630 : vector<1x8xf32> to vector<32x8xf32>
    %634 = arith.mulf %633, %632 : vector<32x8xf32>
    %635 = arith.addf %629, %634 : vector<32x8xf32>
    %636 = vector.extract_strided_slice %417 {offsets = [18, 0], sizes = [1, 8], strides = [1, 1]} : vector<32x8xf32> to vector<1x8xf32>
    %c18_293 = arith.constant 18 : index
    %c0_294 = arith.constant 0 : index
    %c0_295 = arith.constant 0 : index
    %637 = vector.load %arg10[%c18_293, %c0_294, %c0_295] : memref<32x32x8xf32, #tpu.memory_space<vmem>>, vector<1x32x8xf32>
    %638 = vector.shape_cast %637 : vector<1x32x8xf32> to vector<32x8xf32>
    %639 = vector.broadcast %636 : vector<1x8xf32> to vector<32x8xf32>
    %640 = arith.mulf %639, %638 : vector<32x8xf32>
    %641 = arith.addf %635, %640 : vector<32x8xf32>
    %642 = vector.extract_strided_slice %420 {offsets = [18, 0], sizes = [1, 8], strides = [1, 1]} : vector<32x8xf32> to vector<1x8xf32>
    %c18_296 = arith.constant 18 : index
    %c0_297 = arith.constant 0 : index
    %c0_298 = arith.constant 0 : index
    %643 = vector.load %arg11[%c18_296, %c0_297, %c0_298] : memref<32x32x8xf32, #tpu.memory_space<vmem>>, vector<1x32x8xf32>
    %644 = vector.shape_cast %643 : vector<1x32x8xf32> to vector<32x8xf32>
    %645 = vector.broadcast %642 : vector<1x8xf32> to vector<32x8xf32>
    %646 = arith.mulf %645, %644 : vector<32x8xf32>
    %647 = arith.addf %641, %646 : vector<32x8xf32>
    %648 = vector.extract_strided_slice %417 {offsets = [19, 0], sizes = [1, 8], strides = [1, 1]} : vector<32x8xf32> to vector<1x8xf32>
    %c19_299 = arith.constant 19 : index
    %c0_300 = arith.constant 0 : index
    %c0_301 = arith.constant 0 : index
    %649 = vector.load %arg10[%c19_299, %c0_300, %c0_301] : memref<32x32x8xf32, #tpu.memory_space<vmem>>, vector<1x32x8xf32>
    %650 = vector.shape_cast %649 : vector<1x32x8xf32> to vector<32x8xf32>
    %651 = vector.broadcast %648 : vector<1x8xf32> to vector<32x8xf32>
    %652 = arith.mulf %651, %650 : vector<32x8xf32>
    %653 = arith.addf %647, %652 : vector<32x8xf32>
    %654 = vector.extract_strided_slice %420 {offsets = [19, 0], sizes = [1, 8], strides = [1, 1]} : vector<32x8xf32> to vector<1x8xf32>
    %c19_302 = arith.constant 19 : index
    %c0_303 = arith.constant 0 : index
    %c0_304 = arith.constant 0 : index
    %655 = vector.load %arg11[%c19_302, %c0_303, %c0_304] : memref<32x32x8xf32, #tpu.memory_space<vmem>>, vector<1x32x8xf32>
    %656 = vector.shape_cast %655 : vector<1x32x8xf32> to vector<32x8xf32>
    %657 = vector.broadcast %654 : vector<1x8xf32> to vector<32x8xf32>
    %658 = arith.mulf %657, %656 : vector<32x8xf32>
    %659 = arith.addf %653, %658 : vector<32x8xf32>
    %660 = vector.extract_strided_slice %417 {offsets = [20, 0], sizes = [1, 8], strides = [1, 1]} : vector<32x8xf32> to vector<1x8xf32>
    %c20_305 = arith.constant 20 : index
    %c0_306 = arith.constant 0 : index
    %c0_307 = arith.constant 0 : index
    %661 = vector.load %arg10[%c20_305, %c0_306, %c0_307] : memref<32x32x8xf32, #tpu.memory_space<vmem>>, vector<1x32x8xf32>
    %662 = vector.shape_cast %661 : vector<1x32x8xf32> to vector<32x8xf32>
    %663 = vector.broadcast %660 : vector<1x8xf32> to vector<32x8xf32>
    %664 = arith.mulf %663, %662 : vector<32x8xf32>
    %665 = arith.addf %659, %664 : vector<32x8xf32>
    %666 = vector.extract_strided_slice %420 {offsets = [20, 0], sizes = [1, 8], strides = [1, 1]} : vector<32x8xf32> to vector<1x8xf32>
    %c20_308 = arith.constant 20 : index
    %c0_309 = arith.constant 0 : index
    %c0_310 = arith.constant 0 : index
    %667 = vector.load %arg11[%c20_308, %c0_309, %c0_310] : memref<32x32x8xf32, #tpu.memory_space<vmem>>, vector<1x32x8xf32>
    %668 = vector.shape_cast %667 : vector<1x32x8xf32> to vector<32x8xf32>
    %669 = vector.broadcast %666 : vector<1x8xf32> to vector<32x8xf32>
    %670 = arith.mulf %669, %668 : vector<32x8xf32>
    %671 = arith.addf %665, %670 : vector<32x8xf32>
    %672 = vector.extract_strided_slice %417 {offsets = [21, 0], sizes = [1, 8], strides = [1, 1]} : vector<32x8xf32> to vector<1x8xf32>
    %c21_311 = arith.constant 21 : index
    %c0_312 = arith.constant 0 : index
    %c0_313 = arith.constant 0 : index
    %673 = vector.load %arg10[%c21_311, %c0_312, %c0_313] : memref<32x32x8xf32, #tpu.memory_space<vmem>>, vector<1x32x8xf32>
    %674 = vector.shape_cast %673 : vector<1x32x8xf32> to vector<32x8xf32>
    %675 = vector.broadcast %672 : vector<1x8xf32> to vector<32x8xf32>
    %676 = arith.mulf %675, %674 : vector<32x8xf32>
    %677 = arith.addf %671, %676 : vector<32x8xf32>
    %678 = vector.extract_strided_slice %420 {offsets = [21, 0], sizes = [1, 8], strides = [1, 1]} : vector<32x8xf32> to vector<1x8xf32>
    %c21_314 = arith.constant 21 : index
    %c0_315 = arith.constant 0 : index
    %c0_316 = arith.constant 0 : index
    %679 = vector.load %arg11[%c21_314, %c0_315, %c0_316] : memref<32x32x8xf32, #tpu.memory_space<vmem>>, vector<1x32x8xf32>
    %680 = vector.shape_cast %679 : vector<1x32x8xf32> to vector<32x8xf32>
    %681 = vector.broadcast %678 : vector<1x8xf32> to vector<32x8xf32>
    %682 = arith.mulf %681, %680 : vector<32x8xf32>
    %683 = arith.addf %677, %682 : vector<32x8xf32>
    %684 = vector.extract_strided_slice %417 {offsets = [22, 0], sizes = [1, 8], strides = [1, 1]} : vector<32x8xf32> to vector<1x8xf32>
    %c22_317 = arith.constant 22 : index
    %c0_318 = arith.constant 0 : index
    %c0_319 = arith.constant 0 : index
    %685 = vector.load %arg10[%c22_317, %c0_318, %c0_319] : memref<32x32x8xf32, #tpu.memory_space<vmem>>, vector<1x32x8xf32>
    %686 = vector.shape_cast %685 : vector<1x32x8xf32> to vector<32x8xf32>
    %687 = vector.broadcast %684 : vector<1x8xf32> to vector<32x8xf32>
    %688 = arith.mulf %687, %686 : vector<32x8xf32>
    %689 = arith.addf %683, %688 : vector<32x8xf32>
    %690 = vector.extract_strided_slice %420 {offsets = [22, 0], sizes = [1, 8], strides = [1, 1]} : vector<32x8xf32> to vector<1x8xf32>
    %c22_320 = arith.constant 22 : index
    %c0_321 = arith.constant 0 : index
    %c0_322 = arith.constant 0 : index
    %691 = vector.load %arg11[%c22_320, %c0_321, %c0_322] : memref<32x32x8xf32, #tpu.memory_space<vmem>>, vector<1x32x8xf32>
    %692 = vector.shape_cast %691 : vector<1x32x8xf32> to vector<32x8xf32>
    %693 = vector.broadcast %690 : vector<1x8xf32> to vector<32x8xf32>
    %694 = arith.mulf %693, %692 : vector<32x8xf32>
    %695 = arith.addf %689, %694 : vector<32x8xf32>
    %696 = vector.extract_strided_slice %417 {offsets = [23, 0], sizes = [1, 8], strides = [1, 1]} : vector<32x8xf32> to vector<1x8xf32>
    %c23_323 = arith.constant 23 : index
    %c0_324 = arith.constant 0 : index
    %c0_325 = arith.constant 0 : index
    %697 = vector.load %arg10[%c23_323, %c0_324, %c0_325] : memref<32x32x8xf32, #tpu.memory_space<vmem>>, vector<1x32x8xf32>
    %698 = vector.shape_cast %697 : vector<1x32x8xf32> to vector<32x8xf32>
    %699 = vector.broadcast %696 : vector<1x8xf32> to vector<32x8xf32>
    %700 = arith.mulf %699, %698 : vector<32x8xf32>
    %701 = arith.addf %695, %700 : vector<32x8xf32>
    %702 = vector.extract_strided_slice %420 {offsets = [23, 0], sizes = [1, 8], strides = [1, 1]} : vector<32x8xf32> to vector<1x8xf32>
    %c23_326 = arith.constant 23 : index
    %c0_327 = arith.constant 0 : index
    %c0_328 = arith.constant 0 : index
    %703 = vector.load %arg11[%c23_326, %c0_327, %c0_328] : memref<32x32x8xf32, #tpu.memory_space<vmem>>, vector<1x32x8xf32>
    %704 = vector.shape_cast %703 : vector<1x32x8xf32> to vector<32x8xf32>
    %705 = vector.broadcast %702 : vector<1x8xf32> to vector<32x8xf32>
    %706 = arith.mulf %705, %704 : vector<32x8xf32>
    %707 = arith.addf %701, %706 : vector<32x8xf32>
    %708 = vector.extract_strided_slice %417 {offsets = [24, 0], sizes = [1, 8], strides = [1, 1]} : vector<32x8xf32> to vector<1x8xf32>
    %c24_329 = arith.constant 24 : index
    %c0_330 = arith.constant 0 : index
    %c0_331 = arith.constant 0 : index
    %709 = vector.load %arg10[%c24_329, %c0_330, %c0_331] : memref<32x32x8xf32, #tpu.memory_space<vmem>>, vector<1x32x8xf32>
    %710 = vector.shape_cast %709 : vector<1x32x8xf32> to vector<32x8xf32>
    %711 = vector.broadcast %708 : vector<1x8xf32> to vector<32x8xf32>
    %712 = arith.mulf %711, %710 : vector<32x8xf32>
    %713 = arith.addf %707, %712 : vector<32x8xf32>
    %714 = vector.extract_strided_slice %420 {offsets = [24, 0], sizes = [1, 8], strides = [1, 1]} : vector<32x8xf32> to vector<1x8xf32>
    %c24_332 = arith.constant 24 : index
    %c0_333 = arith.constant 0 : index
    %c0_334 = arith.constant 0 : index
    %715 = vector.load %arg11[%c24_332, %c0_333, %c0_334] : memref<32x32x8xf32, #tpu.memory_space<vmem>>, vector<1x32x8xf32>
    %716 = vector.shape_cast %715 : vector<1x32x8xf32> to vector<32x8xf32>
    %717 = vector.broadcast %714 : vector<1x8xf32> to vector<32x8xf32>
    %718 = arith.mulf %717, %716 : vector<32x8xf32>
    %719 = arith.addf %713, %718 : vector<32x8xf32>
    %720 = vector.extract_strided_slice %417 {offsets = [25, 0], sizes = [1, 8], strides = [1, 1]} : vector<32x8xf32> to vector<1x8xf32>
    %c25_335 = arith.constant 25 : index
    %c0_336 = arith.constant 0 : index
    %c0_337 = arith.constant 0 : index
    %721 = vector.load %arg10[%c25_335, %c0_336, %c0_337] : memref<32x32x8xf32, #tpu.memory_space<vmem>>, vector<1x32x8xf32>
    %722 = vector.shape_cast %721 : vector<1x32x8xf32> to vector<32x8xf32>
    %723 = vector.broadcast %720 : vector<1x8xf32> to vector<32x8xf32>
    %724 = arith.mulf %723, %722 : vector<32x8xf32>
    %725 = arith.addf %719, %724 : vector<32x8xf32>
    %726 = vector.extract_strided_slice %420 {offsets = [25, 0], sizes = [1, 8], strides = [1, 1]} : vector<32x8xf32> to vector<1x8xf32>
    %c25_338 = arith.constant 25 : index
    %c0_339 = arith.constant 0 : index
    %c0_340 = arith.constant 0 : index
    %727 = vector.load %arg11[%c25_338, %c0_339, %c0_340] : memref<32x32x8xf32, #tpu.memory_space<vmem>>, vector<1x32x8xf32>
    %728 = vector.shape_cast %727 : vector<1x32x8xf32> to vector<32x8xf32>
    %729 = vector.broadcast %726 : vector<1x8xf32> to vector<32x8xf32>
    %730 = arith.mulf %729, %728 : vector<32x8xf32>
    %731 = arith.addf %725, %730 : vector<32x8xf32>
    %732 = vector.extract_strided_slice %417 {offsets = [26, 0], sizes = [1, 8], strides = [1, 1]} : vector<32x8xf32> to vector<1x8xf32>
    %c26_341 = arith.constant 26 : index
    %c0_342 = arith.constant 0 : index
    %c0_343 = arith.constant 0 : index
    %733 = vector.load %arg10[%c26_341, %c0_342, %c0_343] : memref<32x32x8xf32, #tpu.memory_space<vmem>>, vector<1x32x8xf32>
    %734 = vector.shape_cast %733 : vector<1x32x8xf32> to vector<32x8xf32>
    %735 = vector.broadcast %732 : vector<1x8xf32> to vector<32x8xf32>
    %736 = arith.mulf %735, %734 : vector<32x8xf32>
    %737 = arith.addf %731, %736 : vector<32x8xf32>
    %738 = vector.extract_strided_slice %420 {offsets = [26, 0], sizes = [1, 8], strides = [1, 1]} : vector<32x8xf32> to vector<1x8xf32>
    %c26_344 = arith.constant 26 : index
    %c0_345 = arith.constant 0 : index
    %c0_346 = arith.constant 0 : index
    %739 = vector.load %arg11[%c26_344, %c0_345, %c0_346] : memref<32x32x8xf32, #tpu.memory_space<vmem>>, vector<1x32x8xf32>
    %740 = vector.shape_cast %739 : vector<1x32x8xf32> to vector<32x8xf32>
    %741 = vector.broadcast %738 : vector<1x8xf32> to vector<32x8xf32>
    %742 = arith.mulf %741, %740 : vector<32x8xf32>
    %743 = arith.addf %737, %742 : vector<32x8xf32>
    %744 = vector.extract_strided_slice %417 {offsets = [27, 0], sizes = [1, 8], strides = [1, 1]} : vector<32x8xf32> to vector<1x8xf32>
    %c27_347 = arith.constant 27 : index
    %c0_348 = arith.constant 0 : index
    %c0_349 = arith.constant 0 : index
    %745 = vector.load %arg10[%c27_347, %c0_348, %c0_349] : memref<32x32x8xf32, #tpu.memory_space<vmem>>, vector<1x32x8xf32>
    %746 = vector.shape_cast %745 : vector<1x32x8xf32> to vector<32x8xf32>
    %747 = vector.broadcast %744 : vector<1x8xf32> to vector<32x8xf32>
    %748 = arith.mulf %747, %746 : vector<32x8xf32>
    %749 = arith.addf %743, %748 : vector<32x8xf32>
    %750 = vector.extract_strided_slice %420 {offsets = [27, 0], sizes = [1, 8], strides = [1, 1]} : vector<32x8xf32> to vector<1x8xf32>
    %c27_350 = arith.constant 27 : index
    %c0_351 = arith.constant 0 : index
    %c0_352 = arith.constant 0 : index
    %751 = vector.load %arg11[%c27_350, %c0_351, %c0_352] : memref<32x32x8xf32, #tpu.memory_space<vmem>>, vector<1x32x8xf32>
    %752 = vector.shape_cast %751 : vector<1x32x8xf32> to vector<32x8xf32>
    %753 = vector.broadcast %750 : vector<1x8xf32> to vector<32x8xf32>
    %754 = arith.mulf %753, %752 : vector<32x8xf32>
    %755 = arith.addf %749, %754 : vector<32x8xf32>
    %756 = vector.extract_strided_slice %417 {offsets = [28, 0], sizes = [1, 8], strides = [1, 1]} : vector<32x8xf32> to vector<1x8xf32>
    %c28_353 = arith.constant 28 : index
    %c0_354 = arith.constant 0 : index
    %c0_355 = arith.constant 0 : index
    %757 = vector.load %arg10[%c28_353, %c0_354, %c0_355] : memref<32x32x8xf32, #tpu.memory_space<vmem>>, vector<1x32x8xf32>
    %758 = vector.shape_cast %757 : vector<1x32x8xf32> to vector<32x8xf32>
    %759 = vector.broadcast %756 : vector<1x8xf32> to vector<32x8xf32>
    %760 = arith.mulf %759, %758 : vector<32x8xf32>
    %761 = arith.addf %755, %760 : vector<32x8xf32>
    %762 = vector.extract_strided_slice %420 {offsets = [28, 0], sizes = [1, 8], strides = [1, 1]} : vector<32x8xf32> to vector<1x8xf32>
    %c28_356 = arith.constant 28 : index
    %c0_357 = arith.constant 0 : index
    %c0_358 = arith.constant 0 : index
    %763 = vector.load %arg11[%c28_356, %c0_357, %c0_358] : memref<32x32x8xf32, #tpu.memory_space<vmem>>, vector<1x32x8xf32>
    %764 = vector.shape_cast %763 : vector<1x32x8xf32> to vector<32x8xf32>
    %765 = vector.broadcast %762 : vector<1x8xf32> to vector<32x8xf32>
    %766 = arith.mulf %765, %764 : vector<32x8xf32>
    %767 = arith.addf %761, %766 : vector<32x8xf32>
    %768 = vector.extract_strided_slice %417 {offsets = [29, 0], sizes = [1, 8], strides = [1, 1]} : vector<32x8xf32> to vector<1x8xf32>
    %c29_359 = arith.constant 29 : index
    %c0_360 = arith.constant 0 : index
    %c0_361 = arith.constant 0 : index
    %769 = vector.load %arg10[%c29_359, %c0_360, %c0_361] : memref<32x32x8xf32, #tpu.memory_space<vmem>>, vector<1x32x8xf32>
    %770 = vector.shape_cast %769 : vector<1x32x8xf32> to vector<32x8xf32>
    %771 = vector.broadcast %768 : vector<1x8xf32> to vector<32x8xf32>
    %772 = arith.mulf %771, %770 : vector<32x8xf32>
    %773 = arith.addf %767, %772 : vector<32x8xf32>
    %774 = vector.extract_strided_slice %420 {offsets = [29, 0], sizes = [1, 8], strides = [1, 1]} : vector<32x8xf32> to vector<1x8xf32>
    %c29_362 = arith.constant 29 : index
    %c0_363 = arith.constant 0 : index
    %c0_364 = arith.constant 0 : index
    %775 = vector.load %arg11[%c29_362, %c0_363, %c0_364] : memref<32x32x8xf32, #tpu.memory_space<vmem>>, vector<1x32x8xf32>
    %776 = vector.shape_cast %775 : vector<1x32x8xf32> to vector<32x8xf32>
    %777 = vector.broadcast %774 : vector<1x8xf32> to vector<32x8xf32>
    %778 = arith.mulf %777, %776 : vector<32x8xf32>
    %779 = arith.addf %773, %778 : vector<32x8xf32>
    %780 = vector.extract_strided_slice %417 {offsets = [30, 0], sizes = [1, 8], strides = [1, 1]} : vector<32x8xf32> to vector<1x8xf32>
    %c30_365 = arith.constant 30 : index
    %c0_366 = arith.constant 0 : index
    %c0_367 = arith.constant 0 : index
    %781 = vector.load %arg10[%c30_365, %c0_366, %c0_367] : memref<32x32x8xf32, #tpu.memory_space<vmem>>, vector<1x32x8xf32>
    %782 = vector.shape_cast %781 : vector<1x32x8xf32> to vector<32x8xf32>
    %783 = vector.broadcast %780 : vector<1x8xf32> to vector<32x8xf32>
    %784 = arith.mulf %783, %782 : vector<32x8xf32>
    %785 = arith.addf %779, %784 : vector<32x8xf32>
    %786 = vector.extract_strided_slice %420 {offsets = [30, 0], sizes = [1, 8], strides = [1, 1]} : vector<32x8xf32> to vector<1x8xf32>
    %c30_368 = arith.constant 30 : index
    %c0_369 = arith.constant 0 : index
    %c0_370 = arith.constant 0 : index
    %787 = vector.load %arg11[%c30_368, %c0_369, %c0_370] : memref<32x32x8xf32, #tpu.memory_space<vmem>>, vector<1x32x8xf32>
    %788 = vector.shape_cast %787 : vector<1x32x8xf32> to vector<32x8xf32>
    %789 = vector.broadcast %786 : vector<1x8xf32> to vector<32x8xf32>
    %790 = arith.mulf %789, %788 : vector<32x8xf32>
    %791 = arith.addf %785, %790 : vector<32x8xf32>
    %792 = vector.extract_strided_slice %417 {offsets = [31, 0], sizes = [1, 8], strides = [1, 1]} : vector<32x8xf32> to vector<1x8xf32>
    %c31_371 = arith.constant 31 : index
    %c0_372 = arith.constant 0 : index
    %c0_373 = arith.constant 0 : index
    %793 = vector.load %arg10[%c31_371, %c0_372, %c0_373] : memref<32x32x8xf32, #tpu.memory_space<vmem>>, vector<1x32x8xf32>
    %794 = vector.shape_cast %793 : vector<1x32x8xf32> to vector<32x8xf32>
    %795 = vector.broadcast %792 : vector<1x8xf32> to vector<32x8xf32>
    %796 = arith.mulf %795, %794 : vector<32x8xf32>
    %797 = arith.addf %791, %796 : vector<32x8xf32>
    %798 = vector.extract_strided_slice %420 {offsets = [31, 0], sizes = [1, 8], strides = [1, 1]} : vector<32x8xf32> to vector<1x8xf32>
    %c31_374 = arith.constant 31 : index
    %c0_375 = arith.constant 0 : index
    %c0_376 = arith.constant 0 : index
    %799 = vector.load %arg11[%c31_374, %c0_375, %c0_376] : memref<32x32x8xf32, #tpu.memory_space<vmem>>, vector<1x32x8xf32>
    %800 = vector.shape_cast %799 : vector<1x32x8xf32> to vector<32x8xf32>
    %801 = vector.broadcast %798 : vector<1x8xf32> to vector<32x8xf32>
    %802 = arith.mulf %801, %800 : vector<32x8xf32>
    %803 = arith.addf %797, %802 : vector<32x8xf32>
    %c0_377 = arith.constant 0 : index
    %c0_378 = arith.constant 0 : index
    %804 = vector.load %arg15[%c0_377, %c0_378] : memref<8x16xf32, #tpu.memory_space<vmem>>, vector<8x16xf32>
    %cst_379 = arith.constant dense<0.000000e+00> : vector<32x16xf32>
    %805 = tpu.matmul %803, %804, %cst_379 {dimension_numbers = #tpu.dot_dimension_numbers<[1], [0], [0], [1], [0, 0, 1, 1], [], []>} : vector<32x8xf32>, vector<8x16xf32>, vector<32x16xf32> -> vector<32x16xf32>
    %c0_380 = arith.constant 0 : index
    %c0_381 = arith.constant 0 : index
    %806 = vector.load %arg12[%c0_380, %c0_381] : memref<32x32xf32, #tpu.memory_space<vmem>>, vector<32x32xf32>
    %cst_382 = arith.constant dense<0.000000e+00> : vector<32x16xf32>
    %807 = tpu.matmul %806, %805, %cst_382 {dimension_numbers = #tpu.dot_dimension_numbers<[1], [0], [0], [1], [0, 0, 1, 1], [], []>} : vector<32x32xf32>, vector<32x16xf32>, vector<32x16xf32> -> vector<32x16xf32>
    %c0_383 = arith.constant 0 : index
    %c0_384 = arith.constant 0 : index
    %808 = vector.load %arg13[%c0_383, %c0_384] : memref<32x1xf32, #tpu.memory_space<vmem>>, vector<32x1xf32>
    %809 = vector.broadcast %808 : vector<32x1xf32> to vector<32x16xf32>
    %810 = arith.addf %807, %809 : vector<32x16xf32>
    %811 = arith.addf %805, %810 : vector<32x16xf32>
    %cst_385 = arith.constant 5.000000e-01 : f32
    %812 = vector.broadcast %cst_385 : f32 to vector<32x16xf32>
    %813 = arith.mulf %812, %811 : vector<32x16xf32>
    %cst_386 = arith.constant 4.471500e-02 : f32
    %814 = vector.broadcast %cst_386 : f32 to vector<32x16xf32>
    %815 = arith.mulf %814, %811 : vector<32x16xf32>
    %816 = arith.mulf %815, %811 : vector<32x16xf32>
    %817 = arith.mulf %816, %811 : vector<32x16xf32>
    %818 = arith.addf %811, %817 : vector<32x16xf32>
    %cst_387 = arith.constant 0.797884583 : f32
    %819 = vector.broadcast %cst_387 : f32 to vector<32x16xf32>
    %820 = arith.mulf %819, %818 : vector<32x16xf32>
    %821 = math.tanh %820 : vector<32x16xf32>
    %cst_388 = arith.constant 1.000000e+00 : f32
    %822 = vector.broadcast %cst_388 : f32 to vector<32x16xf32>
    %823 = arith.addf %822, %821 : vector<32x16xf32>
    %824 = arith.mulf %813, %823 : vector<32x16xf32>
    %c0_389 = arith.constant 0 : index
    %c0_390 = arith.constant 0 : index
    %825 = vector.load %arg14[%c0_389, %c0_390] : memref<16x8xf32, #tpu.memory_space<vmem>>, vector<16x8xf32>
    %cst_391 = arith.constant dense<0.000000e+00> : vector<32x8xf32>
    %826 = tpu.matmul %824, %825, %cst_391 {dimension_numbers = #tpu.dot_dimension_numbers<[1], [0], [0], [1], [0, 0, 1, 1], [], []>} : vector<32x16xf32>, vector<16x8xf32>, vector<32x8xf32> -> vector<32x8xf32>
    %827 = vector.extract_strided_slice %826 {offsets = [0, 0], sizes = [1, 8], strides = [1, 1]} : vector<32x8xf32> to vector<1x8xf32>
    %c0_392 = arith.constant 0 : index
    %c0_393 = arith.constant 0 : index
    %c0_394 = arith.constant 0 : index
    %828 = vector.load %arg16[%c0_392, %c0_393, %c0_394] : memref<32x32x8xf32, #tpu.memory_space<vmem>>, vector<1x32x8xf32>
    %829 = vector.shape_cast %828 : vector<1x32x8xf32> to vector<32x8xf32>
    %830 = vector.broadcast %827 : vector<1x8xf32> to vector<32x8xf32>
    %831 = arith.mulf %830, %829 : vector<32x8xf32>
    %832 = vector.extract_strided_slice %826 {offsets = [1, 0], sizes = [1, 8], strides = [1, 1]} : vector<32x8xf32> to vector<1x8xf32>
    %c1_395 = arith.constant 1 : index
    %c0_396 = arith.constant 0 : index
    %c0_397 = arith.constant 0 : index
    %833 = vector.load %arg16[%c1_395, %c0_396, %c0_397] : memref<32x32x8xf32, #tpu.memory_space<vmem>>, vector<1x32x8xf32>
    %834 = vector.shape_cast %833 : vector<1x32x8xf32> to vector<32x8xf32>
    %835 = vector.broadcast %832 : vector<1x8xf32> to vector<32x8xf32>
    %836 = arith.mulf %835, %834 : vector<32x8xf32>
    %837 = arith.addf %831, %836 : vector<32x8xf32>
    %838 = vector.extract_strided_slice %826 {offsets = [2, 0], sizes = [1, 8], strides = [1, 1]} : vector<32x8xf32> to vector<1x8xf32>
    %c2_398 = arith.constant 2 : index
    %c0_399 = arith.constant 0 : index
    %c0_400 = arith.constant 0 : index
    %839 = vector.load %arg16[%c2_398, %c0_399, %c0_400] : memref<32x32x8xf32, #tpu.memory_space<vmem>>, vector<1x32x8xf32>
    %840 = vector.shape_cast %839 : vector<1x32x8xf32> to vector<32x8xf32>
    %841 = vector.broadcast %838 : vector<1x8xf32> to vector<32x8xf32>
    %842 = arith.mulf %841, %840 : vector<32x8xf32>
    %843 = arith.addf %837, %842 : vector<32x8xf32>
    %844 = vector.extract_strided_slice %826 {offsets = [3, 0], sizes = [1, 8], strides = [1, 1]} : vector<32x8xf32> to vector<1x8xf32>
    %c3_401 = arith.constant 3 : index
    %c0_402 = arith.constant 0 : index
    %c0_403 = arith.constant 0 : index
    %845 = vector.load %arg16[%c3_401, %c0_402, %c0_403] : memref<32x32x8xf32, #tpu.memory_space<vmem>>, vector<1x32x8xf32>
    %846 = vector.shape_cast %845 : vector<1x32x8xf32> to vector<32x8xf32>
    %847 = vector.broadcast %844 : vector<1x8xf32> to vector<32x8xf32>
    %848 = arith.mulf %847, %846 : vector<32x8xf32>
    %849 = arith.addf %843, %848 : vector<32x8xf32>
    %850 = vector.extract_strided_slice %826 {offsets = [4, 0], sizes = [1, 8], strides = [1, 1]} : vector<32x8xf32> to vector<1x8xf32>
    %c4_404 = arith.constant 4 : index
    %c0_405 = arith.constant 0 : index
    %c0_406 = arith.constant 0 : index
    %851 = vector.load %arg16[%c4_404, %c0_405, %c0_406] : memref<32x32x8xf32, #tpu.memory_space<vmem>>, vector<1x32x8xf32>
    %852 = vector.shape_cast %851 : vector<1x32x8xf32> to vector<32x8xf32>
    %853 = vector.broadcast %850 : vector<1x8xf32> to vector<32x8xf32>
    %854 = arith.mulf %853, %852 : vector<32x8xf32>
    %855 = arith.addf %849, %854 : vector<32x8xf32>
    %856 = vector.extract_strided_slice %826 {offsets = [5, 0], sizes = [1, 8], strides = [1, 1]} : vector<32x8xf32> to vector<1x8xf32>
    %c5_407 = arith.constant 5 : index
    %c0_408 = arith.constant 0 : index
    %c0_409 = arith.constant 0 : index
    %857 = vector.load %arg16[%c5_407, %c0_408, %c0_409] : memref<32x32x8xf32, #tpu.memory_space<vmem>>, vector<1x32x8xf32>
    %858 = vector.shape_cast %857 : vector<1x32x8xf32> to vector<32x8xf32>
    %859 = vector.broadcast %856 : vector<1x8xf32> to vector<32x8xf32>
    %860 = arith.mulf %859, %858 : vector<32x8xf32>
    %861 = arith.addf %855, %860 : vector<32x8xf32>
    %862 = vector.extract_strided_slice %826 {offsets = [6, 0], sizes = [1, 8], strides = [1, 1]} : vector<32x8xf32> to vector<1x8xf32>
    %c6_410 = arith.constant 6 : index
    %c0_411 = arith.constant 0 : index
    %c0_412 = arith.constant 0 : index
    %863 = vector.load %arg16[%c6_410, %c0_411, %c0_412] : memref<32x32x8xf32, #tpu.memory_space<vmem>>, vector<1x32x8xf32>
    %864 = vector.shape_cast %863 : vector<1x32x8xf32> to vector<32x8xf32>
    %865 = vector.broadcast %862 : vector<1x8xf32> to vector<32x8xf32>
    %866 = arith.mulf %865, %864 : vector<32x8xf32>
    %867 = arith.addf %861, %866 : vector<32x8xf32>
    %868 = vector.extract_strided_slice %826 {offsets = [7, 0], sizes = [1, 8], strides = [1, 1]} : vector<32x8xf32> to vector<1x8xf32>
    %c7_413 = arith.constant 7 : index
    %c0_414 = arith.constant 0 : index
    %c0_415 = arith.constant 0 : index
    %869 = vector.load %arg16[%c7_413, %c0_414, %c0_415] : memref<32x32x8xf32, #tpu.memory_space<vmem>>, vector<1x32x8xf32>
    %870 = vector.shape_cast %869 : vector<1x32x8xf32> to vector<32x8xf32>
    %871 = vector.broadcast %868 : vector<1x8xf32> to vector<32x8xf32>
    %872 = arith.mulf %871, %870 : vector<32x8xf32>
    %873 = arith.addf %867, %872 : vector<32x8xf32>
    %874 = vector.extract_strided_slice %826 {offsets = [8, 0], sizes = [1, 8], strides = [1, 1]} : vector<32x8xf32> to vector<1x8xf32>
    %c8_416 = arith.constant 8 : index
    %c0_417 = arith.constant 0 : index
    %c0_418 = arith.constant 0 : index
    %875 = vector.load %arg16[%c8_416, %c0_417, %c0_418] : memref<32x32x8xf32, #tpu.memory_space<vmem>>, vector<1x32x8xf32>
    %876 = vector.shape_cast %875 : vector<1x32x8xf32> to vector<32x8xf32>
    %877 = vector.broadcast %874 : vector<1x8xf32> to vector<32x8xf32>
    %878 = arith.mulf %877, %876 : vector<32x8xf32>
    %879 = arith.addf %873, %878 : vector<32x8xf32>
    %880 = vector.extract_strided_slice %826 {offsets = [9, 0], sizes = [1, 8], strides = [1, 1]} : vector<32x8xf32> to vector<1x8xf32>
    %c9_419 = arith.constant 9 : index
    %c0_420 = arith.constant 0 : index
    %c0_421 = arith.constant 0 : index
    %881 = vector.load %arg16[%c9_419, %c0_420, %c0_421] : memref<32x32x8xf32, #tpu.memory_space<vmem>>, vector<1x32x8xf32>
    %882 = vector.shape_cast %881 : vector<1x32x8xf32> to vector<32x8xf32>
    %883 = vector.broadcast %880 : vector<1x8xf32> to vector<32x8xf32>
    %884 = arith.mulf %883, %882 : vector<32x8xf32>
    %885 = arith.addf %879, %884 : vector<32x8xf32>
    %886 = vector.extract_strided_slice %826 {offsets = [10, 0], sizes = [1, 8], strides = [1, 1]} : vector<32x8xf32> to vector<1x8xf32>
    %c10_422 = arith.constant 10 : index
    %c0_423 = arith.constant 0 : index
    %c0_424 = arith.constant 0 : index
    %887 = vector.load %arg16[%c10_422, %c0_423, %c0_424] : memref<32x32x8xf32, #tpu.memory_space<vmem>>, vector<1x32x8xf32>
    %888 = vector.shape_cast %887 : vector<1x32x8xf32> to vector<32x8xf32>
    %889 = vector.broadcast %886 : vector<1x8xf32> to vector<32x8xf32>
    %890 = arith.mulf %889, %888 : vector<32x8xf32>
    %891 = arith.addf %885, %890 : vector<32x8xf32>
    %892 = vector.extract_strided_slice %826 {offsets = [11, 0], sizes = [1, 8], strides = [1, 1]} : vector<32x8xf32> to vector<1x8xf32>
    %c11_425 = arith.constant 11 : index
    %c0_426 = arith.constant 0 : index
    %c0_427 = arith.constant 0 : index
    %893 = vector.load %arg16[%c11_425, %c0_426, %c0_427] : memref<32x32x8xf32, #tpu.memory_space<vmem>>, vector<1x32x8xf32>
    %894 = vector.shape_cast %893 : vector<1x32x8xf32> to vector<32x8xf32>
    %895 = vector.broadcast %892 : vector<1x8xf32> to vector<32x8xf32>
    %896 = arith.mulf %895, %894 : vector<32x8xf32>
    %897 = arith.addf %891, %896 : vector<32x8xf32>
    %898 = vector.extract_strided_slice %826 {offsets = [12, 0], sizes = [1, 8], strides = [1, 1]} : vector<32x8xf32> to vector<1x8xf32>
    %c12_428 = arith.constant 12 : index
    %c0_429 = arith.constant 0 : index
    %c0_430 = arith.constant 0 : index
    %899 = vector.load %arg16[%c12_428, %c0_429, %c0_430] : memref<32x32x8xf32, #tpu.memory_space<vmem>>, vector<1x32x8xf32>
    %900 = vector.shape_cast %899 : vector<1x32x8xf32> to vector<32x8xf32>
    %901 = vector.broadcast %898 : vector<1x8xf32> to vector<32x8xf32>
    %902 = arith.mulf %901, %900 : vector<32x8xf32>
    %903 = arith.addf %897, %902 : vector<32x8xf32>
    %904 = vector.extract_strided_slice %826 {offsets = [13, 0], sizes = [1, 8], strides = [1, 1]} : vector<32x8xf32> to vector<1x8xf32>
    %c13_431 = arith.constant 13 : index
    %c0_432 = arith.constant 0 : index
    %c0_433 = arith.constant 0 : index
    %905 = vector.load %arg16[%c13_431, %c0_432, %c0_433] : memref<32x32x8xf32, #tpu.memory_space<vmem>>, vector<1x32x8xf32>
    %906 = vector.shape_cast %905 : vector<1x32x8xf32> to vector<32x8xf32>
    %907 = vector.broadcast %904 : vector<1x8xf32> to vector<32x8xf32>
    %908 = arith.mulf %907, %906 : vector<32x8xf32>
    %909 = arith.addf %903, %908 : vector<32x8xf32>
    %910 = vector.extract_strided_slice %826 {offsets = [14, 0], sizes = [1, 8], strides = [1, 1]} : vector<32x8xf32> to vector<1x8xf32>
    %c14_434 = arith.constant 14 : index
    %c0_435 = arith.constant 0 : index
    %c0_436 = arith.constant 0 : index
    %911 = vector.load %arg16[%c14_434, %c0_435, %c0_436] : memref<32x32x8xf32, #tpu.memory_space<vmem>>, vector<1x32x8xf32>
    %912 = vector.shape_cast %911 : vector<1x32x8xf32> to vector<32x8xf32>
    %913 = vector.broadcast %910 : vector<1x8xf32> to vector<32x8xf32>
    %914 = arith.mulf %913, %912 : vector<32x8xf32>
    %915 = arith.addf %909, %914 : vector<32x8xf32>
    %916 = vector.extract_strided_slice %826 {offsets = [15, 0], sizes = [1, 8], strides = [1, 1]} : vector<32x8xf32> to vector<1x8xf32>
    %c15_437 = arith.constant 15 : index
    %c0_438 = arith.constant 0 : index
    %c0_439 = arith.constant 0 : index
    %917 = vector.load %arg16[%c15_437, %c0_438, %c0_439] : memref<32x32x8xf32, #tpu.memory_space<vmem>>, vector<1x32x8xf32>
    %918 = vector.shape_cast %917 : vector<1x32x8xf32> to vector<32x8xf32>
    %919 = vector.broadcast %916 : vector<1x8xf32> to vector<32x8xf32>
    %920 = arith.mulf %919, %918 : vector<32x8xf32>
    %921 = arith.addf %915, %920 : vector<32x8xf32>
    %922 = vector.extract_strided_slice %826 {offsets = [16, 0], sizes = [1, 8], strides = [1, 1]} : vector<32x8xf32> to vector<1x8xf32>
    %c16_440 = arith.constant 16 : index
    %c0_441 = arith.constant 0 : index
    %c0_442 = arith.constant 0 : index
    %923 = vector.load %arg16[%c16_440, %c0_441, %c0_442] : memref<32x32x8xf32, #tpu.memory_space<vmem>>, vector<1x32x8xf32>
    %924 = vector.shape_cast %923 : vector<1x32x8xf32> to vector<32x8xf32>
    %925 = vector.broadcast %922 : vector<1x8xf32> to vector<32x8xf32>
    %926 = arith.mulf %925, %924 : vector<32x8xf32>
    %927 = arith.addf %921, %926 : vector<32x8xf32>
    %928 = vector.extract_strided_slice %826 {offsets = [17, 0], sizes = [1, 8], strides = [1, 1]} : vector<32x8xf32> to vector<1x8xf32>
    %c17_443 = arith.constant 17 : index
    %c0_444 = arith.constant 0 : index
    %c0_445 = arith.constant 0 : index
    %929 = vector.load %arg16[%c17_443, %c0_444, %c0_445] : memref<32x32x8xf32, #tpu.memory_space<vmem>>, vector<1x32x8xf32>
    %930 = vector.shape_cast %929 : vector<1x32x8xf32> to vector<32x8xf32>
    %931 = vector.broadcast %928 : vector<1x8xf32> to vector<32x8xf32>
    %932 = arith.mulf %931, %930 : vector<32x8xf32>
    %933 = arith.addf %927, %932 : vector<32x8xf32>
    %934 = vector.extract_strided_slice %826 {offsets = [18, 0], sizes = [1, 8], strides = [1, 1]} : vector<32x8xf32> to vector<1x8xf32>
    %c18_446 = arith.constant 18 : index
    %c0_447 = arith.constant 0 : index
    %c0_448 = arith.constant 0 : index
    %935 = vector.load %arg16[%c18_446, %c0_447, %c0_448] : memref<32x32x8xf32, #tpu.memory_space<vmem>>, vector<1x32x8xf32>
    %936 = vector.shape_cast %935 : vector<1x32x8xf32> to vector<32x8xf32>
    %937 = vector.broadcast %934 : vector<1x8xf32> to vector<32x8xf32>
    %938 = arith.mulf %937, %936 : vector<32x8xf32>
    %939 = arith.addf %933, %938 : vector<32x8xf32>
    %940 = vector.extract_strided_slice %826 {offsets = [19, 0], sizes = [1, 8], strides = [1, 1]} : vector<32x8xf32> to vector<1x8xf32>
    %c19_449 = arith.constant 19 : index
    %c0_450 = arith.constant 0 : index
    %c0_451 = arith.constant 0 : index
    %941 = vector.load %arg16[%c19_449, %c0_450, %c0_451] : memref<32x32x8xf32, #tpu.memory_space<vmem>>, vector<1x32x8xf32>
    %942 = vector.shape_cast %941 : vector<1x32x8xf32> to vector<32x8xf32>
    %943 = vector.broadcast %940 : vector<1x8xf32> to vector<32x8xf32>
    %944 = arith.mulf %943, %942 : vector<32x8xf32>
    %945 = arith.addf %939, %944 : vector<32x8xf32>
    %946 = vector.extract_strided_slice %826 {offsets = [20, 0], sizes = [1, 8], strides = [1, 1]} : vector<32x8xf32> to vector<1x8xf32>
    %c20_452 = arith.constant 20 : index
    %c0_453 = arith.constant 0 : index
    %c0_454 = arith.constant 0 : index
    %947 = vector.load %arg16[%c20_452, %c0_453, %c0_454] : memref<32x32x8xf32, #tpu.memory_space<vmem>>, vector<1x32x8xf32>
    %948 = vector.shape_cast %947 : vector<1x32x8xf32> to vector<32x8xf32>
    %949 = vector.broadcast %946 : vector<1x8xf32> to vector<32x8xf32>
    %950 = arith.mulf %949, %948 : vector<32x8xf32>
    %951 = arith.addf %945, %950 : vector<32x8xf32>
    %952 = vector.extract_strided_slice %826 {offsets = [21, 0], sizes = [1, 8], strides = [1, 1]} : vector<32x8xf32> to vector<1x8xf32>
    %c21_455 = arith.constant 21 : index
    %c0_456 = arith.constant 0 : index
    %c0_457 = arith.constant 0 : index
    %953 = vector.load %arg16[%c21_455, %c0_456, %c0_457] : memref<32x32x8xf32, #tpu.memory_space<vmem>>, vector<1x32x8xf32>
    %954 = vector.shape_cast %953 : vector<1x32x8xf32> to vector<32x8xf32>
    %955 = vector.broadcast %952 : vector<1x8xf32> to vector<32x8xf32>
    %956 = arith.mulf %955, %954 : vector<32x8xf32>
    %957 = arith.addf %951, %956 : vector<32x8xf32>
    %958 = vector.extract_strided_slice %826 {offsets = [22, 0], sizes = [1, 8], strides = [1, 1]} : vector<32x8xf32> to vector<1x8xf32>
    %c22_458 = arith.constant 22 : index
    %c0_459 = arith.constant 0 : index
    %c0_460 = arith.constant 0 : index
    %959 = vector.load %arg16[%c22_458, %c0_459, %c0_460] : memref<32x32x8xf32, #tpu.memory_space<vmem>>, vector<1x32x8xf32>
    %960 = vector.shape_cast %959 : vector<1x32x8xf32> to vector<32x8xf32>
    %961 = vector.broadcast %958 : vector<1x8xf32> to vector<32x8xf32>
    %962 = arith.mulf %961, %960 : vector<32x8xf32>
    %963 = arith.addf %957, %962 : vector<32x8xf32>
    %964 = vector.extract_strided_slice %826 {offsets = [23, 0], sizes = [1, 8], strides = [1, 1]} : vector<32x8xf32> to vector<1x8xf32>
    %c23_461 = arith.constant 23 : index
    %c0_462 = arith.constant 0 : index
    %c0_463 = arith.constant 0 : index
    %965 = vector.load %arg16[%c23_461, %c0_462, %c0_463] : memref<32x32x8xf32, #tpu.memory_space<vmem>>, vector<1x32x8xf32>
    %966 = vector.shape_cast %965 : vector<1x32x8xf32> to vector<32x8xf32>
    %967 = vector.broadcast %964 : vector<1x8xf32> to vector<32x8xf32>
    %968 = arith.mulf %967, %966 : vector<32x8xf32>
    %969 = arith.addf %963, %968 : vector<32x8xf32>
    %970 = vector.extract_strided_slice %826 {offsets = [24, 0], sizes = [1, 8], strides = [1, 1]} : vector<32x8xf32> to vector<1x8xf32>
    %c24_464 = arith.constant 24 : index
    %c0_465 = arith.constant 0 : index
    %c0_466 = arith.constant 0 : index
    %971 = vector.load %arg16[%c24_464, %c0_465, %c0_466] : memref<32x32x8xf32, #tpu.memory_space<vmem>>, vector<1x32x8xf32>
    %972 = vector.shape_cast %971 : vector<1x32x8xf32> to vector<32x8xf32>
    %973 = vector.broadcast %970 : vector<1x8xf32> to vector<32x8xf32>
    %974 = arith.mulf %973, %972 : vector<32x8xf32>
    %975 = arith.addf %969, %974 : vector<32x8xf32>
    %976 = vector.extract_strided_slice %826 {offsets = [25, 0], sizes = [1, 8], strides = [1, 1]} : vector<32x8xf32> to vector<1x8xf32>
    %c25_467 = arith.constant 25 : index
    %c0_468 = arith.constant 0 : index
    %c0_469 = arith.constant 0 : index
    %977 = vector.load %arg16[%c25_467, %c0_468, %c0_469] : memref<32x32x8xf32, #tpu.memory_space<vmem>>, vector<1x32x8xf32>
    %978 = vector.shape_cast %977 : vector<1x32x8xf32> to vector<32x8xf32>
    %979 = vector.broadcast %976 : vector<1x8xf32> to vector<32x8xf32>
    %980 = arith.mulf %979, %978 : vector<32x8xf32>
    %981 = arith.addf %975, %980 : vector<32x8xf32>
    %982 = vector.extract_strided_slice %826 {offsets = [26, 0], sizes = [1, 8], strides = [1, 1]} : vector<32x8xf32> to vector<1x8xf32>
    %c26_470 = arith.constant 26 : index
    %c0_471 = arith.constant 0 : index
    %c0_472 = arith.constant 0 : index
    %983 = vector.load %arg16[%c26_470, %c0_471, %c0_472] : memref<32x32x8xf32, #tpu.memory_space<vmem>>, vector<1x32x8xf32>
    %984 = vector.shape_cast %983 : vector<1x32x8xf32> to vector<32x8xf32>
    %985 = vector.broadcast %982 : vector<1x8xf32> to vector<32x8xf32>
    %986 = arith.mulf %985, %984 : vector<32x8xf32>
    %987 = arith.addf %981, %986 : vector<32x8xf32>
    %988 = vector.extract_strided_slice %826 {offsets = [27, 0], sizes = [1, 8], strides = [1, 1]} : vector<32x8xf32> to vector<1x8xf32>
    %c27_473 = arith.constant 27 : index
    %c0_474 = arith.constant 0 : index
    %c0_475 = arith.constant 0 : index
    %989 = vector.load %arg16[%c27_473, %c0_474, %c0_475] : memref<32x32x8xf32, #tpu.memory_space<vmem>>, vector<1x32x8xf32>
    %990 = vector.shape_cast %989 : vector<1x32x8xf32> to vector<32x8xf32>
    %991 = vector.broadcast %988 : vector<1x8xf32> to vector<32x8xf32>
    %992 = arith.mulf %991, %990 : vector<32x8xf32>
    %993 = arith.addf %987, %992 : vector<32x8xf32>
    %994 = vector.extract_strided_slice %826 {offsets = [28, 0], sizes = [1, 8], strides = [1, 1]} : vector<32x8xf32> to vector<1x8xf32>
    %c28_476 = arith.constant 28 : index
    %c0_477 = arith.constant 0 : index
    %c0_478 = arith.constant 0 : index
    %995 = vector.load %arg16[%c28_476, %c0_477, %c0_478] : memref<32x32x8xf32, #tpu.memory_space<vmem>>, vector<1x32x8xf32>
    %996 = vector.shape_cast %995 : vector<1x32x8xf32> to vector<32x8xf32>
    %997 = vector.broadcast %994 : vector<1x8xf32> to vector<32x8xf32>
    %998 = arith.mulf %997, %996 : vector<32x8xf32>
    %999 = arith.addf %993, %998 : vector<32x8xf32>
    %1000 = vector.extract_strided_slice %826 {offsets = [29, 0], sizes = [1, 8], strides = [1, 1]} : vector<32x8xf32> to vector<1x8xf32>
    %c29_479 = arith.constant 29 : index
    %c0_480 = arith.constant 0 : index
    %c0_481 = arith.constant 0 : index
    %1001 = vector.load %arg16[%c29_479, %c0_480, %c0_481] : memref<32x32x8xf32, #tpu.memory_space<vmem>>, vector<1x32x8xf32>
    %1002 = vector.shape_cast %1001 : vector<1x32x8xf32> to vector<32x8xf32>
    %1003 = vector.broadcast %1000 : vector<1x8xf32> to vector<32x8xf32>
    %1004 = arith.mulf %1003, %1002 : vector<32x8xf32>
    %1005 = arith.addf %999, %1004 : vector<32x8xf32>
    %1006 = vector.extract_strided_slice %826 {offsets = [30, 0], sizes = [1, 8], strides = [1, 1]} : vector<32x8xf32> to vector<1x8xf32>
    %c30_482 = arith.constant 30 : index
    %c0_483 = arith.constant 0 : index
    %c0_484 = arith.constant 0 : index
    %1007 = vector.load %arg16[%c30_482, %c0_483, %c0_484] : memref<32x32x8xf32, #tpu.memory_space<vmem>>, vector<1x32x8xf32>
    %1008 = vector.shape_cast %1007 : vector<1x32x8xf32> to vector<32x8xf32>
    %1009 = vector.broadcast %1006 : vector<1x8xf32> to vector<32x8xf32>
    %1010 = arith.mulf %1009, %1008 : vector<32x8xf32>
    %1011 = arith.addf %1005, %1010 : vector<32x8xf32>
    %1012 = vector.extract_strided_slice %826 {offsets = [31, 0], sizes = [1, 8], strides = [1, 1]} : vector<32x8xf32> to vector<1x8xf32>
    %c31_485 = arith.constant 31 : index
    %c0_486 = arith.constant 0 : index
    %c0_487 = arith.constant 0 : index
    %1013 = vector.load %arg16[%c31_485, %c0_486, %c0_487] : memref<32x32x8xf32, #tpu.memory_space<vmem>>, vector<1x32x8xf32>
    %1014 = vector.shape_cast %1013 : vector<1x32x8xf32> to vector<32x8xf32>
    %1015 = vector.broadcast %1012 : vector<1x8xf32> to vector<32x8xf32>
    %1016 = arith.mulf %1015, %1014 : vector<32x8xf32>
    %1017 = arith.addf %1011, %1016 : vector<32x8xf32>
    %c0_488 = arith.constant 0 : index
    %c0_489 = arith.constant 0 : index
    %1018 = vector.load %arg15[%c0_488, %c0_489] : memref<8x16xf32, #tpu.memory_space<vmem>>, vector<8x16xf32>
    %cst_490 = arith.constant dense<0.000000e+00> : vector<32x16xf32>
    %1019 = tpu.matmul %1017, %1018, %cst_490 {dimension_numbers = #tpu.dot_dimension_numbers<[1], [0], [0], [1], [0, 0, 1, 1], [], []>} : vector<32x8xf32>, vector<8x16xf32>, vector<32x16xf32> -> vector<32x16xf32>
    %c0_491 = arith.constant 0 : index
    %c0_492 = arith.constant 0 : index
    %1020 = vector.load %arg17[%c0_491, %c0_492] : memref<32x32xf32, #tpu.memory_space<vmem>>, vector<32x32xf32>
    %cst_493 = arith.constant dense<0.000000e+00> : vector<32x16xf32>
    %1021 = tpu.matmul %1020, %824, %cst_493 {dimension_numbers = #tpu.dot_dimension_numbers<[1], [0], [0], [1], [0, 0, 1, 1], [], []>} : vector<32x32xf32>, vector<32x16xf32>, vector<32x16xf32> -> vector<32x16xf32>
    %c0_494 = arith.constant 0 : index
    %c0_495 = arith.constant 0 : index
    %1022 = vector.load %arg18[%c0_494, %c0_495] : memref<32x1xf32, #tpu.memory_space<vmem>>, vector<32x1xf32>
    %1023 = vector.broadcast %1022 : vector<32x1xf32> to vector<32x16xf32>
    %1024 = arith.addf %1021, %1023 : vector<32x16xf32>
    %1025 = arith.addf %1019, %1024 : vector<32x16xf32>
    %cst_496 = arith.constant 5.000000e-01 : f32
    %1026 = vector.broadcast %cst_496 : f32 to vector<32x16xf32>
    %1027 = arith.mulf %1026, %1025 : vector<32x16xf32>
    %cst_497 = arith.constant 4.471500e-02 : f32
    %1028 = vector.broadcast %cst_497 : f32 to vector<32x16xf32>
    %1029 = arith.mulf %1028, %1025 : vector<32x16xf32>
    %1030 = arith.mulf %1029, %1025 : vector<32x16xf32>
    %1031 = arith.mulf %1030, %1025 : vector<32x16xf32>
    %1032 = arith.addf %1025, %1031 : vector<32x16xf32>
    %cst_498 = arith.constant 0.797884583 : f32
    %1033 = vector.broadcast %cst_498 : f32 to vector<32x16xf32>
    %1034 = arith.mulf %1033, %1032 : vector<32x16xf32>
    %1035 = math.tanh %1034 : vector<32x16xf32>
    %cst_499 = arith.constant 1.000000e+00 : f32
    %1036 = vector.broadcast %cst_499 : f32 to vector<32x16xf32>
    %1037 = arith.addf %1036, %1035 : vector<32x16xf32>
    %1038 = arith.mulf %1027, %1037 : vector<32x16xf32>
    %c0_500 = arith.constant 0 : index
    %c0_501 = arith.constant 0 : index
    %1039 = vector.load %arg14[%c0_500, %c0_501] : memref<16x8xf32, #tpu.memory_space<vmem>>, vector<16x8xf32>
    %cst_502 = arith.constant dense<0.000000e+00> : vector<32x8xf32>
    %1040 = tpu.matmul %1038, %1039, %cst_502 {dimension_numbers = #tpu.dot_dimension_numbers<[1], [0], [0], [1], [0, 0, 1, 1], [], []>} : vector<32x16xf32>, vector<16x8xf32>, vector<32x8xf32> -> vector<32x8xf32>
    %1041 = vector.extract_strided_slice %1040 {offsets = [0, 0], sizes = [1, 8], strides = [1, 1]} : vector<32x8xf32> to vector<1x8xf32>
    %c0_503 = arith.constant 0 : index
    %c0_504 = arith.constant 0 : index
    %c0_505 = arith.constant 0 : index
    %1042 = vector.load %arg19[%c0_503, %c0_504, %c0_505] : memref<32x32x8xf32, #tpu.memory_space<vmem>>, vector<1x32x8xf32>
    %1043 = vector.shape_cast %1042 : vector<1x32x8xf32> to vector<32x8xf32>
    %1044 = vector.broadcast %1041 : vector<1x8xf32> to vector<32x8xf32>
    %1045 = arith.mulf %1044, %1043 : vector<32x8xf32>
    %1046 = vector.extract_strided_slice %1040 {offsets = [1, 0], sizes = [1, 8], strides = [1, 1]} : vector<32x8xf32> to vector<1x8xf32>
    %c1_506 = arith.constant 1 : index
    %c0_507 = arith.constant 0 : index
    %c0_508 = arith.constant 0 : index
    %1047 = vector.load %arg19[%c1_506, %c0_507, %c0_508] : memref<32x32x8xf32, #tpu.memory_space<vmem>>, vector<1x32x8xf32>
    %1048 = vector.shape_cast %1047 : vector<1x32x8xf32> to vector<32x8xf32>
    %1049 = vector.broadcast %1046 : vector<1x8xf32> to vector<32x8xf32>
    %1050 = arith.mulf %1049, %1048 : vector<32x8xf32>
    %1051 = arith.addf %1045, %1050 : vector<32x8xf32>
    %1052 = vector.extract_strided_slice %1040 {offsets = [2, 0], sizes = [1, 8], strides = [1, 1]} : vector<32x8xf32> to vector<1x8xf32>
    %c2_509 = arith.constant 2 : index
    %c0_510 = arith.constant 0 : index
    %c0_511 = arith.constant 0 : index
    %1053 = vector.load %arg19[%c2_509, %c0_510, %c0_511] : memref<32x32x8xf32, #tpu.memory_space<vmem>>, vector<1x32x8xf32>
    %1054 = vector.shape_cast %1053 : vector<1x32x8xf32> to vector<32x8xf32>
    %1055 = vector.broadcast %1052 : vector<1x8xf32> to vector<32x8xf32>
    %1056 = arith.mulf %1055, %1054 : vector<32x8xf32>
    %1057 = arith.addf %1051, %1056 : vector<32x8xf32>
    %1058 = vector.extract_strided_slice %1040 {offsets = [3, 0], sizes = [1, 8], strides = [1, 1]} : vector<32x8xf32> to vector<1x8xf32>
    %c3_512 = arith.constant 3 : index
    %c0_513 = arith.constant 0 : index
    %c0_514 = arith.constant 0 : index
    %1059 = vector.load %arg19[%c3_512, %c0_513, %c0_514] : memref<32x32x8xf32, #tpu.memory_space<vmem>>, vector<1x32x8xf32>
    %1060 = vector.shape_cast %1059 : vector<1x32x8xf32> to vector<32x8xf32>
    %1061 = vector.broadcast %1058 : vector<1x8xf32> to vector<32x8xf32>
    %1062 = arith.mulf %1061, %1060 : vector<32x8xf32>
    %1063 = arith.addf %1057, %1062 : vector<32x8xf32>
    %1064 = vector.extract_strided_slice %1040 {offsets = [4, 0], sizes = [1, 8], strides = [1, 1]} : vector<32x8xf32> to vector<1x8xf32>
    %c4_515 = arith.constant 4 : index
    %c0_516 = arith.constant 0 : index
    %c0_517 = arith.constant 0 : index
    %1065 = vector.load %arg19[%c4_515, %c0_516, %c0_517] : memref<32x32x8xf32, #tpu.memory_space<vmem>>, vector<1x32x8xf32>
    %1066 = vector.shape_cast %1065 : vector<1x32x8xf32> to vector<32x8xf32>
    %1067 = vector.broadcast %1064 : vector<1x8xf32> to vector<32x8xf32>
    %1068 = arith.mulf %1067, %1066 : vector<32x8xf32>
    %1069 = arith.addf %1063, %1068 : vector<32x8xf32>
    %1070 = vector.extract_strided_slice %1040 {offsets = [5, 0], sizes = [1, 8], strides = [1, 1]} : vector<32x8xf32> to vector<1x8xf32>
    %c5_518 = arith.constant 5 : index
    %c0_519 = arith.constant 0 : index
    %c0_520 = arith.constant 0 : index
    %1071 = vector.load %arg19[%c5_518, %c0_519, %c0_520] : memref<32x32x8xf32, #tpu.memory_space<vmem>>, vector<1x32x8xf32>
    %1072 = vector.shape_cast %1071 : vector<1x32x8xf32> to vector<32x8xf32>
    %1073 = vector.broadcast %1070 : vector<1x8xf32> to vector<32x8xf32>
    %1074 = arith.mulf %1073, %1072 : vector<32x8xf32>
    %1075 = arith.addf %1069, %1074 : vector<32x8xf32>
    %1076 = vector.extract_strided_slice %1040 {offsets = [6, 0], sizes = [1, 8], strides = [1, 1]} : vector<32x8xf32> to vector<1x8xf32>
    %c6_521 = arith.constant 6 : index
    %c0_522 = arith.constant 0 : index
    %c0_523 = arith.constant 0 : index
    %1077 = vector.load %arg19[%c6_521, %c0_522, %c0_523] : memref<32x32x8xf32, #tpu.memory_space<vmem>>, vector<1x32x8xf32>
    %1078 = vector.shape_cast %1077 : vector<1x32x8xf32> to vector<32x8xf32>
    %1079 = vector.broadcast %1076 : vector<1x8xf32> to vector<32x8xf32>
    %1080 = arith.mulf %1079, %1078 : vector<32x8xf32>
    %1081 = arith.addf %1075, %1080 : vector<32x8xf32>
    %1082 = vector.extract_strided_slice %1040 {offsets = [7, 0], sizes = [1, 8], strides = [1, 1]} : vector<32x8xf32> to vector<1x8xf32>
    %c7_524 = arith.constant 7 : index
    %c0_525 = arith.constant 0 : index
    %c0_526 = arith.constant 0 : index
    %1083 = vector.load %arg19[%c7_524, %c0_525, %c0_526] : memref<32x32x8xf32, #tpu.memory_space<vmem>>, vector<1x32x8xf32>
    %1084 = vector.shape_cast %1083 : vector<1x32x8xf32> to vector<32x8xf32>
    %1085 = vector.broadcast %1082 : vector<1x8xf32> to vector<32x8xf32>
    %1086 = arith.mulf %1085, %1084 : vector<32x8xf32>
    %1087 = arith.addf %1081, %1086 : vector<32x8xf32>
    %1088 = vector.extract_strided_slice %1040 {offsets = [8, 0], sizes = [1, 8], strides = [1, 1]} : vector<32x8xf32> to vector<1x8xf32>
    %c8_527 = arith.constant 8 : index
    %c0_528 = arith.constant 0 : index
    %c0_529 = arith.constant 0 : index
    %1089 = vector.load %arg19[%c8_527, %c0_528, %c0_529] : memref<32x32x8xf32, #tpu.memory_space<vmem>>, vector<1x32x8xf32>
    %1090 = vector.shape_cast %1089 : vector<1x32x8xf32> to vector<32x8xf32>
    %1091 = vector.broadcast %1088 : vector<1x8xf32> to vector<32x8xf32>
    %1092 = arith.mulf %1091, %1090 : vector<32x8xf32>
    %1093 = arith.addf %1087, %1092 : vector<32x8xf32>
    %1094 = vector.extract_strided_slice %1040 {offsets = [9, 0], sizes = [1, 8], strides = [1, 1]} : vector<32x8xf32> to vector<1x8xf32>
    %c9_530 = arith.constant 9 : index
    %c0_531 = arith.constant 0 : index
    %c0_532 = arith.constant 0 : index
    %1095 = vector.load %arg19[%c9_530, %c0_531, %c0_532] : memref<32x32x8xf32, #tpu.memory_space<vmem>>, vector<1x32x8xf32>
    %1096 = vector.shape_cast %1095 : vector<1x32x8xf32> to vector<32x8xf32>
    %1097 = vector.broadcast %1094 : vector<1x8xf32> to vector<32x8xf32>
    %1098 = arith.mulf %1097, %1096 : vector<32x8xf32>
    %1099 = arith.addf %1093, %1098 : vector<32x8xf32>
    %1100 = vector.extract_strided_slice %1040 {offsets = [10, 0], sizes = [1, 8], strides = [1, 1]} : vector<32x8xf32> to vector<1x8xf32>
    %c10_533 = arith.constant 10 : index
    %c0_534 = arith.constant 0 : index
    %c0_535 = arith.constant 0 : index
    %1101 = vector.load %arg19[%c10_533, %c0_534, %c0_535] : memref<32x32x8xf32, #tpu.memory_space<vmem>>, vector<1x32x8xf32>
    %1102 = vector.shape_cast %1101 : vector<1x32x8xf32> to vector<32x8xf32>
    %1103 = vector.broadcast %1100 : vector<1x8xf32> to vector<32x8xf32>
    %1104 = arith.mulf %1103, %1102 : vector<32x8xf32>
    %1105 = arith.addf %1099, %1104 : vector<32x8xf32>
    %1106 = vector.extract_strided_slice %1040 {offsets = [11, 0], sizes = [1, 8], strides = [1, 1]} : vector<32x8xf32> to vector<1x8xf32>
    %c11_536 = arith.constant 11 : index
    %c0_537 = arith.constant 0 : index
    %c0_538 = arith.constant 0 : index
    %1107 = vector.load %arg19[%c11_536, %c0_537, %c0_538] : memref<32x32x8xf32, #tpu.memory_space<vmem>>, vector<1x32x8xf32>
    %1108 = vector.shape_cast %1107 : vector<1x32x8xf32> to vector<32x8xf32>
    %1109 = vector.broadcast %1106 : vector<1x8xf32> to vector<32x8xf32>
    %1110 = arith.mulf %1109, %1108 : vector<32x8xf32>
    %1111 = arith.addf %1105, %1110 : vector<32x8xf32>
    %1112 = vector.extract_strided_slice %1040 {offsets = [12, 0], sizes = [1, 8], strides = [1, 1]} : vector<32x8xf32> to vector<1x8xf32>
    %c12_539 = arith.constant 12 : index
    %c0_540 = arith.constant 0 : index
    %c0_541 = arith.constant 0 : index
    %1113 = vector.load %arg19[%c12_539, %c0_540, %c0_541] : memref<32x32x8xf32, #tpu.memory_space<vmem>>, vector<1x32x8xf32>
    %1114 = vector.shape_cast %1113 : vector<1x32x8xf32> to vector<32x8xf32>
    %1115 = vector.broadcast %1112 : vector<1x8xf32> to vector<32x8xf32>
    %1116 = arith.mulf %1115, %1114 : vector<32x8xf32>
    %1117 = arith.addf %1111, %1116 : vector<32x8xf32>
    %1118 = vector.extract_strided_slice %1040 {offsets = [13, 0], sizes = [1, 8], strides = [1, 1]} : vector<32x8xf32> to vector<1x8xf32>
    %c13_542 = arith.constant 13 : index
    %c0_543 = arith.constant 0 : index
    %c0_544 = arith.constant 0 : index
    %1119 = vector.load %arg19[%c13_542, %c0_543, %c0_544] : memref<32x32x8xf32, #tpu.memory_space<vmem>>, vector<1x32x8xf32>
    %1120 = vector.shape_cast %1119 : vector<1x32x8xf32> to vector<32x8xf32>
    %1121 = vector.broadcast %1118 : vector<1x8xf32> to vector<32x8xf32>
    %1122 = arith.mulf %1121, %1120 : vector<32x8xf32>
    %1123 = arith.addf %1117, %1122 : vector<32x8xf32>
    %1124 = vector.extract_strided_slice %1040 {offsets = [14, 0], sizes = [1, 8], strides = [1, 1]} : vector<32x8xf32> to vector<1x8xf32>
    %c14_545 = arith.constant 14 : index
    %c0_546 = arith.constant 0 : index
    %c0_547 = arith.constant 0 : index
    %1125 = vector.load %arg19[%c14_545, %c0_546, %c0_547] : memref<32x32x8xf32, #tpu.memory_space<vmem>>, vector<1x32x8xf32>
    %1126 = vector.shape_cast %1125 : vector<1x32x8xf32> to vector<32x8xf32>
    %1127 = vector.broadcast %1124 : vector<1x8xf32> to vector<32x8xf32>
    %1128 = arith.mulf %1127, %1126 : vector<32x8xf32>
    %1129 = arith.addf %1123, %1128 : vector<32x8xf32>
    %1130 = vector.extract_strided_slice %1040 {offsets = [15, 0], sizes = [1, 8], strides = [1, 1]} : vector<32x8xf32> to vector<1x8xf32>
    %c15_548 = arith.constant 15 : index
    %c0_549 = arith.constant 0 : index
    %c0_550 = arith.constant 0 : index
    %1131 = vector.load %arg19[%c15_548, %c0_549, %c0_550] : memref<32x32x8xf32, #tpu.memory_space<vmem>>, vector<1x32x8xf32>
    %1132 = vector.shape_cast %1131 : vector<1x32x8xf32> to vector<32x8xf32>
    %1133 = vector.broadcast %1130 : vector<1x8xf32> to vector<32x8xf32>
    %1134 = arith.mulf %1133, %1132 : vector<32x8xf32>
    %1135 = arith.addf %1129, %1134 : vector<32x8xf32>
    %1136 = vector.extract_strided_slice %1040 {offsets = [16, 0], sizes = [1, 8], strides = [1, 1]} : vector<32x8xf32> to vector<1x8xf32>
    %c16_551 = arith.constant 16 : index
    %c0_552 = arith.constant 0 : index
    %c0_553 = arith.constant 0 : index
    %1137 = vector.load %arg19[%c16_551, %c0_552, %c0_553] : memref<32x32x8xf32, #tpu.memory_space<vmem>>, vector<1x32x8xf32>
    %1138 = vector.shape_cast %1137 : vector<1x32x8xf32> to vector<32x8xf32>
    %1139 = vector.broadcast %1136 : vector<1x8xf32> to vector<32x8xf32>
    %1140 = arith.mulf %1139, %1138 : vector<32x8xf32>
    %1141 = arith.addf %1135, %1140 : vector<32x8xf32>
    %1142 = vector.extract_strided_slice %1040 {offsets = [17, 0], sizes = [1, 8], strides = [1, 1]} : vector<32x8xf32> to vector<1x8xf32>
    %c17_554 = arith.constant 17 : index
    %c0_555 = arith.constant 0 : index
    %c0_556 = arith.constant 0 : index
    %1143 = vector.load %arg19[%c17_554, %c0_555, %c0_556] : memref<32x32x8xf32, #tpu.memory_space<vmem>>, vector<1x32x8xf32>
    %1144 = vector.shape_cast %1143 : vector<1x32x8xf32> to vector<32x8xf32>
    %1145 = vector.broadcast %1142 : vector<1x8xf32> to vector<32x8xf32>
    %1146 = arith.mulf %1145, %1144 : vector<32x8xf32>
    %1147 = arith.addf %1141, %1146 : vector<32x8xf32>
    %1148 = vector.extract_strided_slice %1040 {offsets = [18, 0], sizes = [1, 8], strides = [1, 1]} : vector<32x8xf32> to vector<1x8xf32>
    %c18_557 = arith.constant 18 : index
    %c0_558 = arith.constant 0 : index
    %c0_559 = arith.constant 0 : index
    %1149 = vector.load %arg19[%c18_557, %c0_558, %c0_559] : memref<32x32x8xf32, #tpu.memory_space<vmem>>, vector<1x32x8xf32>
    %1150 = vector.shape_cast %1149 : vector<1x32x8xf32> to vector<32x8xf32>
    %1151 = vector.broadcast %1148 : vector<1x8xf32> to vector<32x8xf32>
    %1152 = arith.mulf %1151, %1150 : vector<32x8xf32>
    %1153 = arith.addf %1147, %1152 : vector<32x8xf32>
    %1154 = vector.extract_strided_slice %1040 {offsets = [19, 0], sizes = [1, 8], strides = [1, 1]} : vector<32x8xf32> to vector<1x8xf32>
    %c19_560 = arith.constant 19 : index
    %c0_561 = arith.constant 0 : index
    %c0_562 = arith.constant 0 : index
    %1155 = vector.load %arg19[%c19_560, %c0_561, %c0_562] : memref<32x32x8xf32, #tpu.memory_space<vmem>>, vector<1x32x8xf32>
    %1156 = vector.shape_cast %1155 : vector<1x32x8xf32> to vector<32x8xf32>
    %1157 = vector.broadcast %1154 : vector<1x8xf32> to vector<32x8xf32>
    %1158 = arith.mulf %1157, %1156 : vector<32x8xf32>
    %1159 = arith.addf %1153, %1158 : vector<32x8xf32>
    %1160 = vector.extract_strided_slice %1040 {offsets = [20, 0], sizes = [1, 8], strides = [1, 1]} : vector<32x8xf32> to vector<1x8xf32>
    %c20_563 = arith.constant 20 : index
    %c0_564 = arith.constant 0 : index
    %c0_565 = arith.constant 0 : index
    %1161 = vector.load %arg19[%c20_563, %c0_564, %c0_565] : memref<32x32x8xf32, #tpu.memory_space<vmem>>, vector<1x32x8xf32>
    %1162 = vector.shape_cast %1161 : vector<1x32x8xf32> to vector<32x8xf32>
    %1163 = vector.broadcast %1160 : vector<1x8xf32> to vector<32x8xf32>
    %1164 = arith.mulf %1163, %1162 : vector<32x8xf32>
    %1165 = arith.addf %1159, %1164 : vector<32x8xf32>
    %1166 = vector.extract_strided_slice %1040 {offsets = [21, 0], sizes = [1, 8], strides = [1, 1]} : vector<32x8xf32> to vector<1x8xf32>
    %c21_566 = arith.constant 21 : index
    %c0_567 = arith.constant 0 : index
    %c0_568 = arith.constant 0 : index
    %1167 = vector.load %arg19[%c21_566, %c0_567, %c0_568] : memref<32x32x8xf32, #tpu.memory_space<vmem>>, vector<1x32x8xf32>
    %1168 = vector.shape_cast %1167 : vector<1x32x8xf32> to vector<32x8xf32>
    %1169 = vector.broadcast %1166 : vector<1x8xf32> to vector<32x8xf32>
    %1170 = arith.mulf %1169, %1168 : vector<32x8xf32>
    %1171 = arith.addf %1165, %1170 : vector<32x8xf32>
    %1172 = vector.extract_strided_slice %1040 {offsets = [22, 0], sizes = [1, 8], strides = [1, 1]} : vector<32x8xf32> to vector<1x8xf32>
    %c22_569 = arith.constant 22 : index
    %c0_570 = arith.constant 0 : index
    %c0_571 = arith.constant 0 : index
    %1173 = vector.load %arg19[%c22_569, %c0_570, %c0_571] : memref<32x32x8xf32, #tpu.memory_space<vmem>>, vector<1x32x8xf32>
    %1174 = vector.shape_cast %1173 : vector<1x32x8xf32> to vector<32x8xf32>
    %1175 = vector.broadcast %1172 : vector<1x8xf32> to vector<32x8xf32>
    %1176 = arith.mulf %1175, %1174 : vector<32x8xf32>
    %1177 = arith.addf %1171, %1176 : vector<32x8xf32>
    %1178 = vector.extract_strided_slice %1040 {offsets = [23, 0], sizes = [1, 8], strides = [1, 1]} : vector<32x8xf32> to vector<1x8xf32>
    %c23_572 = arith.constant 23 : index
    %c0_573 = arith.constant 0 : index
    %c0_574 = arith.constant 0 : index
    %1179 = vector.load %arg19[%c23_572, %c0_573, %c0_574] : memref<32x32x8xf32, #tpu.memory_space<vmem>>, vector<1x32x8xf32>
    %1180 = vector.shape_cast %1179 : vector<1x32x8xf32> to vector<32x8xf32>
    %1181 = vector.broadcast %1178 : vector<1x8xf32> to vector<32x8xf32>
    %1182 = arith.mulf %1181, %1180 : vector<32x8xf32>
    %1183 = arith.addf %1177, %1182 : vector<32x8xf32>
    %1184 = vector.extract_strided_slice %1040 {offsets = [24, 0], sizes = [1, 8], strides = [1, 1]} : vector<32x8xf32> to vector<1x8xf32>
    %c24_575 = arith.constant 24 : index
    %c0_576 = arith.constant 0 : index
    %c0_577 = arith.constant 0 : index
    %1185 = vector.load %arg19[%c24_575, %c0_576, %c0_577] : memref<32x32x8xf32, #tpu.memory_space<vmem>>, vector<1x32x8xf32>
    %1186 = vector.shape_cast %1185 : vector<1x32x8xf32> to vector<32x8xf32>
    %1187 = vector.broadcast %1184 : vector<1x8xf32> to vector<32x8xf32>
    %1188 = arith.mulf %1187, %1186 : vector<32x8xf32>
    %1189 = arith.addf %1183, %1188 : vector<32x8xf32>
    %1190 = vector.extract_strided_slice %1040 {offsets = [25, 0], sizes = [1, 8], strides = [1, 1]} : vector<32x8xf32> to vector<1x8xf32>
    %c25_578 = arith.constant 25 : index
    %c0_579 = arith.constant 0 : index
    %c0_580 = arith.constant 0 : index
    %1191 = vector.load %arg19[%c25_578, %c0_579, %c0_580] : memref<32x32x8xf32, #tpu.memory_space<vmem>>, vector<1x32x8xf32>
    %1192 = vector.shape_cast %1191 : vector<1x32x8xf32> to vector<32x8xf32>
    %1193 = vector.broadcast %1190 : vector<1x8xf32> to vector<32x8xf32>
    %1194 = arith.mulf %1193, %1192 : vector<32x8xf32>
    %1195 = arith.addf %1189, %1194 : vector<32x8xf32>
    %1196 = vector.extract_strided_slice %1040 {offsets = [26, 0], sizes = [1, 8], strides = [1, 1]} : vector<32x8xf32> to vector<1x8xf32>
    %c26_581 = arith.constant 26 : index
    %c0_582 = arith.constant 0 : index
    %c0_583 = arith.constant 0 : index
    %1197 = vector.load %arg19[%c26_581, %c0_582, %c0_583] : memref<32x32x8xf32, #tpu.memory_space<vmem>>, vector<1x32x8xf32>
    %1198 = vector.shape_cast %1197 : vector<1x32x8xf32> to vector<32x8xf32>
    %1199 = vector.broadcast %1196 : vector<1x8xf32> to vector<32x8xf32>
    %1200 = arith.mulf %1199, %1198 : vector<32x8xf32>
    %1201 = arith.addf %1195, %1200 : vector<32x8xf32>
    %1202 = vector.extract_strided_slice %1040 {offsets = [27, 0], sizes = [1, 8], strides = [1, 1]} : vector<32x8xf32> to vector<1x8xf32>
    %c27_584 = arith.constant 27 : index
    %c0_585 = arith.constant 0 : index
    %c0_586 = arith.constant 0 : index
    %1203 = vector.load %arg19[%c27_584, %c0_585, %c0_586] : memref<32x32x8xf32, #tpu.memory_space<vmem>>, vector<1x32x8xf32>
    %1204 = vector.shape_cast %1203 : vector<1x32x8xf32> to vector<32x8xf32>
    %1205 = vector.broadcast %1202 : vector<1x8xf32> to vector<32x8xf32>
    %1206 = arith.mulf %1205, %1204 : vector<32x8xf32>
    %1207 = arith.addf %1201, %1206 : vector<32x8xf32>
    %1208 = vector.extract_strided_slice %1040 {offsets = [28, 0], sizes = [1, 8], strides = [1, 1]} : vector<32x8xf32> to vector<1x8xf32>
    %c28_587 = arith.constant 28 : index
    %c0_588 = arith.constant 0 : index
    %c0_589 = arith.constant 0 : index
    %1209 = vector.load %arg19[%c28_587, %c0_588, %c0_589] : memref<32x32x8xf32, #tpu.memory_space<vmem>>, vector<1x32x8xf32>
    %1210 = vector.shape_cast %1209 : vector<1x32x8xf32> to vector<32x8xf32>
    %1211 = vector.broadcast %1208 : vector<1x8xf32> to vector<32x8xf32>
    %1212 = arith.mulf %1211, %1210 : vector<32x8xf32>
    %1213 = arith.addf %1207, %1212 : vector<32x8xf32>
    %1214 = vector.extract_strided_slice %1040 {offsets = [29, 0], sizes = [1, 8], strides = [1, 1]} : vector<32x8xf32> to vector<1x8xf32>
    %c29_590 = arith.constant 29 : index
    %c0_591 = arith.constant 0 : index
    %c0_592 = arith.constant 0 : index
    %1215 = vector.load %arg19[%c29_590, %c0_591, %c0_592] : memref<32x32x8xf32, #tpu.memory_space<vmem>>, vector<1x32x8xf32>
    %1216 = vector.shape_cast %1215 : vector<1x32x8xf32> to vector<32x8xf32>
    %1217 = vector.broadcast %1214 : vector<1x8xf32> to vector<32x8xf32>
    %1218 = arith.mulf %1217, %1216 : vector<32x8xf32>
    %1219 = arith.addf %1213, %1218 : vector<32x8xf32>
    %1220 = vector.extract_strided_slice %1040 {offsets = [30, 0], sizes = [1, 8], strides = [1, 1]} : vector<32x8xf32> to vector<1x8xf32>
    %c30_593 = arith.constant 30 : index
    %c0_594 = arith.constant 0 : index
    %c0_595 = arith.constant 0 : index
    %1221 = vector.load %arg19[%c30_593, %c0_594, %c0_595] : memref<32x32x8xf32, #tpu.memory_space<vmem>>, vector<1x32x8xf32>
    %1222 = vector.shape_cast %1221 : vector<1x32x8xf32> to vector<32x8xf32>
    %1223 = vector.broadcast %1220 : vector<1x8xf32> to vector<32x8xf32>
    %1224 = arith.mulf %1223, %1222 : vector<32x8xf32>
    %1225 = arith.addf %1219, %1224 : vector<32x8xf32>
    %1226 = vector.extract_strided_slice %1040 {offsets = [31, 0], sizes = [1, 8], strides = [1, 1]} : vector<32x8xf32> to vector<1x8xf32>
    %c31_596 = arith.constant 31 : index
    %c0_597 = arith.constant 0 : index
    %c0_598 = arith.constant 0 : index
    %1227 = vector.load %arg19[%c31_596, %c0_597, %c0_598] : memref<32x32x8xf32, #tpu.memory_space<vmem>>, vector<1x32x8xf32>
    %1228 = vector.shape_cast %1227 : vector<1x32x8xf32> to vector<32x8xf32>
    %1229 = vector.broadcast %1226 : vector<1x8xf32> to vector<32x8xf32>
    %1230 = arith.mulf %1229, %1228 : vector<32x8xf32>
    %1231 = arith.addf %1225, %1230 : vector<32x8xf32>
    %c0_599 = arith.constant 0 : index
    %c0_600 = arith.constant 0 : index
    %1232 = vector.load %arg15[%c0_599, %c0_600] : memref<8x16xf32, #tpu.memory_space<vmem>>, vector<8x16xf32>
    %cst_601 = arith.constant dense<0.000000e+00> : vector<32x16xf32>
    %1233 = tpu.matmul %1231, %1232, %cst_601 {dimension_numbers = #tpu.dot_dimension_numbers<[1], [0], [0], [1], [0, 0, 1, 1], [], []>} : vector<32x8xf32>, vector<8x16xf32>, vector<32x16xf32> -> vector<32x16xf32>
    %c0_602 = arith.constant 0 : index
    %c0_603 = arith.constant 0 : index
    %1234 = vector.load %arg20[%c0_602, %c0_603] : memref<32x32xf32, #tpu.memory_space<vmem>>, vector<32x32xf32>
    %cst_604 = arith.constant dense<0.000000e+00> : vector<32x16xf32>
    %1235 = tpu.matmul %1234, %1038, %cst_604 {dimension_numbers = #tpu.dot_dimension_numbers<[1], [0], [0], [1], [0, 0, 1, 1], [], []>} : vector<32x32xf32>, vector<32x16xf32>, vector<32x16xf32> -> vector<32x16xf32>
    %c0_605 = arith.constant 0 : index
    %c0_606 = arith.constant 0 : index
    %1236 = vector.load %arg21[%c0_605, %c0_606] : memref<32x1xf32, #tpu.memory_space<vmem>>, vector<32x1xf32>
    %1237 = vector.broadcast %1236 : vector<32x1xf32> to vector<32x16xf32>
    %1238 = arith.addf %1235, %1237 : vector<32x16xf32>
    %1239 = arith.addf %1233, %1238 : vector<32x16xf32>
    %c0_607 = arith.constant 0 : index
    %c0_608 = arith.constant 0 : index
    %1240 = vector.load %arg22[%c0_607, %c0_608] : memref<8x32xf32, #tpu.memory_space<vmem>>, vector<8x32xf32>
    %cst_609 = arith.constant dense<0.000000e+00> : vector<8x16xf32>
    %1241 = tpu.matmul %1240, %1239, %cst_609 {dimension_numbers = #tpu.dot_dimension_numbers<[1], [0], [0], [1], [0, 0, 1, 1], [], []>} : vector<8x32xf32>, vector<32x16xf32>, vector<8x16xf32> -> vector<8x16xf32>
    %c0_610 = arith.constant 0 : index
    %c0_611 = arith.constant 0 : index
    %1242 = vector.load %arg23[%c0_610, %c0_611] : memref<8x1xf32, #tpu.memory_space<vmem>>, vector<8x1xf32>
    %1243 = vector.broadcast %1242 : vector<8x1xf32> to vector<8x16xf32>
    %1244 = arith.addf %1241, %1243 : vector<8x16xf32>
    %cst_612 = arith.constant 5.000000e-01 : f32
    %1245 = vector.broadcast %cst_612 : f32 to vector<8x16xf32>
    %1246 = arith.mulf %1245, %1244 : vector<8x16xf32>
    %cst_613 = arith.constant 4.471500e-02 : f32
    %1247 = vector.broadcast %cst_613 : f32 to vector<8x16xf32>
    %1248 = arith.mulf %1247, %1244 : vector<8x16xf32>
    %1249 = arith.mulf %1248, %1244 : vector<8x16xf32>
    %1250 = arith.mulf %1249, %1244 : vector<8x16xf32>
    %1251 = arith.addf %1244, %1250 : vector<8x16xf32>
    %cst_614 = arith.constant 0.797884583 : f32
    %1252 = vector.broadcast %cst_614 : f32 to vector<8x16xf32>
    %1253 = arith.mulf %1252, %1251 : vector<8x16xf32>
    %1254 = math.tanh %1253 : vector<8x16xf32>
    %cst_615 = arith.constant 1.000000e+00 : f32
    %1255 = vector.broadcast %cst_615 : f32 to vector<8x16xf32>
    %1256 = arith.addf %1255, %1254 : vector<8x16xf32>
    %1257 = arith.mulf %1246, %1256 : vector<8x16xf32>
    %c0_616 = arith.constant 0 : index
    %c0_617 = arith.constant 0 : index
    %1258 = vector.load %arg24[%c0_616, %c0_617] : memref<1x8xf32, #tpu.memory_space<vmem>>, vector<1x8xf32>
    %cst_618 = arith.constant dense<0.000000e+00> : vector<1x16xf32>
    %1259 = tpu.matmul %1258, %1257, %cst_618 {dimension_numbers = #tpu.dot_dimension_numbers<[1], [0], [0], [1], [0, 0, 1, 1], [], []>} : vector<1x8xf32>, vector<8x16xf32>, vector<1x16xf32> -> vector<1x16xf32>
    %c0_619 = arith.constant 0 : index
    %c0_620 = arith.constant 0 : index
    %1260 = vector.load %arg25[%c0_619, %c0_620] : memref<1x1xf32, #tpu.memory_space<vmem>>, vector<1x1xf32>
    %1261 = vector.broadcast %1260 : vector<1x1xf32> to vector<1x16xf32>
    %1262 = arith.addf %1259, %1261 : vector<1x16xf32>
    %c0_621 = arith.constant 0 : index
    %c0_622 = arith.constant 0 : index
    %c0_623 = arith.constant 0 : index
    %1263 = vector.load %arg26[%c0_621, %c0_622, %c0_623] : memref<1x1x16xf32, #tpu.memory_space<vmem>>, vector<1x1x16xf32>
    %1264 = vector.shape_cast %1263 : vector<1x1x16xf32> to vector<1x16xf32>
    %1265 = vector.shape_cast %1262 : vector<1x16xf32> to vector<1x1x16xf32>
    tpu.vector_store %arg26[%c0_621, %c0_622, %c0_623], %1265 {strides = array<i32>} : memref<1x1x16xf32, #tpu.memory_space<vmem>>, vector<1x1x16xf32>,
    return
  }
  func.func @transform_0(%arg0: i32) -> (i32, i32, i32) {
    %c0_i32 = arith.constant 0 : i32
    %c0_i32_0 = arith.constant 0 : i32
    %c0_i32_1 = arith.constant 0 : i32
    return %arg0, %c0_i32, %c0_i32_0 : i32, i32, i32
  }
  func.func @transform_1(%arg0: i32) -> (i32, i32) {
    %c0_i32 = arith.constant 0 : i32
    %c0_i32_0 = arith.constant 0 : i32
    %c0_i32_1 = arith.constant 0 : i32
    return %c0_i32, %c0_i32_0 : i32, i32
  }
  func.func @transform_2(%arg0: i32) -> (i32, i32) {
    %c0_i32 = arith.constant 0 : i32
    %c0_i32_0 = arith.constant 0 : i32
    %c0_i32_1 = arith.constant 0 : i32
    return %c0_i32, %c0_i32_0 : i32, i32
  }
  func.func @transform_3(%arg0: i32) -> (i32, i32) {
    %c0_i32 = arith.constant 0 : i32
    %c0_i32_0 = arith.constant 0 : i32
    %c0_i32_1 = arith.constant 0 : i32
    return %c0_i32, %c0_i32_0 : i32, i32
  }
  func.func @transform_4(%arg0: i32) -> (i32, i32) {
    %c0_i32 = arith.constant 0 : i32
    %c0_i32_0 = arith.constant 0 : i32
    %c0_i32_1 = arith.constant 0 : i32
    return %c0_i32, %c0_i32_0 : i32, i32
  }
  func.func @transform_5(%arg0: i32) -> (i32, i32, i32) {
    %c0_i32 = arith.constant 0 : i32
    %c0_i32_0 = arith.constant 0 : i32
    %c0_i32_1 = arith.constant 0 : i32
    %c0_i32_2 = arith.constant 0 : i32
    return %c0_i32, %c0_i32_0, %c0_i32_1 : i32, i32, i32
  }
  func.func @transform_6(%arg0: i32) -> (i32, i32, i32) {
    %c0_i32 = arith.constant 0 : i32
    %c0_i32_0 = arith.constant 0 : i32
    %c0_i32_1 = arith.constant 0 : i32
    %c0_i32_2 = arith.constant 0 : i32
    return %c0_i32, %c0_i32_0, %c0_i32_1 : i32, i32, i32
  }
  func.func @transform_7(%arg0: i32) -> (i32, i32) {
    %c0_i32 = arith.constant 0 : i32
    %c0_i32_0 = arith.constant 0 : i32
    %c0_i32_1 = arith.constant 0 : i32
    return %c0_i32, %c0_i32_0 : i32, i32
  }
  func.func @transform_8(%arg0: i32) -> (i32, i32) {
    %c0_i32 = arith.constant 0 : i32
    %c0_i32_0 = arith.constant 0 : i32
    %c0_i32_1 = arith.constant 0 : i32
    return %c0_i32, %c0_i32_0 : i32, i32
  }
  func.func @transform_9(%arg0: i32) -> (i32, i32, i32) {
    %c0_i32 = arith.constant 0 : i32
    %c0_i32_0 = arith.constant 0 : i32
    %c0_i32_1 = arith.constant 0 : i32
    %c0_i32_2 = arith.constant 0 : i32
    return %c0_i32, %c0_i32_0, %c0_i32_1 : i32, i32, i32
  }
  func.func @transform_10(%arg0: i32) -> (i32, i32, i32) {
    %c0_i32 = arith.constant 0 : i32
    %c0_i32_0 = arith.constant 0 : i32
    %c0_i32_1 = arith.constant 0 : i32
    %c0_i32_2 = arith.constant 0 : i32
    return %c0_i32, %c0_i32_0, %c0_i32_1 : i32, i32, i32
  }
  func.func @transform_11(%arg0: i32) -> (i32, i32) {
    %c0_i32 = arith.constant 0 : i32
    %c0_i32_0 = arith.constant 0 : i32
    %c0_i32_1 = arith.constant 0 : i32
    return %c0_i32, %c0_i32_0 : i32, i32
  }
  func.func @transform_12(%arg0: i32) -> (i32, i32) {
    %c0_i32 = arith.constant 0 : i32
    %c0_i32_0 = arith.constant 0 : i32
    %c0_i32_1 = arith.constant 0 : i32
    return %c0_i32, %c0_i32_0 : i32, i32
  }
  func.func @transform_13(%arg0: i32) -> (i32, i32) {
    %c0_i32 = arith.constant 0 : i32
    %c0_i32_0 = arith.constant 0 : i32
    %c0_i32_1 = arith.constant 0 : i32
    return %c0_i32, %c0_i32_0 : i32, i32
  }
  func.func @transform_14(%arg0: i32) -> (i32, i32) {
    %c0_i32 = arith.constant 0 : i32
    %c0_i32_0 = arith.constant 0 : i32
    %c0_i32_1 = arith.constant 0 : i32
    return %c0_i32, %c0_i32_0 : i32, i32
  }
  func.func @transform_15(%arg0: i32) -> (i32, i32, i32) {
    %c0_i32 = arith.constant 0 : i32
    %c0_i32_0 = arith.constant 0 : i32
    %c0_i32_1 = arith.constant 0 : i32
    %c0_i32_2 = arith.constant 0 : i32
    return %c0_i32, %c0_i32_0, %c0_i32_1 : i32, i32, i32
  }
  func.func @transform_16(%arg0: i32) -> (i32, i32) {
    %c0_i32 = arith.constant 0 : i32
    %c0_i32_0 = arith.constant 0 : i32
    %c0_i32_1 = arith.constant 0 : i32
    return %c0_i32, %c0_i32_0 : i32, i32
  }
  func.func @transform_17(%arg0: i32) -> (i32, i32) {
    %c0_i32 = arith.constant 0 : i32
    %c0_i32_0 = arith.constant 0 : i32
    %c0_i32_1 = arith.constant 0 : i32
    return %c0_i32, %c0_i32_0 : i32, i32
  }
  func.func @transform_18(%arg0: i32) -> (i32, i32, i32) {
    %c0_i32 = arith.constant 0 : i32
    %c0_i32_0 = arith.constant 0 : i32
    %c0_i32_1 = arith.constant 0 : i32
    %c0_i32_2 = arith.constant 0 : i32
    return %c0_i32, %c0_i32_0, %c0_i32_1 : i32, i32, i32
  }
  func.func @transform_19(%arg0: i32) -> (i32, i32) {
    %c0_i32 = arith.constant 0 : i32
    %c0_i32_0 = arith.constant 0 : i32
    %c0_i32_1 = arith.constant 0 : i32
    return %c0_i32, %c0_i32_0 : i32, i32
  }
  func.func @transform_20(%arg0: i32) -> (i32, i32) {
    %c0_i32 = arith.constant 0 : i32
    %c0_i32_0 = arith.constant 0 : i32
    %c0_i32_1 = arith.constant 0 : i32
    return %c0_i32, %c0_i32_0 : i32, i32
  }
  func.func @transform_21(%arg0: i32) -> (i32, i32) {
    %c0_i32 = arith.constant 0 : i32
    %c0_i32_0 = arith.constant 0 : i32
    %c0_i32_1 = arith.constant 0 : i32
    return %c0_i32, %c0_i32_0 : i32, i32
  }
  func.func @transform_22(%arg0: i32) -> (i32, i32) {
    %c0_i32 = arith.constant 0 : i32
    %c0_i32_0 = arith.constant 0 : i32
    %c0_i32_1 = arith.constant 0 : i32
    return %c0_i32, %c0_i32_0 : i32, i32
  }
  func.func @transform_23(%arg0: i32) -> (i32, i32) {
    %c0_i32 = arith.constant 0 : i32
    %c0_i32_0 = arith.constant 0 : i32
    %c0_i32_1 = arith.constant 0 : i32
    return %c0_i32, %c0_i32_0 : i32, i32
  }
  func.func @transform_24(%arg0: i32) -> (i32, i32) {
    %c0_i32 = arith.constant 0 : i32
    %c0_i32_0 = arith.constant 0 : i32
    %c0_i32_1 = arith.constant 0 : i32
    return %c0_i32, %c0_i32_0 : i32, i32
  }
  func.func @transform_25(%arg0: i32) -> (i32, i32, i32) {
    %c0_i32 = arith.constant 0 : i32
    %c0_i32_0 = arith.constant 0 : i32
    %c0_i32_1 = arith.constant 0 : i32
    return %arg0, %c0_i32, %c0_i32_0 : i32, i32, i32
  }
}

</mosaic_0001>

<llo_original>
// kernel: tpu_custom_call.1
$region0: #{tpu_custom_call.1}
  #allocation0 [shape = 'u32[]', space=smem, size = 0x4, offset = 0x4, fixed_abs, tag = 'smem constant byte address 0x4 - core index']
  #allocation1 [shape = 'u32[144,128]{1,0:T(1,128)}', space=vmem, size = 0x12000, scoped, tag = 'internal scratch']
  #allocation2 [shape = 'f32[1,1]{1,0:T(1,128)S(1)}', space=vmem, size = 0x200, scoped, tag = 'scoped memory for tpu_custom_call.1']
  %s0 = inlined_call_operand.vmem [shape: f32[2,7,16], index: 0, kind: input, shape index: {}]
  %s1 = inlined_call_operand.vmem [shape: f32[32,7], index: 1, kind: input, shape index: {}]
  %s2 = inlined_call_operand.vmem [shape: f32[32,1], index: 2, kind: input, shape index: {}]
  %s3 = inlined_call_operand.vmem [shape: f32[16,8], index: 3, kind: input, shape index: {}]
  %s4 = inlined_call_operand.vmem [shape: f32[8,16], index: 4, kind: input, shape index: {}]
  %s5 = inlined_call_operand.vmem [shape: f32[32,32,8], index: 5, kind: input, shape index: {}]
  %s6 = inlined_call_operand.vmem [shape: f32[32,32,8], index: 6, kind: input, shape index: {}]
  %s7 = inlined_call_operand.vmem [shape: f32[32,32], index: 7, kind: input, shape index: {}]
  %s8 = inlined_call_operand.vmem [shape: f32[32,1], index: 8, kind: input, shape index: {}]
  %s9 = inlined_call_operand.vmem [shape: f32[32,32,8], index: 9, kind: input, shape index: {}]
  %s10 = inlined_call_operand.vmem [shape: f32[32,32,8], index: 10, kind: input, shape index: {}]
  %s11 = inlined_call_operand.vmem [shape: f32[32,32], index: 11, kind: input, shape index: {}]
  %s12 = inlined_call_operand.vmem [shape: f32[32,1], index: 12, kind: input, shape index: {}]
  %s13 = inlined_call_operand.vmem [shape: f32[16,8], index: 13, kind: input, shape index: {}]
  %s14 = inlined_call_operand.vmem [shape: f32[8,16], index: 14, kind: input, shape index: {}]
  %s15 = inlined_call_operand.vmem [shape: f32[32,32,8], index: 15, kind: input, shape index: {}]
  %s16 = inlined_call_operand.vmem [shape: f32[32,32], index: 16, kind: input, shape index: {}]
  %s17 = inlined_call_operand.vmem [shape: f32[32,1], index: 17, kind: input, shape index: {}]
  %s18 = inlined_call_operand.vmem [shape: f32[32,32,8], index: 18, kind: input, shape index: {}]
  %s19 = inlined_call_operand.vmem [shape: f32[32,32], index: 19, kind: input, shape index: {}]
  %s20 = inlined_call_operand.vmem [shape: f32[32,1], index: 20, kind: input, shape index: {}]
  %s21 = inlined_call_operand.vmem [shape: f32[8,32], index: 21, kind: input, shape index: {}]
  %s22 = inlined_call_operand.vmem [shape: f32[8,1], index: 22, kind: input, shape index: {}]
  %s23 = inlined_call_operand.vmem [shape: f32[1,8], index: 23, kind: input, shape index: {}]
  %s24 = inlined_call_operand.<no memory space> [shape: f32[1,1], index: 24, kind: input, shape index: {}]
  %s25 = inlined_call_operand.hbm [shape: f32[2,1,16], index: 25, kind: output, shape index: {}]
  %s26 = sld [smem:[#allocation0]]
  $region133: #{tpu_custom_call.1} parent=0
    _
  %s28 = ssub.s32 1, %s26
  %s29 = scalar_select 0, %s28, %s26
  %v30 = vstv %s24
  %31 = vst [vmem:[#allocation2] sm:$0x1] %v30
  $region1: #{tpu_custom_call.1} parent=0
    #allocation3 [shape = 'u8[1024]{0}', space=vmem, size = 0x400, scoped, tag = 'output window, operand 0']
    #allocation4 [shape = 's32[2]{0}', space=sflag, size = 0x8, scoped, tag = 'scoped memory for tpu_custom_call.1']
    %32 = vsyncpa [#allocation4], 0
    %s33 = scalar_lea.sflag [#allocation4], 1
    %34 = vsyncpa %s33, 0
    loop: start=0, step=1, limit=4
    $region2: #{tpu_custom_call.1} parent=1 // loop_pre_header
      _
    $region3: #{tpu_custom_call.1} parent=1 // loop_header
      %s36 = sphi 0, %s40
      %p37 = scmp.ge.s32.totalorder %s36, 4
      %s46 = sphi 0, %s48
      %s49 = sphi 0, %s46
      %s50 = sphi 0, %s49
      %s66 = sphi 0, %s50
      %s70 = sphi 0, %s70
      %s72 = sphi 0, %s70
      %s73 = sphi 0, %s72
      %s87 = sphi 0, %s73
      %s91 = sphi 0, %s91
      %s93 = sphi 0, %s91
      %s94 = sphi 0, %s93
      %s108 = sphi 0, %s94
      %s112 = sphi 0, %s112
      %s114 = sphi 0, %s112
      %s115 = sphi 0, %s114
      %s129 = sphi 0, %s115
      %s133 = sphi 0, %s133
      %s135 = sphi 0, %s133
      %s136 = sphi 0, %s135
      %s150 = sphi 0, %s136
      %s154 = sphi 0, %s154
      %s156 = sphi 0, %s154
      %s157 = sphi 0, %s156
      %s171 = sphi 0, %s157
      %s175 = sphi 0, %s175
      %s177 = sphi 0, %s175
      %s178 = sphi 0, %s177
      %s192 = sphi 0, %s178
      %s196 = sphi 0, %s196
      %s198 = sphi 0, %s196
      %s199 = sphi 0, %s198
      %s213 = sphi 0, %s199
      %s217 = sphi 0, %s217
      %s219 = sphi 0, %s217
      %s220 = sphi 0, %s219
      %s234 = sphi 0, %s220
      %s238 = sphi 0, %s238
      %s240 = sphi 0, %s238
      %s241 = sphi 0, %s240
      %s255 = sphi 0, %s241
      %s259 = sphi 0, %s259
      %s261 = sphi 0, %s259
      %s262 = sphi 0, %s261
      %s276 = sphi 0, %s262
      %s280 = sphi 0, %s280
      %s282 = sphi 0, %s280
      %s283 = sphi 0, %s282
      %s297 = sphi 0, %s283
      %s301 = sphi 0, %s301
      %s303 = sphi 0, %s301
      %s304 = sphi 0, %s303
      %s318 = sphi 0, %s304
      %s322 = sphi 0, %s322
      %s324 = sphi 0, %s322
      %s325 = sphi 0, %s324
      %s339 = sphi 0, %s325
      %s343 = sphi 0, %s343
      %s345 = sphi 0, %s343
      %s346 = sphi 0, %s345
      %s360 = sphi 0, %s346
      %s364 = sphi 0, %s364
      %s366 = sphi 0, %s364
      %s367 = sphi 0, %s366
      %s381 = sphi 0, %s367
      %s385 = sphi 0, %s385
      %s387 = sphi 0, %s385
      %s388 = sphi 0, %s387
      %s402 = sphi 0, %s388
      %s406 = sphi 0, %s406
      %s408 = sphi 0, %s406
      %s409 = sphi 0, %s408
      %s423 = sphi 0, %s409
      %s427 = sphi 0, %s427
      %s429 = sphi 0, %s427
      %s430 = sphi 0, %s429
      %s444 = sphi 0, %s430
      %s448 = sphi 0, %s448
      %s450 = sphi 0, %s448
      %s451 = sphi 0, %s450
      %s465 = sphi 0, %s451
      %s469 = sphi 0, %s469
      %s471 = sphi 0, %s469
      %s472 = sphi 0, %s471
      %s486 = sphi 0, %s472
      %s490 = sphi 0, %s490
      %s492 = sphi 0, %s490
      %s493 = sphi 0, %s492
      %s507 = sphi 0, %s493
      %s511 = sphi 0, %s511
      %s513 = sphi 0, %s511
      %s514 = sphi 0, %s513
      %s528 = sphi 0, %s514
      %s532 = sphi 0, %s532
      %s534 = sphi 0, %s532
      %s535 = sphi 0, %s534
      %s549 = sphi 0, %s535
      %s553 = sphi 0, %s553
      %s555 = sphi 0, %s553
      %s556 = sphi 0, %s555
      %s570 = sphi 0, %s556
      %s576 = sphi 0, %s578
      %s579 = sphi 0, %s576
      %s580 = sphi 0, %s579
      %s596 = sphi 0, %s580
    $region4: #{tpu_custom_call.1} parent=1 // loop_header_branch
      %39 = sbr.rel (%p37) target = $region8
    $region5: #{tpu_custom_call.1} parent=1 // loop_body
      %s41 = ssub.s32 %s36, 1
      %s42 = ssub.s32 %s36, 2
      %s43 = sadd.s32 %s36, 1
      %s44 = ssub.s32 %s36, %s43
      %p45 = scmp.eq.s32.totalorder %s44, 0
      %s47 = sadd.s32 %s46, 1
      %s48 = scalar_select %p45, %s46, %s47
      %p51 = pneg %p45
      %p52 = scmp.eq.s32.totalorder %s36, 1
      %p53 = por %p51, %p52
      %p54 = scmp.ne.s32.totalorder %s46, %s49
      %p55 = scmp.eq.s32.totalorder %s36, 0
      %p56 = por %p54, %p55
      %p57 = scmp.ne.s32.totalorder %s46, %s49
      %p58 = scmp.eq.s32.totalorder %s41, 1
      %p59 = por %p57, %p58
      %p60 = scmp.ne.s32.totalorder %s49, %s50
      %p61 = scmp.eq.s32.totalorder %s41, 0
      %p62 = por %p60, %p61
      %p63 = scmp.ne.s32.totalorder %s49, %s50
      %p64 = scmp.eq.s32.totalorder %s42, 1
      %p65 = por %p63, %p64
      %p67 = scmp.ne.s32.totalorder %s50, %s66
      %p68 = scmp.eq.s32.totalorder %s42, 0
      %p69 = por %p67, %p68
      %s71 = sadd.s32 %s70, 1
      %p74 = scmp.eq.s32.totalorder %s36, 1
      %p75 = scmp.ne.s32.totalorder %s70, %s72
      %p76 = scmp.eq.s32.totalorder %s36, 0
      %p77 = por %p75, %p76
      %p78 = scmp.ne.s32.totalorder %s70, %s72
      %p79 = scmp.eq.s32.totalorder %s41, 1
      %p80 = por %p78, %p79
      %p81 = scmp.ne.s32.totalorder %s72, %s73
      %p82 = scmp.eq.s32.totalorder %s41, 0
      %p83 = por %p81, %p82
      %p84 = scmp.ne.s32.totalorder %s72, %s73
      %p85 = scmp.eq.s32.totalorder %s42, 1
      %p86 = por %p84, %p85
      %p88 = scmp.ne.s32.totalorder %s73, %s87
      %p89 = scmp.eq.s32.totalorder %s42, 0
      %p90 = por %p88, %p89
      %s92 = sadd.s32 %s91, 1
      %p95 = scmp.eq.s32.totalorder %s36, 1
      %p96 = scmp.ne.s32.totalorder %s91, %s93
      %p97 = scmp.eq.s32.totalorder %s36, 0
      %p98 = por %p96, %p97
      %p99 = scmp.ne.s32.totalorder %s91, %s93
      %p100 = scmp.eq.s32.totalorder %s41, 1
      %p101 = por %p99, %p100
      %p102 = scmp.ne.s32.totalorder %s93, %s94
      %p103 = scmp.eq.s32.totalorder %s41, 0
      %p104 = por %p102, %p103
      %p105 = scmp.ne.s32.totalorder %s93, %s94
      %p106 = scmp.eq.s32.totalorder %s42, 1
      %p107 = por %p105, %p106
      %p109 = scmp.ne.s32.totalorder %s94, %s108
      %p110 = scmp.eq.s32.totalorder %s42, 0
      %p111 = por %p109, %p110
      %s113 = sadd.s32 %s112, 1
      %p116 = scmp.eq.s32.totalorder %s36, 1
      %p117 = scmp.ne.s32.totalorder %s112, %s114
      %p118 = scmp.eq.s32.totalorder %s36, 0
      %p119 = por %p117, %p118
      %p120 = scmp.ne.s32.totalorder %s112, %s114
      %p121 = scmp.eq.s32.totalorder %s41, 1
      %p122 = por %p120, %p121
      %p123 = scmp.ne.s32.totalorder %s114, %s115
      %p124 = scmp.eq.s32.totalorder %s41, 0
      %p125 = por %p123, %p124
      %p126 = scmp.ne.s32.totalorder %s114, %s115
      %p127 = scmp.eq.s32.totalorder %s42, 1
      %p128 = por %p126, %p127
      %p130 = scmp.ne.s32.totalorder %s115, %s129
      %p131 = scmp.eq.s32.totalorder %s42, 0
      %p132 = por %p130, %p131
      %s134 = sadd.s32 %s133, 1
      %p137 = scmp.eq.s32.totalorder %s36, 1
      %p138 = scmp.ne.s32.totalorder %s133, %s135
      %p139 = scmp.eq.s32.totalorder %s36, 0
      %p140 = por %p138, %p139
      %p141 = scmp.ne.s32.totalorder %s133, %s135
      %p142 = scmp.eq.s32.totalorder %s41, 1
      %p143 = por %p141, %p142
      %p144 = scmp.ne.s32.totalorder %s135, %s136
      %p145 = scmp.eq.s32.totalorder %s41, 0
      %p146 = por %p144, %p145
      %p147 = scmp.ne.s32.totalorder %s135, %s136
      %p148 = scmp.eq.s32.totalorder %s42, 1
      %p149 = por %p147, %p148
      %p151 = scmp.ne.s32.totalorder %s136, %s150
      %p152 = scmp.eq.s32.totalorder %s42, 0
      %p153 = por %p151, %p152
      %s155 = sadd.s32 %s154, 1
      %p158 = scmp.eq.s32.totalorder %s36, 1
      %p159 = scmp.ne.s32.totalorder %s154, %s156
      %p160 = scmp.eq.s32.totalorder %s36, 0
      %p161 = por %p159, %p160
      %p162 = scmp.ne.s32.totalorder %s154, %s156
      %p163 = scmp.eq.s32.totalorder %s41, 1
      %p164 = por %p162, %p163
      %p165 = scmp.ne.s32.totalorder %s156, %s157
      %p166 = scmp.eq.s32.totalorder %s41, 0
      %p167 = por %p165, %p166
      %p168 = scmp.ne.s32.totalorder %s156, %s157
      %p169 = scmp.eq.s32.totalorder %s42, 1
      %p170 = por %p168, %p169
      %p172 = scmp.ne.s32.totalorder %s157, %s171
      %p173 = scmp.eq.s32.totalorder %s42, 0
      %p174 = por %p172, %p173
      %s176 = sadd.s32 %s175, 1
      %p179 = scmp.eq.s32.totalorder %s36, 1
      %p180 = scmp.ne.s32.totalorder %s175, %s177
      %p181 = scmp.eq.s32.totalorder %s36, 0
      %p182 = por %p180, %p181
      %p183 = scmp.ne.s32.totalorder %s175, %s177
      %p184 = scmp.eq.s32.totalorder %s41, 1
      %p185 = por %p183, %p184
      %p186 = scmp.ne.s32.totalorder %s177, %s178
      %p187 = scmp.eq.s32.totalorder %s41, 0
      %p188 = por %p186, %p187
      %p189 = scmp.ne.s32.totalorder %s177, %s178
      %p190 = scmp.eq.s32.totalorder %s42, 1
      %p191 = por %p189, %p190
      %p193 = scmp.ne.s32.totalorder %s178, %s192
      %p194 = scmp.eq.s32.totalorder %s42, 0
      %p195 = por %p193, %p194
      %s197 = sadd.s32 %s196, 1
      %p200 = scmp.eq.s32.totalorder %s36, 1
      %p201 = scmp.ne.s32.totalorder %s196, %s198
      %p202 = scmp.eq.s32.totalorder %s36, 0
      %p203 = por %p201, %p202
      %p204 = scmp.ne.s32.totalorder %s196, %s198
      %p205 = scmp.eq.s32.totalorder %s41, 1
      %p206 = por %p204, %p205
      %p207 = scmp.ne.s32.totalorder %s198, %s199
      %p208 = scmp.eq.s32.totalorder %s41, 0
      %p209 = por %p207, %p208
      %p210 = scmp.ne.s32.totalorder %s198, %s199
      %p211 = scmp.eq.s32.totalorder %s42, 1
      %p212 = por %p210, %p211
      %p214 = scmp.ne.s32.totalorder %s199, %s213
      %p215 = scmp.eq.s32.totalorder %s42, 0
      %p216 = por %p214, %p215
      %s218 = sadd.s32 %s217, 1
      %p221 = scmp.eq.s32.totalorder %s36, 1
      %p222 = scmp.ne.s32.totalorder %s217, %s219
      %p223 = scmp.eq.s32.totalorder %s36, 0
      %p224 = por %p222, %p223
      %p225 = scmp.ne.s32.totalorder %s217, %s219
      %p226 = scmp.eq.s32.totalorder %s41, 1
      %p227 = por %p225, %p226
      %p228 = scmp.ne.s32.totalorder %s219, %s220
      %p229 = scmp.eq.s32.totalorder %s41, 0
      %p230 = por %p228, %p229
      %p231 = scmp.ne.s32.totalorder %s219, %s220
      %p232 = scmp.eq.s32.totalorder %s42, 1
      %p233 = por %p231, %p232
      %p235 = scmp.ne.s32.totalorder %s220, %s234
      %p236 = scmp.eq.s32.totalorder %s42, 0
      %p237 = por %p235, %p236
      %s239 = sadd.s32 %s238, 1
      %p242 = scmp.eq.s32.totalorder %s36, 1
      %p243 = scmp.ne.s32.totalorder %s238, %s240
      %p244 = scmp.eq.s32.totalorder %s36, 0
      %p245 = por %p243, %p244
      %p246 = scmp.ne.s32.totalorder %s238, %s240
      %p247 = scmp.eq.s32.totalorder %s41, 1
      %p248 = por %p246, %p247
      %p249 = scmp.ne.s32.totalorder %s240, %s241
      %p250 = scmp.eq.s32.totalorder %s41, 0
      %p251 = por %p249, %p250
      %p252 = scmp.ne.s32.totalorder %s240, %s241
      %p253 = scmp.eq.s32.totalorder %s42, 1
      %p254 = por %p252, %p253
      %p256 = scmp.ne.s32.totalorder %s241, %s255
      %p257 = scmp.eq.s32.totalorder %s42, 0
      %p258 = por %p256, %p257
      %s260 = sadd.s32 %s259, 1
      %p263 = scmp.eq.s32.totalorder %s36, 1
      %p264 = scmp.ne.s32.totalorder %s259, %s261
      %p265 = scmp.eq.s32.totalorder %s36, 0
      %p266 = por %p264, %p265
      %p267 = scmp.ne.s32.totalorder %s259, %s261
      %p268 = scmp.eq.s32.totalorder %s41, 1
      %p269 = por %p267, %p268
      %p270 = scmp.ne.s32.totalorder %s261, %s262
      %p271 = scmp.eq.s32.totalorder %s41, 0
      %p272 = por %p270, %p271
      %p273 = scmp.ne.s32.totalorder %s261, %s262
      %p274 = scmp.eq.s32.totalorder %s42, 1
      %p275 = por %p273, %p274
      %p277 = scmp.ne.s32.totalorder %s262, %s276
      %p278 = scmp.eq.s32.totalorder %s42, 0
      %p279 = por %p277, %p278
      %s281 = sadd.s32 %s280, 1
      %p284 = scmp.eq.s32.totalorder %s36, 1
      %p285 = scmp.ne.s32.totalorder %s280, %s282
      %p286 = scmp.eq.s32.totalorder %s36, 0
      %p287 = por %p285, %p286
      %p288 = scmp.ne.s32.totalorder %s280, %s282
      %p289 = scmp.eq.s32.totalorder %s41, 1
      %p290 = por %p288, %p289
      %p291 = scmp.ne.s32.totalorder %s282, %s283
      %p292 = scmp.eq.s32.totalorder %s41, 0
      %p293 = por %p291, %p292
      %p294 = scmp.ne.s32.totalorder %s282, %s283
      %p295 = scmp.eq.s32.totalorder %s42, 1
      %p296 = por %p294, %p295
      %p298 = scmp.ne.s32.totalorder %s283, %s297
      %p299 = scmp.eq.s32.totalorder %s42, 0
      %p300 = por %p298, %p299
      %s302 = sadd.s32 %s301, 1
      %p305 = scmp.eq.s32.totalorder %s36, 1
      %p306 = scmp.ne.s32.totalorder %s301, %s303
      %p307 = scmp.eq.s32.totalorder %s36, 0
      %p308 = por %p306, %p307
      %p309 = scmp.ne.s32.totalorder %s301, %s303
      %p310 = scmp.eq.s32.totalorder %s41, 1
      %p311 = por %p309, %p310
      %p312 = scmp.ne.s32.totalorder %s303, %s304
      %p313 = scmp.eq.s32.totalorder %s41, 0
      %p314 = por %p312, %p313
      %p315 = scmp.ne.s32.totalorder %s303, %s304
      %p316 = scmp.eq.s32.totalorder %s42, 1
      %p317 = por %p315, %p316
      %p319 = scmp.ne.s32.totalorder %s304, %s318
      %p320 = scmp.eq.s32.totalorder %s42, 0
      %p321 = por %p319, %p320
      %s323 = sadd.s32 %s322, 1
      %p326 = scmp.eq.s32.totalorder %s36, 1
      %p327 = scmp.ne.s32.totalorder %s322, %s324
      %p328 = scmp.eq.s32.totalorder %s36, 0
      %p329 = por %p327, %p328
      %p330 = scmp.ne.s32.totalorder %s322, %s324
      %p331 = scmp.eq.s32.totalorder %s41, 1
      %p332 = por %p330, %p331
      %p333 = scmp.ne.s32.totalorder %s324, %s325
      %p334 = scmp.eq.s32.totalorder %s41, 0
      %p335 = por %p333, %p334
      %p336 = scmp.ne.s32.totalorder %s324, %s325
      %p337 = scmp.eq.s32.totalorder %s42, 1
      %p338 = por %p336, %p337
      %p340 = scmp.ne.s32.totalorder %s325, %s339
      %p341 = scmp.eq.s32.totalorder %s42, 0
      %p342 = por %p340, %p341
      %s344 = sadd.s32 %s343, 1
      %p347 = scmp.eq.s32.totalorder %s36, 1
      %p348 = scmp.ne.s32.totalorder %s343, %s345
      %p349 = scmp.eq.s32.totalorder %s36, 0
      %p350 = por %p348, %p349
      %p351 = scmp.ne.s32.totalorder %s343, %s345
      %p352 = scmp.eq.s32.totalorder %s41, 1
      %p353 = por %p351, %p352
      %p354 = scmp.ne.s32.totalorder %s345, %s346
      %p355 = scmp.eq.s32.totalorder %s41, 0
      %p356 = por %p354, %p355
      %p357 = scmp.ne.s32.totalorder %s345, %s346
      %p358 = scmp.eq.s32.totalorder %s42, 1
      %p359 = por %p357, %p358
      %p361 = scmp.ne.s32.totalorder %s346, %s360
      %p362 = scmp.eq.s32.totalorder %s42, 0
      %p363 = por %p361, %p362
      %s365 = sadd.s32 %s364, 1
      %p368 = scmp.eq.s32.totalorder %s36, 1
      %p369 = scmp.ne.s32.totalorder %s364, %s366
      %p370 = scmp.eq.s32.totalorder %s36, 0
      %p371 = por %p369, %p370
      %p372 = scmp.ne.s32.totalorder %s364, %s366
      %p373 = scmp.eq.s32.totalorder %s41, 1
      %p374 = por %p372, %p373
      %p375 = scmp.ne.s32.totalorder %s366, %s367
      %p376 = scmp.eq.s32.totalorder %s41, 0
      %p377 = por %p375, %p376
      %p378 = scmp.ne.s32.totalorder %s366, %s367
      %p379 = scmp.eq.s32.totalorder %s42, 1
      %p380 = por %p378, %p379
      %p382 = scmp.ne.s32.totalorder %s367, %s381
      %p383 = scmp.eq.s32.totalorder %s42, 0
      %p384 = por %p382, %p383
      %s386 = sadd.s32 %s385, 1
      %p389 = scmp.eq.s32.totalorder %s36, 1
      %p390 = scmp.ne.s32.totalorder %s385, %s387
      %p391 = scmp.eq.s32.totalorder %s36, 0
      %p392 = por %p390, %p391
      %p393 = scmp.ne.s32.totalorder %s385, %s387
      %p394 = scmp.eq.s32.totalorder %s41, 1
      %p395 = por %p393, %p394
      %p396 = scmp.ne.s32.totalorder %s387, %s388
      %p397 = scmp.eq.s32.totalorder %s41, 0
      %p398 = por %p396, %p397
      %p399 = scmp.ne.s32.totalorder %s387, %s388
      %p400 = scmp.eq.s32.totalorder %s42, 1
      %p401 = por %p399, %p400
      %p403 = scmp.ne.s32.totalorder %s388, %s402
      %p404 = scmp.eq.s32.totalorder %s42, 0
      %p405 = por %p403, %p404
      %s407 = sadd.s32 %s406, 1
      %p410 = scmp.eq.s32.totalorder %s36, 1
      %p411 = scmp.ne.s32.totalorder %s406, %s408
      %p412 = scmp.eq.s32.totalorder %s36, 0
      %p413 = por %p411, %p412
      %p414 = scmp.ne.s32.totalorder %s406, %s408
      %p415 = scmp.eq.s32.totalorder %s41, 1
      %p416 = por %p414, %p415
      %p417 = scmp.ne.s32.totalorder %s408, %s409
      %p418 = scmp.eq.s32.totalorder %s41, 0
      %p419 = por %p417, %p418
      %p420 = scmp.ne.s32.totalorder %s408, %s409
      %p421 = scmp.eq.s32.totalorder %s42, 1
      %p422 = por %p420, %p421
      %p424 = scmp.ne.s32.totalorder %s409, %s423
      %p425 = scmp.eq.s32.totalorder %s42, 0
      %p426 = por %p424, %p425
      %s428 = sadd.s32 %s427, 1
      %p431 = scmp.eq.s32.totalorder %s36, 1
      %p432 = scmp.ne.s32.totalorder %s427, %s429
      %p433 = scmp.eq.s32.totalorder %s36, 0
      %p434 = por %p432, %p433
      %p435 = scmp.ne.s32.totalorder %s427, %s429
      %p436 = scmp.eq.s32.totalorder %s41, 1
      %p437 = por %p435, %p436
      %p438 = scmp.ne.s32.totalorder %s429, %s430
      %p439 = scmp.eq.s32.totalorder %s41, 0
      %p440 = por %p438, %p439
      %p441 = scmp.ne.s32.totalorder %s429, %s430
      %p442 = scmp.eq.s32.totalorder %s42, 1
      %p443 = por %p441, %p442
      %p445 = scmp.ne.s32.totalorder %s430, %s444
      %p446 = scmp.eq.s32.totalorder %s42, 0
      %p447 = por %p445, %p446
      %s449 = sadd.s32 %s448, 1
      %p452 = scmp.eq.s32.totalorder %s36, 1
      %p453 = scmp.ne.s32.totalorder %s448, %s450
      %p454 = scmp.eq.s32.totalorder %s36, 0
      %p455 = por %p453, %p454
      %p456 = scmp.ne.s32.totalorder %s448, %s450
      %p457 = scmp.eq.s32.totalorder %s41, 1
      %p458 = por %p456, %p457
      %p459 = scmp.ne.s32.totalorder %s450, %s451
      %p460 = scmp.eq.s32.totalorder %s41, 0
      %p461 = por %p459, %p460
      %p462 = scmp.ne.s32.totalorder %s450, %s451
      %p463 = scmp.eq.s32.totalorder %s42, 1
      %p464 = por %p462, %p463
      %p466 = scmp.ne.s32.totalorder %s451, %s465
      %p467 = scmp.eq.s32.totalorder %s42, 0
      %p468 = por %p466, %p467
      %s470 = sadd.s32 %s469, 1
      %p473 = scmp.eq.s32.totalorder %s36, 1
      %p474 = scmp.ne.s32.totalorder %s469, %s471
      %p475 = scmp.eq.s32.totalorder %s36, 0
      %p476 = por %p474, %p475
      %p477 = scmp.ne.s32.totalorder %s469, %s471
      %p478 = scmp.eq.s32.totalorder %s41, 1
      %p479 = por %p477, %p478
      %p480 = scmp.ne.s32.totalorder %s471, %s472
      %p481 = scmp.eq.s32.totalorder %s41, 0
      %p482 = por %p480, %p481
      %p483 = scmp.ne.s32.totalorder %s471, %s472
      %p484 = scmp.eq.s32.totalorder %s42, 1
      %p485 = por %p483, %p484
      %p487 = scmp.ne.s32.totalorder %s472, %s486
      %p488 = scmp.eq.s32.totalorder %s42, 0
      %p489 = por %p487, %p488
      %s491 = sadd.s32 %s490, 1
      %p494 = scmp.eq.s32.totalorder %s36, 1
      %p495 = scmp.ne.s32.totalorder %s490, %s492
      %p496 = scmp.eq.s32.totalorder %s36, 0
      %p497 = por %p495, %p496
      %p498 = scmp.ne.s32.totalorder %s490, %s492
      %p499 = scmp.eq.s32.totalorder %s41, 1
      %p500 = por %p498, %p499
      %p501 = scmp.ne.s32.totalorder %s492, %s493
      %p502 = scmp.eq.s32.totalorder %s41, 0
      %p503 = por %p501, %p502
      %p504 = scmp.ne.s32.totalorder %s492, %s493
      %p505 = scmp.eq.s32.totalorder %s42, 1
      %p506 = por %p504, %p505
      %p508 = scmp.ne.s32.totalorder %s493, %s507
      %p509 = scmp.eq.s32.totalorder %s42, 0
      %p510 = por %p508, %p509
      %s512 = sadd.s32 %s511, 1
      %p515 = scmp.eq.s32.totalorder %s36, 1
      %p516 = scmp.ne.s32.totalorder %s511, %s513
      %p517 = scmp.eq.s32.totalorder %s36, 0
      %p518 = por %p516, %p517
      %p519 = scmp.ne.s32.totalorder %s511, %s513
      %p520 = scmp.eq.s32.totalorder %s41, 1
      %p521 = por %p519, %p520
      %p522 = scmp.ne.s32.totalorder %s513, %s514
      %p523 = scmp.eq.s32.totalorder %s41, 0
      %p524 = por %p522, %p523
      %p525 = scmp.ne.s32.totalorder %s513, %s514
      %p526 = scmp.eq.s32.totalorder %s42, 1
      %p527 = por %p525, %p526
      %p529 = scmp.ne.s32.totalorder %s514, %s528
      %p530 = scmp.eq.s32.totalorder %s42, 0
      %p531 = por %p529, %p530
      %s533 = sadd.s32 %s532, 1
      %p536 = scmp.eq.s32.totalorder %s36, 1
      %p537 = scmp.ne.s32.totalorder %s532, %s534
      %p538 = scmp.eq.s32.totalorder %s36, 0
      %p539 = por %p537, %p538
      %p540 = scmp.ne.s32.totalorder %s532, %s534
      %p541 = scmp.eq.s32.totalorder %s41, 1
      %p542 = por %p540, %p541
      %p543 = scmp.ne.s32.totalorder %s534, %s535
      %p544 = scmp.eq.s32.totalorder %s41, 0
      %p545 = por %p543, %p544
      %p546 = scmp.ne.s32.totalorder %s534, %s535
      %p547 = scmp.eq.s32.totalorder %s42, 1
      %p548 = por %p546, %p547
      %p550 = scmp.ne.s32.totalorder %s535, %s549
      %p551 = scmp.eq.s32.totalorder %s42, 0
      %p552 = por %p550, %p551
      %s554 = sadd.s32 %s553, 1
      %p557 = scmp.eq.s32.totalorder %s36, 1
      %p558 = scmp.ne.s32.totalorder %s553, %s555
      %p559 = scmp.eq.s32.totalorder %s36, 0
      %p560 = por %p558, %p559
      %p561 = scmp.ne.s32.totalorder %s553, %s555
      %p562 = scmp.eq.s32.totalorder %s41, 1
      %p563 = por %p561, %p562
      %p564 = scmp.ne.s32.totalorder %s555, %s556
      %p565 = scmp.eq.s32.totalorder %s41, 0
      %p566 = por %p564, %p565
      %p567 = scmp.ne.s32.totalorder %s555, %s556
      %p568 = scmp.eq.s32.totalorder %s42, 1
      %p569 = por %p567, %p568
      %p571 = scmp.ne.s32.totalorder %s556, %s570
      %p572 = scmp.eq.s32.totalorder %s42, 0
      %p573 = por %p571, %p572
      %s574 = ssub.s32 %s36, %s43
      %p575 = scmp.eq.s32.totalorder %s574, 0
      %s577 = sadd.s32 %s576, 1
      %s578 = scalar_select %p575, %s576, %s577
      %p581 = pneg %p575
      %p582 = scmp.eq.s32.totalorder %s36, 1
      %p583 = por %p581, %p582
      %p584 = scmp.ne.s32.totalorder %s576, %s579
      %p585 = scmp.eq.s32.totalorder %s36, 0
      %p586 = por %p584, %p585
      %p587 = scmp.ne.s32.totalorder %s576, %s579
      %p588 = scmp.eq.s32.totalorder %s41, 1
      %p589 = por %p587, %p588
      %p590 = scmp.ne.s32.totalorder %s579, %s580
      %p591 = scmp.eq.s32.totalorder %s41, 0
      %p592 = por %p590, %p591
      %p593 = scmp.ne.s32.totalorder %s579, %s580
      %p594 = scmp.eq.s32.totalorder %s42, 1
      %p595 = por %p593, %p594
      %p597 = scmp.ne.s32.totalorder %s580, %s596
      %p598 = scmp.eq.s32.totalorder %s42, 0
      %p599 = por %p597, %p598
      %p600 = scmp.le.s32.totalorder 1, %s36
      %p601 = scmp.lt.s32.totalorder %s36, 3
      %p602 = pnand %p600, %p601
      %p603 = pneg %p602
      // Predicated region
      $region9: #{tpu_custom_call.1} parent=5 // pred_check
        _
      $region10: #{tpu_custom_call.1} parent=5 // pred_check_branch
        %605 = sbr.rel (%p602) target = $region12
      $region11: #{tpu_custom_call.1} parent=5 // pred_region
        %s606 = ssub.s32 %s36, 1
        // Predicated region
        $region13: #{tpu_custom_call.1} parent=11 // pred_check
          %p607 = pneg %p83
        $region14: #{tpu_custom_call.1} parent=11 // pred_check_branch
          %609 = sbr.rel (%p607) target = $region16
        $region15: #{tpu_custom_call.1} parent=11 // pred_region
          _
        $region16: #{tpu_custom_call.1} parent=11 // pred_fallthru
          _
        // Predicated region
        $region17: #{tpu_custom_call.1} parent=11 // pred_check
          %p610 = pneg %p104
        $region18: #{tpu_custom_call.1} parent=11 // pred_check_branch
          %612 = sbr.rel (%p610) target = $region20
        $region19: #{tpu_custom_call.1} parent=11 // pred_region
          _
        $region20: #{tpu_custom_call.1} parent=11 // pred_fallthru
          _
        // Predicated region
        $region21: #{tpu_custom_call.1} parent=11 // pred_check
          %p613 = pneg %p125
        $region22: #{tpu_custom_call.1} parent=11 // pred_check_branch
          %615 = sbr.rel (%p613) target = $region24
        $region23: #{tpu_custom_call.1} parent=11 // pred_region
          _
        $region24: #{tpu_custom_call.1} parent=11 // pred_fallthru
          _
        // Predicated region
        $region25: #{tpu_custom_call.1} parent=11 // pred_check
          %p616 = pneg %p146
        $region26: #{tpu_custom_call.1} parent=11 // pred_check_branch
          %618 = sbr.rel (%p616) target = $region28
        $region27: #{tpu_custom_call.1} parent=11 // pred_region
          _
        $region28: #{tpu_custom_call.1} parent=11 // pred_fallthru
          _
        // Predicated region
        $region29: #{tpu_custom_call.1} parent=11 // pred_check
          %p619 = pneg %p167
        $region30: #{tpu_custom_call.1} parent=11 // pred_check_branch
          %621 = sbr.rel (%p619) target = $region32
        $region31: #{tpu_custom_call.1} parent=11 // pred_region
          _
        $region32: #{tpu_custom_call.1} parent=11 // pred_fallthru
          _
        // Predicated region
        $region33: #{tpu_custom_call.1} parent=11 // pred_check
          %p622 = pneg %p188
        $region34: #{tpu_custom_call.1} parent=11 // pred_check_branch
          %624 = sbr.rel (%p622) target = $region36
        $region35: #{tpu_custom_call.1} parent=11 // pred_region
          _
        $region36: #{tpu_custom_call.1} parent=11 // pred_fallthru
          _
        // Predicated region
        $region37: #{tpu_custom_call.1} parent=11 // pred_check
          %p625 = pneg %p209
        $region38: #{tpu_custom_call.1} parent=11 // pred_check_branch
          %627 = sbr.rel (%p625) target = $region40
        $region39: #{tpu_custom_call.1} parent=11 // pred_region
          _
        $region40: #{tpu_custom_call.1} parent=11 // pred_fallthru
          _
        // Predicated region
        $region41: #{tpu_custom_call.1} parent=11 // pred_check
          %p628 = pneg %p230
        $region42: #{tpu_custom_call.1} parent=11 // pred_check_branch
          %630 = sbr.rel (%p628) target = $region44
        $region43: #{tpu_custom_call.1} parent=11 // pred_region
          _
        $region44: #{tpu_custom_call.1} parent=11 // pred_fallthru
          _
        // Predicated region
        $region45: #{tpu_custom_call.1} parent=11 // pred_check
          %p631 = pneg %p251
        $region46: #{tpu_custom_call.1} parent=11 // pred_check_branch
          %633 = sbr.rel (%p631) target = $region48
        $region47: #{tpu_custom_call.1} parent=11 // pred_region
          _
        $region48: #{tpu_custom_call.1} parent=11 // pred_fallthru
          _
        // Predicated region
        $region49: #{tpu_custom_call.1} parent=11 // pred_check
          %p634 = pneg %p272
        $region50: #{tpu_custom_call.1} parent=11 // pred_check_branch
          %636 = sbr.rel (%p634) target = $region52
        $region51: #{tpu_custom_call.1} parent=11 // pred_region
          _
        $region52: #{tpu_custom_call.1} parent=11 // pred_fallthru
          _
        // Predicated region
        $region53: #{tpu_custom_call.1} parent=11 // pred_check
          %p637 = pneg %p293
        $region54: #{tpu_custom_call.1} parent=11 // pred_check_branch
          %639 = sbr.rel (%p637) target = $region56
        $region55: #{tpu_custom_call.1} parent=11 // pred_region
          _
        $region56: #{tpu_custom_call.1} parent=11 // pred_fallthru
          _
        // Predicated region
        $region57: #{tpu_custom_call.1} parent=11 // pred_check
          %p640 = pneg %p314
        $region58: #{tpu_custom_call.1} parent=11 // pred_check_branch
          %642 = sbr.rel (%p640) target = $region60
        $region59: #{tpu_custom_call.1} parent=11 // pred_region
          _
        $region60: #{tpu_custom_call.1} parent=11 // pred_fallthru
          _
        // Predicated region
        $region61: #{tpu_custom_call.1} parent=11 // pred_check
          %p643 = pneg %p335
        $region62: #{tpu_custom_call.1} parent=11 // pred_check_branch
          %645 = sbr.rel (%p643) target = $region64
        $region63: #{tpu_custom_call.1} parent=11 // pred_region
          _
        $region64: #{tpu_custom_call.1} parent=11 // pred_fallthru
          _
        // Predicated region
        $region65: #{tpu_custom_call.1} parent=11 // pred_check
          %p646 = pneg %p356
        $region66: #{tpu_custom_call.1} parent=11 // pred_check_branch
          %648 = sbr.rel (%p646) target = $region68
        $region67: #{tpu_custom_call.1} parent=11 // pred_region
          _
        $region68: #{tpu_custom_call.1} parent=11 // pred_fallthru
          _
        // Predicated region
        $region69: #{tpu_custom_call.1} parent=11 // pred_check
          %p649 = pneg %p377
        $region70: #{tpu_custom_call.1} parent=11 // pred_check_branch
          %651 = sbr.rel (%p649) target = $region72
        $region71: #{tpu_custom_call.1} parent=11 // pred_region
          _
        $region72: #{tpu_custom_call.1} parent=11 // pred_fallthru
          _
        // Predicated region
        $region73: #{tpu_custom_call.1} parent=11 // pred_check
          %p652 = pneg %p398
        $region74: #{tpu_custom_call.1} parent=11 // pred_check_branch
          %654 = sbr.rel (%p652) target = $region76
        $region75: #{tpu_custom_call.1} parent=11 // pred_region
          _
        $region76: #{tpu_custom_call.1} parent=11 // pred_fallthru
          _
        // Predicated region
        $region77: #{tpu_custom_call.1} parent=11 // pred_check
          %p655 = pneg %p419
        $region78: #{tpu_custom_call.1} parent=11 // pred_check_branch
          %657 = sbr.rel (%p655) target = $region80
        $region79: #{tpu_custom_call.1} parent=11 // pred_region
          _
        $region80: #{tpu_custom_call.1} parent=11 // pred_fallthru
          _
        // Predicated region
        $region81: #{tpu_custom_call.1} parent=11 // pred_check
          %p658 = pneg %p440
        $region82: #{tpu_custom_call.1} parent=11 // pred_check_branch
          %660 = sbr.rel (%p658) target = $region84
        $region83: #{tpu_custom_call.1} parent=11 // pred_region
          _
        $region84: #{tpu_custom_call.1} parent=11 // pred_fallthru
          _
        // Predicated region
        $region85: #{tpu_custom_call.1} parent=11 // pred_check
          %p661 = pneg %p461
        $region86: #{tpu_custom_call.1} parent=11 // pred_check_branch
          %663 = sbr.rel (%p661) target = $region88
        $region87: #{tpu_custom_call.1} parent=11 // pred_region
          _
        $region88: #{tpu_custom_call.1} parent=11 // pred_fallthru
          _
        // Predicated region
        $region89: #{tpu_custom_call.1} parent=11 // pred_check
          %p664 = pneg %p482
        $region90: #{tpu_custom_call.1} parent=11 // pred_check_branch
          %666 = sbr.rel (%p664) target = $region92
        $region91: #{tpu_custom_call.1} parent=11 // pred_region
          _
        $region92: #{tpu_custom_call.1} parent=11 // pred_fallthru
          _
        // Predicated region
        $region93: #{tpu_custom_call.1} parent=11 // pred_check
          %p667 = pneg %p503
        $region94: #{tpu_custom_call.1} parent=11 // pred_check_branch
          %669 = sbr.rel (%p667) target = $region96
        $region95: #{tpu_custom_call.1} parent=11 // pred_region
          _
        $region96: #{tpu_custom_call.1} parent=11 // pred_fallthru
          _
        // Predicated region
        $region97: #{tpu_custom_call.1} parent=11 // pred_check
          %p670 = pneg %p524
        $region98: #{tpu_custom_call.1} parent=11 // pred_check_branch
          %672 = sbr.rel (%p670) target = $region100
        $region99: #{tpu_custom_call.1} parent=11 // pred_region
          _
        $region100: #{tpu_custom_call.1} parent=11 // pred_fallthru
          _
        // Predicated region
        $region101: #{tpu_custom_call.1} parent=11 // pred_check
          %p673 = pneg %p545
        $region102: #{tpu_custom_call.1} parent=11 // pred_check_branch
          %675 = sbr.rel (%p673) target = $region104
        $region103: #{tpu_custom_call.1} parent=11 // pred_region
          _
        $region104: #{tpu_custom_call.1} parent=11 // pred_fallthru
          _
        // Predicated region
        $region105: #{tpu_custom_call.1} parent=11 // pred_check
          %p676 = pneg %p566
        $region106: #{tpu_custom_call.1} parent=11 // pred_check_branch
          %678 = sbr.rel (%p676) target = $region108
        $region107: #{tpu_custom_call.1} parent=11 // pred_region
          _
        $region108: #{tpu_custom_call.1} parent=11 // pred_fallthru
          _
      $region12: #{tpu_custom_call.1} parent=5 // pred_fallthru
        _
      %p679 = scmp.lt.s32.totalorder %s36, 2
      // Predicated region
      $region109: #{tpu_custom_call.1} parent=5 // pred_check
        %p680 = pneg %p679
      $region110: #{tpu_custom_call.1} parent=5 // pred_check_branch
        %682 = sbr.rel (%p680) target = $region112
      $region111: #{tpu_custom_call.1} parent=5 // pred_region
        // Predicated region
        $region113: #{tpu_custom_call.1} parent=111 // pred_check
          %p683 = pneg %p56
        $region114: #{tpu_custom_call.1} parent=111 // pred_check_branch
          %685 = sbr.rel (%p683) target = $region116
        $region115: #{tpu_custom_call.1} parent=111 // pred_region
          %p686 = scmp.lt.s32.totalorder %s36, 1
          %s687 = scalar_select %p686, %s36, 1
          %s688 = smul.addr %s687, 8
          %s689 = scalar_lea.vmem %s0, %s688
        $region116: #{tpu_custom_call.1} parent=111 // pred_fallthru
          _
      $region112: #{tpu_custom_call.1} parent=5 // pred_fallthru
        _
      %p690 = scmp.le.s32.totalorder 1, %s36
      %p691 = scmp.lt.s32.totalorder %s36, 3
      %p692 = pnand %p690, %p691
      %p693 = pneg %p692
      // Predicated region
      $region117: #{tpu_custom_call.1} parent=5 // pred_check
        _
      $region118: #{tpu_custom_call.1} parent=5 // pred_check_branch
        %695 = sbr.rel (%p692) target = $region120
      $region119: #{tpu_custom_call.1} parent=5 // pred_region
        %s696 = ssub.s32 %s36, 1
        %p697 = scmp.lt.s32.totalorder %s41, 1
        %s698 = scalar_select %p697, %s41, 1
        %s699 = smul.addr %s698, 8
        %s700 = scalar_lea.vmem %s0, %s699
        %p701 = pneg %p62
        %p702 = pneg %p59
        %p703 = pneg %p83
        %p704 = pneg %p80
        %p705 = pneg %p104
        %p706 = pneg %p101
        %p707 = pneg %p125
        %p708 = pneg %p122
        %p709 = pneg %p146
        %p710 = pneg %p143
        %p711 = pneg %p167
        %p712 = pneg %p164
        %p713 = pneg %p188
        %p714 = pneg %p185
        %p715 = pneg %p209
        %p716 = pneg %p206
        %p717 = pneg %p230
        %p718 = pneg %p227
        %p719 = pneg %p251
        %p720 = pneg %p248
        %p721 = pneg %p272
        %p722 = pneg %p269
        %p723 = pneg %p293
        %p724 = pneg %p290
        %p725 = pneg %p314
        %p726 = pneg %p311
        %p727 = pneg %p335
        %p728 = pneg %p332
        %p729 = pneg %p356
        %p730 = pneg %p353
        %p731 = pneg %p377
        %p732 = pneg %p374
        %p733 = pneg %p398
        %p734 = pneg %p395
        %p735 = pneg %p419
        %p736 = pneg %p416
        %p737 = pneg %p440
        %p738 = pneg %p437
        %p739 = pneg %p461
        %p740 = pneg %p458
        %p741 = pneg %p482
        %p742 = pneg %p479
        %p743 = pneg %p503
        %p744 = pneg %p500
        %p745 = pneg %p524
        %p746 = pneg %p521
        %p747 = pneg %p545
        %p748 = pneg %p542
        %p749 = pneg %p566
        %p750 = pneg %p563
        %p751 = pneg %p592
        %p752 = pneg %p589
        %s753 = sand.u32 %s579, 1
        %s754 = scalar_lea.sflag [#allocation4], %s753
        %s755 = sand.u32 %s579, 1
        %s756 = scalar_lea.vmem [#allocation3], %s755
        %p757 = scmp.lt.s32.totalorder %s41, 1
        %s758 = scalar_select %p757, %s41, 1
        %s759 = smul.addr %s758, 8
        %s760 = scalar_lea.vmem %s0, %s759
        %v761 = vld [vmem:[%s760] sm:$0x7f]
        %v762 = vld [vmem:[%s1] sm:$0xff]
        %v763 = vld [vmem:[%s1 + $0x8] sm:$0xff]
        %v764 = vld [vmem:[%s1 + $0x10] sm:$0xff]
        %v765 = vld [vmem:[%s1 + $0x18] sm:$0xff]
        %v766 = vld [vmem:[%s2] sm:$0xff]
        %v767 = vld [vmem:[%s2 + $0x8] sm:$0xff]
        %v768 = vld [vmem:[%s2 + $0x10] sm:$0xff]
        %v769 = vld [vmem:[%s2 + $0x18] sm:$0xff]
        %771 = vset.pattern.permute.xlu0 0
        %772 = vperm.xlu0 %771, %v766
        %v773 = vpop.permute.xlu0 %772
        %776 = vset.pattern.permute.xlu0 0
        %777 = vperm.xlu0 %776, %v767
        %v778 = vpop.permute.xlu0 %777
        %781 = vset.pattern.permute.xlu0 0
        %782 = vperm.xlu0 %781, %v768
        %v783 = vpop.permute.xlu0 %782
        %786 = vset.pattern.permute.xlu0 0
        %787 = vperm.xlu0 %786, %v769
        %v788 = vpop.permute.xlu0 %787
        %vm790 = vcmask 56320
        %v792 = vsel %vm790, %v762, 0
        %v795 = vsel %vm790, %v763, 0
        %v798 = vsel %vm790, %v764, 0
        %v801 = vsel %vm790, %v765, 0
        %vm803 = vcmask 1046528
        %v805 = vsel %vm803, %v761, 0
        %807 = vmatprep.subr.mxu0 0.0
        %808 = vmatpush1.msra.mxu0 %v805
        %809 = vmatprep.subr.mxu0 0.0
        %810 = vmatpush1.msra.mxu0 0.0
        %811 = vmatprep.subr.mxu0 0.0
        %812 = vmatpush1.msra.mxu0 0.0
        %813 = vmatprep.subr.mxu0 0.0
        %814 = vmatpush1.msra.mxu0 0.0
        %815 = vmatprep.subr.mxu0 0.0
        %816 = vmatpush1.msra.mxu0 0.0
        %817 = vmatprep.subr.mxu0 0.0
        %818 = vmatpush1.msra.mxu0 0.0
        %819 = vmatprep.subr.mxu0 0.0
        %820 = vmatpush1.msra.mxu0 0.0
        %821 = vmatprep.subr.mxu0 0.0
        %822 = vmatpush1.msra.mxu0 0.0
        %823 = vmatprep.subr.mxu0 0.0
        %824 = vmatpush1.msra.mxu0 0.0
        %825 = vmatprep.subr.mxu0 0.0
        %826 = vmatpush1.msra.mxu0 0.0
        %827 = vmatprep.subr.mxu0 0.0
        %828 = vmatpush1.msra.mxu0 0.0
        %829 = vmatprep.subr.mxu0 0.0
        %830 = vmatpush1.msra.mxu0 0.0
        %831 = vmatprep.subr.mxu0 0.0
        %832 = vmatpush1.msra.mxu0 0.0
        %833 = vmatprep.subr.mxu0 0.0
        %834 = vmatpush1.msra.mxu0 0.0
        %835 = vmatprep.subr.mxu0 0.0
        %836 = vmatpush1.msra.mxu0 0.0
        %837 = vmatprep.subr.mxu0 0.0
        %838 = vmatpush1.msra.mxu0 0.0
        %839 = vmatprep.subr.mxu0 0.0
        %840 = vmatpush1.msra.mxu0 0.0
        %841 = vmatprep.subr.mxu0 0.0
        %842 = vmatpush1.msra.mxu0 0.0
        %843 = vmatprep.subr.mxu0 0.0
        %844 = vmatpush1.msra.mxu0 0.0
        %845 = vmatprep.subr.mxu0 0.0
        %846 = vmatpush1.msra.mxu0 0.0
        %847 = vmatprep.subr.mxu0 0.0
        %848 = vmatpush1.msra.mxu0 0.0
        %849 = vmatprep.subr.mxu0 0.0
        %850 = vmatpush1.msra.mxu0 0.0
        %851 = vmatprep.subr.mxu0 0.0
        %852 = vmatpush1.msra.mxu0 0.0
        %853 = vmatprep.subr.mxu0 0.0
        %854 = vmatpush1.msra.mxu0 0.0
        %855 = vmatprep.subr.mxu0 0.0
        %856 = vmatpush1.msra.mxu0 0.0
        %857 = vmatprep.subr.mxu0 0.0
        %858 = vmatpush1.msra.mxu0 0.0
        %859 = vmatprep.subr.mxu0 0.0
        %860 = vmatpush1.msra.mxu0 0.0
        %861 = vmatprep.subr.mxu0 0.0
        %862 = vmatpush1.msra.mxu0 0.0
        %863 = vmatprep.subr.mxu0 0.0
        %864 = vmatpush1.msra.mxu0 0.0
        %865 = vmatprep.subr.mxu0 0.0
        %866 = vmatpush1.msra.mxu0 0.0
        %867 = vmatprep.subr.mxu0 0.0
        %868 = vmatpush1.msra.mxu0 0.0
        %869 = vmatprep.subr.mxu0 0.0
        %870 = vmatpush1.msra.mxu0 0.0
        %871 = vmatprep.mubr.f32.mxu0 0.0
        %872 = vmatmul.mubr.f32.gmra.mrb[0].mxu0 %v792
        %v873 = vpop.f32.mrb[0].mxu0
        %v874 = vadd.f32 %v773, %v873
        %v875 = vpop.f32.mrb[0].mxu0
        %876 = vmatprep.mubr.f32.mxu0 0.0
        %877 = vmatmul.mubr.f32.gmra.mrb[0].mxu0 %v795
        %v878 = vpop.f32.mrb[0].mxu0
        %v879 = vadd.f32 %v778, %v878
        %v880 = vpop.f32.mrb[0].mxu0
        %881 = vmatprep.mubr.f32.mxu0 0.0
        %882 = vmatmul.mubr.f32.gmra.mrb[0].mxu0 %v798
        %v883 = vpop.f32.mrb[0].mxu0
        %v884 = vadd.f32 %v783, %v883
        %v885 = vpop.f32.mrb[0].mxu0
        %886 = vmatprep.mubr.f32.mxu0 0.0
        %887 = vmatmul.mubr.f32.gmra.mrb[0].mxu0 %v801
        %v888 = vpop.f32.mrb[0].mxu0
        %v889 = vadd.f32 %v788, %v888
        %v890 = vpop.f32.mrb[0].mxu0
        %891 = vdwg.mxu0
        %v892 = vld [vmem:[%s3] sm:$0xff]
        %v893 = vld [vmem:[%s3 + $0x8] sm:$0xff]
        %vm894 = vcmask 130048
        %v896 = vsel %vm894, %v874, 0
        %v899 = vsel %vm894, %v879, 0
        %v902 = vsel %vm894, %v884, 0
        %v905 = vsel %vm894, %v889, 0
        %907 = vmatprep.subr.mxu0 0.0
        %908 = vmatpush1.msra.mxu0 %v892
        %909 = vmatprep.subr.mxu0 0.0
        %910 = vmatpush1.msra.mxu0 %v893
        %911 = vmatprep.subr.mxu0 0.0
        %912 = vmatpush1.msra.mxu0 0.0
        %913 = vmatprep.subr.mxu0 0.0
        %914 = vmatpush1.msra.mxu0 0.0
        %915 = vmatprep.subr.mxu0 0.0
        %916 = vmatpush1.msra.mxu0 0.0
        %917 = vmatprep.subr.mxu0 0.0
        %918 = vmatpush1.msra.mxu0 0.0
        %919 = vmatprep.subr.mxu0 0.0
        %920 = vmatpush1.msra.mxu0 0.0
        %921 = vmatprep.subr.mxu0 0.0
        %922 = vmatpush1.msra.mxu0 0.0
        %923 = vmatprep.subr.mxu0 0.0
        %924 = vmatpush1.msra.mxu0 0.0
        %925 = vmatprep.subr.mxu0 0.0
        %926 = vmatpush1.msra.mxu0 0.0
        %927 = vmatprep.subr.mxu0 0.0
        %928 = vmatpush1.msra.mxu0 0.0
        %929 = vmatprep.subr.mxu0 0.0
        %930 = vmatpush1.msra.mxu0 0.0
        %931 = vmatprep.subr.mxu0 0.0
        %932 = vmatpush1.msra.mxu0 0.0
        %933 = vmatprep.subr.mxu0 0.0
        %934 = vmatpush1.msra.mxu0 0.0
        %935 = vmatprep.subr.mxu0 0.0
        %936 = vmatpush1.msra.mxu0 0.0
        %937 = vmatprep.subr.mxu0 0.0
        %938 = vmatpush1.msra.mxu0 0.0
        %939 = vmatprep.subr.mxu0 0.0
        %940 = vmatpush1.msra.mxu0 0.0
        %941 = vmatprep.subr.mxu0 0.0
        %942 = vmatpush1.msra.mxu0 0.0
        %943 = vmatprep.subr.mxu0 0.0
        %944 = vmatpush1.msra.mxu0 0.0
        %945 = vmatprep.subr.mxu0 0.0
        %946 = vmatpush1.msra.mxu0 0.0
        %947 = vmatprep.subr.mxu0 0.0
        %948 = vmatpush1.msra.mxu0 0.0
        %949 = vmatprep.subr.mxu0 0.0
        %950 = vmatpush1.msra.mxu0 0.0
        %951 = vmatprep.subr.mxu0 0.0
        %952 = vmatpush1.msra.mxu0 0.0
        %953 = vmatprep.subr.mxu0 0.0
        %954 = vmatpush1.msra.mxu0 0.0
        %955 = vmatprep.subr.mxu0 0.0
        %956 = vmatpush1.msra.mxu0 0.0
        %957 = vmatprep.subr.mxu0 0.0
        %958 = vmatpush1.msra.mxu0 0.0
        %959 = vmatprep.subr.mxu0 0.0
        %960 = vmatpush1.msra.mxu0 0.0
        %961 = vmatprep.subr.mxu0 0.0
        %962 = vmatpush1.msra.mxu0 0.0
        %963 = vmatprep.subr.mxu0 0.0
        %964 = vmatpush1.msra.mxu0 0.0
        %965 = vmatprep.subr.mxu0 0.0
        %966 = vmatpush1.msra.mxu0 0.0
        %967 = vmatprep.subr.mxu0 0.0
        %968 = vmatpush1.msra.mxu0 0.0
        %969 = vmatprep.subr.mxu0 0.0
        %970 = vmatpush1.msra.mxu0 0.0
        %971 = vmatprep.mubr.f32.mxu0 0.0
        %972 = vmatmul.mubr.f32.gmra.mrb[0].mxu0 %v896
        %v973 = vpop.f32.mrb[0].mxu0
        %v974 = vadd.f32 0.0, %v973
        %v975 = vpop.f32.mrb[0].mxu0
        %976 = vmatprep.mubr.f32.mxu0 0.0
        %977 = vmatmul.mubr.f32.gmra.mrb[0].mxu0 %v899
        %v978 = vpop.f32.mrb[0].mxu0
        %v979 = vadd.f32 0.0, %v978
        %v980 = vpop.f32.mrb[0].mxu0
        %981 = vmatprep.mubr.f32.mxu0 0.0
        %982 = vmatmul.mubr.f32.gmra.mrb[0].mxu0 %v902
        %v983 = vpop.f32.mrb[0].mxu0
        %v984 = vadd.f32 0.0, %v983
        %v985 = vpop.f32.mrb[0].mxu0
        %986 = vmatprep.mubr.f32.mxu0 0.0
        %987 = vmatmul.mubr.f32.gmra.mrb[0].mxu0 %v905
        %v988 = vpop.f32.mrb[0].mxu0
        %v989 = vadd.f32 0.0, %v988
        %v990 = vpop.f32.mrb[0].mxu0
        %991 = vdwg.mxu0
        %996 = vrot.lane.b32.xlu0 %v974, 124
        %v997 = vpop.permute.xlu0 %996
        %998 = vrot.lane.b32.xlu0 %v979, 124
        %v999 = vpop.permute.xlu0 %998
        %1000 = vrot.lane.b32.xlu0 %v984, 124
        %v1001 = vpop.permute.xlu0 %1000
        %1002 = vrot.lane.b32.xlu0 %v989, 124
        %v1003 = vpop.permute.xlu0 %1002
        %1008 = vrot.lane.b32.xlu0 %v974, 4
        %v1009 = vpop.permute.xlu0 %1008
        %1010 = vrot.lane.b32.xlu0 %v979, 4
        %v1011 = vpop.permute.xlu0 %1010
        %1012 = vrot.lane.b32.xlu0 %v984, 4
        %v1013 = vpop.permute.xlu0 %1012
        %1014 = vrot.lane.b32.xlu0 %v989, 4
        %v1015 = vpop.permute.xlu0 %1014
        %vm1020 = vcmask 31744
        %v1021 = vsel %vm1020, %v997, %v1009
        %v1022 = vsel %vm1020, %v999, %v1011
        %v1023 = vsel %vm1020, %v1001, %v1013
        %v1024 = vsel %vm1020, %v1003, %v1015
        %v1025 = vld [vmem:[%s5] sm:$0xff]
        %v1026 = vld [vmem:[%s5 + $0x8] sm:$0xff]
        %v1027 = vld [vmem:[%s5 + $0x10] sm:$0xff]
        %v1028 = vld [vmem:[%s5 + $0x18] sm:$0xff]
        %v1029 = vlaneseq
        %v1030 = vshrl.u32 %v1029, 7
        %v1031 = vsub.s32 0, %v1030
        %v1032 = vrot.slane %v974, %v1031
        %v1033 = vmul.f32 %v1032, %v1025
        %v1034 = vmul.f32 %v1032, %v1026
        %v1035 = vmul.f32 %v1032, %v1027
        %v1036 = vmul.f32 %v1032, %v1028
        %v1037 = vld [vmem:[%s6] sm:$0xff]
        %v1038 = vld [vmem:[%s6 + $0x8] sm:$0xff]
        %v1039 = vld [vmem:[%s6 + $0x10] sm:$0xff]
        %v1040 = vld [vmem:[%s6 + $0x18] sm:$0xff]
        %v1041 = vlaneseq
        %v1042 = vshrl.u32 %v1041, 7
        %v1043 = vsub.s32 0, %v1042
        %v1044 = vrot.slane %v1021, %v1043
        %v1045 = vmul.f32 %v1044, %v1037
        %v1046 = vmul.f32 %v1044, %v1038
        %v1047 = vmul.f32 %v1044, %v1039
        %v1048 = vmul.f32 %v1044, %v1040
        %v1049 = vadd.f32 %v1033, %v1045
        %v1050 = vadd.f32 %v1034, %v1046
        %v1051 = vadd.f32 %v1035, %v1047
        %v1052 = vadd.f32 %v1036, %v1048
        %s1053 = scalar_lea.vmem %s5, 32
        %v1054 = vld [vmem:[%s1053] sm:$0xff]
        %v1055 = vld [vmem:[%s1053 + $0x8] sm:$0xff]
        %v1056 = vld [vmem:[%s1053 + $0x10] sm:$0xff]
        %v1057 = vld [vmem:[%s1053 + $0x18] sm:$0xff]
        %v1058 = vlaneseq
        %v1059 = vshrl.u32 %v1058, 7
        %v1060 = vsub.s32 1, %v1059
        %v1061 = vrot.slane %v974, %v1060
        %v1062 = vmul.f32 %v1061, %v1054
        %v1063 = vmul.f32 %v1061, %v1055
        %v1064 = vmul.f32 %v1061, %v1056
        %v1065 = vmul.f32 %v1061, %v1057
        %v1066 = vadd.f32 %v1049, %v1062
        %v1067 = vadd.f32 %v1050, %v1063
        %v1068 = vadd.f32 %v1051, %v1064
        %v1069 = vadd.f32 %v1052, %v1065
        %s1070 = scalar_lea.vmem %s6, 32
        %v1071 = vld [vmem:[%s1070] sm:$0xff]
        %v1072 = vld [vmem:[%s1070 + $0x8] sm:$0xff]
        %v1073 = vld [vmem:[%s1070 + $0x10] sm:$0xff]
        %v1074 = vld [vmem:[%s1070 + $0x18] sm:$0xff]
        %v1075 = vlaneseq
        %v1076 = vshrl.u32 %v1075, 7
        %v1077 = vsub.s32 1, %v1076
        %v1078 = vrot.slane %v1021, %v1077
        %v1079 = vmul.f32 %v1078, %v1071
        %v1080 = vmul.f32 %v1078, %v1072
        %v1081 = vmul.f32 %v1078, %v1073
        %v1082 = vmul.f32 %v1078, %v1074
        %v1083 = vadd.f32 %v1066, %v1079
        %v1084 = vadd.f32 %v1067, %v1080
        %v1085 = vadd.f32 %v1068, %v1081
        %v1086 = vadd.f32 %v1069, %v1082
        %s1087 = scalar_lea.vmem %s5, 64
        %v1088 = vld [vmem:[%s1087] sm:$0xff]
        %v1089 = vld [vmem:[%s1087 + $0x8] sm:$0xff]
        %v1090 = vld [vmem:[%s1087 + $0x10] sm:$0xff]
        %v1091 = vld [vmem:[%s1087 + $0x18] sm:$0xff]
        %v1092 = vlaneseq
        %v1093 = vshrl.u32 %v1092, 7
        %v1094 = vsub.s32 2, %v1093
        %v1095 = vrot.slane %v974, %v1094
        %v1096 = vmul.f32 %v1095, %v1088
        %v1097 = vmul.f32 %v1095, %v1089
        %v1098 = vmul.f32 %v1095, %v1090
        %v1099 = vmul.f32 %v1095, %v1091
        %v1100 = vadd.f32 %v1083, %v1096
        %v1101 = vadd.f32 %v1084, %v1097
        %v1102 = vadd.f32 %v1085, %v1098
        %v1103 = vadd.f32 %v1086, %v1099
        %s1104 = scalar_lea.vmem %s6, 64
        %v1105 = vld [vmem:[%s1104] sm:$0xff]
        %v1106 = vld [vmem:[%s1104 + $0x8] sm:$0xff]
        %v1107 = vld [vmem:[%s1104 + $0x10] sm:$0xff]
        %v1108 = vld [vmem:[%s1104 + $0x18] sm:$0xff]
        %v1109 = vlaneseq
        %v1110 = vshrl.u32 %v1109, 7
        %v1111 = vsub.s32 2, %v1110
        %v1112 = vrot.slane %v1021, %v1111
        %v1113 = vmul.f32 %v1112, %v1105
        %v1114 = vmul.f32 %v1112, %v1106
        %v1115 = vmul.f32 %v1112, %v1107
        %v1116 = vmul.f32 %v1112, %v1108
        %v1117 = vadd.f32 %v1100, %v1113
        %v1118 = vadd.f32 %v1101, %v1114
        %v1119 = vadd.f32 %v1102, %v1115
        %v1120 = vadd.f32 %v1103, %v1116
        %s1121 = scalar_lea.vmem %s5, 96
        %v1122 = vld [vmem:[%s1121] sm:$0xff]
        %v1123 = vld [vmem:[%s1121 + $0x8] sm:$0xff]
        %v1124 = vld [vmem:[%s1121 + $0x10] sm:$0xff]
        %v1125 = vld [vmem:[%s1121 + $0x18] sm:$0xff]
        %v1126 = vlaneseq
        %v1127 = vshrl.u32 %v1126, 7
        %v1128 = vsub.s32 3, %v1127
        %v1129 = vrot.slane %v974, %v1128
        %v1130 = vmul.f32 %v1129, %v1122
        %v1131 = vmul.f32 %v1129, %v1123
        %v1132 = vmul.f32 %v1129, %v1124
        %v1133 = vmul.f32 %v1129, %v1125
        %v1134 = vadd.f32 %v1117, %v1130
        %v1135 = vadd.f32 %v1118, %v1131
        %v1136 = vadd.f32 %v1119, %v1132
        %v1137 = vadd.f32 %v1120, %v1133
        %s1138 = scalar_lea.vmem %s6, 96
        %v1139 = vld [vmem:[%s1138] sm:$0xff]
        %v1140 = vld [vmem:[%s1138 + $0x8] sm:$0xff]
        %v1141 = vld [vmem:[%s1138 + $0x10] sm:$0xff]
        %v1142 = vld [vmem:[%s1138 + $0x18] sm:$0xff]
        %v1143 = vlaneseq
        %v1144 = vshrl.u32 %v1143, 7
        %v1145 = vsub.s32 3, %v1144
        %v1146 = vrot.slane %v1021, %v1145
        %v1147 = vmul.f32 %v1146, %v1139
        %v1148 = vmul.f32 %v1146, %v1140
        %v1149 = vmul.f32 %v1146, %v1141
        %v1150 = vmul.f32 %v1146, %v1142
        %v1151 = vadd.f32 %v1134, %v1147
        %v1152 = vadd.f32 %v1135, %v1148
        %v1153 = vadd.f32 %v1136, %v1149
        %v1154 = vadd.f32 %v1137, %v1150
        %s1155 = scalar_lea.vmem %s5, 128
        %v1156 = vld [vmem:[%s1155] sm:$0xff]
        %v1157 = vld [vmem:[%s1155 + $0x8] sm:$0xff]
        %v1158 = vld [vmem:[%s1155 + $0x10] sm:$0xff]
        %v1159 = vld [vmem:[%s1155 + $0x18] sm:$0xff]
        %v1160 = vlaneseq
        %v1161 = vshrl.u32 %v1160, 7
        %v1162 = vsub.s32 4, %v1161
        %v1163 = vrot.slane %v974, %v1162
        %v1164 = vmul.f32 %v1163, %v1156
        %v1165 = vmul.f32 %v1163, %v1157
        %v1166 = vmul.f32 %v1163, %v1158
        %v1167 = vmul.f32 %v1163, %v1159
        %v1168 = vadd.f32 %v1151, %v1164
        %v1169 = vadd.f32 %v1152, %v1165
        %v1170 = vadd.f32 %v1153, %v1166
        %v1171 = vadd.f32 %v1154, %v1167
        %s1172 = scalar_lea.vmem %s6, 128
        %v1173 = vld [vmem:[%s1172] sm:$0xff]
        %v1174 = vld [vmem:[%s1172 + $0x8] sm:$0xff]
        %v1175 = vld [vmem:[%s1172 + $0x10] sm:$0xff]
        %v1176 = vld [vmem:[%s1172 + $0x18] sm:$0xff]
        %v1177 = vlaneseq
        %v1178 = vshrl.u32 %v1177, 7
        %v1179 = vsub.s32 4, %v1178
        %v1180 = vrot.slane %v1021, %v1179
        %v1181 = vmul.f32 %v1180, %v1173
        %v1182 = vmul.f32 %v1180, %v1174
        %v1183 = vmul.f32 %v1180, %v1175
        %v1184 = vmul.f32 %v1180, %v1176
        %v1185 = vadd.f32 %v1168, %v1181
        %v1186 = vadd.f32 %v1169, %v1182
        %v1187 = vadd.f32 %v1170, %v1183
        %v1188 = vadd.f32 %v1171, %v1184
        %s1189 = scalar_lea.vmem %s5, 160
        %v1190 = vld [vmem:[%s1189] sm:$0xff]
        %v1191 = vld [vmem:[%s1189 + $0x8] sm:$0xff]
        %v1192 = vld [vmem:[%s1189 + $0x10] sm:$0xff]
        %v1193 = vld [vmem:[%s1189 + $0x18] sm:$0xff]
        %v1194 = vlaneseq
        %v1195 = vshrl.u32 %v1194, 7
        %v1196 = vsub.s32 5, %v1195
        %v1197 = vrot.slane %v974, %v1196
        %v1198 = vmul.f32 %v1197, %v1190
        %v1199 = vmul.f32 %v1197, %v1191
        %v1200 = vmul.f32 %v1197, %v1192
        %v1201 = vmul.f32 %v1197, %v1193
        %v1202 = vadd.f32 %v1185, %v1198
        %v1203 = vadd.f32 %v1186, %v1199
        %v1204 = vadd.f32 %v1187, %v1200
        %v1205 = vadd.f32 %v1188, %v1201
        %s1206 = scalar_lea.vmem %s6, 160
        %v1207 = vld [vmem:[%s1206] sm:$0xff]
        %v1208 = vld [vmem:[%s1206 + $0x8] sm:$0xff]
        %v1209 = vld [vmem:[%s1206 + $0x10] sm:$0xff]
        %v1210 = vld [vmem:[%s1206 + $0x18] sm:$0xff]
        %v1211 = vlaneseq
        %v1212 = vshrl.u32 %v1211, 7
        %v1213 = vsub.s32 5, %v1212
        %v1214 = vrot.slane %v1021, %v1213
        %v1215 = vmul.f32 %v1214, %v1207
        %v1216 = vmul.f32 %v1214, %v1208
        %v1217 = vmul.f32 %v1214, %v1209
        %v1218 = vmul.f32 %v1214, %v1210
        %v1219 = vadd.f32 %v1202, %v1215
        %v1220 = vadd.f32 %v1203, %v1216
        %v1221 = vadd.f32 %v1204, %v1217
        %v1222 = vadd.f32 %v1205, %v1218
        %s1223 = scalar_lea.vmem %s5, 192
        %v1224 = vld [vmem:[%s1223] sm:$0xff]
        %v1225 = vld [vmem:[%s1223 + $0x8] sm:$0xff]
        %v1226 = vld [vmem:[%s1223 + $0x10] sm:$0xff]
        %v1227 = vld [vmem:[%s1223 + $0x18] sm:$0xff]
        %v1228 = vlaneseq
        %v1229 = vshrl.u32 %v1228, 7
        %v1230 = vsub.s32 6, %v1229
        %v1231 = vrot.slane %v974, %v1230
        %v1232 = vmul.f32 %v1231, %v1224
        %v1233 = vmul.f32 %v1231, %v1225
        %v1234 = vmul.f32 %v1231, %v1226
        %v1235 = vmul.f32 %v1231, %v1227
        %v1236 = vadd.f32 %v1219, %v1232
        %v1237 = vadd.f32 %v1220, %v1233
        %v1238 = vadd.f32 %v1221, %v1234
        %v1239 = vadd.f32 %v1222, %v1235
        %s1240 = scalar_lea.vmem %s6, 192
        %v1241 = vld [vmem:[%s1240] sm:$0xff]
        %v1242 = vld [vmem:[%s1240 + $0x8] sm:$0xff]
        %v1243 = vld [vmem:[%s1240 + $0x10] sm:$0xff]
        %v1244 = vld [vmem:[%s1240 + $0x18] sm:$0xff]
        %v1245 = vlaneseq
        %v1246 = vshrl.u32 %v1245, 7
        %v1247 = vsub.s32 6, %v1246
        %v1248 = vrot.slane %v1021, %v1247
        %v1249 = vmul.f32 %v1248, %v1241
        %v1250 = vmul.f32 %v1248, %v1242
        %v1251 = vmul.f32 %v1248, %v1243
        %v1252 = vmul.f32 %v1248, %v1244
        %v1253 = vadd.f32 %v1236, %v1249
        %v1254 = vadd.f32 %v1237, %v1250
        %v1255 = vadd.f32 %v1238, %v1251
        %v1256 = vadd.f32 %v1239, %v1252
        %s1257 = scalar_lea.vmem %s5, 224
        %v1258 = vld [vmem:[%s1257] sm:$0xff]
        %v1259 = vld [vmem:[%s1257 + $0x8] sm:$0xff]
        %v1260 = vld [vmem:[%s1257 + $0x10] sm:$0xff]
        %v1261 = vld [vmem:[%s1257 + $0x18] sm:$0xff]
        %v1262 = vlaneseq
        %v1263 = vshrl.u32 %v1262, 7
        %v1264 = vsub.s32 7, %v1263
        %v1265 = vrot.slane %v974, %v1264
        %v1266 = vmul.f32 %v1265, %v1258
        %v1267 = vmul.f32 %v1265, %v1259
        %v1268 = vmul.f32 %v1265, %v1260
        %v1269 = vmul.f32 %v1265, %v1261
        %v1270 = vadd.f32 %v1253, %v1266
        %v1271 = vadd.f32 %v1254, %v1267
        %v1272 = vadd.f32 %v1255, %v1268
        %v1273 = vadd.f32 %v1256, %v1269
        %s1274 = scalar_lea.vmem %s6, 224
        %v1275 = vld [vmem:[%s1274] sm:$0xff]
        %v1276 = vld [vmem:[%s1274 + $0x8] sm:$0xff]
        %v1277 = vld [vmem:[%s1274 + $0x10] sm:$0xff]
        %v1278 = vld [vmem:[%s1274 + $0x18] sm:$0xff]
        %v1279 = vlaneseq
        %v1280 = vshrl.u32 %v1279, 7
        %v1281 = vsub.s32 7, %v1280
        %v1282 = vrot.slane %v1021, %v1281
        %v1283 = vmul.f32 %v1282, %v1275
        %v1284 = vmul.f32 %v1282, %v1276
        %v1285 = vmul.f32 %v1282, %v1277
        %v1286 = vmul.f32 %v1282, %v1278
        %v1287 = vadd.f32 %v1270, %v1283
        %v1288 = vadd.f32 %v1271, %v1284
        %v1289 = vadd.f32 %v1272, %v1285
        %v1290 = vadd.f32 %v1273, %v1286
        %s1291 = scalar_lea.vmem %s5, 256
        %v1292 = vld [vmem:[%s1291] sm:$0xff]
        %v1293 = vld [vmem:[%s1291 + $0x8] sm:$0xff]
        %v1294 = vld [vmem:[%s1291 + $0x10] sm:$0xff]
        %v1295 = vld [vmem:[%s1291 + $0x18] sm:$0xff]
        %v1296 = vlaneseq
        %v1297 = vshrl.u32 %v1296, 7
        %v1298 = vsub.s32 0, %v1297
        %v1299 = vrot.slane %v979, %v1298
        %v1300 = vmul.f32 %v1299, %v1292
        %v1301 = vmul.f32 %v1299, %v1293
        %v1302 = vmul.f32 %v1299, %v1294
        %v1303 = vmul.f32 %v1299, %v1295
        %v1304 = vadd.f32 %v1287, %v1300
        %v1305 = vadd.f32 %v1288, %v1301
        %v1306 = vadd.f32 %v1289, %v1302
        %v1307 = vadd.f32 %v1290, %v1303
        %s1308 = scalar_lea.vmem %s6, 256
        %v1309 = vld [vmem:[%s1308] sm:$0xff]
        %v1310 = vld [vmem:[%s1308 + $0x8] sm:$0xff]
        %v1311 = vld [vmem:[%s1308 + $0x10] sm:$0xff]
        %v1312 = vld [vmem:[%s1308 + $0x18] sm:$0xff]
        %v1313 = vlaneseq
        %v1314 = vshrl.u32 %v1313, 7
        %v1315 = vsub.s32 0, %v1314
        %v1316 = vrot.slane %v1022, %v1315
        %v1317 = vmul.f32 %v1316, %v1309
        %v1318 = vmul.f32 %v1316, %v1310
        %v1319 = vmul.f32 %v1316, %v1311
        %v1320 = vmul.f32 %v1316, %v1312
        %v1321 = vadd.f32 %v1304, %v1317
        %v1322 = vadd.f32 %v1305, %v1318
        %v1323 = vadd.f32 %v1306, %v1319
        %v1324 = vadd.f32 %v1307, %v1320
        %s1325 = scalar_lea.vmem %s5, 288
        %v1326 = vld [vmem:[%s1325] sm:$0xff]
        %v1327 = vld [vmem:[%s1325 + $0x8] sm:$0xff]
        %v1328 = vld [vmem:[%s1325 + $0x10] sm:$0xff]
        %v1329 = vld [vmem:[%s1325 + $0x18] sm:$0xff]
        %v1330 = vlaneseq
        %v1331 = vshrl.u32 %v1330, 7
        %v1332 = vsub.s32 1, %v1331
        %v1333 = vrot.slane %v979, %v1332
        %v1334 = vmul.f32 %v1333, %v1326
        %v1335 = vmul.f32 %v1333, %v1327
        %v1336 = vmul.f32 %v1333, %v1328
        %v1337 = vmul.f32 %v1333, %v1329
        %v1338 = vadd.f32 %v1321, %v1334
        %v1339 = vadd.f32 %v1322, %v1335
        %v1340 = vadd.f32 %v1323, %v1336
        %v1341 = vadd.f32 %v1324, %v1337
        %s1342 = scalar_lea.vmem %s6, 288
        %v1343 = vld [vmem:[%s1342] sm:$0xff]
        %v1344 = vld [vmem:[%s1342 + $0x8] sm:$0xff]
        %v1345 = vld [vmem:[%s1342 + $0x10] sm:$0xff]
        %v1346 = vld [vmem:[%s1342 + $0x18] sm:$0xff]
        %v1347 = vlaneseq
        %v1348 = vshrl.u32 %v1347, 7
        %v1349 = vsub.s32 1, %v1348
        %v1350 = vrot.slane %v1022, %v1349
        %v1351 = vmul.f32 %v1350, %v1343
        %v1352 = vmul.f32 %v1350, %v1344
        %v1353 = vmul.f32 %v1350, %v1345
        %v1354 = vmul.f32 %v1350, %v1346
        %v1355 = vadd.f32 %v1338, %v1351
        %v1356 = vadd.f32 %v1339, %v1352
        %v1357 = vadd.f32 %v1340, %v1353
        %v1358 = vadd.f32 %v1341, %v1354
        %s1359 = scalar_lea.vmem %s5, 320
        %v1360 = vld [vmem:[%s1359] sm:$0xff]
        %v1361 = vld [vmem:[%s1359 + $0x8] sm:$0xff]
        %v1362 = vld [vmem:[%s1359 + $0x10] sm:$0xff]
        %v1363 = vld [vmem:[%s1359 + $0x18] sm:$0xff]
        %v1364 = vlaneseq
        %v1365 = vshrl.u32 %v1364, 7
        %v1366 = vsub.s32 2, %v1365
        %v1367 = vrot.slane %v979, %v1366
        %v1368 = vmul.f32 %v1367, %v1360
        %v1369 = vmul.f32 %v1367, %v1361
        %v1370 = vmul.f32 %v1367, %v1362
        %v1371 = vmul.f32 %v1367, %v1363
        %v1372 = vadd.f32 %v1355, %v1368
        %v1373 = vadd.f32 %v1356, %v1369
        %v1374 = vadd.f32 %v1357, %v1370
        %v1375 = vadd.f32 %v1358, %v1371
        %s1376 = scalar_lea.vmem %s6, 320
        %v1377 = vld [vmem:[%s1376] sm:$0xff]
        %v1378 = vld [vmem:[%s1376 + $0x8] sm:$0xff]
        %v1379 = vld [vmem:[%s1376 + $0x10] sm:$0xff]
        %v1380 = vld [vmem:[%s1376 + $0x18] sm:$0xff]
        %v1381 = vlaneseq
        %v1382 = vshrl.u32 %v1381, 7
        %v1383 = vsub.s32 2, %v1382
        %v1384 = vrot.slane %v1022, %v1383
        %v1385 = vmul.f32 %v1384, %v1377
        %v1386 = vmul.f32 %v1384, %v1378
        %v1387 = vmul.f32 %v1384, %v1379
        %v1388 = vmul.f32 %v1384, %v1380
        %v1389 = vadd.f32 %v1372, %v1385
        %v1390 = vadd.f32 %v1373, %v1386
        %v1391 = vadd.f32 %v1374, %v1387
        %v1392 = vadd.f32 %v1375, %v1388
        %s1393 = scalar_lea.vmem %s5, 352
        %v1394 = vld [vmem:[%s1393] sm:$0xff]
        %v1395 = vld [vmem:[%s1393 + $0x8] sm:$0xff]
        %v1396 = vld [vmem:[%s1393 + $0x10] sm:$0xff]
        %v1397 = vld [vmem:[%s1393 + $0x18] sm:$0xff]
        %v1398 = vlaneseq
        %v1399 = vshrl.u32 %v1398, 7
        %v1400 = vsub.s32 3, %v1399
        %v1401 = vrot.slane %v979, %v1400
        %v1402 = vmul.f32 %v1401, %v1394
        %v1403 = vmul.f32 %v1401, %v1395
        %v1404 = vmul.f32 %v1401, %v1396
        %v1405 = vmul.f32 %v1401, %v1397
        %v1406 = vadd.f32 %v1389, %v1402
        %v1407 = vadd.f32 %v1390, %v1403
        %v1408 = vadd.f32 %v1391, %v1404
        %v1409 = vadd.f32 %v1392, %v1405
        %s1410 = scalar_lea.vmem %s6, 352
        %v1411 = vld [vmem:[%s1410] sm:$0xff]
        %v1412 = vld [vmem:[%s1410 + $0x8] sm:$0xff]
        %v1413 = vld [vmem:[%s1410 + $0x10] sm:$0xff]
        %v1414 = vld [vmem:[%s1410 + $0x18] sm:$0xff]
        %v1415 = vlaneseq
        %v1416 = vshrl.u32 %v1415, 7
        %v1417 = vsub.s32 3, %v1416
        %v1418 = vrot.slane %v1022, %v1417
        %v1419 = vmul.f32 %v1418, %v1411
        %v1420 = vmul.f32 %v1418, %v1412
        %v1421 = vmul.f32 %v1418, %v1413
        %v1422 = vmul.f32 %v1418, %v1414
        %v1423 = vadd.f32 %v1406, %v1419
        %v1424 = vadd.f32 %v1407, %v1420
        %v1425 = vadd.f32 %v1408, %v1421
        %v1426 = vadd.f32 %v1409, %v1422
        %s1427 = scalar_lea.vmem %s5, 384
        %v1428 = vld [vmem:[%s1427] sm:$0xff]
        %v1429 = vld [vmem:[%s1427 + $0x8] sm:$0xff]
        %v1430 = vld [vmem:[%s1427 + $0x10] sm:$0xff]
        %v1431 = vld [vmem:[%s1427 + $0x18] sm:$0xff]
        %v1432 = vlaneseq
        %v1433 = vshrl.u32 %v1432, 7
        %v1434 = vsub.s32 4, %v1433
        %v1435 = vrot.slane %v979, %v1434
        %v1436 = vmul.f32 %v1435, %v1428
        %v1437 = vmul.f32 %v1435, %v1429
        %v1438 = vmul.f32 %v1435, %v1430
        %v1439 = vmul.f32 %v1435, %v1431
        %v1440 = vadd.f32 %v1423, %v1436
        %v1441 = vadd.f32 %v1424, %v1437
        %v1442 = vadd.f32 %v1425, %v1438
        %v1443 = vadd.f32 %v1426, %v1439
        %s1444 = scalar_lea.vmem %s6, 384
        %v1445 = vld [vmem:[%s1444] sm:$0xff]
        %v1446 = vld [vmem:[%s1444 + $0x8] sm:$0xff]
        %v1447 = vld [vmem:[%s1444 + $0x10] sm:$0xff]
        %v1448 = vld [vmem:[%s1444 + $0x18] sm:$0xff]
        %v1449 = vlaneseq
        %v1450 = vshrl.u32 %v1449, 7
        %v1451 = vsub.s32 4, %v1450
        %v1452 = vrot.slane %v1022, %v1451
        %v1453 = vmul.f32 %v1452, %v1445
        %v1454 = vmul.f32 %v1452, %v1446
        %v1455 = vmul.f32 %v1452, %v1447
        %v1456 = vmul.f32 %v1452, %v1448
        %v1457 = vadd.f32 %v1440, %v1453
        %v1458 = vadd.f32 %v1441, %v1454
        %v1459 = vadd.f32 %v1442, %v1455
        %v1460 = vadd.f32 %v1443, %v1456
        %s1461 = scalar_lea.vmem %s5, 416
        %v1462 = vld [vmem:[%s1461] sm:$0xff]
        %v1463 = vld [vmem:[%s1461 + $0x8] sm:$0xff]
        %v1464 = vld [vmem:[%s1461 + $0x10] sm:$0xff]
        %v1465 = vld [vmem:[%s1461 + $0x18] sm:$0xff]
        %v1466 = vlaneseq
        %v1467 = vshrl.u32 %v1466, 7
        %v1468 = vsub.s32 5, %v1467
        %v1469 = vrot.slane %v979, %v1468
        %v1470 = vmul.f32 %v1469, %v1462
        %v1471 = vmul.f32 %v1469, %v1463
        %v1472 = vmul.f32 %v1469, %v1464
        %v1473 = vmul.f32 %v1469, %v1465
        %v1474 = vadd.f32 %v1457, %v1470
        %v1475 = vadd.f32 %v1458, %v1471
        %v1476 = vadd.f32 %v1459, %v1472
        %v1477 = vadd.f32 %v1460, %v1473
        %s1478 = scalar_lea.vmem %s6, 416
        %v1479 = vld [vmem:[%s1478] sm:$0xff]
        %v1480 = vld [vmem:[%s1478 + $0x8] sm:$0xff]
        %v1481 = vld [vmem:[%s1478 + $0x10] sm:$0xff]
        %v1482 = vld [vmem:[%s1478 + $0x18] sm:$0xff]
        %v1483 = vlaneseq
        %v1484 = vshrl.u32 %v1483, 7
        %v1485 = vsub.s32 5, %v1484
        %v1486 = vrot.slane %v1022, %v1485
        %v1487 = vmul.f32 %v1486, %v1479
        %v1488 = vmul.f32 %v1486, %v1480
        %v1489 = vmul.f32 %v1486, %v1481
        %v1490 = vmul.f32 %v1486, %v1482
        %v1491 = vadd.f32 %v1474, %v1487
        %v1492 = vadd.f32 %v1475, %v1488
        %v1493 = vadd.f32 %v1476, %v1489
        %v1494 = vadd.f32 %v1477, %v1490
        %s1495 = scalar_lea.vmem %s5, 448
        %v1496 = vld [vmem:[%s1495] sm:$0xff]
        %v1497 = vld [vmem:[%s1495 + $0x8] sm:$0xff]
        %v1498 = vld [vmem:[%s1495 + $0x10] sm:$0xff]
        %v1499 = vld [vmem:[%s1495 + $0x18] sm:$0xff]
        %v1500 = vlaneseq
        %v1501 = vshrl.u32 %v1500, 7
        %v1502 = vsub.s32 6, %v1501
        %v1503 = vrot.slane %v979, %v1502
        %v1504 = vmul.f32 %v1503, %v1496
        %v1505 = vmul.f32 %v1503, %v1497
        %v1506 = vmul.f32 %v1503, %v1498
        %v1507 = vmul.f32 %v1503, %v1499
        %v1508 = vadd.f32 %v1491, %v1504
        %v1509 = vadd.f32 %v1492, %v1505
        %v1510 = vadd.f32 %v1493, %v1506
        %v1511 = vadd.f32 %v1494, %v1507
        %s1512 = scalar_lea.vmem %s6, 448
        %v1513 = vld [vmem:[%s1512] sm:$0xff]
        %v1514 = vld [vmem:[%s1512 + $0x8] sm:$0xff]
        %v1515 = vld [vmem:[%s1512 + $0x10] sm:$0xff]
        %v1516 = vld [vmem:[%s1512 + $0x18] sm:$0xff]
        %v1517 = vlaneseq
        %v1518 = vshrl.u32 %v1517, 7
        %v1519 = vsub.s32 6, %v1518
        %v1520 = vrot.slane %v1022, %v1519
        %v1521 = vmul.f32 %v1520, %v1513
        %v1522 = vmul.f32 %v1520, %v1514
        %v1523 = vmul.f32 %v1520, %v1515
        %v1524 = vmul.f32 %v1520, %v1516
        %v1525 = vadd.f32 %v1508, %v1521
        %v1526 = vadd.f32 %v1509, %v1522
        %v1527 = vadd.f32 %v1510, %v1523
        %v1528 = vadd.f32 %v1511, %v1524
        %s1529 = scalar_lea.vmem %s5, 480
        %v1530 = vld [vmem:[%s1529] sm:$0xff]
        %v1531 = vld [vmem:[%s1529 + $0x8] sm:$0xff]
        %v1532 = vld [vmem:[%s1529 + $0x10] sm:$0xff]
        %v1533 = vld [vmem:[%s1529 + $0x18] sm:$0xff]
        %v1534 = vlaneseq
        %v1535 = vshrl.u32 %v1534, 7
        %v1536 = vsub.s32 7, %v1535
        %v1537 = vrot.slane %v979, %v1536
        %v1538 = vmul.f32 %v1537, %v1530
        %v1539 = vmul.f32 %v1537, %v1531
        %v1540 = vmul.f32 %v1537, %v1532
        %v1541 = vmul.f32 %v1537, %v1533
        %v1542 = vadd.f32 %v1525, %v1538
        %v1543 = vadd.f32 %v1526, %v1539
        %v1544 = vadd.f32 %v1527, %v1540
        %v1545 = vadd.f32 %v1528, %v1541
        %s1546 = scalar_lea.vmem %s6, 480
        %v1547 = vld [vmem:[%s1546] sm:$0xff]
        %v1548 = vld [vmem:[%s1546 + $0x8] sm:$0xff]
        %v1549 = vld [vmem:[%s1546 + $0x10] sm:$0xff]
        %v1550 = vld [vmem:[%s1546 + $0x18] sm:$0xff]
        %v1551 = vlaneseq
        %v1552 = vshrl.u32 %v1551, 7
        %v1553 = vsub.s32 7, %v1552
        %v1554 = vrot.slane %v1022, %v1553
        %v1555 = vmul.f32 %v1554, %v1547
        %v1556 = vmul.f32 %v1554, %v1548
        %v1557 = vmul.f32 %v1554, %v1549
        %v1558 = vmul.f32 %v1554, %v1550
        %v1559 = vadd.f32 %v1542, %v1555
        %v1560 = vadd.f32 %v1543, %v1556
        %v1561 = vadd.f32 %v1544, %v1557
        %v1562 = vadd.f32 %v1545, %v1558
        %s1563 = scalar_lea.vmem %s5, 512
        %v1564 = vld [vmem:[%s1563] sm:$0xff]
        %v1565 = vld [vmem:[%s1563 + $0x8] sm:$0xff]
        %v1566 = vld [vmem:[%s1563 + $0x10] sm:$0xff]
        %v1567 = vld [vmem:[%s1563 + $0x18] sm:$0xff]
        %v1568 = vlaneseq
        %v1569 = vshrl.u32 %v1568, 7
        %v1570 = vsub.s32 0, %v1569
        %v1571 = vrot.slane %v984, %v1570
        %v1572 = vmul.f32 %v1571, %v1564
        %v1573 = vmul.f32 %v1571, %v1565
        %v1574 = vmul.f32 %v1571, %v1566
        %v1575 = vmul.f32 %v1571, %v1567
        %v1576 = vadd.f32 %v1559, %v1572
        %v1577 = vadd.f32 %v1560, %v1573
        %v1578 = vadd.f32 %v1561, %v1574
        %v1579 = vadd.f32 %v1562, %v1575
        %s1580 = scalar_lea.vmem %s6, 512
        %v1581 = vld [vmem:[%s1580] sm:$0xff]
        %v1582 = vld [vmem:[%s1580 + $0x8] sm:$0xff]
        %v1583 = vld [vmem:[%s1580 + $0x10] sm:$0xff]
        %v1584 = vld [vmem:[%s1580 + $0x18] sm:$0xff]
        %v1585 = vlaneseq
        %v1586 = vshrl.u32 %v1585, 7
        %v1587 = vsub.s32 0, %v1586
        %v1588 = vrot.slane %v1023, %v1587
        %v1589 = vmul.f32 %v1588, %v1581
        %v1590 = vmul.f32 %v1588, %v1582
        %v1591 = vmul.f32 %v1588, %v1583
        %v1592 = vmul.f32 %v1588, %v1584
        %v1593 = vadd.f32 %v1576, %v1589
        %v1594 = vadd.f32 %v1577, %v1590
        %v1595 = vadd.f32 %v1578, %v1591
        %v1596 = vadd.f32 %v1579, %v1592
        %s1597 = scalar_lea.vmem %s5, 544
        %v1598 = vld [vmem:[%s1597] sm:$0xff]
        %v1599 = vld [vmem:[%s1597 + $0x8] sm:$0xff]
        %v1600 = vld [vmem:[%s1597 + $0x10] sm:$0xff]
        %v1601 = vld [vmem:[%s1597 + $0x18] sm:$0xff]
        %v1602 = vlaneseq
        %v1603 = vshrl.u32 %v1602, 7
        %v1604 = vsub.s32 1, %v1603
        %v1605 = vrot.slane %v984, %v1604
        %v1606 = vmul.f32 %v1605, %v1598
        %v1607 = vmul.f32 %v1605, %v1599
        %v1608 = vmul.f32 %v1605, %v1600
        %v1609 = vmul.f32 %v1605, %v1601
        %v1610 = vadd.f32 %v1593, %v1606
        %v1611 = vadd.f32 %v1594, %v1607
        %v1612 = vadd.f32 %v1595, %v1608
        %v1613 = vadd.f32 %v1596, %v1609
        %s1614 = scalar_lea.vmem %s6, 544
        %v1615 = vld [vmem:[%s1614] sm:$0xff]
        %v1616 = vld [vmem:[%s1614 + $0x8] sm:$0xff]
        %v1617 = vld [vmem:[%s1614 + $0x10] sm:$0xff]
        %v1618 = vld [vmem:[%s1614 + $0x18] sm:$0xff]
        %v1619 = vlaneseq
        %v1620 = vshrl.u32 %v1619, 7
        %v1621 = vsub.s32 1, %v1620
        %v1622 = vrot.slane %v1023, %v1621
        %v1623 = vmul.f32 %v1622, %v1615
        %v1624 = vmul.f32 %v1622, %v1616
        %v1625 = vmul.f32 %v1622, %v1617
        %v1626 = vmul.f32 %v1622, %v1618
        %v1627 = vadd.f32 %v1610, %v1623
        %v1628 = vadd.f32 %v1611, %v1624
        %v1629 = vadd.f32 %v1612, %v1625
        %v1630 = vadd.f32 %v1613, %v1626
        %s1631 = scalar_lea.vmem %s5, 576
        %v1632 = vld [vmem:[%s1631] sm:$0xff]
        %v1633 = vld [vmem:[%s1631 + $0x8] sm:$0xff]
        %v1634 = vld [vmem:[%s1631 + $0x10] sm:$0xff]
        %v1635 = vld [vmem:[%s1631 + $0x18] sm:$0xff]
        %v1636 = vlaneseq
        %v1637 = vshrl.u32 %v1636, 7
        %v1638 = vsub.s32 2, %v1637
        %v1639 = vrot.slane %v984, %v1638
        %v1640 = vmul.f32 %v1639, %v1632
        %v1641 = vmul.f32 %v1639, %v1633
        %v1642 = vmul.f32 %v1639, %v1634
        %v1643 = vmul.f32 %v1639, %v1635
        %v1644 = vadd.f32 %v1627, %v1640
        %v1645 = vadd.f32 %v1628, %v1641
        %v1646 = vadd.f32 %v1629, %v1642
        %v1647 = vadd.f32 %v1630, %v1643
        %s1648 = scalar_lea.vmem %s6, 576
        %v1649 = vld [vmem:[%s1648] sm:$0xff]
        %v1650 = vld [vmem:[%s1648 + $0x8] sm:$0xff]
        %v1651 = vld [vmem:[%s1648 + $0x10] sm:$0xff]
        %v1652 = vld [vmem:[%s1648 + $0x18] sm:$0xff]
        %v1653 = vlaneseq
        %v1654 = vshrl.u32 %v1653, 7
        %v1655 = vsub.s32 2, %v1654
        %v1656 = vrot.slane %v1023, %v1655
        %v1657 = vmul.f32 %v1656, %v1649
        %v1658 = vmul.f32 %v1656, %v1650
        %v1659 = vmul.f32 %v1656, %v1651
        %v1660 = vmul.f32 %v1656, %v1652
        %v1661 = vadd.f32 %v1644, %v1657
        %v1662 = vadd.f32 %v1645, %v1658
        %v1663 = vadd.f32 %v1646, %v1659
        %v1664 = vadd.f32 %v1647, %v1660
        %s1665 = scalar_lea.vmem %s5, 608
        %v1666 = vld [vmem:[%s1665] sm:$0xff]
        %v1667 = vld [vmem:[%s1665 + $0x8] sm:$0xff]
        %v1668 = vld [vmem:[%s1665 + $0x10] sm:$0xff]
        %v1669 = vld [vmem:[%s1665 + $0x18] sm:$0xff]
        %v1670 = vlaneseq
        %v1671 = vshrl.u32 %v1670, 7
        %v1672 = vsub.s32 3, %v1671
        %v1673 = vrot.slane %v984, %v1672
        %v1674 = vmul.f32 %v1673, %v1666
        %v1675 = vmul.f32 %v1673, %v1667
        %v1676 = vmul.f32 %v1673, %v1668
        %v1677 = vmul.f32 %v1673, %v1669
        %v1678 = vadd.f32 %v1661, %v1674
        %v1679 = vadd.f32 %v1662, %v1675
        %v1680 = vadd.f32 %v1663, %v1676
        %v1681 = vadd.f32 %v1664, %v1677
        %s1682 = scalar_lea.vmem %s6, 608
        %v1683 = vld [vmem:[%s1682] sm:$0xff]
        %v1684 = vld [vmem:[%s1682 + $0x8] sm:$0xff]
        %v1685 = vld [vmem:[%s1682 + $0x10] sm:$0xff]
        %v1686 = vld [vmem:[%s1682 + $0x18] sm:$0xff]
        %v1687 = vlaneseq
        %v1688 = vshrl.u32 %v1687, 7
        %v1689 = vsub.s32 3, %v1688
        %v1690 = vrot.slane %v1023, %v1689
        %v1691 = vmul.f32 %v1690, %v1683
        %v1692 = vmul.f32 %v1690, %v1684
        %v1693 = vmul.f32 %v1690, %v1685
        %v1694 = vmul.f32 %v1690, %v1686
        %v1695 = vadd.f32 %v1678, %v1691
        %v1696 = vadd.f32 %v1679, %v1692
        %v1697 = vadd.f32 %v1680, %v1693
        %v1698 = vadd.f32 %v1681, %v1694
        %s1699 = scalar_lea.vmem %s5, 640
        %v1700 = vld [vmem:[%s1699] sm:$0xff]
        %v1701 = vld [vmem:[%s1699 + $0x8] sm:$0xff]
        %v1702 = vld [vmem:[%s1699 + $0x10] sm:$0xff]
        %v1703 = vld [vmem:[%s1699 + $0x18] sm:$0xff]
        %v1704 = vlaneseq
        %v1705 = vshrl.u32 %v1704, 7
        %v1706 = vsub.s32 4, %v1705
        %v1707 = vrot.slane %v984, %v1706
        %v1708 = vmul.f32 %v1707, %v1700
        %v1709 = vmul.f32 %v1707, %v1701
        %v1710 = vmul.f32 %v1707, %v1702
        %v1711 = vmul.f32 %v1707, %v1703
        %v1712 = vadd.f32 %v1695, %v1708
        %v1713 = vadd.f32 %v1696, %v1709
        %v1714 = vadd.f32 %v1697, %v1710
        %v1715 = vadd.f32 %v1698, %v1711
        %s1716 = scalar_lea.vmem %s6, 640
        %v1717 = vld [vmem:[%s1716] sm:$0xff]
        %v1718 = vld [vmem:[%s1716 + $0x8] sm:$0xff]
        %v1719 = vld [vmem:[%s1716 + $0x10] sm:$0xff]
        %v1720 = vld [vmem:[%s1716 + $0x18] sm:$0xff]
        %v1721 = vlaneseq
        %v1722 = vshrl.u32 %v1721, 7
        %v1723 = vsub.s32 4, %v1722
        %v1724 = vrot.slane %v1023, %v1723
        %v1725 = vmul.f32 %v1724, %v1717
        %v1726 = vmul.f32 %v1724, %v1718
        %v1727 = vmul.f32 %v1724, %v1719
        %v1728 = vmul.f32 %v1724, %v1720
        %v1729 = vadd.f32 %v1712, %v1725
        %v1730 = vadd.f32 %v1713, %v1726
        %v1731 = vadd.f32 %v1714, %v1727
        %v1732 = vadd.f32 %v1715, %v1728
        %s1733 = scalar_lea.vmem %s5, 672
        %v1734 = vld [vmem:[%s1733] sm:$0xff]
        %v1735 = vld [vmem:[%s1733 + $0x8] sm:$0xff]
        %v1736 = vld [vmem:[%s1733 + $0x10] sm:$0xff]
        %v1737 = vld [vmem:[%s1733 + $0x18] sm:$0xff]
        %v1738 = vlaneseq
        %v1739 = vshrl.u32 %v1738, 7
        %v1740 = vsub.s32 5, %v1739
        %v1741 = vrot.slane %v984, %v1740
        %v1742 = vmul.f32 %v1741, %v1734
        %v1743 = vmul.f32 %v1741, %v1735
        %v1744 = vmul.f32 %v1741, %v1736
        %v1745 = vmul.f32 %v1741, %v1737
        %v1746 = vadd.f32 %v1729, %v1742
        %v1747 = vadd.f32 %v1730, %v1743
        %v1748 = vadd.f32 %v1731, %v1744
        %v1749 = vadd.f32 %v1732, %v1745
        %s1750 = scalar_lea.vmem %s6, 672
        %v1751 = vld [vmem:[%s1750] sm:$0xff]
        %v1752 = vld [vmem:[%s1750 + $0x8] sm:$0xff]
        %v1753 = vld [vmem:[%s1750 + $0x10] sm:$0xff]
        %v1754 = vld [vmem:[%s1750 + $0x18] sm:$0xff]
        %v1755 = vlaneseq
        %v1756 = vshrl.u32 %v1755, 7
        %v1757 = vsub.s32 5, %v1756
        %v1758 = vrot.slane %v1023, %v1757
        %v1759 = vmul.f32 %v1758, %v1751
        %v1760 = vmul.f32 %v1758, %v1752
        %v1761 = vmul.f32 %v1758, %v1753
        %v1762 = vmul.f32 %v1758, %v1754
        %v1763 = vadd.f32 %v1746, %v1759
        %v1764 = vadd.f32 %v1747, %v1760
        %v1765 = vadd.f32 %v1748, %v1761
        %v1766 = vadd.f32 %v1749, %v1762
        %s1767 = scalar_lea.vmem %s5, 704
        %v1768 = vld [vmem:[%s1767] sm:$0xff]
        %v1769 = vld [vmem:[%s1767 + $0x8] sm:$0xff]
        %v1770 = vld [vmem:[%s1767 + $0x10] sm:$0xff]
        %v1771 = vld [vmem:[%s1767 + $0x18] sm:$0xff]
        %v1772 = vlaneseq
        %v1773 = vshrl.u32 %v1772, 7
        %v1774 = vsub.s32 6, %v1773
        %v1775 = vrot.slane %v984, %v1774
        %v1776 = vmul.f32 %v1775, %v1768
        %v1777 = vmul.f32 %v1775, %v1769
        %v1778 = vmul.f32 %v1775, %v1770
        %v1779 = vmul.f32 %v1775, %v1771
        %v1780 = vadd.f32 %v1763, %v1776
        %v1781 = vadd.f32 %v1764, %v1777
        %v1782 = vadd.f32 %v1765, %v1778
        %v1783 = vadd.f32 %v1766, %v1779
        %s1784 = scalar_lea.vmem %s6, 704
        %v1785 = vld [vmem:[%s1784] sm:$0xff]
        %v1786 = vld [vmem:[%s1784 + $0x8] sm:$0xff]
        %v1787 = vld [vmem:[%s1784 + $0x10] sm:$0xff]
        %v1788 = vld [vmem:[%s1784 + $0x18] sm:$0xff]
        %v1789 = vlaneseq
        %v1790 = vshrl.u32 %v1789, 7
        %v1791 = vsub.s32 6, %v1790
        %v1792 = vrot.slane %v1023, %v1791
        %v1793 = vmul.f32 %v1792, %v1785
        %v1794 = vmul.f32 %v1792, %v1786
        %v1795 = vmul.f32 %v1792, %v1787
        %v1796 = vmul.f32 %v1792, %v1788
        %v1797 = vadd.f32 %v1780, %v1793
        %v1798 = vadd.f32 %v1781, %v1794
        %v1799 = vadd.f32 %v1782, %v1795
        %v1800 = vadd.f32 %v1783, %v1796
        %s1801 = scalar_lea.vmem %s5, 736
        %v1802 = vld [vmem:[%s1801] sm:$0xff]
        %v1803 = vld [vmem:[%s1801 + $0x8] sm:$0xff]
        %v1804 = vld [vmem:[%s1801 + $0x10] sm:$0xff]
        %v1805 = vld [vmem:[%s1801 + $0x18] sm:$0xff]
        %v1806 = vlaneseq
        %v1807 = vshrl.u32 %v1806, 7
        %v1808 = vsub.s32 7, %v1807
        %v1809 = vrot.slane %v984, %v1808
        %v1810 = vmul.f32 %v1809, %v1802
        %v1811 = vmul.f32 %v1809, %v1803
        %v1812 = vmul.f32 %v1809, %v1804
        %v1813 = vmul.f32 %v1809, %v1805
        %v1814 = vadd.f32 %v1797, %v1810
        %v1815 = vadd.f32 %v1798, %v1811
        %v1816 = vadd.f32 %v1799, %v1812
        %v1817 = vadd.f32 %v1800, %v1813
        %s1818 = scalar_lea.vmem %s6, 736
        %v1819 = vld [vmem:[%s1818] sm:$0xff]
        %v1820 = vld [vmem:[%s1818 + $0x8] sm:$0xff]
        %v1821 = vld [vmem:[%s1818 + $0x10] sm:$0xff]
        %v1822 = vld [vmem:[%s1818 + $0x18] sm:$0xff]
        %v1823 = vlaneseq
        %v1824 = vshrl.u32 %v1823, 7
        %v1825 = vsub.s32 7, %v1824
        %v1826 = vrot.slane %v1023, %v1825
        %v1827 = vmul.f32 %v1826, %v1819
        %v1828 = vmul.f32 %v1826, %v1820
        %v1829 = vmul.f32 %v1826, %v1821
        %v1830 = vmul.f32 %v1826, %v1822
        %v1831 = vadd.f32 %v1814, %v1827
        %v1832 = vadd.f32 %v1815, %v1828
        %v1833 = vadd.f32 %v1816, %v1829
        %v1834 = vadd.f32 %v1817, %v1830
        %s1835 = scalar_lea.vmem %s5, 768
        %v1836 = vld [vmem:[%s1835] sm:$0xff]
        %v1837 = vld [vmem:[%s1835 + $0x8] sm:$0xff]
        %v1838 = vld [vmem:[%s1835 + $0x10] sm:$0xff]
        %v1839 = vld [vmem:[%s1835 + $0x18] sm:$0xff]
        %v1840 = vlaneseq
        %v1841 = vshrl.u32 %v1840, 7
        %v1842 = vsub.s32 0, %v1841
        %v1843 = vrot.slane %v989, %v1842
        %v1844 = vmul.f32 %v1843, %v1836
        %v1845 = vmul.f32 %v1843, %v1837
        %v1846 = vmul.f32 %v1843, %v1838
        %v1847 = vmul.f32 %v1843, %v1839
        %v1848 = vadd.f32 %v1831, %v1844
        %v1849 = vadd.f32 %v1832, %v1845
        %v1850 = vadd.f32 %v1833, %v1846
        %v1851 = vadd.f32 %v1834, %v1847
        %s1852 = scalar_lea.vmem %s6, 768
        %v1853 = vld [vmem:[%s1852] sm:$0xff]
        %v1854 = vld [vmem:[%s1852 + $0x8] sm:$0xff]
        %v1855 = vld [vmem:[%s1852 + $0x10] sm:$0xff]
        %v1856 = vld [vmem:[%s1852 + $0x18] sm:$0xff]
        %v1857 = vlaneseq
        %v1858 = vshrl.u32 %v1857, 7
        %v1859 = vsub.s32 0, %v1858
        %v1860 = vrot.slane %v1024, %v1859
        %v1861 = vmul.f32 %v1860, %v1853
        %v1862 = vmul.f32 %v1860, %v1854
        %v1863 = vmul.f32 %v1860, %v1855
        %v1864 = vmul.f32 %v1860, %v1856
        %v1865 = vadd.f32 %v1848, %v1861
        %v1866 = vadd.f32 %v1849, %v1862
        %v1867 = vadd.f32 %v1850, %v1863
        %v1868 = vadd.f32 %v1851, %v1864
        %s1869 = scalar_lea.vmem %s5, 800
        %v1870 = vld [vmem:[%s1869] sm:$0xff]
        %v1871 = vld [vmem:[%s1869 + $0x8] sm:$0xff]
        %v1872 = vld [vmem:[%s1869 + $0x10] sm:$0xff]
        %v1873 = vld [vmem:[%s1869 + $0x18] sm:$0xff]
        %v1874 = vlaneseq
        %v1875 = vshrl.u32 %v1874, 7
        %v1876 = vsub.s32 1, %v1875
        %v1877 = vrot.slane %v989, %v1876
        %v1878 = vmul.f32 %v1877, %v1870
        %v1879 = vmul.f32 %v1877, %v1871
        %v1880 = vmul.f32 %v1877, %v1872
        %v1881 = vmul.f32 %v1877, %v1873
        %v1882 = vadd.f32 %v1865, %v1878
        %v1883 = vadd.f32 %v1866, %v1879
        %v1884 = vadd.f32 %v1867, %v1880
        %v1885 = vadd.f32 %v1868, %v1881
        %s1886 = scalar_lea.vmem %s6, 800
        %v1887 = vld [vmem:[%s1886] sm:$0xff]
        %v1888 = vld [vmem:[%s1886 + $0x8] sm:$0xff]
        %v1889 = vld [vmem:[%s1886 + $0x10] sm:$0xff]
        %v1890 = vld [vmem:[%s1886 + $0x18] sm:$0xff]
        %v1891 = vlaneseq
        %v1892 = vshrl.u32 %v1891, 7
        %v1893 = vsub.s32 1, %v1892
        %v1894 = vrot.slane %v1024, %v1893
        %v1895 = vmul.f32 %v1894, %v1887
        %v1896 = vmul.f32 %v1894, %v1888
        %v1897 = vmul.f32 %v1894, %v1889
        %v1898 = vmul.f32 %v1894, %v1890
        %v1899 = vadd.f32 %v1882, %v1895
        %v1900 = vadd.f32 %v1883, %v1896
        %v1901 = vadd.f32 %v1884, %v1897
        %v1902 = vadd.f32 %v1885, %v1898
        %s1903 = scalar_lea.vmem %s5, 832
        %v1904 = vld [vmem:[%s1903] sm:$0xff]
        %v1905 = vld [vmem:[%s1903 + $0x8] sm:$0xff]
        %v1906 = vld [vmem:[%s1903 + $0x10] sm:$0xff]
        %v1907 = vld [vmem:[%s1903 + $0x18] sm:$0xff]
        %v1908 = vlaneseq
        %v1909 = vshrl.u32 %v1908, 7
        %v1910 = vsub.s32 2, %v1909
        %v1911 = vrot.slane %v989, %v1910
        %v1912 = vmul.f32 %v1911, %v1904
        %v1913 = vmul.f32 %v1911, %v1905
        %v1914 = vmul.f32 %v1911, %v1906
        %v1915 = vmul.f32 %v1911, %v1907
        %v1916 = vadd.f32 %v1899, %v1912
        %v1917 = vadd.f32 %v1900, %v1913
        %v1918 = vadd.f32 %v1901, %v1914
        %v1919 = vadd.f32 %v1902, %v1915
        %s1920 = scalar_lea.vmem %s6, 832
        %v1921 = vld [vmem:[%s1920] sm:$0xff]
        %v1922 = vld [vmem:[%s1920 + $0x8] sm:$0xff]
        %v1923 = vld [vmem:[%s1920 + $0x10] sm:$0xff]
        %v1924 = vld [vmem:[%s1920 + $0x18] sm:$0xff]
        %v1925 = vlaneseq
        %v1926 = vshrl.u32 %v1925, 7
        %v1927 = vsub.s32 2, %v1926
        %v1928 = vrot.slane %v1024, %v1927
        %v1929 = vmul.f32 %v1928, %v1921
        %v1930 = vmul.f32 %v1928, %v1922
        %v1931 = vmul.f32 %v1928, %v1923
        %v1932 = vmul.f32 %v1928, %v1924
        %v1933 = vadd.f32 %v1916, %v1929
        %v1934 = vadd.f32 %v1917, %v1930
        %v1935 = vadd.f32 %v1918, %v1931
        %v1936 = vadd.f32 %v1919, %v1932
        %s1937 = scalar_lea.vmem %s5, 864
        %v1938 = vld [vmem:[%s1937] sm:$0xff]
        %v1939 = vld [vmem:[%s1937 + $0x8] sm:$0xff]
        %v1940 = vld [vmem:[%s1937 + $0x10] sm:$0xff]
        %v1941 = vld [vmem:[%s1937 + $0x18] sm:$0xff]
        %v1942 = vlaneseq
        %v1943 = vshrl.u32 %v1942, 7
        %v1944 = vsub.s32 3, %v1943
        %v1945 = vrot.slane %v989, %v1944
        %v1946 = vmul.f32 %v1945, %v1938
        %v1947 = vmul.f32 %v1945, %v1939
        %v1948 = vmul.f32 %v1945, %v1940
        %v1949 = vmul.f32 %v1945, %v1941
        %v1950 = vadd.f32 %v1933, %v1946
        %v1951 = vadd.f32 %v1934, %v1947
        %v1952 = vadd.f32 %v1935, %v1948
        %v1953 = vadd.f32 %v1936, %v1949
        %s1954 = scalar_lea.vmem %s6, 864
        %v1955 = vld [vmem:[%s1954] sm:$0xff]
        %v1956 = vld [vmem:[%s1954 + $0x8] sm:$0xff]
        %v1957 = vld [vmem:[%s1954 + $0x10] sm:$0xff]
        %v1958 = vld [vmem:[%s1954 + $0x18] sm:$0xff]
        %v1959 = vlaneseq
        %v1960 = vshrl.u32 %v1959, 7
        %v1961 = vsub.s32 3, %v1960
        %v1962 = vrot.slane %v1024, %v1961
        %v1963 = vmul.f32 %v1962, %v1955
        %v1964 = vmul.f32 %v1962, %v1956
        %v1965 = vmul.f32 %v1962, %v1957
        %v1966 = vmul.f32 %v1962, %v1958
        %v1967 = vadd.f32 %v1950, %v1963
        %v1968 = vadd.f32 %v1951, %v1964
        %v1969 = vadd.f32 %v1952, %v1965
        %v1970 = vadd.f32 %v1953, %v1966
        %s1971 = scalar_lea.vmem %s5, 896
        %v1972 = vld [vmem:[%s1971] sm:$0xff]
        %v1973 = vld [vmem:[%s1971 + $0x8] sm:$0xff]
        %v1974 = vld [vmem:[%s1971 + $0x10] sm:$0xff]
        %v1975 = vld [vmem:[%s1971 + $0x18] sm:$0xff]
        %v1976 = vlaneseq
        %v1977 = vshrl.u32 %v1976, 7
        %v1978 = vsub.s32 4, %v1977
        %v1979 = vrot.slane %v989, %v1978
        %v1980 = vmul.f32 %v1979, %v1972
        %v1981 = vmul.f32 %v1979, %v1973
        %v1982 = vmul.f32 %v1979, %v1974
        %v1983 = vmul.f32 %v1979, %v1975
        %v1984 = vadd.f32 %v1967, %v1980
        %v1985 = vadd.f32 %v1968, %v1981
        %v1986 = vadd.f32 %v1969, %v1982
        %v1987 = vadd.f32 %v1970, %v1983
        %s1988 = scalar_lea.vmem %s6, 896
        %v1989 = vld [vmem:[%s1988] sm:$0xff]
        %v1990 = vld [vmem:[%s1988 + $0x8] sm:$0xff]
        %v1991 = vld [vmem:[%s1988 + $0x10] sm:$0xff]
        %v1992 = vld [vmem:[%s1988 + $0x18] sm:$0xff]
        %v1993 = vlaneseq
        %v1994 = vshrl.u32 %v1993, 7
        %v1995 = vsub.s32 4, %v1994
        %v1996 = vrot.slane %v1024, %v1995
        %v1997 = vmul.f32 %v1996, %v1989
        %v1998 = vmul.f32 %v1996, %v1990
        %v1999 = vmul.f32 %v1996, %v1991
        %v2000 = vmul.f32 %v1996, %v1992
        %v2001 = vadd.f32 %v1984, %v1997
        %v2002 = vadd.f32 %v1985, %v1998
        %v2003 = vadd.f32 %v1986, %v1999
        %v2004 = vadd.f32 %v1987, %v2000
        %s2005 = scalar_lea.vmem %s5, 928
        %v2006 = vld [vmem:[%s2005] sm:$0xff]
        %v2007 = vld [vmem:[%s2005 + $0x8] sm:$0xff]
        %v2008 = vld [vmem:[%s2005 + $0x10] sm:$0xff]
        %v2009 = vld [vmem:[%s2005 + $0x18] sm:$0xff]
        %v2010 = vlaneseq
        %v2011 = vshrl.u32 %v2010, 7
        %v2012 = vsub.s32 5, %v2011
        %v2013 = vrot.slane %v989, %v2012
        %v2014 = vmul.f32 %v2013, %v2006
        %v2015 = vmul.f32 %v2013, %v2007
        %v2016 = vmul.f32 %v2013, %v2008
        %v2017 = vmul.f32 %v2013, %v2009
        %v2018 = vadd.f32 %v2001, %v2014
        %v2019 = vadd.f32 %v2002, %v2015
        %v2020 = vadd.f32 %v2003, %v2016
        %v2021 = vadd.f32 %v2004, %v2017
        %s2022 = scalar_lea.vmem %s6, 928
        %v2023 = vld [vmem:[%s2022] sm:$0xff]
        %v2024 = vld [vmem:[%s2022 + $0x8] sm:$0xff]
        %v2025 = vld [vmem:[%s2022 + $0x10] sm:$0xff]
        %v2026 = vld [vmem:[%s2022 + $0x18] sm:$0xff]
        %v2027 = vlaneseq
        %v2028 = vshrl.u32 %v2027, 7
        %v2029 = vsub.s32 5, %v2028
        %v2030 = vrot.slane %v1024, %v2029
        %v2031 = vmul.f32 %v2030, %v2023
        %v2032 = vmul.f32 %v2030, %v2024
        %v2033 = vmul.f32 %v2030, %v2025
        %v2034 = vmul.f32 %v2030, %v2026
        %v2035 = vadd.f32 %v2018, %v2031
        %v2036 = vadd.f32 %v2019, %v2032
        %v2037 = vadd.f32 %v2020, %v2033
        %v2038 = vadd.f32 %v2021, %v2034
        %s2039 = scalar_lea.vmem %s5, 960
        %v2040 = vld [vmem:[%s2039] sm:$0xff]
        %v2041 = vld [vmem:[%s2039 + $0x8] sm:$0xff]
        %v2042 = vld [vmem:[%s2039 + $0x10] sm:$0xff]
        %v2043 = vld [vmem:[%s2039 + $0x18] sm:$0xff]
        %v2044 = vlaneseq
        %v2045 = vshrl.u32 %v2044, 7
        %v2046 = vsub.s32 6, %v2045
        %v2047 = vrot.slane %v989, %v2046
        %v2048 = vmul.f32 %v2047, %v2040
        %v2049 = vmul.f32 %v2047, %v2041
        %v2050 = vmul.f32 %v2047, %v2042
        %v2051 = vmul.f32 %v2047, %v2043
        %v2052 = vadd.f32 %v2035, %v2048
        %v2053 = vadd.f32 %v2036, %v2049
        %v2054 = vadd.f32 %v2037, %v2050
        %v2055 = vadd.f32 %v2038, %v2051
        %s2056 = scalar_lea.vmem %s6, 960
        %v2057 = vld [vmem:[%s2056] sm:$0xff]
        %v2058 = vld [vmem:[%s2056 + $0x8] sm:$0xff]
        %v2059 = vld [vmem:[%s2056 + $0x10] sm:$0xff]
        %v2060 = vld [vmem:[%s2056 + $0x18] sm:$0xff]
        %v2061 = vlaneseq
        %v2062 = vshrl.u32 %v2061, 7
        %v2063 = vsub.s32 6, %v2062
        %v2064 = vrot.slane %v1024, %v2063
        %v2065 = vmul.f32 %v2064, %v2057
        %v2066 = vmul.f32 %v2064, %v2058
        %v2067 = vmul.f32 %v2064, %v2059
        %v2068 = vmul.f32 %v2064, %v2060
        %v2069 = vadd.f32 %v2052, %v2065
        %v2070 = vadd.f32 %v2053, %v2066
        %v2071 = vadd.f32 %v2054, %v2067
        %v2072 = vadd.f32 %v2055, %v2068
        %s2073 = scalar_lea.vmem %s5, 992
        %v2074 = vld [vmem:[%s2073] sm:$0xff]
        %v2075 = vld [vmem:[%s2073 + $0x8] sm:$0xff]
        %v2076 = vld [vmem:[%s2073 + $0x10] sm:$0xff]
        %v2077 = vld [vmem:[%s2073 + $0x18] sm:$0xff]
        %v2078 = vlaneseq
        %v2079 = vshrl.u32 %v2078, 7
        %v2080 = vsub.s32 7, %v2079
        %v2081 = vrot.slane %v989, %v2080
        %v2082 = vmul.f32 %v2081, %v2074
        %v2083 = vmul.f32 %v2081, %v2075
        %v2084 = vmul.f32 %v2081, %v2076
        %v2085 = vmul.f32 %v2081, %v2077
        %v2086 = vadd.f32 %v2069, %v2082
        %v2087 = vadd.f32 %v2070, %v2083
        %v2088 = vadd.f32 %v2071, %v2084
        %v2089 = vadd.f32 %v2072, %v2085
        %s2090 = scalar_lea.vmem %s6, 992
        %v2091 = vld [vmem:[%s2090] sm:$0xff]
        %v2092 = vld [vmem:[%s2090 + $0x8] sm:$0xff]
        %v2093 = vld [vmem:[%s2090 + $0x10] sm:$0xff]
        %v2094 = vld [vmem:[%s2090 + $0x18] sm:$0xff]
        %v2095 = vlaneseq
        %v2096 = vshrl.u32 %v2095, 7
        %v2097 = vsub.s32 7, %v2096
        %v2098 = vrot.slane %v1024, %v2097
        %v2099 = vmul.f32 %v2098, %v2091
        %v2100 = vmul.f32 %v2098, %v2092
        %v2101 = vmul.f32 %v2098, %v2093
        %v2102 = vmul.f32 %v2098, %v2094
        %v2103 = vadd.f32 %v2086, %v2099
        %v2104 = vadd.f32 %v2087, %v2100
        %v2105 = vadd.f32 %v2088, %v2101
        %v2106 = vadd.f32 %v2089, %v2102
        %v2107 = vld [vmem:[%s4] sm:$0xff]
        %v2108 = vld [vmem:[%s7] sm:$0xff]
        %v2109 = vld [vmem:[%s7 + $0x8] sm:$0xff]
        %v2110 = vld [vmem:[%s7 + $0x10] sm:$0xff]
        %v2111 = vld [vmem:[%s7 + $0x18] sm:$0xff]
        %v2112 = vld [vmem:[%s8] sm:$0xff]
        %v2113 = vld [vmem:[%s8 + $0x8] sm:$0xff]
        %v2114 = vld [vmem:[%s8 + $0x10] sm:$0xff]
        %v2115 = vld [vmem:[%s8 + $0x18] sm:$0xff]
        %2117 = vset.pattern.permute.xlu0 0
        %2118 = vperm.xlu0 %2117, %v2112
        %v2119 = vpop.permute.xlu0 %2118
        %2122 = vset.pattern.permute.xlu0 0
        %2123 = vperm.xlu0 %2122, %v2113
        %v2124 = vpop.permute.xlu0 %2123
        %2127 = vset.pattern.permute.xlu0 0
        %2128 = vperm.xlu0 %2127, %v2114
        %v2129 = vpop.permute.xlu0 %2128
        %2132 = vset.pattern.permute.xlu0 0
        %2133 = vperm.xlu0 %2132, %v2115
        %v2134 = vpop.permute.xlu0 %2133
        %vm2136 = vcmask 261120
        %v2138 = vsel %vm2136, %v2108, 0
        %v2141 = vsel %vm2136, %v2109, 0
        %v2144 = vsel %vm2136, %v2110, 0
        %v2147 = vsel %vm2136, %v2111, 0
        %2149 = vmatprep.subr.mxu0 0.0
        %2150 = vmatpush1.msra.mxu0 %v874
        %2151 = vmatprep.subr.mxu0 0.0
        %2152 = vmatpush1.msra.mxu0 %v879
        %2153 = vmatprep.subr.mxu0 0.0
        %2154 = vmatpush1.msra.mxu0 %v884
        %2155 = vmatprep.subr.mxu0 0.0
        %2156 = vmatpush1.msra.mxu0 %v889
        %2157 = vmatprep.subr.mxu0 0.0
        %2158 = vmatpush1.msra.mxu0 0.0
        %2159 = vmatprep.subr.mxu0 0.0
        %2160 = vmatpush1.msra.mxu0 0.0
        %2161 = vmatprep.subr.mxu0 0.0
        %2162 = vmatpush1.msra.mxu0 0.0
        %2163 = vmatprep.subr.mxu0 0.0
        %2164 = vmatpush1.msra.mxu0 0.0
        %2165 = vmatprep.subr.mxu0 0.0
        %2166 = vmatpush1.msra.mxu0 0.0
        %2167 = vmatprep.subr.mxu0 0.0
        %2168 = vmatpush1.msra.mxu0 0.0
        %2169 = vmatprep.subr.mxu0 0.0
        %2170 = vmatpush1.msra.mxu0 0.0
        %2171 = vmatprep.subr.mxu0 0.0
        %2172 = vmatpush1.msra.mxu0 0.0
        %2173 = vmatprep.subr.mxu0 0.0
        %2174 = vmatpush1.msra.mxu0 0.0
        %2175 = vmatprep.subr.mxu0 0.0
        %2176 = vmatpush1.msra.mxu0 0.0
        %2177 = vmatprep.subr.mxu0 0.0
        %2178 = vmatpush1.msra.mxu0 0.0
        %2179 = vmatprep.subr.mxu0 0.0
        %2180 = vmatpush1.msra.mxu0 0.0
        %2181 = vmatprep.subr.mxu0 0.0
        %2182 = vmatpush1.msra.mxu0 0.0
        %2183 = vmatprep.subr.mxu0 0.0
        %2184 = vmatpush1.msra.mxu0 0.0
        %2185 = vmatprep.subr.mxu0 0.0
        %2186 = vmatpush1.msra.mxu0 0.0
        %2187 = vmatprep.subr.mxu0 0.0
        %2188 = vmatpush1.msra.mxu0 0.0
        %2189 = vmatprep.subr.mxu0 0.0
        %2190 = vmatpush1.msra.mxu0 0.0
        %2191 = vmatprep.subr.mxu0 0.0
        %2192 = vmatpush1.msra.mxu0 0.0
        %2193 = vmatprep.subr.mxu0 0.0
        %2194 = vmatpush1.msra.mxu0 0.0
        %2195 = vmatprep.subr.mxu0 0.0
        %2196 = vmatpush1.msra.mxu0 0.0
        %2197 = vmatprep.subr.mxu0 0.0
        %2198 = vmatpush1.msra.mxu0 0.0
        %2199 = vmatprep.subr.mxu0 0.0
        %2200 = vmatpush1.msra.mxu0 0.0
        %2201 = vmatprep.subr.mxu0 0.0
        %2202 = vmatpush1.msra.mxu0 0.0
        %2203 = vmatprep.subr.mxu0 0.0
        %2204 = vmatpush1.msra.mxu0 0.0
        %2205 = vmatprep.subr.mxu0 0.0
        %2206 = vmatpush1.msra.mxu0 0.0
        %2207 = vmatprep.subr.mxu0 0.0
        %2208 = vmatpush1.msra.mxu0 0.0
        %2209 = vmatprep.subr.mxu0 0.0
        %2210 = vmatpush1.msra.mxu0 0.0
        %2211 = vmatprep.subr.mxu0 0.0
        %2212 = vmatpush1.msra.mxu0 0.0
        %2213 = vmatprep.mubr.f32.mxu0 0.0
        %2214 = vmatmul.mubr.f32.gmra.mrb[0].mxu0 %v2138
        %v2215 = vpop.f32.mrb[0].mxu0
        %v2216 = vadd.f32 %v2119, %v2215
        %v2217 = vpop.f32.mrb[0].mxu0
        %2218 = vmatprep.mubr.f32.mxu0 0.0
        %2219 = vmatmul.mubr.f32.gmra.mrb[0].mxu0 %v2141
        %v2220 = vpop.f32.mrb[0].mxu0
        %v2221 = vadd.f32 %v2124, %v2220
        %v2222 = vpop.f32.mrb[0].mxu0
        %2223 = vmatprep.mubr.f32.mxu0 0.0
        %2224 = vmatmul.mubr.f32.gmra.mrb[0].mxu0 %v2144
        %v2225 = vpop.f32.mrb[0].mxu0
        %v2226 = vadd.f32 %v2129, %v2225
        %v2227 = vpop.f32.mrb[0].mxu0
        %2228 = vmatprep.mubr.f32.mxu0 0.0
        %2229 = vmatmul.mubr.f32.gmra.mrb[0].mxu0 %v2147
        %v2230 = vpop.f32.mrb[0].mxu0
        %v2231 = vadd.f32 %v2134, %v2230
        %v2232 = vpop.f32.mrb[0].mxu0
        %2233 = vdwg.mxu0
        %vm2234 = vcmask 64512
        %v2236 = vsel %vm2234, %v2103, 0
        %v2239 = vsel %vm2234, %v2104, 0
        %v2242 = vsel %vm2234, %v2105, 0
        %v2245 = vsel %vm2234, %v2106, 0
        %2247 = vmatprep.subr.mxu0 0.0
        %2248 = vmatpush1.msra.mxu0 %v2107
        %2249 = vmatprep.subr.mxu0 0.0
        %2250 = vmatpush1.msra.mxu0 0.0
        %2251 = vmatprep.subr.mxu0 0.0
        %2252 = vmatpush1.msra.mxu0 0.0
        %2253 = vmatprep.subr.mxu0 0.0
        %2254 = vmatpush1.msra.mxu0 0.0
        %2255 = vmatprep.subr.mxu0 0.0
        %2256 = vmatpush1.msra.mxu0 0.0
        %2257 = vmatprep.subr.mxu0 0.0
        %2258 = vmatpush1.msra.mxu0 0.0
        %2259 = vmatprep.subr.mxu0 0.0
        %2260 = vmatpush1.msra.mxu0 0.0
        %2261 = vmatprep.subr.mxu0 0.0
        %2262 = vmatpush1.msra.mxu0 0.0
        %2263 = vmatprep.subr.mxu0 0.0
        %2264 = vmatpush1.msra.mxu0 0.0
        %2265 = vmatprep.subr.mxu0 0.0
        %2266 = vmatpush1.msra.mxu0 0.0
        %2267 = vmatprep.subr.mxu0 0.0
        %2268 = vmatpush1.msra.mxu0 0.0
        %2269 = vmatprep.subr.mxu0 0.0
        %2270 = vmatpush1.msra.mxu0 0.0
        %2271 = vmatprep.subr.mxu0 0.0
        %2272 = vmatpush1.msra.mxu0 0.0
        %2273 = vmatprep.subr.mxu0 0.0
        %2274 = vmatpush1.msra.mxu0 0.0
        %2275 = vmatprep.subr.mxu0 0.0
        %2276 = vmatpush1.msra.mxu0 0.0
        %2277 = vmatprep.subr.mxu0 0.0
        %2278 = vmatpush1.msra.mxu0 0.0
        %2279 = vmatprep.subr.mxu0 0.0
        %2280 = vmatpush1.msra.mxu0 0.0
        %2281 = vmatprep.subr.mxu0 0.0
        %2282 = vmatpush1.msra.mxu0 0.0
        %2283 = vmatprep.subr.mxu0 0.0
        %2284 = vmatpush1.msra.mxu0 0.0
        %2285 = vmatprep.subr.mxu0 0.0
        %2286 = vmatpush1.msra.mxu0 0.0
        %2287 = vmatprep.subr.mxu0 0.0
        %2288 = vmatpush1.msra.mxu0 0.0
        %2289 = vmatprep.subr.mxu0 0.0
        %2290 = vmatpush1.msra.mxu0 0.0
        %2291 = vmatprep.subr.mxu0 0.0
        %2292 = vmatpush1.msra.mxu0 0.0
        %2293 = vmatprep.subr.mxu0 0.0
        %2294 = vmatpush1.msra.mxu0 0.0
        %2295 = vmatprep.subr.mxu0 0.0
        %2296 = vmatpush1.msra.mxu0 0.0
        %2297 = vmatprep.subr.mxu0 0.0
        %2298 = vmatpush1.msra.mxu0 0.0
        %2299 = vmatprep.subr.mxu0 0.0
        %2300 = vmatpush1.msra.mxu0 0.0
        %2301 = vmatprep.subr.mxu0 0.0
        %2302 = vmatpush1.msra.mxu0 0.0
        %2303 = vmatprep.subr.mxu0 0.0
        %2304 = vmatpush1.msra.mxu0 0.0
        %2305 = vmatprep.subr.mxu0 0.0
        %2306 = vmatpush1.msra.mxu0 0.0
        %2307 = vmatprep.subr.mxu0 0.0
        %2308 = vmatpush1.msra.mxu0 0.0
        %2309 = vmatprep.subr.mxu0 0.0
        %2310 = vmatpush1.msra.mxu0 0.0
        %2311 = vmatprep.mubr.f32.mxu0 0.0
        %2312 = vmatmul.mubr.f32.gmra.mrb[0].mxu0 %v2236
        %v2313 = vpop.f32.mrb[0].mxu0
        %v2314 = vadd.f32 %v2216, %v2313
        %v2315 = vpop.f32.mrb[0].mxu0
        %2316 = vmatprep.mubr.f32.mxu0 0.0
        %2317 = vmatmul.mubr.f32.gmra.mrb[0].mxu0 %v2239
        %v2318 = vpop.f32.mrb[0].mxu0
        %v2319 = vadd.f32 %v2221, %v2318
        %v2320 = vpop.f32.mrb[0].mxu0
        %2321 = vmatprep.mubr.f32.mxu0 0.0
        %2322 = vmatmul.mubr.f32.gmra.mrb[0].mxu0 %v2242
        %v2323 = vpop.f32.mrb[0].mxu0
        %v2324 = vadd.f32 %v2226, %v2323
        %v2325 = vpop.f32.mrb[0].mxu0
        %2326 = vmatprep.mubr.f32.mxu0 0.0
        %2327 = vmatmul.mubr.f32.gmra.mrb[0].mxu0 %v2245
        %v2328 = vpop.f32.mrb[0].mxu0
        %v2329 = vadd.f32 %v2231, %v2328
        %v2330 = vpop.f32.mrb[0].mxu0
        %2331 = vdwg.mxu0
        %v2332 = vmul.f32 %v2314, 0.5
        %v2333 = vmul.f32 %v2319, 0.5
        %v2334 = vmul.f32 %v2324, 0.5
        %v2335 = vmul.f32 %v2329, 0.5
        %v2336 = vmul.f32 %v2314, 0.044715
        %v2337 = vmul.f32 %v2319, 0.044715
        %v2338 = vmul.f32 %v2324, 0.044715
        %v2339 = vmul.f32 %v2329, 0.044715
        %v2340 = vmul.f32 %v2336, %v2314
        %v2341 = vmul.f32 %v2337, %v2319
        %v2342 = vmul.f32 %v2338, %v2324
        %v2343 = vmul.f32 %v2339, %v2329
        %v2344 = vmul.f32 %v2340, %v2314
        %v2345 = vmul.f32 %v2341, %v2319
        %v2346 = vmul.f32 %v2342, %v2324
        %v2347 = vmul.f32 %v2343, %v2329
        %v2348 = vadd.f32 %v2314, %v2344
        %v2349 = vadd.f32 %v2319, %v2345
        %v2350 = vadd.f32 %v2324, %v2346
        %v2351 = vadd.f32 %v2329, %v2347
        %v2352 = vmul.f32 %v2348, 0.7978846
        %v2353 = vmul.f32 %v2349, 0.7978846
        %v2354 = vmul.f32 %v2350, 0.7978846
        %v2355 = vmul.f32 %v2351, 0.7978846
        %v2356 = vtanh.pop %v2352
        %v2357 = vtanh.pop %v2353
        %v2358 = vtanh.pop %v2354
        %v2359 = vtanh.pop %v2355
        %v2360 = vadd.f32 %v2356, 1.0
        %v2361 = vadd.f32 %v2357, 1.0
        %v2362 = vadd.f32 %v2358, 1.0
        %v2363 = vadd.f32 %v2359, 1.0
        %v2364 = vmul.f32 %v2332, %v2360
        %v2365 = vmul.f32 %v2333, %v2361
        %v2366 = vmul.f32 %v2334, %v2362
        %v2367 = vmul.f32 %v2335, %v2363
        %v2369 = vsel %vm894, %v2364, 0
        %v2372 = vsel %vm894, %v2365, 0
        %v2375 = vsel %vm894, %v2366, 0
        %v2378 = vsel %vm894, %v2367, 0
        %2380 = vmatprep.subr.mxu0 0.0
        %2381 = vmatpush1.msra.mxu0 %v892
        %2382 = vmatprep.subr.mxu0 0.0
        %2383 = vmatpush1.msra.mxu0 %v893
        %2384 = vmatprep.subr.mxu0 0.0
        %2385 = vmatpush1.msra.mxu0 0.0
        %2386 = vmatprep.subr.mxu0 0.0
        %2387 = vmatpush1.msra.mxu0 0.0
        %2388 = vmatprep.subr.mxu0 0.0
        %2389 = vmatpush1.msra.mxu0 0.0
        %2390 = vmatprep.subr.mxu0 0.0
        %2391 = vmatpush1.msra.mxu0 0.0
        %2392 = vmatprep.subr.mxu0 0.0
        %2393 = vmatpush1.msra.mxu0 0.0
        %2394 = vmatprep.subr.mxu0 0.0
        %2395 = vmatpush1.msra.mxu0 0.0
        %2396 = vmatprep.subr.mxu0 0.0
        %2397 = vmatpush1.msra.mxu0 0.0
        %2398 = vmatprep.subr.mxu0 0.0
        %2399 = vmatpush1.msra.mxu0 0.0
        %2400 = vmatprep.subr.mxu0 0.0
        %2401 = vmatpush1.msra.mxu0 0.0
        %2402 = vmatprep.subr.mxu0 0.0
        %2403 = vmatpush1.msra.mxu0 0.0
        %2404 = vmatprep.subr.mxu0 0.0
        %2405 = vmatpush1.msra.mxu0 0.0
        %2406 = vmatprep.subr.mxu0 0.0
        %2407 = vmatpush1.msra.mxu0 0.0
        %2408 = vmatprep.subr.mxu0 0.0
        %2409 = vmatpush1.msra.mxu0 0.0
        %2410 = vmatprep.subr.mxu0 0.0
        %2411 = vmatpush1.msra.mxu0 0.0
        %2412 = vmatprep.subr.mxu0 0.0
        %2413 = vmatpush1.msra.mxu0 0.0
        %2414 = vmatprep.subr.mxu0 0.0
        %2415 = vmatpush1.msra.mxu0 0.0
        %2416 = vmatprep.subr.mxu0 0.0
        %2417 = vmatpush1.msra.mxu0 0.0
        %2418 = vmatprep.subr.mxu0 0.0
        %2419 = vmatpush1.msra.mxu0 0.0
        %2420 = vmatprep.subr.mxu0 0.0
        %2421 = vmatpush1.msra.mxu0 0.0
        %2422 = vmatprep.subr.mxu0 0.0
        %2423 = vmatpush1.msra.mxu0 0.0
        %2424 = vmatprep.subr.mxu0 0.0
        %2425 = vmatpush1.msra.mxu0 0.0
        %2426 = vmatprep.subr.mxu0 0.0
        %2427 = vmatpush1.msra.mxu0 0.0
        %2428 = vmatprep.subr.mxu0 0.0
        %2429 = vmatpush1.msra.mxu0 0.0
        %2430 = vmatprep.subr.mxu0 0.0
        %2431 = vmatpush1.msra.mxu0 0.0
        %2432 = vmatprep.subr.mxu0 0.0
        %2433 = vmatpush1.msra.mxu0 0.0
        %2434 = vmatprep.subr.mxu0 0.0
        %2435 = vmatpush1.msra.mxu0 0.0
        %2436 = vmatprep.subr.mxu0 0.0
        %2437 = vmatpush1.msra.mxu0 0.0
        %2438 = vmatprep.subr.mxu0 0.0
        %2439 = vmatpush1.msra.mxu0 0.0
        %2440 = vmatprep.subr.mxu0 0.0
        %2441 = vmatpush1.msra.mxu0 0.0
        %2442 = vmatprep.subr.mxu0 0.0
        %2443 = vmatpush1.msra.mxu0 0.0
        %2444 = vmatprep.mubr.f32.mxu0 0.0
        %2445 = vmatmul.mubr.f32.gmra.mrb[0].mxu0 %v2369
        %v2446 = vpop.f32.mrb[0].mxu0
        %v2447 = vadd.f32 0.0, %v2446
        %v2448 = vpop.f32.mrb[0].mxu0
        %2449 = vmatprep.mubr.f32.mxu0 0.0
        %2450 = vmatmul.mubr.f32.gmra.mrb[0].mxu0 %v2372
        %v2451 = vpop.f32.mrb[0].mxu0
        %v2452 = vadd.f32 0.0, %v2451
        %v2453 = vpop.f32.mrb[0].mxu0
        %2454 = vmatprep.mubr.f32.mxu0 0.0
        %2455 = vmatmul.mubr.f32.gmra.mrb[0].mxu0 %v2375
        %v2456 = vpop.f32.mrb[0].mxu0
        %v2457 = vadd.f32 0.0, %v2456
        %v2458 = vpop.f32.mrb[0].mxu0
        %2459 = vmatprep.mubr.f32.mxu0 0.0
        %2460 = vmatmul.mubr.f32.gmra.mrb[0].mxu0 %v2378
        %v2461 = vpop.f32.mrb[0].mxu0
        %v2462 = vadd.f32 0.0, %v2461
        %v2463 = vpop.f32.mrb[0].mxu0
        %2464 = vdwg.mxu0
        %2469 = vrot.lane.b32.xlu0 %v2447, 124
        %v2470 = vpop.permute.xlu0 %2469
        %2471 = vrot.lane.b32.xlu0 %v2452, 124
        %v2472 = vpop.permute.xlu0 %2471
        %2473 = vrot.lane.b32.xlu0 %v2457, 124
        %v2474 = vpop.permute.xlu0 %2473
        %2475 = vrot.lane.b32.xlu0 %v2462, 124
        %v2476 = vpop.permute.xlu0 %2475
        %2481 = vrot.lane.b32.xlu0 %v2447, 4
        %v2482 = vpop.permute.xlu0 %2481
        %2483 = vrot.lane.b32.xlu0 %v2452, 4
        %v2484 = vpop.permute.xlu0 %2483
        %2485 = vrot.lane.b32.xlu0 %v2457, 4
        %v2486 = vpop.permute.xlu0 %2485
        %2487 = vrot.lane.b32.xlu0 %v2462, 4
        %v2488 = vpop.permute.xlu0 %2487
        %v2493 = vsel %vm1020, %v2470, %v2482
        %v2494 = vsel %vm1020, %v2472, %v2484
        %v2495 = vsel %vm1020, %v2474, %v2486
        %v2496 = vsel %vm1020, %v2476, %v2488
        %v2497 = vld [vmem:[%s9] sm:$0xff]
        %v2498 = vld [vmem:[%s9 + $0x8] sm:$0xff]
        %v2499 = vld [vmem:[%s9 + $0x10] sm:$0xff]
        %v2500 = vld [vmem:[%s9 + $0x18] sm:$0xff]
        %v2501 = vlaneseq
        %v2502 = vshrl.u32 %v2501, 7
        %v2503 = vsub.s32 0, %v2502
        %v2504 = vrot.slane %v2447, %v2503
        %v2505 = vmul.f32 %v2504, %v2497
        %v2506 = vmul.f32 %v2504, %v2498
        %v2507 = vmul.f32 %v2504, %v2499
        %v2508 = vmul.f32 %v2504, %v2500
        %v2509 = vld [vmem:[%s10] sm:$0xff]
        %v2510 = vld [vmem:[%s10 + $0x8] sm:$0xff]
        %v2511 = vld [vmem:[%s10 + $0x10] sm:$0xff]
        %v2512 = vld [vmem:[%s10 + $0x18] sm:$0xff]
        %v2513 = vlaneseq
        %v2514 = vshrl.u32 %v2513, 7
        %v2515 = vsub.s32 0, %v2514
        %v2516 = vrot.slane %v2493, %v2515
        %v2517 = vmul.f32 %v2516, %v2509
        %v2518 = vmul.f32 %v2516, %v2510
        %v2519 = vmul.f32 %v2516, %v2511
        %v2520 = vmul.f32 %v2516, %v2512
        %v2521 = vadd.f32 %v2505, %v2517
        %v2522 = vadd.f32 %v2506, %v2518
        %v2523 = vadd.f32 %v2507, %v2519
        %v2524 = vadd.f32 %v2508, %v2520
        %s2525 = scalar_lea.vmem %s9, 32
        %v2526 = vld [vmem:[%s2525] sm:$0xff]
        %v2527 = vld [vmem:[%s2525 + $0x8] sm:$0xff]
        %v2528 = vld [vmem:[%s2525 + $0x10] sm:$0xff]
        %v2529 = vld [vmem:[%s2525 + $0x18] sm:$0xff]
        %v2530 = vlaneseq
        %v2531 = vshrl.u32 %v2530, 7
        %v2532 = vsub.s32 1, %v2531
        %v2533 = vrot.slane %v2447, %v2532
        %v2534 = vmul.f32 %v2533, %v2526
        %v2535 = vmul.f32 %v2533, %v2527
        %v2536 = vmul.f32 %v2533, %v2528
        %v2537 = vmul.f32 %v2533, %v2529
        %v2538 = vadd.f32 %v2521, %v2534
        %v2539 = vadd.f32 %v2522, %v2535
        %v2540 = vadd.f32 %v2523, %v2536
        %v2541 = vadd.f32 %v2524, %v2537
        %s2542 = scalar_lea.vmem %s10, 32
        %v2543 = vld [vmem:[%s2542] sm:$0xff]
        %v2544 = vld [vmem:[%s2542 + $0x8] sm:$0xff]
        %v2545 = vld [vmem:[%s2542 + $0x10] sm:$0xff]
        %v2546 = vld [vmem:[%s2542 + $0x18] sm:$0xff]
        %v2547 = vlaneseq
        %v2548 = vshrl.u32 %v2547, 7
        %v2549 = vsub.s32 1, %v2548
        %v2550 = vrot.slane %v2493, %v2549
        %v2551 = vmul.f32 %v2550, %v2543
        %v2552 = vmul.f32 %v2550, %v2544
        %v2553 = vmul.f32 %v2550, %v2545
        %v2554 = vmul.f32 %v2550, %v2546
        %v2555 = vadd.f32 %v2538, %v2551
        %v2556 = vadd.f32 %v2539, %v2552
        %v2557 = vadd.f32 %v2540, %v2553
        %v2558 = vadd.f32 %v2541, %v2554
        %s2559 = scalar_lea.vmem %s9, 64
        %v2560 = vld [vmem:[%s2559] sm:$0xff]
        %v2561 = vld [vmem:[%s2559 + $0x8] sm:$0xff]
        %v2562 = vld [vmem:[%s2559 + $0x10] sm:$0xff]
        %v2563 = vld [vmem:[%s2559 + $0x18] sm:$0xff]
        %v2564 = vlaneseq
        %v2565 = vshrl.u32 %v2564, 7
        %v2566 = vsub.s32 2, %v2565
        %v2567 = vrot.slane %v2447, %v2566
        %v2568 = vmul.f32 %v2567, %v2560
        %v2569 = vmul.f32 %v2567, %v2561
        %v2570 = vmul.f32 %v2567, %v2562
        %v2571 = vmul.f32 %v2567, %v2563
        %v2572 = vadd.f32 %v2555, %v2568
        %v2573 = vadd.f32 %v2556, %v2569
        %v2574 = vadd.f32 %v2557, %v2570
        %v2575 = vadd.f32 %v2558, %v2571
        %s2576 = scalar_lea.vmem %s10, 64
        %v2577 = vld [vmem:[%s2576] sm:$0xff]
        %v2578 = vld [vmem:[%s2576 + $0x8] sm:$0xff]
        %v2579 = vld [vmem:[%s2576 + $0x10] sm:$0xff]
        %v2580 = vld [vmem:[%s2576 + $0x18] sm:$0xff]
        %v2581 = vlaneseq
        %v2582 = vshrl.u32 %v2581, 7
        %v2583 = vsub.s32 2, %v2582
        %v2584 = vrot.slane %v2493, %v2583
        %v2585 = vmul.f32 %v2584, %v2577
        %v2586 = vmul.f32 %v2584, %v2578
        %v2587 = vmul.f32 %v2584, %v2579
        %v2588 = vmul.f32 %v2584, %v2580
        %v2589 = vadd.f32 %v2572, %v2585
        %v2590 = vadd.f32 %v2573, %v2586
        %v2591 = vadd.f32 %v2574, %v2587
        %v2592 = vadd.f32 %v2575, %v2588
        %s2593 = scalar_lea.vmem %s9, 96
        %v2594 = vld [vmem:[%s2593] sm:$0xff]
        %v2595 = vld [vmem:[%s2593 + $0x8] sm:$0xff]
        %v2596 = vld [vmem:[%s2593 + $0x10] sm:$0xff]
        %v2597 = vld [vmem:[%s2593 + $0x18] sm:$0xff]
        %v2598 = vlaneseq
        %v2599 = vshrl.u32 %v2598, 7
        %v2600 = vsub.s32 3, %v2599
        %v2601 = vrot.slane %v2447, %v2600
        %v2602 = vmul.f32 %v2601, %v2594
        %v2603 = vmul.f32 %v2601, %v2595
        %v2604 = vmul.f32 %v2601, %v2596
        %v2605 = vmul.f32 %v2601, %v2597
        %v2606 = vadd.f32 %v2589, %v2602
        %v2607 = vadd.f32 %v2590, %v2603
        %v2608 = vadd.f32 %v2591, %v2604
        %v2609 = vadd.f32 %v2592, %v2605
        %s2610 = scalar_lea.vmem %s10, 96
        %v2611 = vld [vmem:[%s2610] sm:$0xff]
        %v2612 = vld [vmem:[%s2610 + $0x8] sm:$0xff]
        %v2613 = vld [vmem:[%s2610 + $0x10] sm:$0xff]
        %v2614 = vld [vmem:[%s2610 + $0x18] sm:$0xff]
        %v2615 = vlaneseq
        %v2616 = vshrl.u32 %v2615, 7
        %v2617 = vsub.s32 3, %v2616
        %v2618 = vrot.slane %v2493, %v2617
        %v2619 = vmul.f32 %v2618, %v2611
        %v2620 = vmul.f32 %v2618, %v2612
        %v2621 = vmul.f32 %v2618, %v2613
        %v2622 = vmul.f32 %v2618, %v2614
        %v2623 = vadd.f32 %v2606, %v2619
        %v2624 = vadd.f32 %v2607, %v2620
        %v2625 = vadd.f32 %v2608, %v2621
        %v2626 = vadd.f32 %v2609, %v2622
        %s2627 = scalar_lea.vmem %s9, 128
        %v2628 = vld [vmem:[%s2627] sm:$0xff]
        %v2629 = vld [vmem:[%s2627 + $0x8] sm:$0xff]
        %v2630 = vld [vmem:[%s2627 + $0x10] sm:$0xff]
        %v2631 = vld [vmem:[%s2627 + $0x18] sm:$0xff]
        %v2632 = vlaneseq
        %v2633 = vshrl.u32 %v2632, 7
        %v2634 = vsub.s32 4, %v2633
        %v2635 = vrot.slane %v2447, %v2634
        %v2636 = vmul.f32 %v2635, %v2628
        %v2637 = vmul.f32 %v2635, %v2629
        %v2638 = vmul.f32 %v2635, %v2630
        %v2639 = vmul.f32 %v2635, %v2631
        %v2640 = vadd.f32 %v2623, %v2636
        %v2641 = vadd.f32 %v2624, %v2637
        %v2642 = vadd.f32 %v2625, %v2638
        %v2643 = vadd.f32 %v2626, %v2639
        %s2644 = scalar_lea.vmem %s10, 128
        %v2645 = vld [vmem:[%s2644] sm:$0xff]
        %v2646 = vld [vmem:[%s2644 + $0x8] sm:$0xff]
        %v2647 = vld [vmem:[%s2644 + $0x10] sm:$0xff]
        %v2648 = vld [vmem:[%s2644 + $0x18] sm:$0xff]
        %v2649 = vlaneseq
        %v2650 = vshrl.u32 %v2649, 7
        %v2651 = vsub.s32 4, %v2650
        %v2652 = vrot.slane %v2493, %v2651
        %v2653 = vmul.f32 %v2652, %v2645
        %v2654 = vmul.f32 %v2652, %v2646
        %v2655 = vmul.f32 %v2652, %v2647
        %v2656 = vmul.f32 %v2652, %v2648
        %v2657 = vadd.f32 %v2640, %v2653
        %v2658 = vadd.f32 %v2641, %v2654
        %v2659 = vadd.f32 %v2642, %v2655
        %v2660 = vadd.f32 %v2643, %v2656
        %s2661 = scalar_lea.vmem %s9, 160
        %v2662 = vld [vmem:[%s2661] sm:$0xff]
        %v2663 = vld [vmem:[%s2661 + $0x8] sm:$0xff]
        %v2664 = vld [vmem:[%s2661 + $0x10] sm:$0xff]
        %v2665 = vld [vmem:[%s2661 + $0x18] sm:$0xff]
        %v2666 = vlaneseq
        %v2667 = vshrl.u32 %v2666, 7
        %v2668 = vsub.s32 5, %v2667
        %v2669 = vrot.slane %v2447, %v2668
        %v2670 = vmul.f32 %v2669, %v2662
        %v2671 = vmul.f32 %v2669, %v2663
        %v2672 = vmul.f32 %v2669, %v2664
        %v2673 = vmul.f32 %v2669, %v2665
        %v2674 = vadd.f32 %v2657, %v2670
        %v2675 = vadd.f32 %v2658, %v2671
        %v2676 = vadd.f32 %v2659, %v2672
        %v2677 = vadd.f32 %v2660, %v2673
        %s2678 = scalar_lea.vmem %s10, 160
        %v2679 = vld [vmem:[%s2678] sm:$0xff]
        %v2680 = vld [vmem:[%s2678 + $0x8] sm:$0xff]
        %v2681 = vld [vmem:[%s2678 + $0x10] sm:$0xff]
        %v2682 = vld [vmem:[%s2678 + $0x18] sm:$0xff]
        %v2683 = vlaneseq
        %v2684 = vshrl.u32 %v2683, 7
        %v2685 = vsub.s32 5, %v2684
        %v2686 = vrot.slane %v2493, %v2685
        %v2687 = vmul.f32 %v2686, %v2679
        %v2688 = vmul.f32 %v2686, %v2680
        %v2689 = vmul.f32 %v2686, %v2681
        %v2690 = vmul.f32 %v2686, %v2682
        %v2691 = vadd.f32 %v2674, %v2687
        %v2692 = vadd.f32 %v2675, %v2688
        %v2693 = vadd.f32 %v2676, %v2689
        %v2694 = vadd.f32 %v2677, %v2690
        %s2695 = scalar_lea.vmem %s9, 192
        %v2696 = vld [vmem:[%s2695] sm:$0xff]
        %v2697 = vld [vmem:[%s2695 + $0x8] sm:$0xff]
        %v2698 = vld [vmem:[%s2695 + $0x10] sm:$0xff]
        %v2699 = vld [vmem:[%s2695 + $0x18] sm:$0xff]
        %v2700 = vlaneseq
        %v2701 = vshrl.u32 %v2700, 7
        %v2702 = vsub.s32 6, %v2701
        %v2703 = vrot.slane %v2447, %v2702
        %v2704 = vmul.f32 %v2703, %v2696
        %v2705 = vmul.f32 %v2703, %v2697
        %v2706 = vmul.f32 %v2703, %v2698
        %v2707 = vmul.f32 %v2703, %v2699
        %v2708 = vadd.f32 %v2691, %v2704
        %v2709 = vadd.f32 %v2692, %v2705
        %v2710 = vadd.f32 %v2693, %v2706
        %v2711 = vadd.f32 %v2694, %v2707
        %s2712 = scalar_lea.vmem %s10, 192
        %v2713 = vld [vmem:[%s2712] sm:$0xff]
        %v2714 = vld [vmem:[%s2712 + $0x8] sm:$0xff]
        %v2715 = vld [vmem:[%s2712 + $0x10] sm:$0xff]
        %v2716 = vld [vmem:[%s2712 + $0x18] sm:$0xff]
        %v2717 = vlaneseq
        %v2718 = vshrl.u32 %v2717, 7
        %v2719 = vsub.s32 6, %v2718
        %v2720 = vrot.slane %v2493, %v2719
        %v2721 = vmul.f32 %v2720, %v2713
        %v2722 = vmul.f32 %v2720, %v2714
        %v2723 = vmul.f32 %v2720, %v2715
        %v2724 = vmul.f32 %v2720, %v2716
        %v2725 = vadd.f32 %v2708, %v2721
        %v2726 = vadd.f32 %v2709, %v2722
        %v2727 = vadd.f32 %v2710, %v2723
        %v2728 = vadd.f32 %v2711, %v2724
        %s2729 = scalar_lea.vmem %s9, 224
        %v2730 = vld [vmem:[%s2729] sm:$0xff]
        %v2731 = vld [vmem:[%s2729 + $0x8] sm:$0xff]
        %v2732 = vld [vmem:[%s2729 + $0x10] sm:$0xff]
        %v2733 = vld [vmem:[%s2729 + $0x18] sm:$0xff]
        %v2734 = vlaneseq
        %v2735 = vshrl.u32 %v2734, 7
        %v2736 = vsub.s32 7, %v2735
        %v2737 = vrot.slane %v2447, %v2736
        %v2738 = vmul.f32 %v2737, %v2730
        %v2739 = vmul.f32 %v2737, %v2731
        %v2740 = vmul.f32 %v2737, %v2732
        %v2741 = vmul.f32 %v2737, %v2733
        %v2742 = vadd.f32 %v2725, %v2738
        %v2743 = vadd.f32 %v2726, %v2739
        %v2744 = vadd.f32 %v2727, %v2740
        %v2745 = vadd.f32 %v2728, %v2741
        %s2746 = scalar_lea.vmem %s10, 224
        %v2747 = vld [vmem:[%s2746] sm:$0xff]
        %v2748 = vld [vmem:[%s2746 + $0x8] sm:$0xff]
        %v2749 = vld [vmem:[%s2746 + $0x10] sm:$0xff]
        %v2750 = vld [vmem:[%s2746 + $0x18] sm:$0xff]
        %v2751 = vlaneseq
        %v2752 = vshrl.u32 %v2751, 7
        %v2753 = vsub.s32 7, %v2752
        %v2754 = vrot.slane %v2493, %v2753
        %v2755 = vmul.f32 %v2754, %v2747
        %v2756 = vmul.f32 %v2754, %v2748
        %v2757 = vmul.f32 %v2754, %v2749
        %v2758 = vmul.f32 %v2754, %v2750
        %v2759 = vadd.f32 %v2742, %v2755
        %v2760 = vadd.f32 %v2743, %v2756
        %v2761 = vadd.f32 %v2744, %v2757
        %v2762 = vadd.f32 %v2745, %v2758
        %s2763 = scalar_lea.vmem %s9, 256
        %v2764 = vld [vmem:[%s2763] sm:$0xff]
        %v2765 = vld [vmem:[%s2763 + $0x8] sm:$0xff]
        %v2766 = vld [vmem:[%s2763 + $0x10] sm:$0xff]
        %v2767 = vld [vmem:[%s2763 + $0x18] sm:$0xff]
        %v2768 = vlaneseq
        %v2769 = vshrl.u32 %v2768, 7
        %v2770 = vsub.s32 0, %v2769
        %v2771 = vrot.slane %v2452, %v2770
        %v2772 = vmul.f32 %v2771, %v2764
        %v2773 = vmul.f32 %v2771, %v2765
        %v2774 = vmul.f32 %v2771, %v2766
        %v2775 = vmul.f32 %v2771, %v2767
        %v2776 = vadd.f32 %v2759, %v2772
        %v2777 = vadd.f32 %v2760, %v2773
        %v2778 = vadd.f32 %v2761, %v2774
        %v2779 = vadd.f32 %v2762, %v2775
        %s2780 = scalar_lea.vmem %s10, 256
        %v2781 = vld [vmem:[%s2780] sm:$0xff]
        %v2782 = vld [vmem:[%s2780 + $0x8] sm:$0xff]
        %v2783 = vld [vmem:[%s2780 + $0x10] sm:$0xff]
        %v2784 = vld [vmem:[%s2780 + $0x18] sm:$0xff]
        %v2785 = vlaneseq
        %v2786 = vshrl.u32 %v2785, 7
        %v2787 = vsub.s32 0, %v2786
        %v2788 = vrot.slane %v2494, %v2787
        %v2789 = vmul.f32 %v2788, %v2781
        %v2790 = vmul.f32 %v2788, %v2782
        %v2791 = vmul.f32 %v2788, %v2783
        %v2792 = vmul.f32 %v2788, %v2784
        %v2793 = vadd.f32 %v2776, %v2789
        %v2794 = vadd.f32 %v2777, %v2790
        %v2795 = vadd.f32 %v2778, %v2791
        %v2796 = vadd.f32 %v2779, %v2792
        %s2797 = scalar_lea.vmem %s9, 288
        %v2798 = vld [vmem:[%s2797] sm:$0xff]
        %v2799 = vld [vmem:[%s2797 + $0x8] sm:$0xff]
        %v2800 = vld [vmem:[%s2797 + $0x10] sm:$0xff]
        %v2801 = vld [vmem:[%s2797 + $0x18] sm:$0xff]
        %v2802 = vlaneseq
        %v2803 = vshrl.u32 %v2802, 7
        %v2804 = vsub.s32 1, %v2803
        %v2805 = vrot.slane %v2452, %v2804
        %v2806 = vmul.f32 %v2805, %v2798
        %v2807 = vmul.f32 %v2805, %v2799
        %v2808 = vmul.f32 %v2805, %v2800
        %v2809 = vmul.f32 %v2805, %v2801
        %v2810 = vadd.f32 %v2793, %v2806
        %v2811 = vadd.f32 %v2794, %v2807
        %v2812 = vadd.f32 %v2795, %v2808
        %v2813 = vadd.f32 %v2796, %v2809
        %s2814 = scalar_lea.vmem %s10, 288
        %v2815 = vld [vmem:[%s2814] sm:$0xff]
        %v2816 = vld [vmem:[%s2814 + $0x8] sm:$0xff]
        %v2817 = vld [vmem:[%s2814 + $0x10] sm:$0xff]
        %v2818 = vld [vmem:[%s2814 + $0x18] sm:$0xff]
        %v2819 = vlaneseq
        %v2820 = vshrl.u32 %v2819, 7
        %v2821 = vsub.s32 1, %v2820
        %v2822 = vrot.slane %v2494, %v2821
        %v2823 = vmul.f32 %v2822, %v2815
        %v2824 = vmul.f32 %v2822, %v2816
        %v2825 = vmul.f32 %v2822, %v2817
        %v2826 = vmul.f32 %v2822, %v2818
        %v2827 = vadd.f32 %v2810, %v2823
        %v2828 = vadd.f32 %v2811, %v2824
        %v2829 = vadd.f32 %v2812, %v2825
        %v2830 = vadd.f32 %v2813, %v2826
        %s2831 = scalar_lea.vmem %s9, 320
        %v2832 = vld [vmem:[%s2831] sm:$0xff]
        %v2833 = vld [vmem:[%s2831 + $0x8] sm:$0xff]
        %v2834 = vld [vmem:[%s2831 + $0x10] sm:$0xff]
        %v2835 = vld [vmem:[%s2831 + $0x18] sm:$0xff]
        %v2836 = vlaneseq
        %v2837 = vshrl.u32 %v2836, 7
        %v2838 = vsub.s32 2, %v2837
        %v2839 = vrot.slane %v2452, %v2838
        %v2840 = vmul.f32 %v2839, %v2832
        %v2841 = vmul.f32 %v2839, %v2833
        %v2842 = vmul.f32 %v2839, %v2834
        %v2843 = vmul.f32 %v2839, %v2835
        %v2844 = vadd.f32 %v2827, %v2840
        %v2845 = vadd.f32 %v2828, %v2841
        %v2846 = vadd.f32 %v2829, %v2842
        %v2847 = vadd.f32 %v2830, %v2843
        %s2848 = scalar_lea.vmem %s10, 320
        %v2849 = vld [vmem:[%s2848] sm:$0xff]
        %v2850 = vld [vmem:[%s2848 + $0x8] sm:$0xff]
        %v2851 = vld [vmem:[%s2848 + $0x10] sm:$0xff]
        %v2852 = vld [vmem:[%s2848 + $0x18] sm:$0xff]
        %v2853 = vlaneseq
        %v2854 = vshrl.u32 %v2853, 7
        %v2855 = vsub.s32 2, %v2854
        %v2856 = vrot.slane %v2494, %v2855
        %v2857 = vmul.f32 %v2856, %v2849
        %v2858 = vmul.f32 %v2856, %v2850
        %v2859 = vmul.f32 %v2856, %v2851
        %v2860 = vmul.f32 %v2856, %v2852
        %v2861 = vadd.f32 %v2844, %v2857
        %v2862 = vadd.f32 %v2845, %v2858
        %v2863 = vadd.f32 %v2846, %v2859
        %v2864 = vadd.f32 %v2847, %v2860
        %s2865 = scalar_lea.vmem %s9, 352
        %v2866 = vld [vmem:[%s2865] sm:$0xff]
        %v2867 = vld [vmem:[%s2865 + $0x8] sm:$0xff]
        %v2868 = vld [vmem:[%s2865 + $0x10] sm:$0xff]
        %v2869 = vld [vmem:[%s2865 + $0x18] sm:$0xff]
        %v2870 = vlaneseq
        %v2871 = vshrl.u32 %v2870, 7
        %v2872 = vsub.s32 3, %v2871
        %v2873 = vrot.slane %v2452, %v2872
        %v2874 = vmul.f32 %v2873, %v2866
        %v2875 = vmul.f32 %v2873, %v2867
        %v2876 = vmul.f32 %v2873, %v2868
        %v2877 = vmul.f32 %v2873, %v2869
        %v2878 = vadd.f32 %v2861, %v2874
        %v2879 = vadd.f32 %v2862, %v2875
        %v2880 = vadd.f32 %v2863, %v2876
        %v2881 = vadd.f32 %v2864, %v2877
        %s2882 = scalar_lea.vmem %s10, 352
        %v2883 = vld [vmem:[%s2882] sm:$0xff]
        %v2884 = vld [vmem:[%s2882 + $0x8] sm:$0xff]
        %v2885 = vld [vmem:[%s2882 + $0x10] sm:$0xff]
        %v2886 = vld [vmem:[%s2882 + $0x18] sm:$0xff]
        %v2887 = vlaneseq
        %v2888 = vshrl.u32 %v2887, 7
        %v2889 = vsub.s32 3, %v2888
        %v2890 = vrot.slane %v2494, %v2889
        %v2891 = vmul.f32 %v2890, %v2883
        %v2892 = vmul.f32 %v2890, %v2884
        %v2893 = vmul.f32 %v2890, %v2885
        %v2894 = vmul.f32 %v2890, %v2886
        %v2895 = vadd.f32 %v2878, %v2891
        %v2896 = vadd.f32 %v2879, %v2892
        %v2897 = vadd.f32 %v2880, %v2893
        %v2898 = vadd.f32 %v2881, %v2894
        %s2899 = scalar_lea.vmem %s9, 384
        %v2900 = vld [vmem:[%s2899] sm:$0xff]
        %v2901 = vld [vmem:[%s2899 + $0x8] sm:$0xff]
        %v2902 = vld [vmem:[%s2899 + $0x10] sm:$0xff]
        %v2903 = vld [vmem:[%s2899 + $0x18] sm:$0xff]
        %v2904 = vlaneseq
        %v2905 = vshrl.u32 %v2904, 7
        %v2906 = vsub.s32 4, %v2905
        %v2907 = vrot.slane %v2452, %v2906
        %v2908 = vmul.f32 %v2907, %v2900
        %v2909 = vmul.f32 %v2907, %v2901
        %v2910 = vmul.f32 %v2907, %v2902
        %v2911 = vmul.f32 %v2907, %v2903
        %v2912 = vadd.f32 %v2895, %v2908
        %v2913 = vadd.f32 %v2896, %v2909
        %v2914 = vadd.f32 %v2897, %v2910
        %v2915 = vadd.f32 %v2898, %v2911
        %s2916 = scalar_lea.vmem %s10, 384
        %v2917 = vld [vmem:[%s2916] sm:$0xff]
        %v2918 = vld [vmem:[%s2916 + $0x8] sm:$0xff]
        %v2919 = vld [vmem:[%s2916 + $0x10] sm:$0xff]
        %v2920 = vld [vmem:[%s2916 + $0x18] sm:$0xff]
        %v2921 = vlaneseq
        %v2922 = vshrl.u32 %v2921, 7
        %v2923 = vsub.s32 4, %v2922
        %v2924 = vrot.slane %v2494, %v2923
        %v2925 = vmul.f32 %v2924, %v2917
        %v2926 = vmul.f32 %v2924, %v2918
        %v2927 = vmul.f32 %v2924, %v2919
        %v2928 = vmul.f32 %v2924, %v2920
        %v2929 = vadd.f32 %v2912, %v2925
        %v2930 = vadd.f32 %v2913, %v2926
        %v2931 = vadd.f32 %v2914, %v2927
        %v2932 = vadd.f32 %v2915, %v2928
        %s2933 = scalar_lea.vmem %s9, 416
        %v2934 = vld [vmem:[%s2933] sm:$0xff]
        %v2935 = vld [vmem:[%s2933 + $0x8] sm:$0xff]
        %v2936 = vld [vmem:[%s2933 + $0x10] sm:$0xff]
        %v2937 = vld [vmem:[%s2933 + $0x18] sm:$0xff]
        %v2938 = vlaneseq
        %v2939 = vshrl.u32 %v2938, 7
        %v2940 = vsub.s32 5, %v2939
        %v2941 = vrot.slane %v2452, %v2940
        %v2942 = vmul.f32 %v2941, %v2934
        %v2943 = vmul.f32 %v2941, %v2935
        %v2944 = vmul.f32 %v2941, %v2936
        %v2945 = vmul.f32 %v2941, %v2937
        %v2946 = vadd.f32 %v2929, %v2942
        %v2947 = vadd.f32 %v2930, %v2943
        %v2948 = vadd.f32 %v2931, %v2944
        %v2949 = vadd.f32 %v2932, %v2945
        %s2950 = scalar_lea.vmem %s10, 416
        %v2951 = vld [vmem:[%s2950] sm:$0xff]
        %v2952 = vld [vmem:[%s2950 + $0x8] sm:$0xff]
        %v2953 = vld [vmem:[%s2950 + $0x10] sm:$0xff]
        %v2954 = vld [vmem:[%s2950 + $0x18] sm:$0xff]
        %v2955 = vlaneseq
        %v2956 = vshrl.u32 %v2955, 7
        %v2957 = vsub.s32 5, %v2956
        %v2958 = vrot.slane %v2494, %v2957
        %v2959 = vmul.f32 %v2958, %v2951
        %v2960 = vmul.f32 %v2958, %v2952
        %v2961 = vmul.f32 %v2958, %v2953
        %v2962 = vmul.f32 %v2958, %v2954
        %v2963 = vadd.f32 %v2946, %v2959
        %v2964 = vadd.f32 %v2947, %v2960
        %v2965 = vadd.f32 %v2948, %v2961
        %v2966 = vadd.f32 %v2949, %v2962
        %s2967 = scalar_lea.vmem %s9, 448
        %v2968 = vld [vmem:[%s2967] sm:$0xff]
        %v2969 = vld [vmem:[%s2967 + $0x8] sm:$0xff]
        %v2970 = vld [vmem:[%s2967 + $0x10] sm:$0xff]
        %v2971 = vld [vmem:[%s2967 + $0x18] sm:$0xff]
        %v2972 = vlaneseq
        %v2973 = vshrl.u32 %v2972, 7
        %v2974 = vsub.s32 6, %v2973
        %v2975 = vrot.slane %v2452, %v2974
        %v2976 = vmul.f32 %v2975, %v2968
        %v2977 = vmul.f32 %v2975, %v2969
        %v2978 = vmul.f32 %v2975, %v2970
        %v2979 = vmul.f32 %v2975, %v2971
        %v2980 = vadd.f32 %v2963, %v2976
        %v2981 = vadd.f32 %v2964, %v2977
        %v2982 = vadd.f32 %v2965, %v2978
        %v2983 = vadd.f32 %v2966, %v2979
        %s2984 = scalar_lea.vmem %s10, 448
        %v2985 = vld [vmem:[%s2984] sm:$0xff]
        %v2986 = vld [vmem:[%s2984 + $0x8] sm:$0xff]
        %v2987 = vld [vmem:[%s2984 + $0x10] sm:$0xff]
        %v2988 = vld [vmem:[%s2984 + $0x18] sm:$0xff]
        %v2989 = vlaneseq
        %v2990 = vshrl.u32 %v2989, 7
        %v2991 = vsub.s32 6, %v2990
        %v2992 = vrot.slane %v2494, %v2991
        %v2993 = vmul.f32 %v2992, %v2985
        %v2994 = vmul.f32 %v2992, %v2986
        %v2995 = vmul.f32 %v2992, %v2987
        %v2996 = vmul.f32 %v2992, %v2988
        %v2997 = vadd.f32 %v2980, %v2993
        %v2998 = vadd.f32 %v2981, %v2994
        %v2999 = vadd.f32 %v2982, %v2995
        %v3000 = vadd.f32 %v2983, %v2996
        %s3001 = scalar_lea.vmem %s9, 480
        %v3002 = vld [vmem:[%s3001] sm:$0xff]
        %v3003 = vld [vmem:[%s3001 + $0x8] sm:$0xff]
        %v3004 = vld [vmem:[%s3001 + $0x10] sm:$0xff]
        %v3005 = vld [vmem:[%s3001 + $0x18] sm:$0xff]
        %v3006 = vlaneseq
        %v3007 = vshrl.u32 %v3006, 7
        %v3008 = vsub.s32 7, %v3007
        %v3009 = vrot.slane %v2452, %v3008
        %v3010 = vmul.f32 %v3009, %v3002
        %v3011 = vmul.f32 %v3009, %v3003
        %v3012 = vmul.f32 %v3009, %v3004
        %v3013 = vmul.f32 %v3009, %v3005
        %v3014 = vadd.f32 %v2997, %v3010
        %v3015 = vadd.f32 %v2998, %v3011
        %v3016 = vadd.f32 %v2999, %v3012
        %v3017 = vadd.f32 %v3000, %v3013
        %s3018 = scalar_lea.vmem %s10, 480
        %v3019 = vld [vmem:[%s3018] sm:$0xff]
        %v3020 = vld [vmem:[%s3018 + $0x8] sm:$0xff]
        %v3021 = vld [vmem:[%s3018 + $0x10] sm:$0xff]
        %v3022 = vld [vmem:[%s3018 + $0x18] sm:$0xff]
        %v3023 = vlaneseq
        %v3024 = vshrl.u32 %v3023, 7
        %v3025 = vsub.s32 7, %v3024
        %v3026 = vrot.slane %v2494, %v3025
        %v3027 = vmul.f32 %v3026, %v3019
        %v3028 = vmul.f32 %v3026, %v3020
        %v3029 = vmul.f32 %v3026, %v3021
        %v3030 = vmul.f32 %v3026, %v3022
        %v3031 = vadd.f32 %v3014, %v3027
        %v3032 = vadd.f32 %v3015, %v3028
        %v3033 = vadd.f32 %v3016, %v3029
        %v3034 = vadd.f32 %v3017, %v3030
        %s3035 = scalar_lea.vmem %s9, 512
        %v3036 = vld [vmem:[%s3035] sm:$0xff]
        %v3037 = vld [vmem:[%s3035 + $0x8] sm:$0xff]
        %v3038 = vld [vmem:[%s3035 + $0x10] sm:$0xff]
        %v3039 = vld [vmem:[%s3035 + $0x18] sm:$0xff]
        %v3040 = vlaneseq
        %v3041 = vshrl.u32 %v3040, 7
        %v3042 = vsub.s32 0, %v3041
        %v3043 = vrot.slane %v2457, %v3042
        %v3044 = vmul.f32 %v3043, %v3036
        %v3045 = vmul.f32 %v3043, %v3037
        %v3046 = vmul.f32 %v3043, %v3038
        %v3047 = vmul.f32 %v3043, %v3039
        %v3048 = vadd.f32 %v3031, %v3044
        %v3049 = vadd.f32 %v3032, %v3045
        %v3050 = vadd.f32 %v3033, %v3046
        %v3051 = vadd.f32 %v3034, %v3047
        %s3052 = scalar_lea.vmem %s10, 512
        %v3053 = vld [vmem:[%s3052] sm:$0xff]
        %v3054 = vld [vmem:[%s3052 + $0x8] sm:$0xff]
        %v3055 = vld [vmem:[%s3052 + $0x10] sm:$0xff]
        %v3056 = vld [vmem:[%s3052 + $0x18] sm:$0xff]
        %v3057 = vlaneseq
        %v3058 = vshrl.u32 %v3057, 7
        %v3059 = vsub.s32 0, %v3058
        %v3060 = vrot.slane %v2495, %v3059
        %v3061 = vmul.f32 %v3060, %v3053
        %v3062 = vmul.f32 %v3060, %v3054
        %v3063 = vmul.f32 %v3060, %v3055
        %v3064 = vmul.f32 %v3060, %v3056
        %v3065 = vadd.f32 %v3048, %v3061
        %v3066 = vadd.f32 %v3049, %v3062
        %v3067 = vadd.f32 %v3050, %v3063
        %v3068 = vadd.f32 %v3051, %v3064
        %s3069 = scalar_lea.vmem %s9, 544
        %v3070 = vld [vmem:[%s3069] sm:$0xff]
        %v3071 = vld [vmem:[%s3069 + $0x8] sm:$0xff]
        %v3072 = vld [vmem:[%s3069 + $0x10] sm:$0xff]
        %v3073 = vld [vmem:[%s3069 + $0x18] sm:$0xff]
        %v3074 = vlaneseq
        %v3075 = vshrl.u32 %v3074, 7
        %v3076 = vsub.s32 1, %v3075
        %v3077 = vrot.slane %v2457, %v3076
        %v3078 = vmul.f32 %v3077, %v3070
        %v3079 = vmul.f32 %v3077, %v3071
        %v3080 = vmul.f32 %v3077, %v3072
        %v3081 = vmul.f32 %v3077, %v3073
        %v3082 = vadd.f32 %v3065, %v3078
        %v3083 = vadd.f32 %v3066, %v3079
        %v3084 = vadd.f32 %v3067, %v3080
        %v3085 = vadd.f32 %v3068, %v3081
        %s3086 = scalar_lea.vmem %s10, 544
        %v3087 = vld [vmem:[%s3086] sm:$0xff]
        %v3088 = vld [vmem:[%s3086 + $0x8] sm:$0xff]
        %v3089 = vld [vmem:[%s3086 + $0x10] sm:$0xff]
        %v3090 = vld [vmem:[%s3086 + $0x18] sm:$0xff]
        %v3091 = vlaneseq
        %v3092 = vshrl.u32 %v3091, 7
        %v3093 = vsub.s32 1, %v3092
        %v3094 = vrot.slane %v2495, %v3093
        %v3095 = vmul.f32 %v3094, %v3087
        %v3096 = vmul.f32 %v3094, %v3088
        %v3097 = vmul.f32 %v3094, %v3089
        %v3098 = vmul.f32 %v3094, %v3090
        %v3099 = vadd.f32 %v3082, %v3095
        %v3100 = vadd.f32 %v3083, %v3096
        %v3101 = vadd.f32 %v3084, %v3097
        %v3102 = vadd.f32 %v3085, %v3098
        %s3103 = scalar_lea.vmem %s9, 576
        %v3104 = vld [vmem:[%s3103] sm:$0xff]
        %v3105 = vld [vmem:[%s3103 + $0x8] sm:$0xff]
        %v3106 = vld [vmem:[%s3103 + $0x10] sm:$0xff]
        %v3107 = vld [vmem:[%s3103 + $0x18] sm:$0xff]
        %v3108 = vlaneseq
        %v3109 = vshrl.u32 %v3108, 7
        %v3110 = vsub.s32 2, %v3109
        %v3111 = vrot.slane %v2457, %v3110
        %v3112 = vmul.f32 %v3111, %v3104
        %v3113 = vmul.f32 %v3111, %v3105
        %v3114 = vmul.f32 %v3111, %v3106
        %v3115 = vmul.f32 %v3111, %v3107
        %v3116 = vadd.f32 %v3099, %v3112
        %v3117 = vadd.f32 %v3100, %v3113
        %v3118 = vadd.f32 %v3101, %v3114
        %v3119 = vadd.f32 %v3102, %v3115
        %s3120 = scalar_lea.vmem %s10, 576
        %v3121 = vld [vmem:[%s3120] sm:$0xff]
        %v3122 = vld [vmem:[%s3120 + $0x8] sm:$0xff]
        %v3123 = vld [vmem:[%s3120 + $0x10] sm:$0xff]
        %v3124 = vld [vmem:[%s3120 + $0x18] sm:$0xff]
        %v3125 = vlaneseq
        %v3126 = vshrl.u32 %v3125, 7
        %v3127 = vsub.s32 2, %v3126
        %v3128 = vrot.slane %v2495, %v3127
        %v3129 = vmul.f32 %v3128, %v3121
        %v3130 = vmul.f32 %v3128, %v3122
        %v3131 = vmul.f32 %v3128, %v3123
        %v3132 = vmul.f32 %v3128, %v3124
        %v3133 = vadd.f32 %v3116, %v3129
        %v3134 = vadd.f32 %v3117, %v3130
        %v3135 = vadd.f32 %v3118, %v3131
        %v3136 = vadd.f32 %v3119, %v3132
        %s3137 = scalar_lea.vmem %s9, 608
        %v3138 = vld [vmem:[%s3137] sm:$0xff]
        %v3139 = vld [vmem:[%s3137 + $0x8] sm:$0xff]
        %v3140 = vld [vmem:[%s3137 + $0x10] sm:$0xff]
        %v3141 = vld [vmem:[%s3137 + $0x18] sm:$0xff]
        %v3142 = vlaneseq
        %v3143 = vshrl.u32 %v3142, 7
        %v3144 = vsub.s32 3, %v3143
        %v3145 = vrot.slane %v2457, %v3144
        %v3146 = vmul.f32 %v3145, %v3138
        %v3147 = vmul.f32 %v3145, %v3139
        %v3148 = vmul.f32 %v3145, %v3140
        %v3149 = vmul.f32 %v3145, %v3141
        %v3150 = vadd.f32 %v3133, %v3146
        %v3151 = vadd.f32 %v3134, %v3147
        %v3152 = vadd.f32 %v3135, %v3148
        %v3153 = vadd.f32 %v3136, %v3149
        %s3154 = scalar_lea.vmem %s10, 608
        %v3155 = vld [vmem:[%s3154] sm:$0xff]
        %v3156 = vld [vmem:[%s3154 + $0x8] sm:$0xff]
        %v3157 = vld [vmem:[%s3154 + $0x10] sm:$0xff]
        %v3158 = vld [vmem:[%s3154 + $0x18] sm:$0xff]
        %v3159 = vlaneseq
        %v3160 = vshrl.u32 %v3159, 7
        %v3161 = vsub.s32 3, %v3160
        %v3162 = vrot.slane %v2495, %v3161
        %v3163 = vmul.f32 %v3162, %v3155
        %v3164 = vmul.f32 %v3162, %v3156
        %v3165 = vmul.f32 %v3162, %v3157
        %v3166 = vmul.f32 %v3162, %v3158
        %v3167 = vadd.f32 %v3150, %v3163
        %v3168 = vadd.f32 %v3151, %v3164
        %v3169 = vadd.f32 %v3152, %v3165
        %v3170 = vadd.f32 %v3153, %v3166
        %s3171 = scalar_lea.vmem %s9, 640
        %v3172 = vld [vmem:[%s3171] sm:$0xff]
        %v3173 = vld [vmem:[%s3171 + $0x8] sm:$0xff]
        %v3174 = vld [vmem:[%s3171 + $0x10] sm:$0xff]
        %v3175 = vld [vmem:[%s3171 + $0x18] sm:$0xff]
        %v3176 = vlaneseq
        %v3177 = vshrl.u32 %v3176, 7
        %v3178 = vsub.s32 4, %v3177
        %v3179 = vrot.slane %v2457, %v3178
        %v3180 = vmul.f32 %v3179, %v3172
        %v3181 = vmul.f32 %v3179, %v3173
        %v3182 = vmul.f32 %v3179, %v3174
        %v3183 = vmul.f32 %v3179, %v3175
        %v3184 = vadd.f32 %v3167, %v3180
        %v3185 = vadd.f32 %v3168, %v3181
        %v3186 = vadd.f32 %v3169, %v3182
        %v3187 = vadd.f32 %v3170, %v3183
        %s3188 = scalar_lea.vmem %s10, 640
        %v3189 = vld [vmem:[%s3188] sm:$0xff]
        %v3190 = vld [vmem:[%s3188 + $0x8] sm:$0xff]
        %v3191 = vld [vmem:[%s3188 + $0x10] sm:$0xff]
        %v3192 = vld [vmem:[%s3188 + $0x18] sm:$0xff]
        %v3193 = vlaneseq
        %v3194 = vshrl.u32 %v3193, 7
        %v3195 = vsub.s32 4, %v3194
        %v3196 = vrot.slane %v2495, %v3195
        %v3197 = vmul.f32 %v3196, %v3189
        %v3198 = vmul.f32 %v3196, %v3190
        %v3199 = vmul.f32 %v3196, %v3191
        %v3200 = vmul.f32 %v3196, %v3192
        %v3201 = vadd.f32 %v3184, %v3197
        %v3202 = vadd.f32 %v3185, %v3198
        %v3203 = vadd.f32 %v3186, %v3199
        %v3204 = vadd.f32 %v3187, %v3200
        %s3205 = scalar_lea.vmem %s9, 672
        %v3206 = vld [vmem:[%s3205] sm:$0xff]
        %v3207 = vld [vmem:[%s3205 + $0x8] sm:$0xff]
        %v3208 = vld [vmem:[%s3205 + $0x10] sm:$0xff]
        %v3209 = vld [vmem:[%s3205 + $0x18] sm:$0xff]
        %v3210 = vlaneseq
        %v3211 = vshrl.u32 %v3210, 7
        %v3212 = vsub.s32 5, %v3211
        %v3213 = vrot.slane %v2457, %v3212
        %v3214 = vmul.f32 %v3213, %v3206
        %v3215 = vmul.f32 %v3213, %v3207
        %v3216 = vmul.f32 %v3213, %v3208
        %v3217 = vmul.f32 %v3213, %v3209
        %v3218 = vadd.f32 %v3201, %v3214
        %v3219 = vadd.f32 %v3202, %v3215
        %v3220 = vadd.f32 %v3203, %v3216
        %v3221 = vadd.f32 %v3204, %v3217
        %s3222 = scalar_lea.vmem %s10, 672
        %v3223 = vld [vmem:[%s3222] sm:$0xff]
        %v3224 = vld [vmem:[%s3222 + $0x8] sm:$0xff]
        %v3225 = vld [vmem:[%s3222 + $0x10] sm:$0xff]
        %v3226 = vld [vmem:[%s3222 + $0x18] sm:$0xff]
        %v3227 = vlaneseq
        %v3228 = vshrl.u32 %v3227, 7
        %v3229 = vsub.s32 5, %v3228
        %v3230 = vrot.slane %v2495, %v3229
        %v3231 = vmul.f32 %v3230, %v3223
        %v3232 = vmul.f32 %v3230, %v3224
        %v3233 = vmul.f32 %v3230, %v3225
        %v3234 = vmul.f32 %v3230, %v3226
        %v3235 = vadd.f32 %v3218, %v3231
        %v3236 = vadd.f32 %v3219, %v3232
        %v3237 = vadd.f32 %v3220, %v3233
        %v3238 = vadd.f32 %v3221, %v3234
        %s3239 = scalar_lea.vmem %s9, 704
        %v3240 = vld [vmem:[%s3239] sm:$0xff]
        %v3241 = vld [vmem:[%s3239 + $0x8] sm:$0xff]
        %v3242 = vld [vmem:[%s3239 + $0x10] sm:$0xff]
        %v3243 = vld [vmem:[%s3239 + $0x18] sm:$0xff]
        %v3244 = vlaneseq
        %v3245 = vshrl.u32 %v3244, 7
        %v3246 = vsub.s32 6, %v3245
        %v3247 = vrot.slane %v2457, %v3246
        %v3248 = vmul.f32 %v3247, %v3240
        %v3249 = vmul.f32 %v3247, %v3241
        %v3250 = vmul.f32 %v3247, %v3242
        %v3251 = vmul.f32 %v3247, %v3243
        %v3252 = vadd.f32 %v3235, %v3248
        %v3253 = vadd.f32 %v3236, %v3249
        %v3254 = vadd.f32 %v3237, %v3250
        %v3255 = vadd.f32 %v3238, %v3251
        %s3256 = scalar_lea.vmem %s10, 704
        %v3257 = vld [vmem:[%s3256] sm:$0xff]
        %v3258 = vld [vmem:[%s3256 + $0x8] sm:$0xff]
        %v3259 = vld [vmem:[%s3256 + $0x10] sm:$0xff]
        %v3260 = vld [vmem:[%s3256 + $0x18] sm:$0xff]
        %v3261 = vlaneseq
        %v3262 = vshrl.u32 %v3261, 7
        %v3263 = vsub.s32 6, %v3262
        %v3264 = vrot.slane %v2495, %v3263
        %v3265 = vmul.f32 %v3264, %v3257
        %v3266 = vmul.f32 %v3264, %v3258
        %v3267 = vmul.f32 %v3264, %v3259
        %v3268 = vmul.f32 %v3264, %v3260
        %v3269 = vadd.f32 %v3252, %v3265
        %v3270 = vadd.f32 %v3253, %v3266
        %v3271 = vadd.f32 %v3254, %v3267
        %v3272 = vadd.f32 %v3255, %v3268
        %s3273 = scalar_lea.vmem %s9, 736
        %v3274 = vld [vmem:[%s3273] sm:$0xff]
        %v3275 = vld [vmem:[%s3273 + $0x8] sm:$0xff]
        %v3276 = vld [vmem:[%s3273 + $0x10] sm:$0xff]
        %v3277 = vld [vmem:[%s3273 + $0x18] sm:$0xff]
        %v3278 = vlaneseq
        %v3279 = vshrl.u32 %v3278, 7
        %v3280 = vsub.s32 7, %v3279
        %v3281 = vrot.slane %v2457, %v3280
        %v3282 = vmul.f32 %v3281, %v3274
        %v3283 = vmul.f32 %v3281, %v3275
        %v3284 = vmul.f32 %v3281, %v3276
        %v3285 = vmul.f32 %v3281, %v3277
        %v3286 = vadd.f32 %v3269, %v3282
        %v3287 = vadd.f32 %v3270, %v3283
        %v3288 = vadd.f32 %v3271, %v3284
        %v3289 = vadd.f32 %v3272, %v3285
        %s3290 = scalar_lea.vmem %s10, 736
        %v3291 = vld [vmem:[%s3290] sm:$0xff]
        %v3292 = vld [vmem:[%s3290 + $0x8] sm:$0xff]
        %v3293 = vld [vmem:[%s3290 + $0x10] sm:$0xff]
        %v3294 = vld [vmem:[%s3290 + $0x18] sm:$0xff]
        %v3295 = vlaneseq
        %v3296 = vshrl.u32 %v3295, 7
        %v3297 = vsub.s32 7, %v3296
        %v3298 = vrot.slane %v2495, %v3297
        %v3299 = vmul.f32 %v3298, %v3291
        %v3300 = vmul.f32 %v3298, %v3292
        %v3301 = vmul.f32 %v3298, %v3293
        %v3302 = vmul.f32 %v3298, %v3294
        %v3303 = vadd.f32 %v3286, %v3299
        %v3304 = vadd.f32 %v3287, %v3300
        %v3305 = vadd.f32 %v3288, %v3301
        %v3306 = vadd.f32 %v3289, %v3302
        %s3307 = scalar_lea.vmem %s9, 768
        %v3308 = vld [vmem:[%s3307] sm:$0xff]
        %v3309 = vld [vmem:[%s3307 + $0x8] sm:$0xff]
        %v3310 = vld [vmem:[%s3307 + $0x10] sm:$0xff]
        %v3311 = vld [vmem:[%s3307 + $0x18] sm:$0xff]
        %v3312 = vlaneseq
        %v3313 = vshrl.u32 %v3312, 7
        %v3314 = vsub.s32 0, %v3313
        %v3315 = vrot.slane %v2462, %v3314
        %v3316 = vmul.f32 %v3315, %v3308
        %v3317 = vmul.f32 %v3315, %v3309
        %v3318 = vmul.f32 %v3315, %v3310
        %v3319 = vmul.f32 %v3315, %v3311
        %v3320 = vadd.f32 %v3303, %v3316
        %v3321 = vadd.f32 %v3304, %v3317
        %v3322 = vadd.f32 %v3305, %v3318
        %v3323 = vadd.f32 %v3306, %v3319
        %s3324 = scalar_lea.vmem %s10, 768
        %v3325 = vld [vmem:[%s3324] sm:$0xff]
        %v3326 = vld [vmem:[%s3324 + $0x8] sm:$0xff]
        %v3327 = vld [vmem:[%s3324 + $0x10] sm:$0xff]
        %v3328 = vld [vmem:[%s3324 + $0x18] sm:$0xff]
        %v3329 = vlaneseq
        %v3330 = vshrl.u32 %v3329, 7
        %v3331 = vsub.s32 0, %v3330
        %v3332 = vrot.slane %v2496, %v3331
        %v3333 = vmul.f32 %v3332, %v3325
        %v3334 = vmul.f32 %v3332, %v3326
        %v3335 = vmul.f32 %v3332, %v3327
        %v3336 = vmul.f32 %v3332, %v3328
        %v3337 = vadd.f32 %v3320, %v3333
        %v3338 = vadd.f32 %v3321, %v3334
        %v3339 = vadd.f32 %v3322, %v3335
        %v3340 = vadd.f32 %v3323, %v3336
        %s3341 = scalar_lea.vmem %s9, 800
        %v3342 = vld [vmem:[%s3341] sm:$0xff]
        %v3343 = vld [vmem:[%s3341 + $0x8] sm:$0xff]
        %v3344 = vld [vmem:[%s3341 + $0x10] sm:$0xff]
        %v3345 = vld [vmem:[%s3341 + $0x18] sm:$0xff]
        %v3346 = vlaneseq
        %v3347 = vshrl.u32 %v3346, 7
        %v3348 = vsub.s32 1, %v3347
        %v3349 = vrot.slane %v2462, %v3348
        %v3350 = vmul.f32 %v3349, %v3342
        %v3351 = vmul.f32 %v3349, %v3343
        %v3352 = vmul.f32 %v3349, %v3344
        %v3353 = vmul.f32 %v3349, %v3345
        %v3354 = vadd.f32 %v3337, %v3350
        %v3355 = vadd.f32 %v3338, %v3351
        %v3356 = vadd.f32 %v3339, %v3352
        %v3357 = vadd.f32 %v3340, %v3353
        %s3358 = scalar_lea.vmem %s10, 800
        %v3359 = vld [vmem:[%s3358] sm:$0xff]
        %v3360 = vld [vmem:[%s3358 + $0x8] sm:$0xff]
        %v3361 = vld [vmem:[%s3358 + $0x10] sm:$0xff]
        %v3362 = vld [vmem:[%s3358 + $0x18] sm:$0xff]
        %v3363 = vlaneseq
        %v3364 = vshrl.u32 %v3363, 7
        %v3365 = vsub.s32 1, %v3364
        %v3366 = vrot.slane %v2496, %v3365
        %v3367 = vmul.f32 %v3366, %v3359
        %v3368 = vmul.f32 %v3366, %v3360
        %v3369 = vmul.f32 %v3366, %v3361
        %v3370 = vmul.f32 %v3366, %v3362
        %v3371 = vadd.f32 %v3354, %v3367
        %v3372 = vadd.f32 %v3355, %v3368
        %v3373 = vadd.f32 %v3356, %v3369
        %v3374 = vadd.f32 %v3357, %v3370
        %s3375 = scalar_lea.vmem %s9, 832
        %v3376 = vld [vmem:[%s3375] sm:$0xff]
        %v3377 = vld [vmem:[%s3375 + $0x8] sm:$0xff]
        %v3378 = vld [vmem:[%s3375 + $0x10] sm:$0xff]
        %v3379 = vld [vmem:[%s3375 + $0x18] sm:$0xff]
        %v3380 = vlaneseq
        %v3381 = vshrl.u32 %v3380, 7
        %v3382 = vsub.s32 2, %v3381
        %v3383 = vrot.slane %v2462, %v3382
        %v3384 = vmul.f32 %v3383, %v3376
        %v3385 = vmul.f32 %v3383, %v3377
        %v3386 = vmul.f32 %v3383, %v3378
        %v3387 = vmul.f32 %v3383, %v3379
        %v3388 = vadd.f32 %v3371, %v3384
        %v3389 = vadd.f32 %v3372, %v3385
        %v3390 = vadd.f32 %v3373, %v3386
        %v3391 = vadd.f32 %v3374, %v3387
        %s3392 = scalar_lea.vmem %s10, 832
        %v3393 = vld [vmem:[%s3392] sm:$0xff]
        %v3394 = vld [vmem:[%s3392 + $0x8] sm:$0xff]
        %v3395 = vld [vmem:[%s3392 + $0x10] sm:$0xff]
        %v3396 = vld [vmem:[%s3392 + $0x18] sm:$0xff]
        %v3397 = vlaneseq
        %v3398 = vshrl.u32 %v3397, 7
        %v3399 = vsub.s32 2, %v3398
        %v3400 = vrot.slane %v2496, %v3399
        %v3401 = vmul.f32 %v3400, %v3393
        %v3402 = vmul.f32 %v3400, %v3394
        %v3403 = vmul.f32 %v3400, %v3395
        %v3404 = vmul.f32 %v3400, %v3396
        %v3405 = vadd.f32 %v3388, %v3401
        %v3406 = vadd.f32 %v3389, %v3402
        %v3407 = vadd.f32 %v3390, %v3403
        %v3408 = vadd.f32 %v3391, %v3404
        %s3409 = scalar_lea.vmem %s9, 864
        %v3410 = vld [vmem:[%s3409] sm:$0xff]
        %v3411 = vld [vmem:[%s3409 + $0x8] sm:$0xff]
        %v3412 = vld [vmem:[%s3409 + $0x10] sm:$0xff]
        %v3413 = vld [vmem:[%s3409 + $0x18] sm:$0xff]
        %v3414 = vlaneseq
        %v3415 = vshrl.u32 %v3414, 7
        %v3416 = vsub.s32 3, %v3415
        %v3417 = vrot.slane %v2462, %v3416
        %v3418 = vmul.f32 %v3417, %v3410
        %v3419 = vmul.f32 %v3417, %v3411
        %v3420 = vmul.f32 %v3417, %v3412
        %v3421 = vmul.f32 %v3417, %v3413
        %v3422 = vadd.f32 %v3405, %v3418
        %v3423 = vadd.f32 %v3406, %v3419
        %v3424 = vadd.f32 %v3407, %v3420
        %v3425 = vadd.f32 %v3408, %v3421
        %s3426 = scalar_lea.vmem %s10, 864
        %v3427 = vld [vmem:[%s3426] sm:$0xff]
        %v3428 = vld [vmem:[%s3426 + $0x8] sm:$0xff]
        %v3429 = vld [vmem:[%s3426 + $0x10] sm:$0xff]
        %v3430 = vld [vmem:[%s3426 + $0x18] sm:$0xff]
        %v3431 = vlaneseq
        %v3432 = vshrl.u32 %v3431, 7
        %v3433 = vsub.s32 3, %v3432
        %v3434 = vrot.slane %v2496, %v3433
        %v3435 = vmul.f32 %v3434, %v3427
        %v3436 = vmul.f32 %v3434, %v3428
        %v3437 = vmul.f32 %v3434, %v3429
        %v3438 = vmul.f32 %v3434, %v3430
        %v3439 = vadd.f32 %v3422, %v3435
        %v3440 = vadd.f32 %v3423, %v3436
        %v3441 = vadd.f32 %v3424, %v3437
        %v3442 = vadd.f32 %v3425, %v3438
        %s3443 = scalar_lea.vmem %s9, 896
        %v3444 = vld [vmem:[%s3443] sm:$0xff]
        %v3445 = vld [vmem:[%s3443 + $0x8] sm:$0xff]
        %v3446 = vld [vmem:[%s3443 + $0x10] sm:$0xff]
        %v3447 = vld [vmem:[%s3443 + $0x18] sm:$0xff]
        %v3448 = vlaneseq
        %v3449 = vshrl.u32 %v3448, 7
        %v3450 = vsub.s32 4, %v3449
        %v3451 = vrot.slane %v2462, %v3450
        %v3452 = vmul.f32 %v3451, %v3444
        %v3453 = vmul.f32 %v3451, %v3445
        %v3454 = vmul.f32 %v3451, %v3446
        %v3455 = vmul.f32 %v3451, %v3447
        %v3456 = vadd.f32 %v3439, %v3452
        %v3457 = vadd.f32 %v3440, %v3453
        %v3458 = vadd.f32 %v3441, %v3454
        %v3459 = vadd.f32 %v3442, %v3455
        %s3460 = scalar_lea.vmem %s10, 896
        %v3461 = vld [vmem:[%s3460] sm:$0xff]
        %v3462 = vld [vmem:[%s3460 + $0x8] sm:$0xff]
        %v3463 = vld [vmem:[%s3460 + $0x10] sm:$0xff]
        %v3464 = vld [vmem:[%s3460 + $0x18] sm:$0xff]
        %v3465 = vlaneseq
        %v3466 = vshrl.u32 %v3465, 7
        %v3467 = vsub.s32 4, %v3466
        %v3468 = vrot.slane %v2496, %v3467
        %v3469 = vmul.f32 %v3468, %v3461
        %v3470 = vmul.f32 %v3468, %v3462
        %v3471 = vmul.f32 %v3468, %v3463
        %v3472 = vmul.f32 %v3468, %v3464
        %v3473 = vadd.f32 %v3456, %v3469
        %v3474 = vadd.f32 %v3457, %v3470
        %v3475 = vadd.f32 %v3458, %v3471
        %v3476 = vadd.f32 %v3459, %v3472
        %s3477 = scalar_lea.vmem %s9, 928
        %v3478 = vld [vmem:[%s3477] sm:$0xff]
        %v3479 = vld [vmem:[%s3477 + $0x8] sm:$0xff]
        %v3480 = vld [vmem:[%s3477 + $0x10] sm:$0xff]
        %v3481 = vld [vmem:[%s3477 + $0x18] sm:$0xff]
        %v3482 = vlaneseq
        %v3483 = vshrl.u32 %v3482, 7
        %v3484 = vsub.s32 5, %v3483
        %v3485 = vrot.slane %v2462, %v3484
        %v3486 = vmul.f32 %v3485, %v3478
        %v3487 = vmul.f32 %v3485, %v3479
        %v3488 = vmul.f32 %v3485, %v3480
        %v3489 = vmul.f32 %v3485, %v3481
        %v3490 = vadd.f32 %v3473, %v3486
        %v3491 = vadd.f32 %v3474, %v3487
        %v3492 = vadd.f32 %v3475, %v3488
        %v3493 = vadd.f32 %v3476, %v3489
        %s3494 = scalar_lea.vmem %s10, 928
        %v3495 = vld [vmem:[%s3494] sm:$0xff]
        %v3496 = vld [vmem:[%s3494 + $0x8] sm:$0xff]
        %v3497 = vld [vmem:[%s3494 + $0x10] sm:$0xff]
        %v3498 = vld [vmem:[%s3494 + $0x18] sm:$0xff]
        %v3499 = vlaneseq
        %v3500 = vshrl.u32 %v3499, 7
        %v3501 = vsub.s32 5, %v3500
        %v3502 = vrot.slane %v2496, %v3501
        %v3503 = vmul.f32 %v3502, %v3495
        %v3504 = vmul.f32 %v3502, %v3496
        %v3505 = vmul.f32 %v3502, %v3497
        %v3506 = vmul.f32 %v3502, %v3498
        %v3507 = vadd.f32 %v3490, %v3503
        %v3508 = vadd.f32 %v3491, %v3504
        %v3509 = vadd.f32 %v3492, %v3505
        %v3510 = vadd.f32 %v3493, %v3506
        %s3511 = scalar_lea.vmem %s9, 960
        %v3512 = vld [vmem:[%s3511] sm:$0xff]
        %v3513 = vld [vmem:[%s3511 + $0x8] sm:$0xff]
        %v3514 = vld [vmem:[%s3511 + $0x10] sm:$0xff]
        %v3515 = vld [vmem:[%s3511 + $0x18] sm:$0xff]
        %v3516 = vlaneseq
        %v3517 = vshrl.u32 %v3516, 7
        %v3518 = vsub.s32 6, %v3517
        %v3519 = vrot.slane %v2462, %v3518
        %v3520 = vmul.f32 %v3519, %v3512
        %v3521 = vmul.f32 %v3519, %v3513
        %v3522 = vmul.f32 %v3519, %v3514
        %v3523 = vmul.f32 %v3519, %v3515
        %v3524 = vadd.f32 %v3507, %v3520
        %v3525 = vadd.f32 %v3508, %v3521
        %v3526 = vadd.f32 %v3509, %v3522
        %v3527 = vadd.f32 %v3510, %v3523
        %s3528 = scalar_lea.vmem %s10, 960
        %v3529 = vld [vmem:[%s3528] sm:$0xff]
        %v3530 = vld [vmem:[%s3528 + $0x8] sm:$0xff]
        %v3531 = vld [vmem:[%s3528 + $0x10] sm:$0xff]
        %v3532 = vld [vmem:[%s3528 + $0x18] sm:$0xff]
        %v3533 = vlaneseq
        %v3534 = vshrl.u32 %v3533, 7
        %v3535 = vsub.s32 6, %v3534
        %v3536 = vrot.slane %v2496, %v3535
        %v3537 = vmul.f32 %v3536, %v3529
        %v3538 = vmul.f32 %v3536, %v3530
        %v3539 = vmul.f32 %v3536, %v3531
        %v3540 = vmul.f32 %v3536, %v3532
        %v3541 = vadd.f32 %v3524, %v3537
        %v3542 = vadd.f32 %v3525, %v3538
        %v3543 = vadd.f32 %v3526, %v3539
        %v3544 = vadd.f32 %v3527, %v3540
        %s3545 = scalar_lea.vmem %s9, 992
        %v3546 = vld [vmem:[%s3545] sm:$0xff]
        %v3547 = vld [vmem:[%s3545 + $0x8] sm:$0xff]
        %v3548 = vld [vmem:[%s3545 + $0x10] sm:$0xff]
        %v3549 = vld [vmem:[%s3545 + $0x18] sm:$0xff]
        %v3550 = vlaneseq
        %v3551 = vshrl.u32 %v3550, 7
        %v3552 = vsub.s32 7, %v3551
        %v3553 = vrot.slane %v2462, %v3552
        %v3554 = vmul.f32 %v3553, %v3546
        %v3555 = vmul.f32 %v3553, %v3547
        %v3556 = vmul.f32 %v3553, %v3548
        %v3557 = vmul.f32 %v3553, %v3549
        %v3558 = vadd.f32 %v3541, %v3554
        %v3559 = vadd.f32 %v3542, %v3555
        %v3560 = vadd.f32 %v3543, %v3556
        %v3561 = vadd.f32 %v3544, %v3557
        %s3562 = scalar_lea.vmem %s10, 992
        %v3563 = vld [vmem:[%s3562] sm:$0xff]
        %v3564 = vld [vmem:[%s3562 + $0x8] sm:$0xff]
        %v3565 = vld [vmem:[%s3562 + $0x10] sm:$0xff]
        %v3566 = vld [vmem:[%s3562 + $0x18] sm:$0xff]
        %v3567 = vlaneseq
        %v3568 = vshrl.u32 %v3567, 7
        %v3569 = vsub.s32 7, %v3568
        %v3570 = vrot.slane %v2496, %v3569
        %v3571 = vmul.f32 %v3570, %v3563
        %v3572 = vmul.f32 %v3570, %v3564
        %v3573 = vmul.f32 %v3570, %v3565
        %v3574 = vmul.f32 %v3570, %v3566
        %v3575 = vadd.f32 %v3558, %v3571
        %v3576 = vadd.f32 %v3559, %v3572
        %v3577 = vadd.f32 %v3560, %v3573
        %v3578 = vadd.f32 %v3561, %v3574
        %v3579 = vld [vmem:[%s14] sm:$0xff]
        %v3581 = vsel %vm2234, %v3575, 0
        %v3584 = vsel %vm2234, %v3576, 0
        %v3587 = vsel %vm2234, %v3577, 0
        %v3590 = vsel %vm2234, %v3578, 0
        %3592 = vmatprep.subr.mxu0 0.0
        %3593 = vmatpush1.msra.mxu0 %v3579
        %3594 = vmatprep.subr.mxu0 0.0
        %3595 = vmatpush1.msra.mxu0 0.0
        %3596 = vmatprep.subr.mxu0 0.0
        %3597 = vmatpush1.msra.mxu0 0.0
        %3598 = vmatprep.subr.mxu0 0.0
        %3599 = vmatpush1.msra.mxu0 0.0
        %3600 = vmatprep.subr.mxu0 0.0
        %3601 = vmatpush1.msra.mxu0 0.0
        %3602 = vmatprep.subr.mxu0 0.0
        %3603 = vmatpush1.msra.mxu0 0.0
        %3604 = vmatprep.subr.mxu0 0.0
        %3605 = vmatpush1.msra.mxu0 0.0
        %3606 = vmatprep.subr.mxu0 0.0
        %3607 = vmatpush1.msra.mxu0 0.0
        %3608 = vmatprep.subr.mxu0 0.0
        %3609 = vmatpush1.msra.mxu0 0.0
        %3610 = vmatprep.subr.mxu0 0.0
        %3611 = vmatpush1.msra.mxu0 0.0
        %3612 = vmatprep.subr.mxu0 0.0
        %3613 = vmatpush1.msra.mxu0 0.0
        %3614 = vmatprep.subr.mxu0 0.0
        %3615 = vmatpush1.msra.mxu0 0.0
        %3616 = vmatprep.subr.mxu0 0.0
        %3617 = vmatpush1.msra.mxu0 0.0
        %3618 = vmatprep.subr.mxu0 0.0
        %3619 = vmatpush1.msra.mxu0 0.0
        %3620 = vmatprep.subr.mxu0 0.0
        %3621 = vmatpush1.msra.mxu0 0.0
        %3622 = vmatprep.subr.mxu0 0.0
        %3623 = vmatpush1.msra.mxu0 0.0
        %3624 = vmatprep.subr.mxu0 0.0
        %3625 = vmatpush1.msra.mxu0 0.0
        %3626 = vmatprep.subr.mxu0 0.0
        %3627 = vmatpush1.msra.mxu0 0.0
        %3628 = vmatprep.subr.mxu0 0.0
        %3629 = vmatpush1.msra.mxu0 0.0
        %3630 = vmatprep.subr.mxu0 0.0
        %3631 = vmatpush1.msra.mxu0 0.0
        %3632 = vmatprep.subr.mxu0 0.0
        %3633 = vmatpush1.msra.mxu0 0.0
        %3634 = vmatprep.subr.mxu0 0.0
        %3635 = vmatpush1.msra.mxu0 0.0
        %3636 = vmatprep.subr.mxu0 0.0
        %3637 = vmatpush1.msra.mxu0 0.0
        %3638 = vmatprep.subr.mxu0 0.0
        %3639 = vmatpush1.msra.mxu0 0.0
        %3640 = vmatprep.subr.mxu0 0.0
        %3641 = vmatpush1.msra.mxu0 0.0
        %3642 = vmatprep.subr.mxu0 0.0
        %3643 = vmatpush1.msra.mxu0 0.0
        %3644 = vmatprep.subr.mxu0 0.0
        %3645 = vmatpush1.msra.mxu0 0.0
        %3646 = vmatprep.subr.mxu0 0.0
        %3647 = vmatpush1.msra.mxu0 0.0
        %3648 = vmatprep.subr.mxu0 0.0
        %3649 = vmatpush1.msra.mxu0 0.0
        %3650 = vmatprep.subr.mxu0 0.0
        %3651 = vmatpush1.msra.mxu0 0.0
        %3652 = vmatprep.subr.mxu0 0.0
        %3653 = vmatpush1.msra.mxu0 0.0
        %3654 = vmatprep.subr.mxu0 0.0
        %3655 = vmatpush1.msra.mxu0 0.0
        %3656 = vmatprep.mubr.f32.mxu0 0.0
        %3657 = vmatmul.mubr.f32.gmra.mrb[0].mxu0 %v3581
        %v3658 = vpop.f32.mrb[0].mxu0
        %v3659 = vadd.f32 0.0, %v3658
        %v3660 = vpop.f32.mrb[0].mxu0
        %3661 = vmatprep.mubr.f32.mxu0 0.0
        %3662 = vmatmul.mubr.f32.gmra.mrb[0].mxu0 %v3584
        %v3663 = vpop.f32.mrb[0].mxu0
        %v3664 = vadd.f32 0.0, %v3663
        %v3665 = vpop.f32.mrb[0].mxu0
        %3666 = vmatprep.mubr.f32.mxu0 0.0
        %3667 = vmatmul.mubr.f32.gmra.mrb[0].mxu0 %v3587
        %v3668 = vpop.f32.mrb[0].mxu0
        %v3669 = vadd.f32 0.0, %v3668
        %v3670 = vpop.f32.mrb[0].mxu0
        %3671 = vmatprep.mubr.f32.mxu0 0.0
        %3672 = vmatmul.mubr.f32.gmra.mrb[0].mxu0 %v3590
        %v3673 = vpop.f32.mrb[0].mxu0
        %v3674 = vadd.f32 0.0, %v3673
        %v3675 = vpop.f32.mrb[0].mxu0
        %3676 = vdwg.mxu0
        %v3677 = vld [vmem:[%s11] sm:$0xff]
        %v3678 = vld [vmem:[%s11 + $0x8] sm:$0xff]
        %v3679 = vld [vmem:[%s11 + $0x10] sm:$0xff]
        %v3680 = vld [vmem:[%s11 + $0x18] sm:$0xff]
        %v3681 = vld [vmem:[%s12] sm:$0xff]
        %v3682 = vld [vmem:[%s12 + $0x8] sm:$0xff]
        %v3683 = vld [vmem:[%s12 + $0x10] sm:$0xff]
        %v3684 = vld [vmem:[%s12 + $0x18] sm:$0xff]
        %3686 = vset.pattern.permute.xlu0 0
        %3687 = vperm.xlu0 %3686, %v3681
        %v3688 = vpop.permute.xlu0 %3687
        %3691 = vset.pattern.permute.xlu0 0
        %3692 = vperm.xlu0 %3691, %v3682
        %v3693 = vpop.permute.xlu0 %3692
        %3696 = vset.pattern.permute.xlu0 0
        %3697 = vperm.xlu0 %3696, %v3683
        %v3698 = vpop.permute.xlu0 %3697
        %3701 = vset.pattern.permute.xlu0 0
        %3702 = vperm.xlu0 %3701, %v3684
        %v3703 = vpop.permute.xlu0 %3702
        %v3706 = vsel %vm2136, %v3677, 0
        %v3709 = vsel %vm2136, %v3678, 0
        %v3712 = vsel %vm2136, %v3679, 0
        %v3715 = vsel %vm2136, %v3680, 0
        %3717 = vmatprep.subr.mxu0 0.0
        %3718 = vmatpush1.msra.mxu0 %v3659
        %3719 = vmatprep.subr.mxu0 0.0
        %3720 = vmatpush1.msra.mxu0 %v3664
        %3721 = vmatprep.subr.mxu0 0.0
        %3722 = vmatpush1.msra.mxu0 %v3669
        %3723 = vmatprep.subr.mxu0 0.0
        %3724 = vmatpush1.msra.mxu0 %v3674
        %3725 = vmatprep.subr.mxu0 0.0
        %3726 = vmatpush1.msra.mxu0 0.0
        %3727 = vmatprep.subr.mxu0 0.0
        %3728 = vmatpush1.msra.mxu0 0.0
        %3729 = vmatprep.subr.mxu0 0.0
        %3730 = vmatpush1.msra.mxu0 0.0
        %3731 = vmatprep.subr.mxu0 0.0
        %3732 = vmatpush1.msra.mxu0 0.0
        %3733 = vmatprep.subr.mxu0 0.0
        %3734 = vmatpush1.msra.mxu0 0.0
        %3735 = vmatprep.subr.mxu0 0.0
        %3736 = vmatpush1.msra.mxu0 0.0
        %3737 = vmatprep.subr.mxu0 0.0
        %3738 = vmatpush1.msra.mxu0 0.0
        %3739 = vmatprep.subr.mxu0 0.0
        %3740 = vmatpush1.msra.mxu0 0.0
        %3741 = vmatprep.subr.mxu0 0.0
        %3742 = vmatpush1.msra.mxu0 0.0
        %3743 = vmatprep.subr.mxu0 0.0
        %3744 = vmatpush1.msra.mxu0 0.0
        %3745 = vmatprep.subr.mxu0 0.0
        %3746 = vmatpush1.msra.mxu0 0.0
        %3747 = vmatprep.subr.mxu0 0.0
        %3748 = vmatpush1.msra.mxu0 0.0
        %3749 = vmatprep.subr.mxu0 0.0
        %3750 = vmatpush1.msra.mxu0 0.0
        %3751 = vmatprep.subr.mxu0 0.0
        %3752 = vmatpush1.msra.mxu0 0.0
        %3753 = vmatprep.subr.mxu0 0.0
        %3754 = vmatpush1.msra.mxu0 0.0
        %3755 = vmatprep.subr.mxu0 0.0
        %3756 = vmatpush1.msra.mxu0 0.0
        %3757 = vmatprep.subr.mxu0 0.0
        %3758 = vmatpush1.msra.mxu0 0.0
        %3759 = vmatprep.subr.mxu0 0.0
        %3760 = vmatpush1.msra.mxu0 0.0
        %3761 = vmatprep.subr.mxu0 0.0
        %3762 = vmatpush1.msra.mxu0 0.0
        %3763 = vmatprep.subr.mxu0 0.0
        %3764 = vmatpush1.msra.mxu0 0.0
        %3765 = vmatprep.subr.mxu0 0.0
        %3766 = vmatpush1.msra.mxu0 0.0
        %3767 = vmatprep.subr.mxu0 0.0
        %3768 = vmatpush1.msra.mxu0 0.0
        %3769 = vmatprep.subr.mxu0 0.0
        %3770 = vmatpush1.msra.mxu0 0.0
        %3771 = vmatprep.subr.mxu0 0.0
        %3772 = vmatpush1.msra.mxu0 0.0
        %3773 = vmatprep.subr.mxu0 0.0
        %3774 = vmatpush1.msra.mxu0 0.0
        %3775 = vmatprep.subr.mxu0 0.0
        %3776 = vmatpush1.msra.mxu0 0.0
        %3777 = vmatprep.subr.mxu0 0.0
        %3778 = vmatpush1.msra.mxu0 0.0
        %3779 = vmatprep.subr.mxu0 0.0
        %3780 = vmatpush1.msra.mxu0 0.0
        %3781 = vmatprep.mubr.f32.mxu0 0.0
        %3782 = vmatmul.mubr.f32.gmra.mrb[0].mxu0 %v3706
        %v3783 = vpop.f32.mrb[0].mxu0
        %v3784 = vadd.f32 %v3688, %v3783
        %v3785 = vpop.f32.mrb[0].mxu0
        %3786 = vmatprep.mubr.f32.mxu0 0.0
        %3787 = vmatmul.mubr.f32.gmra.mrb[0].mxu0 %v3709
        %v3788 = vpop.f32.mrb[0].mxu0
        %v3789 = vadd.f32 %v3693, %v3788
        %v3790 = vpop.f32.mrb[0].mxu0
        %3791 = vmatprep.mubr.f32.mxu0 0.0
        %3792 = vmatmul.mubr.f32.gmra.mrb[0].mxu0 %v3712
        %v3793 = vpop.f32.mrb[0].mxu0
        %v3794 = vadd.f32 %v3698, %v3793
        %v3795 = vpop.f32.mrb[0].mxu0
        %3796 = vmatprep.mubr.f32.mxu0 0.0
        %3797 = vmatmul.mubr.f32.gmra.mrb[0].mxu0 %v3715
        %v3798 = vpop.f32.mrb[0].mxu0
        %v3799 = vadd.f32 %v3703, %v3798
        %v3800 = vpop.f32.mrb[0].mxu0
        %3801 = vdwg.mxu0
        %v3802 = vadd.f32 %v3659, %v3784
        %v3803 = vadd.f32 %v3664, %v3789
        %v3804 = vadd.f32 %v3669, %v3794
        %v3805 = vadd.f32 %v3674, %v3799
        %v3806 = vmul.f32 %v3802, 0.5
        %v3807 = vmul.f32 %v3803, 0.5
        %v3808 = vmul.f32 %v3804, 0.5
        %v3809 = vmul.f32 %v3805, 0.5
        %v3810 = vmul.f32 %v3802, 0.044715
        %v3811 = vmul.f32 %v3803, 0.044715
        %v3812 = vmul.f32 %v3804, 0.044715
        %v3813 = vmul.f32 %v3805, 0.044715
        %v3814 = vmul.f32 %v3810, %v3802
        %v3815 = vmul.f32 %v3811, %v3803
        %v3816 = vmul.f32 %v3812, %v3804
        %v3817 = vmul.f32 %v3813, %v3805
        %v3818 = vmul.f32 %v3814, %v3802
        %v3819 = vmul.f32 %v3815, %v3803
        %v3820 = vmul.f32 %v3816, %v3804
        %v3821 = vmul.f32 %v3817, %v3805
        %v3822 = vadd.f32 %v3802, %v3818
        %v3823 = vadd.f32 %v3803, %v3819
        %v3824 = vadd.f32 %v3804, %v3820
        %v3825 = vadd.f32 %v3805, %v3821
        %v3826 = vmul.f32 %v3822, 0.7978846
        %v3827 = vmul.f32 %v3823, 0.7978846
        %v3828 = vmul.f32 %v3824, 0.7978846
        %v3829 = vmul.f32 %v3825, 0.7978846
        %v3830 = vtanh.pop %v3826
        %v3831 = vtanh.pop %v3827
        %v3832 = vtanh.pop %v3828
        %v3833 = vtanh.pop %v3829
        %v3834 = vadd.f32 %v3830, 1.0
        %v3835 = vadd.f32 %v3831, 1.0
        %v3836 = vadd.f32 %v3832, 1.0
        %v3837 = vadd.f32 %v3833, 1.0
        %v3838 = vmul.f32 %v3806, %v3834
        %v3839 = vmul.f32 %v3807, %v3835
        %v3840 = vmul.f32 %v3808, %v3836
        %v3841 = vmul.f32 %v3809, %v3837
        %v3842 = vld [vmem:[%s13] sm:$0xff]
        %v3843 = vld [vmem:[%s13 + $0x8] sm:$0xff]
        %v3845 = vsel %vm894, %v3838, 0
        %v3848 = vsel %vm894, %v3839, 0
        %v3851 = vsel %vm894, %v3840, 0
        %v3854 = vsel %vm894, %v3841, 0
        %3856 = vmatprep.subr.mxu0 0.0
        %3857 = vmatpush1.msra.mxu0 %v3842
        %3858 = vmatprep.subr.mxu0 0.0
        %3859 = vmatpush1.msra.mxu0 %v3843
        %3860 = vmatprep.subr.mxu0 0.0
        %3861 = vmatpush1.msra.mxu0 0.0
        %3862 = vmatprep.subr.mxu0 0.0
        %3863 = vmatpush1.msra.mxu0 0.0
        %3864 = vmatprep.subr.mxu0 0.0
        %3865 = vmatpush1.msra.mxu0 0.0
        %3866 = vmatprep.subr.mxu0 0.0
        %3867 = vmatpush1.msra.mxu0 0.0
        %3868 = vmatprep.subr.mxu0 0.0
        %3869 = vmatpush1.msra.mxu0 0.0
        %3870 = vmatprep.subr.mxu0 0.0
        %3871 = vmatpush1.msra.mxu0 0.0
        %3872 = vmatprep.subr.mxu0 0.0
        %3873 = vmatpush1.msra.mxu0 0.0
        %3874 = vmatprep.subr.mxu0 0.0
        %3875 = vmatpush1.msra.mxu0 0.0
        %3876 = vmatprep.subr.mxu0 0.0
        %3877 = vmatpush1.msra.mxu0 0.0
        %3878 = vmatprep.subr.mxu0 0.0
        %3879 = vmatpush1.msra.mxu0 0.0
        %3880 = vmatprep.subr.mxu0 0.0
        %3881 = vmatpush1.msra.mxu0 0.0
        %3882 = vmatprep.subr.mxu0 0.0
        %3883 = vmatpush1.msra.mxu0 0.0
        %3884 = vmatprep.subr.mxu0 0.0
        %3885 = vmatpush1.msra.mxu0 0.0
        %3886 = vmatprep.subr.mxu0 0.0
        %3887 = vmatpush1.msra.mxu0 0.0
        %3888 = vmatprep.subr.mxu0 0.0
        %3889 = vmatpush1.msra.mxu0 0.0
        %3890 = vmatprep.subr.mxu0 0.0
        %3891 = vmatpush1.msra.mxu0 0.0
        %3892 = vmatprep.subr.mxu0 0.0
        %3893 = vmatpush1.msra.mxu0 0.0
        %3894 = vmatprep.subr.mxu0 0.0
        %3895 = vmatpush1.msra.mxu0 0.0
        %3896 = vmatprep.subr.mxu0 0.0
        %3897 = vmatpush1.msra.mxu0 0.0
        %3898 = vmatprep.subr.mxu0 0.0
        %3899 = vmatpush1.msra.mxu0 0.0
        %3900 = vmatprep.subr.mxu0 0.0
        %3901 = vmatpush1.msra.mxu0 0.0
        %3902 = vmatprep.subr.mxu0 0.0
        %3903 = vmatpush1.msra.mxu0 0.0
        %3904 = vmatprep.subr.mxu0 0.0
        %3905 = vmatpush1.msra.mxu0 0.0
        %3906 = vmatprep.subr.mxu0 0.0
        %3907 = vmatpush1.msra.mxu0 0.0
        %3908 = vmatprep.subr.mxu0 0.0
        %3909 = vmatpush1.msra.mxu0 0.0
        %3910 = vmatprep.subr.mxu0 0.0
        %3911 = vmatpush1.msra.mxu0 0.0
        %3912 = vmatprep.subr.mxu0 0.0
        %3913 = vmatpush1.msra.mxu0 0.0
        %3914 = vmatprep.subr.mxu0 0.0
        %3915 = vmatpush1.msra.mxu0 0.0
        %3916 = vmatprep.subr.mxu0 0.0
        %3917 = vmatpush1.msra.mxu0 0.0
        %3918 = vmatprep.subr.mxu0 0.0
        %3919 = vmatpush1.msra.mxu0 0.0
        %3920 = vmatprep.mubr.f32.mxu0 0.0
        %3921 = vmatmul.mubr.f32.gmra.mrb[0].mxu0 %v3845
        %v3922 = vpop.f32.mrb[0].mxu0
        %v3923 = vadd.f32 0.0, %v3922
        %v3924 = vpop.f32.mrb[0].mxu0
        %3925 = vmatprep.mubr.f32.mxu0 0.0
        %3926 = vmatmul.mubr.f32.gmra.mrb[0].mxu0 %v3848
        %v3927 = vpop.f32.mrb[0].mxu0
        %v3928 = vadd.f32 0.0, %v3927
        %v3929 = vpop.f32.mrb[0].mxu0
        %3930 = vmatprep.mubr.f32.mxu0 0.0
        %3931 = vmatmul.mubr.f32.gmra.mrb[0].mxu0 %v3851
        %v3932 = vpop.f32.mrb[0].mxu0
        %v3933 = vadd.f32 0.0, %v3932
        %v3934 = vpop.f32.mrb[0].mxu0
        %3935 = vmatprep.mubr.f32.mxu0 0.0
        %3936 = vmatmul.mubr.f32.gmra.mrb[0].mxu0 %v3854
        %v3937 = vpop.f32.mrb[0].mxu0
        %v3938 = vadd.f32 0.0, %v3937
        %v3939 = vpop.f32.mrb[0].mxu0
        %3940 = vdwg.mxu0
        %v3941 = vld [vmem:[%s15] sm:$0xff]
        %v3942 = vld [vmem:[%s15 + $0x8] sm:$0xff]
        %v3943 = vld [vmem:[%s15 + $0x10] sm:$0xff]
        %v3944 = vld [vmem:[%s15 + $0x18] sm:$0xff]
        %v3945 = vlaneseq
        %v3946 = vshrl.u32 %v3945, 7
        %v3947 = vsub.s32 0, %v3946
        %v3948 = vrot.slane %v3923, %v3947
        %v3949 = vmul.f32 %v3948, %v3941
        %v3950 = vmul.f32 %v3948, %v3942
        %v3951 = vmul.f32 %v3948, %v3943
        %v3952 = vmul.f32 %v3948, %v3944
        %s3953 = scalar_lea.vmem %s15, 32
        %v3954 = vld [vmem:[%s3953] sm:$0xff]
        %v3955 = vld [vmem:[%s3953 + $0x8] sm:$0xff]
        %v3956 = vld [vmem:[%s3953 + $0x10] sm:$0xff]
        %v3957 = vld [vmem:[%s3953 + $0x18] sm:$0xff]
        %v3958 = vlaneseq
        %v3959 = vshrl.u32 %v3958, 7
        %v3960 = vsub.s32 1, %v3959
        %v3961 = vrot.slane %v3923, %v3960
        %v3962 = vmul.f32 %v3961, %v3954
        %v3963 = vmul.f32 %v3961, %v3955
        %v3964 = vmul.f32 %v3961, %v3956
        %v3965 = vmul.f32 %v3961, %v3957
        %v3966 = vadd.f32 %v3949, %v3962
        %v3967 = vadd.f32 %v3950, %v3963
        %v3968 = vadd.f32 %v3951, %v3964
        %v3969 = vadd.f32 %v3952, %v3965
        %s3970 = scalar_lea.vmem %s15, 64
        %v3971 = vld [vmem:[%s3970] sm:$0xff]
        %v3972 = vld [vmem:[%s3970 + $0x8] sm:$0xff]
        %v3973 = vld [vmem:[%s3970 + $0x10] sm:$0xff]
        %v3974 = vld [vmem:[%s3970 + $0x18] sm:$0xff]
        %v3975 = vlaneseq
        %v3976 = vshrl.u32 %v3975, 7
        %v3977 = vsub.s32 2, %v3976
        %v3978 = vrot.slane %v3923, %v3977
        %v3979 = vmul.f32 %v3978, %v3971
        %v3980 = vmul.f32 %v3978, %v3972
        %v3981 = vmul.f32 %v3978, %v3973
        %v3982 = vmul.f32 %v3978, %v3974
        %v3983 = vadd.f32 %v3966, %v3979
        %v3984 = vadd.f32 %v3967, %v3980
        %v3985 = vadd.f32 %v3968, %v3981
        %v3986 = vadd.f32 %v3969, %v3982
        %s3987 = scalar_lea.vmem %s15, 96
        %v3988 = vld [vmem:[%s3987] sm:$0xff]
        %v3989 = vld [vmem:[%s3987 + $0x8] sm:$0xff]
        %v3990 = vld [vmem:[%s3987 + $0x10] sm:$0xff]
        %v3991 = vld [vmem:[%s3987 + $0x18] sm:$0xff]
        %v3992 = vlaneseq
        %v3993 = vshrl.u32 %v3992, 7
        %v3994 = vsub.s32 3, %v3993
        %v3995 = vrot.slane %v3923, %v3994
        %v3996 = vmul.f32 %v3995, %v3988
        %v3997 = vmul.f32 %v3995, %v3989
        %v3998 = vmul.f32 %v3995, %v3990
        %v3999 = vmul.f32 %v3995, %v3991
        %v4000 = vadd.f32 %v3983, %v3996
        %v4001 = vadd.f32 %v3984, %v3997
        %v4002 = vadd.f32 %v3985, %v3998
        %v4003 = vadd.f32 %v3986, %v3999
        %s4004 = scalar_lea.vmem %s15, 128
        %v4005 = vld [vmem:[%s4004] sm:$0xff]
        %v4006 = vld [vmem:[%s4004 + $0x8] sm:$0xff]
        %v4007 = vld [vmem:[%s4004 + $0x10] sm:$0xff]
        %v4008 = vld [vmem:[%s4004 + $0x18] sm:$0xff]
        %v4009 = vlaneseq
        %v4010 = vshrl.u32 %v4009, 7
        %v4011 = vsub.s32 4, %v4010
        %v4012 = vrot.slane %v3923, %v4011
        %v4013 = vmul.f32 %v4012, %v4005
        %v4014 = vmul.f32 %v4012, %v4006
        %v4015 = vmul.f32 %v4012, %v4007
        %v4016 = vmul.f32 %v4012, %v4008
        %v4017 = vadd.f32 %v4000, %v4013
        %v4018 = vadd.f32 %v4001, %v4014
        %v4019 = vadd.f32 %v4002, %v4015
        %v4020 = vadd.f32 %v4003, %v4016
        %s4021 = scalar_lea.vmem %s15, 160
        %v4022 = vld [vmem:[%s4021] sm:$0xff]
        %v4023 = vld [vmem:[%s4021 + $0x8] sm:$0xff]
        %v4024 = vld [vmem:[%s4021 + $0x10] sm:$0xff]
        %v4025 = vld [vmem:[%s4021 + $0x18] sm:$0xff]
        %v4026 = vlaneseq
        %v4027 = vshrl.u32 %v4026, 7
        %v4028 = vsub.s32 5, %v4027
        %v4029 = vrot.slane %v3923, %v4028
        %v4030 = vmul.f32 %v4029, %v4022
        %v4031 = vmul.f32 %v4029, %v4023
        %v4032 = vmul.f32 %v4029, %v4024
        %v4033 = vmul.f32 %v4029, %v4025
        %v4034 = vadd.f32 %v4017, %v4030
        %v4035 = vadd.f32 %v4018, %v4031
        %v4036 = vadd.f32 %v4019, %v4032
        %v4037 = vadd.f32 %v4020, %v4033
        %s4038 = scalar_lea.vmem %s15, 192
        %v4039 = vld [vmem:[%s4038] sm:$0xff]
        %v4040 = vld [vmem:[%s4038 + $0x8] sm:$0xff]
        %v4041 = vld [vmem:[%s4038 + $0x10] sm:$0xff]
        %v4042 = vld [vmem:[%s4038 + $0x18] sm:$0xff]
        %v4043 = vlaneseq
        %v4044 = vshrl.u32 %v4043, 7
        %v4045 = vsub.s32 6, %v4044
        %v4046 = vrot.slane %v3923, %v4045
        %v4047 = vmul.f32 %v4046, %v4039
        %v4048 = vmul.f32 %v4046, %v4040
        %v4049 = vmul.f32 %v4046, %v4041
        %v4050 = vmul.f32 %v4046, %v4042
        %v4051 = vadd.f32 %v4034, %v4047
        %v4052 = vadd.f32 %v4035, %v4048
        %v4053 = vadd.f32 %v4036, %v4049
        %v4054 = vadd.f32 %v4037, %v4050
        %s4055 = scalar_lea.vmem %s15, 224
        %v4056 = vld [vmem:[%s4055] sm:$0xff]
        %v4057 = vld [vmem:[%s4055 + $0x8] sm:$0xff]
        %v4058 = vld [vmem:[%s4055 + $0x10] sm:$0xff]
        %v4059 = vld [vmem:[%s4055 + $0x18] sm:$0xff]
        %v4060 = vlaneseq
        %v4061 = vshrl.u32 %v4060, 7
        %v4062 = vsub.s32 7, %v4061
        %v4063 = vrot.slane %v3923, %v4062
        %v4064 = vmul.f32 %v4063, %v4056
        %v4065 = vmul.f32 %v4063, %v4057
        %v4066 = vmul.f32 %v4063, %v4058
        %v4067 = vmul.f32 %v4063, %v4059
        %v4068 = vadd.f32 %v4051, %v4064
        %v4069 = vadd.f32 %v4052, %v4065
        %v4070 = vadd.f32 %v4053, %v4066
        %v4071 = vadd.f32 %v4054, %v4067
        %s4072 = scalar_lea.vmem %s15, 256
        %v4073 = vld [vmem:[%s4072] sm:$0xff]
        %v4074 = vld [vmem:[%s4072 + $0x8] sm:$0xff]
        %v4075 = vld [vmem:[%s4072 + $0x10] sm:$0xff]
        %v4076 = vld [vmem:[%s4072 + $0x18] sm:$0xff]
        %v4077 = vlaneseq
        %v4078 = vshrl.u32 %v4077, 7
        %v4079 = vsub.s32 0, %v4078
        %v4080 = vrot.slane %v3928, %v4079
        %v4081 = vmul.f32 %v4080, %v4073
        %v4082 = vmul.f32 %v4080, %v4074
        %v4083 = vmul.f32 %v4080, %v4075
        %v4084 = vmul.f32 %v4080, %v4076
        %v4085 = vadd.f32 %v4068, %v4081
        %v4086 = vadd.f32 %v4069, %v4082
        %v4087 = vadd.f32 %v4070, %v4083
        %v4088 = vadd.f32 %v4071, %v4084
        %s4089 = scalar_lea.vmem %s15, 288
        %v4090 = vld [vmem:[%s4089] sm:$0xff]
        %v4091 = vld [vmem:[%s4089 + $0x8] sm:$0xff]
        %v4092 = vld [vmem:[%s4089 + $0x10] sm:$0xff]
        %v4093 = vld [vmem:[%s4089 + $0x18] sm:$0xff]
        %v4094 = vlaneseq
        %v4095 = vshrl.u32 %v4094, 7
        %v4096 = vsub.s32 1, %v4095
        %v4097 = vrot.slane %v3928, %v4096
        %v4098 = vmul.f32 %v4097, %v4090
        %v4099 = vmul.f32 %v4097, %v4091
        %v4100 = vmul.f32 %v4097, %v4092
        %v4101 = vmul.f32 %v4097, %v4093
        %v4102 = vadd.f32 %v4085, %v4098
        %v4103 = vadd.f32 %v4086, %v4099
        %v4104 = vadd.f32 %v4087, %v4100
        %v4105 = vadd.f32 %v4088, %v4101
        %s4106 = scalar_lea.vmem %s15, 320
        %v4107 = vld [vmem:[%s4106] sm:$0xff]
        %v4108 = vld [vmem:[%s4106 + $0x8] sm:$0xff]
        %v4109 = vld [vmem:[%s4106 + $0x10] sm:$0xff]
        %v4110 = vld [vmem:[%s4106 + $0x18] sm:$0xff]
        %v4111 = vlaneseq
        %v4112 = vshrl.u32 %v4111, 7
        %v4113 = vsub.s32 2, %v4112
        %v4114 = vrot.slane %v3928, %v4113
        %v4115 = vmul.f32 %v4114, %v4107
        %v4116 = vmul.f32 %v4114, %v4108
        %v4117 = vmul.f32 %v4114, %v4109
        %v4118 = vmul.f32 %v4114, %v4110
        %v4119 = vadd.f32 %v4102, %v4115
        %v4120 = vadd.f32 %v4103, %v4116
        %v4121 = vadd.f32 %v4104, %v4117
        %v4122 = vadd.f32 %v4105, %v4118
        %s4123 = scalar_lea.vmem %s15, 352
        %v4124 = vld [vmem:[%s4123] sm:$0xff]
        %v4125 = vld [vmem:[%s4123 + $0x8] sm:$0xff]
        %v4126 = vld [vmem:[%s4123 + $0x10] sm:$0xff]
        %v4127 = vld [vmem:[%s4123 + $0x18] sm:$0xff]
        %v4128 = vlaneseq
        %v4129 = vshrl.u32 %v4128, 7
        %v4130 = vsub.s32 3, %v4129
        %v4131 = vrot.slane %v3928, %v4130
        %v4132 = vmul.f32 %v4131, %v4124
        %v4133 = vmul.f32 %v4131, %v4125
        %v4134 = vmul.f32 %v4131, %v4126
        %v4135 = vmul.f32 %v4131, %v4127
        %v4136 = vadd.f32 %v4119, %v4132
        %v4137 = vadd.f32 %v4120, %v4133
        %v4138 = vadd.f32 %v4121, %v4134
        %v4139 = vadd.f32 %v4122, %v4135
        %s4140 = scalar_lea.vmem %s15, 384
        %v4141 = vld [vmem:[%s4140] sm:$0xff]
        %v4142 = vld [vmem:[%s4140 + $0x8] sm:$0xff]
        %v4143 = vld [vmem:[%s4140 + $0x10] sm:$0xff]
        %v4144 = vld [vmem:[%s4140 + $0x18] sm:$0xff]
        %v4145 = vlaneseq
        %v4146 = vshrl.u32 %v4145, 7
        %v4147 = vsub.s32 4, %v4146
        %v4148 = vrot.slane %v3928, %v4147
        %v4149 = vmul.f32 %v4148, %v4141
        %v4150 = vmul.f32 %v4148, %v4142
        %v4151 = vmul.f32 %v4148, %v4143
        %v4152 = vmul.f32 %v4148, %v4144
        %v4153 = vadd.f32 %v4136, %v4149
        %v4154 = vadd.f32 %v4137, %v4150
        %v4155 = vadd.f32 %v4138, %v4151
        %v4156 = vadd.f32 %v4139, %v4152
        %s4157 = scalar_lea.vmem %s15, 416
        %v4158 = vld [vmem:[%s4157] sm:$0xff]
        %v4159 = vld [vmem:[%s4157 + $0x8] sm:$0xff]
        %v4160 = vld [vmem:[%s4157 + $0x10] sm:$0xff]
        %v4161 = vld [vmem:[%s4157 + $0x18] sm:$0xff]
        %v4162 = vlaneseq
        %v4163 = vshrl.u32 %v4162, 7
        %v4164 = vsub.s32 5, %v4163
        %v4165 = vrot.slane %v3928, %v4164
        %v4166 = vmul.f32 %v4165, %v4158
        %v4167 = vmul.f32 %v4165, %v4159
        %v4168 = vmul.f32 %v4165, %v4160
        %v4169 = vmul.f32 %v4165, %v4161
        %v4170 = vadd.f32 %v4153, %v4166
        %v4171 = vadd.f32 %v4154, %v4167
        %v4172 = vadd.f32 %v4155, %v4168
        %v4173 = vadd.f32 %v4156, %v4169
        %s4174 = scalar_lea.vmem %s15, 448
        %v4175 = vld [vmem:[%s4174] sm:$0xff]
        %v4176 = vld [vmem:[%s4174 + $0x8] sm:$0xff]
        %v4177 = vld [vmem:[%s4174 + $0x10] sm:$0xff]
        %v4178 = vld [vmem:[%s4174 + $0x18] sm:$0xff]
        %v4179 = vlaneseq
        %v4180 = vshrl.u32 %v4179, 7
        %v4181 = vsub.s32 6, %v4180
        %v4182 = vrot.slane %v3928, %v4181
        %v4183 = vmul.f32 %v4182, %v4175
        %v4184 = vmul.f32 %v4182, %v4176
        %v4185 = vmul.f32 %v4182, %v4177
        %v4186 = vmul.f32 %v4182, %v4178
        %v4187 = vadd.f32 %v4170, %v4183
        %v4188 = vadd.f32 %v4171, %v4184
        %v4189 = vadd.f32 %v4172, %v4185
        %v4190 = vadd.f32 %v4173, %v4186
        %s4191 = scalar_lea.vmem %s15, 480
        %v4192 = vld [vmem:[%s4191] sm:$0xff]
        %v4193 = vld [vmem:[%s4191 + $0x8] sm:$0xff]
        %v4194 = vld [vmem:[%s4191 + $0x10] sm:$0xff]
        %v4195 = vld [vmem:[%s4191 + $0x18] sm:$0xff]
        %v4196 = vlaneseq
        %v4197 = vshrl.u32 %v4196, 7
        %v4198 = vsub.s32 7, %v4197
        %v4199 = vrot.slane %v3928, %v4198
        %v4200 = vmul.f32 %v4199, %v4192
        %v4201 = vmul.f32 %v4199, %v4193
        %v4202 = vmul.f32 %v4199, %v4194
        %v4203 = vmul.f32 %v4199, %v4195
        %v4204 = vadd.f32 %v4187, %v4200
        %v4205 = vadd.f32 %v4188, %v4201
        %v4206 = vadd.f32 %v4189, %v4202
        %v4207 = vadd.f32 %v4190, %v4203
        %s4208 = scalar_lea.vmem %s15, 512
        %v4209 = vld [vmem:[%s4208] sm:$0xff]
        %v4210 = vld [vmem:[%s4208 + $0x8] sm:$0xff]
        %v4211 = vld [vmem:[%s4208 + $0x10] sm:$0xff]
        %v4212 = vld [vmem:[%s4208 + $0x18] sm:$0xff]
        %v4213 = vlaneseq
        %v4214 = vshrl.u32 %v4213, 7
        %v4215 = vsub.s32 0, %v4214
        %v4216 = vrot.slane %v3933, %v4215
        %v4217 = vmul.f32 %v4216, %v4209
        %v4218 = vmul.f32 %v4216, %v4210
        %v4219 = vmul.f32 %v4216, %v4211
        %v4220 = vmul.f32 %v4216, %v4212
        %v4221 = vadd.f32 %v4204, %v4217
        %v4222 = vadd.f32 %v4205, %v4218
        %v4223 = vadd.f32 %v4206, %v4219
        %v4224 = vadd.f32 %v4207, %v4220
        %s4225 = scalar_lea.vmem %s15, 544
        %v4226 = vld [vmem:[%s4225] sm:$0xff]
        %v4227 = vld [vmem:[%s4225 + $0x8] sm:$0xff]
        %v4228 = vld [vmem:[%s4225 + $0x10] sm:$0xff]
        %v4229 = vld [vmem:[%s4225 + $0x18] sm:$0xff]
        %v4230 = vlaneseq
        %v4231 = vshrl.u32 %v4230, 7
        %v4232 = vsub.s32 1, %v4231
        %v4233 = vrot.slane %v3933, %v4232
        %v4234 = vmul.f32 %v4233, %v4226
        %v4235 = vmul.f32 %v4233, %v4227
        %v4236 = vmul.f32 %v4233, %v4228
        %v4237 = vmul.f32 %v4233, %v4229
        %v4238 = vadd.f32 %v4221, %v4234
        %v4239 = vadd.f32 %v4222, %v4235
        %v4240 = vadd.f32 %v4223, %v4236
        %v4241 = vadd.f32 %v4224, %v4237
        %s4242 = scalar_lea.vmem %s15, 576
        %v4243 = vld [vmem:[%s4242] sm:$0xff]
        %v4244 = vld [vmem:[%s4242 + $0x8] sm:$0xff]
        %v4245 = vld [vmem:[%s4242 + $0x10] sm:$0xff]
        %v4246 = vld [vmem:[%s4242 + $0x18] sm:$0xff]
        %v4247 = vlaneseq
        %v4248 = vshrl.u32 %v4247, 7
        %v4249 = vsub.s32 2, %v4248
        %v4250 = vrot.slane %v3933, %v4249
        %v4251 = vmul.f32 %v4250, %v4243
        %v4252 = vmul.f32 %v4250, %v4244
        %v4253 = vmul.f32 %v4250, %v4245
        %v4254 = vmul.f32 %v4250, %v4246
        %v4255 = vadd.f32 %v4238, %v4251
        %v4256 = vadd.f32 %v4239, %v4252
        %v4257 = vadd.f32 %v4240, %v4253
        %v4258 = vadd.f32 %v4241, %v4254
        %s4259 = scalar_lea.vmem %s15, 608
        %v4260 = vld [vmem:[%s4259] sm:$0xff]
        %v4261 = vld [vmem:[%s4259 + $0x8] sm:$0xff]
        %v4262 = vld [vmem:[%s4259 + $0x10] sm:$0xff]
        %v4263 = vld [vmem:[%s4259 + $0x18] sm:$0xff]
        %v4264 = vlaneseq
        %v4265 = vshrl.u32 %v4264, 7
        %v4266 = vsub.s32 3, %v4265
        %v4267 = vrot.slane %v3933, %v4266
        %v4268 = vmul.f32 %v4267, %v4260
        %v4269 = vmul.f32 %v4267, %v4261
        %v4270 = vmul.f32 %v4267, %v4262
        %v4271 = vmul.f32 %v4267, %v4263
        %v4272 = vadd.f32 %v4255, %v4268
        %v4273 = vadd.f32 %v4256, %v4269
        %v4274 = vadd.f32 %v4257, %v4270
        %v4275 = vadd.f32 %v4258, %v4271
        %s4276 = scalar_lea.vmem %s15, 640
        %v4277 = vld [vmem:[%s4276] sm:$0xff]
        %v4278 = vld [vmem:[%s4276 + $0x8] sm:$0xff]
        %v4279 = vld [vmem:[%s4276 + $0x10] sm:$0xff]
        %v4280 = vld [vmem:[%s4276 + $0x18] sm:$0xff]
        %v4281 = vlaneseq
        %v4282 = vshrl.u32 %v4281, 7
        %v4283 = vsub.s32 4, %v4282
        %v4284 = vrot.slane %v3933, %v4283
        %v4285 = vmul.f32 %v4284, %v4277
        %v4286 = vmul.f32 %v4284, %v4278
        %v4287 = vmul.f32 %v4284, %v4279
        %v4288 = vmul.f32 %v4284, %v4280
        %v4289 = vadd.f32 %v4272, %v4285
        %v4290 = vadd.f32 %v4273, %v4286
        %v4291 = vadd.f32 %v4274, %v4287
        %v4292 = vadd.f32 %v4275, %v4288
        %s4293 = scalar_lea.vmem %s15, 672
        %v4294 = vld [vmem:[%s4293] sm:$0xff]
        %v4295 = vld [vmem:[%s4293 + $0x8] sm:$0xff]
        %v4296 = vld [vmem:[%s4293 + $0x10] sm:$0xff]
        %v4297 = vld [vmem:[%s4293 + $0x18] sm:$0xff]
        %v4298 = vlaneseq
        %v4299 = vshrl.u32 %v4298, 7
        %v4300 = vsub.s32 5, %v4299
        %v4301 = vrot.slane %v3933, %v4300
        %v4302 = vmul.f32 %v4301, %v4294
        %v4303 = vmul.f32 %v4301, %v4295
        %v4304 = vmul.f32 %v4301, %v4296
        %v4305 = vmul.f32 %v4301, %v4297
        %v4306 = vadd.f32 %v4289, %v4302
        %v4307 = vadd.f32 %v4290, %v4303
        %v4308 = vadd.f32 %v4291, %v4304
        %v4309 = vadd.f32 %v4292, %v4305
        %s4310 = scalar_lea.vmem %s15, 704
        %v4311 = vld [vmem:[%s4310] sm:$0xff]
        %v4312 = vld [vmem:[%s4310 + $0x8] sm:$0xff]
        %v4313 = vld [vmem:[%s4310 + $0x10] sm:$0xff]
        %v4314 = vld [vmem:[%s4310 + $0x18] sm:$0xff]
        %v4315 = vlaneseq
        %v4316 = vshrl.u32 %v4315, 7
        %v4317 = vsub.s32 6, %v4316
        %v4318 = vrot.slane %v3933, %v4317
        %v4319 = vmul.f32 %v4318, %v4311
        %v4320 = vmul.f32 %v4318, %v4312
        %v4321 = vmul.f32 %v4318, %v4313
        %v4322 = vmul.f32 %v4318, %v4314
        %v4323 = vadd.f32 %v4306, %v4319
        %v4324 = vadd.f32 %v4307, %v4320
        %v4325 = vadd.f32 %v4308, %v4321
        %v4326 = vadd.f32 %v4309, %v4322
        %s4327 = scalar_lea.vmem %s15, 736
        %v4328 = vld [vmem:[%s4327] sm:$0xff]
        %v4329 = vld [vmem:[%s4327 + $0x8] sm:$0xff]
        %v4330 = vld [vmem:[%s4327 + $0x10] sm:$0xff]
        %v4331 = vld [vmem:[%s4327 + $0x18] sm:$0xff]
        %v4332 = vlaneseq
        %v4333 = vshrl.u32 %v4332, 7
        %v4334 = vsub.s32 7, %v4333
        %v4335 = vrot.slane %v3933, %v4334
        %v4336 = vmul.f32 %v4335, %v4328
        %v4337 = vmul.f32 %v4335, %v4329
        %v4338 = vmul.f32 %v4335, %v4330
        %v4339 = vmul.f32 %v4335, %v4331
        %v4340 = vadd.f32 %v4323, %v4336
        %v4341 = vadd.f32 %v4324, %v4337
        %v4342 = vadd.f32 %v4325, %v4338
        %v4343 = vadd.f32 %v4326, %v4339
        %s4344 = scalar_lea.vmem %s15, 768
        %v4345 = vld [vmem:[%s4344] sm:$0xff]
        %v4346 = vld [vmem:[%s4344 + $0x8] sm:$0xff]
        %v4347 = vld [vmem:[%s4344 + $0x10] sm:$0xff]
        %v4348 = vld [vmem:[%s4344 + $0x18] sm:$0xff]
        %v4349 = vlaneseq
        %v4350 = vshrl.u32 %v4349, 7
        %v4351 = vsub.s32 0, %v4350
        %v4352 = vrot.slane %v3938, %v4351
        %v4353 = vmul.f32 %v4352, %v4345
        %v4354 = vmul.f32 %v4352, %v4346
        %v4355 = vmul.f32 %v4352, %v4347
        %v4356 = vmul.f32 %v4352, %v4348
        %v4357 = vadd.f32 %v4340, %v4353
        %v4358 = vadd.f32 %v4341, %v4354
        %v4359 = vadd.f32 %v4342, %v4355
        %v4360 = vadd.f32 %v4343, %v4356
        %s4361 = scalar_lea.vmem %s15, 800
        %v4362 = vld [vmem:[%s4361] sm:$0xff]
        %v4363 = vld [vmem:[%s4361 + $0x8] sm:$0xff]
        %v4364 = vld [vmem:[%s4361 + $0x10] sm:$0xff]
        %v4365 = vld [vmem:[%s4361 + $0x18] sm:$0xff]
        %v4366 = vlaneseq
        %v4367 = vshrl.u32 %v4366, 7
        %v4368 = vsub.s32 1, %v4367
        %v4369 = vrot.slane %v3938, %v4368
        %v4370 = vmul.f32 %v4369, %v4362
        %v4371 = vmul.f32 %v4369, %v4363
        %v4372 = vmul.f32 %v4369, %v4364
        %v4373 = vmul.f32 %v4369, %v4365
        %v4374 = vadd.f32 %v4357, %v4370
        %v4375 = vadd.f32 %v4358, %v4371
        %v4376 = vadd.f32 %v4359, %v4372
        %v4377 = vadd.f32 %v4360, %v4373
        %s4378 = scalar_lea.vmem %s15, 832
        %v4379 = vld [vmem:[%s4378] sm:$0xff]
        %v4380 = vld [vmem:[%s4378 + $0x8] sm:$0xff]
        %v4381 = vld [vmem:[%s4378 + $0x10] sm:$0xff]
        %v4382 = vld [vmem:[%s4378 + $0x18] sm:$0xff]
        %v4383 = vlaneseq
        %v4384 = vshrl.u32 %v4383, 7
        %v4385 = vsub.s32 2, %v4384
        %v4386 = vrot.slane %v3938, %v4385
        %v4387 = vmul.f32 %v4386, %v4379
        %v4388 = vmul.f32 %v4386, %v4380
        %v4389 = vmul.f32 %v4386, %v4381
        %v4390 = vmul.f32 %v4386, %v4382
        %v4391 = vadd.f32 %v4374, %v4387
        %v4392 = vadd.f32 %v4375, %v4388
        %v4393 = vadd.f32 %v4376, %v4389
        %v4394 = vadd.f32 %v4377, %v4390
        %s4395 = scalar_lea.vmem %s15, 864
        %v4396 = vld [vmem:[%s4395] sm:$0xff]
        %v4397 = vld [vmem:[%s4395 + $0x8] sm:$0xff]
        %v4398 = vld [vmem:[%s4395 + $0x10] sm:$0xff]
        %v4399 = vld [vmem:[%s4395 + $0x18] sm:$0xff]
        %v4400 = vlaneseq
        %v4401 = vshrl.u32 %v4400, 7
        %v4402 = vsub.s32 3, %v4401
        %v4403 = vrot.slane %v3938, %v4402
        %v4404 = vmul.f32 %v4403, %v4396
        %v4405 = vmul.f32 %v4403, %v4397
        %v4406 = vmul.f32 %v4403, %v4398
        %v4407 = vmul.f32 %v4403, %v4399
        %v4408 = vadd.f32 %v4391, %v4404
        %v4409 = vadd.f32 %v4392, %v4405
        %v4410 = vadd.f32 %v4393, %v4406
        %v4411 = vadd.f32 %v4394, %v4407
        %s4412 = scalar_lea.vmem %s15, 896
        %v4413 = vld [vmem:[%s4412] sm:$0xff]
        %v4414 = vld [vmem:[%s4412 + $0x8] sm:$0xff]
        %v4415 = vld [vmem:[%s4412 + $0x10] sm:$0xff]
        %v4416 = vld [vmem:[%s4412 + $0x18] sm:$0xff]
        %v4417 = vlaneseq
        %v4418 = vshrl.u32 %v4417, 7
        %v4419 = vsub.s32 4, %v4418
        %v4420 = vrot.slane %v3938, %v4419
        %v4421 = vmul.f32 %v4420, %v4413
        %v4422 = vmul.f32 %v4420, %v4414
        %v4423 = vmul.f32 %v4420, %v4415
        %v4424 = vmul.f32 %v4420, %v4416
        %v4425 = vadd.f32 %v4408, %v4421
        %v4426 = vadd.f32 %v4409, %v4422
        %v4427 = vadd.f32 %v4410, %v4423
        %v4428 = vadd.f32 %v4411, %v4424
        %s4429 = scalar_lea.vmem %s15, 928
        %v4430 = vld [vmem:[%s4429] sm:$0xff]
        %v4431 = vld [vmem:[%s4429 + $0x8] sm:$0xff]
        %v4432 = vld [vmem:[%s4429 + $0x10] sm:$0xff]
        %v4433 = vld [vmem:[%s4429 + $0x18] sm:$0xff]
        %v4434 = vlaneseq
        %v4435 = vshrl.u32 %v4434, 7
        %v4436 = vsub.s32 5, %v4435
        %v4437 = vrot.slane %v3938, %v4436
        %v4438 = vmul.f32 %v4437, %v4430
        %v4439 = vmul.f32 %v4437, %v4431
        %v4440 = vmul.f32 %v4437, %v4432
        %v4441 = vmul.f32 %v4437, %v4433
        %v4442 = vadd.f32 %v4425, %v4438
        %v4443 = vadd.f32 %v4426, %v4439
        %v4444 = vadd.f32 %v4427, %v4440
        %v4445 = vadd.f32 %v4428, %v4441
        %s4446 = scalar_lea.vmem %s15, 960
        %v4447 = vld [vmem:[%s4446] sm:$0xff]
        %v4448 = vld [vmem:[%s4446 + $0x8] sm:$0xff]
        %v4449 = vld [vmem:[%s4446 + $0x10] sm:$0xff]
        %v4450 = vld [vmem:[%s4446 + $0x18] sm:$0xff]
        %v4451 = vlaneseq
        %v4452 = vshrl.u32 %v4451, 7
        %v4453 = vsub.s32 6, %v4452
        %v4454 = vrot.slane %v3938, %v4453
        %v4455 = vmul.f32 %v4454, %v4447
        %v4456 = vmul.f32 %v4454, %v4448
        %v4457 = vmul.f32 %v4454, %v4449
        %v4458 = vmul.f32 %v4454, %v4450
        %v4459 = vadd.f32 %v4442, %v4455
        %v4460 = vadd.f32 %v4443, %v4456
        %v4461 = vadd.f32 %v4444, %v4457
        %v4462 = vadd.f32 %v4445, %v4458
        %s4463 = scalar_lea.vmem %s15, 992
        %v4464 = vld [vmem:[%s4463] sm:$0xff]
        %v4465 = vld [vmem:[%s4463 + $0x8] sm:$0xff]
        %v4466 = vld [vmem:[%s4463 + $0x10] sm:$0xff]
        %v4467 = vld [vmem:[%s4463 + $0x18] sm:$0xff]
        %v4468 = vlaneseq
        %v4469 = vshrl.u32 %v4468, 7
        %v4470 = vsub.s32 7, %v4469
        %v4471 = vrot.slane %v3938, %v4470
        %v4472 = vmul.f32 %v4471, %v4464
        %v4473 = vmul.f32 %v4471, %v4465
        %v4474 = vmul.f32 %v4471, %v4466
        %v4475 = vmul.f32 %v4471, %v4467
        %v4476 = vadd.f32 %v4459, %v4472
        %v4477 = vadd.f32 %v4460, %v4473
        %v4478 = vadd.f32 %v4461, %v4474
        %v4479 = vadd.f32 %v4462, %v4475
        %v4480 = vld [vmem:[%s16] sm:$0xff]
        %v4481 = vld [vmem:[%s16 + $0x8] sm:$0xff]
        %v4482 = vld [vmem:[%s16 + $0x10] sm:$0xff]
        %v4483 = vld [vmem:[%s16 + $0x18] sm:$0xff]
        %v4484 = vld [vmem:[%s17] sm:$0xff]
        %v4485 = vld [vmem:[%s17 + $0x8] sm:$0xff]
        %v4486 = vld [vmem:[%s17 + $0x10] sm:$0xff]
        %v4487 = vld [vmem:[%s17 + $0x18] sm:$0xff]
        %4489 = vset.pattern.permute.xlu0 0
        %4490 = vperm.xlu0 %4489, %v4484
        %v4491 = vpop.permute.xlu0 %4490
        %4494 = vset.pattern.permute.xlu0 0
        %4495 = vperm.xlu0 %4494, %v4485
        %v4496 = vpop.permute.xlu0 %4495
        %4499 = vset.pattern.permute.xlu0 0
        %4500 = vperm.xlu0 %4499, %v4486
        %v4501 = vpop.permute.xlu0 %4500
        %4504 = vset.pattern.permute.xlu0 0
        %4505 = vperm.xlu0 %4504, %v4487
        %v4506 = vpop.permute.xlu0 %4505
        %v4509 = vsel %vm2136, %v4480, 0
        %v4512 = vsel %vm2136, %v4481, 0
        %v4515 = vsel %vm2136, %v4482, 0
        %v4518 = vsel %vm2136, %v4483, 0
        %4520 = vmatprep.subr.mxu0 0.0
        %4521 = vmatpush1.msra.mxu0 %v3838
        %4522 = vmatprep.subr.mxu0 0.0
        %4523 = vmatpush1.msra.mxu0 %v3839
        %4524 = vmatprep.subr.mxu0 0.0
        %4525 = vmatpush1.msra.mxu0 %v3840
        %4526 = vmatprep.subr.mxu0 0.0
        %4527 = vmatpush1.msra.mxu0 %v3841
        %4528 = vmatprep.subr.mxu0 0.0
        %4529 = vmatpush1.msra.mxu0 0.0
        %4530 = vmatprep.subr.mxu0 0.0
        %4531 = vmatpush1.msra.mxu0 0.0
        %4532 = vmatprep.subr.mxu0 0.0
        %4533 = vmatpush1.msra.mxu0 0.0
        %4534 = vmatprep.subr.mxu0 0.0
        %4535 = vmatpush1.msra.mxu0 0.0
        %4536 = vmatprep.subr.mxu0 0.0
        %4537 = vmatpush1.msra.mxu0 0.0
        %4538 = vmatprep.subr.mxu0 0.0
        %4539 = vmatpush1.msra.mxu0 0.0
        %4540 = vmatprep.subr.mxu0 0.0
        %4541 = vmatpush1.msra.mxu0 0.0
        %4542 = vmatprep.subr.mxu0 0.0
        %4543 = vmatpush1.msra.mxu0 0.0
        %4544 = vmatprep.subr.mxu0 0.0
        %4545 = vmatpush1.msra.mxu0 0.0
        %4546 = vmatprep.subr.mxu0 0.0
        %4547 = vmatpush1.msra.mxu0 0.0
        %4548 = vmatprep.subr.mxu0 0.0
        %4549 = vmatpush1.msra.mxu0 0.0
        %4550 = vmatprep.subr.mxu0 0.0
        %4551 = vmatpush1.msra.mxu0 0.0
        %4552 = vmatprep.subr.mxu0 0.0
        %4553 = vmatpush1.msra.mxu0 0.0
        %4554 = vmatprep.subr.mxu0 0.0
        %4555 = vmatpush1.msra.mxu0 0.0
        %4556 = vmatprep.subr.mxu0 0.0
        %4557 = vmatpush1.msra.mxu0 0.0
        %4558 = vmatprep.subr.mxu0 0.0
        %4559 = vmatpush1.msra.mxu0 0.0
        %4560 = vmatprep.subr.mxu0 0.0
        %4561 = vmatpush1.msra.mxu0 0.0
        %4562 = vmatprep.subr.mxu0 0.0
        %4563 = vmatpush1.msra.mxu0 0.0
        %4564 = vmatprep.subr.mxu0 0.0
        %4565 = vmatpush1.msra.mxu0 0.0
        %4566 = vmatprep.subr.mxu0 0.0
        %4567 = vmatpush1.msra.mxu0 0.0
        %4568 = vmatprep.subr.mxu0 0.0
        %4569 = vmatpush1.msra.mxu0 0.0
        %4570 = vmatprep.subr.mxu0 0.0
        %4571 = vmatpush1.msra.mxu0 0.0
        %4572 = vmatprep.subr.mxu0 0.0
        %4573 = vmatpush1.msra.mxu0 0.0
        %4574 = vmatprep.subr.mxu0 0.0
        %4575 = vmatpush1.msra.mxu0 0.0
        %4576 = vmatprep.subr.mxu0 0.0
        %4577 = vmatpush1.msra.mxu0 0.0
        %4578 = vmatprep.subr.mxu0 0.0
        %4579 = vmatpush1.msra.mxu0 0.0
        %4580 = vmatprep.subr.mxu0 0.0
        %4581 = vmatpush1.msra.mxu0 0.0
        %4582 = vmatprep.subr.mxu0 0.0
        %4583 = vmatpush1.msra.mxu0 0.0
        %4584 = vmatprep.mubr.f32.mxu0 0.0
        %4585 = vmatmul.mubr.f32.gmra.mrb[0].mxu0 %v4509
        %v4586 = vpop.f32.mrb[0].mxu0
        %v4587 = vadd.f32 %v4491, %v4586
        %v4588 = vpop.f32.mrb[0].mxu0
        %4589 = vmatprep.mubr.f32.mxu0 0.0
        %4590 = vmatmul.mubr.f32.gmra.mrb[0].mxu0 %v4512
        %v4591 = vpop.f32.mrb[0].mxu0
        %v4592 = vadd.f32 %v4496, %v4591
        %v4593 = vpop.f32.mrb[0].mxu0
        %4594 = vmatprep.mubr.f32.mxu0 0.0
        %4595 = vmatmul.mubr.f32.gmra.mrb[0].mxu0 %v4515
        %v4596 = vpop.f32.mrb[0].mxu0
        %v4597 = vadd.f32 %v4501, %v4596
        %v4598 = vpop.f32.mrb[0].mxu0
        %4599 = vmatprep.mubr.f32.mxu0 0.0
        %4600 = vmatmul.mubr.f32.gmra.mrb[0].mxu0 %v4518
        %v4601 = vpop.f32.mrb[0].mxu0
        %v4602 = vadd.f32 %v4506, %v4601
        %v4603 = vpop.f32.mrb[0].mxu0
        %4604 = vdwg.mxu0
        %v4606 = vsel %vm2234, %v4476, 0
        %v4609 = vsel %vm2234, %v4477, 0
        %v4612 = vsel %vm2234, %v4478, 0
        %v4615 = vsel %vm2234, %v4479, 0
        %4617 = vmatprep.subr.mxu0 0.0
        %4618 = vmatpush1.msra.mxu0 %v3579
        %4619 = vmatprep.subr.mxu0 0.0
        %4620 = vmatpush1.msra.mxu0 0.0
        %4621 = vmatprep.subr.mxu0 0.0
        %4622 = vmatpush1.msra.mxu0 0.0
        %4623 = vmatprep.subr.mxu0 0.0
        %4624 = vmatpush1.msra.mxu0 0.0
        %4625 = vmatprep.subr.mxu0 0.0
        %4626 = vmatpush1.msra.mxu0 0.0
        %4627 = vmatprep.subr.mxu0 0.0
        %4628 = vmatpush1.msra.mxu0 0.0
        %4629 = vmatprep.subr.mxu0 0.0
        %4630 = vmatpush1.msra.mxu0 0.0
        %4631 = vmatprep.subr.mxu0 0.0
        %4632 = vmatpush1.msra.mxu0 0.0
        %4633 = vmatprep.subr.mxu0 0.0
        %4634 = vmatpush1.msra.mxu0 0.0
        %4635 = vmatprep.subr.mxu0 0.0
        %4636 = vmatpush1.msra.mxu0 0.0
        %4637 = vmatprep.subr.mxu0 0.0
        %4638 = vmatpush1.msra.mxu0 0.0
        %4639 = vmatprep.subr.mxu0 0.0
        %4640 = vmatpush1.msra.mxu0 0.0
        %4641 = vmatprep.subr.mxu0 0.0
        %4642 = vmatpush1.msra.mxu0 0.0
        %4643 = vmatprep.subr.mxu0 0.0
        %4644 = vmatpush1.msra.mxu0 0.0
        %4645 = vmatprep.subr.mxu0 0.0
        %4646 = vmatpush1.msra.mxu0 0.0
        %4647 = vmatprep.subr.mxu0 0.0
        %4648 = vmatpush1.msra.mxu0 0.0
        %4649 = vmatprep.subr.mxu0 0.0
        %4650 = vmatpush1.msra.mxu0 0.0
        %4651 = vmatprep.subr.mxu0 0.0
        %4652 = vmatpush1.msra.mxu0 0.0
        %4653 = vmatprep.subr.mxu0 0.0
        %4654 = vmatpush1.msra.mxu0 0.0
        %4655 = vmatprep.subr.mxu0 0.0
        %4656 = vmatpush1.msra.mxu0 0.0
        %4657 = vmatprep.subr.mxu0 0.0
        %4658 = vmatpush1.msra.mxu0 0.0
        %4659 = vmatprep.subr.mxu0 0.0
        %4660 = vmatpush1.msra.mxu0 0.0
        %4661 = vmatprep.subr.mxu0 0.0
        %4662 = vmatpush1.msra.mxu0 0.0
        %4663 = vmatprep.subr.mxu0 0.0
        %4664 = vmatpush1.msra.mxu0 0.0
        %4665 = vmatprep.subr.mxu0 0.0
        %4666 = vmatpush1.msra.mxu0 0.0
        %4667 = vmatprep.subr.mxu0 0.0
        %4668 = vmatpush1.msra.mxu0 0.0
        %4669 = vmatprep.subr.mxu0 0.0
        %4670 = vmatpush1.msra.mxu0 0.0
        %4671 = vmatprep.subr.mxu0 0.0
        %4672 = vmatpush1.msra.mxu0 0.0
        %4673 = vmatprep.subr.mxu0 0.0
        %4674 = vmatpush1.msra.mxu0 0.0
        %4675 = vmatprep.subr.mxu0 0.0
        %4676 = vmatpush1.msra.mxu0 0.0
        %4677 = vmatprep.subr.mxu0 0.0
        %4678 = vmatpush1.msra.mxu0 0.0
        %4679 = vmatprep.subr.mxu0 0.0
        %4680 = vmatpush1.msra.mxu0 0.0
        %4681 = vmatprep.mubr.f32.mxu0 0.0
        %4682 = vmatmul.mubr.f32.gmra.mrb[0].mxu0 %v4606
        %v4683 = vpop.f32.mrb[0].mxu0
        %v4684 = vadd.f32 %v4587, %v4683
        %v4685 = vpop.f32.mrb[0].mxu0
        %4686 = vmatprep.mubr.f32.mxu0 0.0
        %4687 = vmatmul.mubr.f32.gmra.mrb[0].mxu0 %v4609
        %v4688 = vpop.f32.mrb[0].mxu0
        %v4689 = vadd.f32 %v4592, %v4688
        %v4690 = vpop.f32.mrb[0].mxu0
        %4691 = vmatprep.mubr.f32.mxu0 0.0
        %4692 = vmatmul.mubr.f32.gmra.mrb[0].mxu0 %v4612
        %v4693 = vpop.f32.mrb[0].mxu0
        %v4694 = vadd.f32 %v4597, %v4693
        %v4695 = vpop.f32.mrb[0].mxu0
        %4696 = vmatprep.mubr.f32.mxu0 0.0
        %4697 = vmatmul.mubr.f32.gmra.mrb[0].mxu0 %v4615
        %v4698 = vpop.f32.mrb[0].mxu0
        %v4699 = vadd.f32 %v4602, %v4698
        %v4700 = vpop.f32.mrb[0].mxu0
        %4701 = vdwg.mxu0
        %v4702 = vmul.f32 %v4684, 0.5
        %v4703 = vmul.f32 %v4689, 0.5
        %v4704 = vmul.f32 %v4694, 0.5
        %v4705 = vmul.f32 %v4699, 0.5
        %v4706 = vmul.f32 %v4684, 0.044715
        %v4707 = vmul.f32 %v4689, 0.044715
        %v4708 = vmul.f32 %v4694, 0.044715
        %v4709 = vmul.f32 %v4699, 0.044715
        %v4710 = vmul.f32 %v4706, %v4684
        %v4711 = vmul.f32 %v4707, %v4689
        %v4712 = vmul.f32 %v4708, %v4694
        %v4713 = vmul.f32 %v4709, %v4699
        %v4714 = vmul.f32 %v4710, %v4684
        %v4715 = vmul.f32 %v4711, %v4689
        %v4716 = vmul.f32 %v4712, %v4694
        %v4717 = vmul.f32 %v4713, %v4699
        %v4718 = vadd.f32 %v4684, %v4714
        %v4719 = vadd.f32 %v4689, %v4715
        %v4720 = vadd.f32 %v4694, %v4716
        %v4721 = vadd.f32 %v4699, %v4717
        %v4722 = vmul.f32 %v4718, 0.7978846
        %v4723 = vmul.f32 %v4719, 0.7978846
        %v4724 = vmul.f32 %v4720, 0.7978846
        %v4725 = vmul.f32 %v4721, 0.7978846
        %v4726 = vtanh.pop %v4722
        %v4727 = vtanh.pop %v4723
        %v4728 = vtanh.pop %v4724
        %v4729 = vtanh.pop %v4725
        %v4730 = vadd.f32 %v4726, 1.0
        %v4731 = vadd.f32 %v4727, 1.0
        %v4732 = vadd.f32 %v4728, 1.0
        %v4733 = vadd.f32 %v4729, 1.0
        %v4734 = vmul.f32 %v4702, %v4730
        %v4735 = vmul.f32 %v4703, %v4731
        %v4736 = vmul.f32 %v4704, %v4732
        %v4737 = vmul.f32 %v4705, %v4733
        %v4739 = vsel %vm894, %v4734, 0
        %v4742 = vsel %vm894, %v4735, 0
        %v4745 = vsel %vm894, %v4736, 0
        %v4748 = vsel %vm894, %v4737, 0
        %4750 = vmatprep.subr.mxu0 0.0
        %4751 = vmatpush1.msra.mxu0 %v3842
        %4752 = vmatprep.subr.mxu0 0.0
        %4753 = vmatpush1.msra.mxu0 %v3843
        %4754 = vmatprep.subr.mxu0 0.0
        %4755 = vmatpush1.msra.mxu0 0.0
        %4756 = vmatprep.subr.mxu0 0.0
        %4757 = vmatpush1.msra.mxu0 0.0
        %4758 = vmatprep.subr.mxu0 0.0
        %4759 = vmatpush1.msra.mxu0 0.0
        %4760 = vmatprep.subr.mxu0 0.0
        %4761 = vmatpush1.msra.mxu0 0.0
        %4762 = vmatprep.subr.mxu0 0.0
        %4763 = vmatpush1.msra.mxu0 0.0
        %4764 = vmatprep.subr.mxu0 0.0
        %4765 = vmatpush1.msra.mxu0 0.0
        %4766 = vmatprep.subr.mxu0 0.0
        %4767 = vmatpush1.msra.mxu0 0.0
        %4768 = vmatprep.subr.mxu0 0.0
        %4769 = vmatpush1.msra.mxu0 0.0
        %4770 = vmatprep.subr.mxu0 0.0
        %4771 = vmatpush1.msra.mxu0 0.0
        %4772 = vmatprep.subr.mxu0 0.0
        %4773 = vmatpush1.msra.mxu0 0.0
        %4774 = vmatprep.subr.mxu0 0.0
        %4775 = vmatpush1.msra.mxu0 0.0
        %4776 = vmatprep.subr.mxu0 0.0
        %4777 = vmatpush1.msra.mxu0 0.0
        %4778 = vmatprep.subr.mxu0 0.0
        %4779 = vmatpush1.msra.mxu0 0.0
        %4780 = vmatprep.subr.mxu0 0.0
        %4781 = vmatpush1.msra.mxu0 0.0
        %4782 = vmatprep.subr.mxu0 0.0
        %4783 = vmatpush1.msra.mxu0 0.0
        %4784 = vmatprep.subr.mxu0 0.0
        %4785 = vmatpush1.msra.mxu0 0.0
        %4786 = vmatprep.subr.mxu0 0.0
        %4787 = vmatpush1.msra.mxu0 0.0
        %4788 = vmatprep.subr.mxu0 0.0
        %4789 = vmatpush1.msra.mxu0 0.0
        %4790 = vmatprep.subr.mxu0 0.0
        %4791 = vmatpush1.msra.mxu0 0.0
        %4792 = vmatprep.subr.mxu0 0.0
        %4793 = vmatpush1.msra.mxu0 0.0
        %4794 = vmatprep.subr.mxu0 0.0
        %4795 = vmatpush1.msra.mxu0 0.0
        %4796 = vmatprep.subr.mxu0 0.0
        %4797 = vmatpush1.msra.mxu0 0.0
        %4798 = vmatprep.subr.mxu0 0.0
        %4799 = vmatpush1.msra.mxu0 0.0
        %4800 = vmatprep.subr.mxu0 0.0
        %4801 = vmatpush1.msra.mxu0 0.0
        %4802 = vmatprep.subr.mxu0 0.0
        %4803 = vmatpush1.msra.mxu0 0.0
        %4804 = vmatprep.subr.mxu0 0.0
        %4805 = vmatpush1.msra.mxu0 0.0
        %4806 = vmatprep.subr.mxu0 0.0
        %4807 = vmatpush1.msra.mxu0 0.0
        %4808 = vmatprep.subr.mxu0 0.0
        %4809 = vmatpush1.msra.mxu0 0.0
        %4810 = vmatprep.subr.mxu0 0.0
        %4811 = vmatpush1.msra.mxu0 0.0
        %4812 = vmatprep.subr.mxu0 0.0
        %4813 = vmatpush1.msra.mxu0 0.0
        %4814 = vmatprep.mubr.f32.mxu0 0.0
        %4815 = vmatmul.mubr.f32.gmra.mrb[0].mxu0 %v4739
        %v4816 = vpop.f32.mrb[0].mxu0
        %v4817 = vadd.f32 0.0, %v4816
        %v4818 = vpop.f32.mrb[0].mxu0
        %4819 = vmatprep.mubr.f32.mxu0 0.0
        %4820 = vmatmul.mubr.f32.gmra.mrb[0].mxu0 %v4742
        %v4821 = vpop.f32.mrb[0].mxu0
        %v4822 = vadd.f32 0.0, %v4821
        %v4823 = vpop.f32.mrb[0].mxu0
        %4824 = vmatprep.mubr.f32.mxu0 0.0
        %4825 = vmatmul.mubr.f32.gmra.mrb[0].mxu0 %v4745
        %v4826 = vpop.f32.mrb[0].mxu0
        %v4827 = vadd.f32 0.0, %v4826
        %v4828 = vpop.f32.mrb[0].mxu0
        %4829 = vmatprep.mubr.f32.mxu0 0.0
        %4830 = vmatmul.mubr.f32.gmra.mrb[0].mxu0 %v4748
        %v4831 = vpop.f32.mrb[0].mxu0
        %v4832 = vadd.f32 0.0, %v4831
        %v4833 = vpop.f32.mrb[0].mxu0
        %4834 = vdwg.mxu0
        %v4835 = vld [vmem:[%s18] sm:$0xff]
        %v4836 = vld [vmem:[%s18 + $0x8] sm:$0xff]
        %v4837 = vld [vmem:[%s18 + $0x10] sm:$0xff]
        %v4838 = vld [vmem:[%s18 + $0x18] sm:$0xff]
        %v4839 = vlaneseq
        %v4840 = vshrl.u32 %v4839, 7
        %v4841 = vsub.s32 0, %v4840
        %v4842 = vrot.slane %v4817, %v4841
        %v4843 = vmul.f32 %v4842, %v4835
        %v4844 = vmul.f32 %v4842, %v4836
        %v4845 = vmul.f32 %v4842, %v4837
        %v4846 = vmul.f32 %v4842, %v4838
        %s4847 = scalar_lea.vmem %s18, 32
        %v4848 = vld [vmem:[%s4847] sm:$0xff]
        %v4849 = vld [vmem:[%s4847 + $0x8] sm:$0xff]
        %v4850 = vld [vmem:[%s4847 + $0x10] sm:$0xff]
        %v4851 = vld [vmem:[%s4847 + $0x18] sm:$0xff]
        %v4852 = vlaneseq
        %v4853 = vshrl.u32 %v4852, 7
        %v4854 = vsub.s32 1, %v4853
        %v4855 = vrot.slane %v4817, %v4854
        %v4856 = vmul.f32 %v4855, %v4848
        %v4857 = vmul.f32 %v4855, %v4849
        %v4858 = vmul.f32 %v4855, %v4850
        %v4859 = vmul.f32 %v4855, %v4851
        %v4860 = vadd.f32 %v4843, %v4856
        %v4861 = vadd.f32 %v4844, %v4857
        %v4862 = vadd.f32 %v4845, %v4858
        %v4863 = vadd.f32 %v4846, %v4859
        %s4864 = scalar_lea.vmem %s18, 64
        %v4865 = vld [vmem:[%s4864] sm:$0xff]
        %v4866 = vld [vmem:[%s4864 + $0x8] sm:$0xff]
        %v4867 = vld [vmem:[%s4864 + $0x10] sm:$0xff]
        %v4868 = vld [vmem:[%s4864 + $0x18] sm:$0xff]
        %v4869 = vlaneseq
        %v4870 = vshrl.u32 %v4869, 7
        %v4871 = vsub.s32 2, %v4870
        %v4872 = vrot.slane %v4817, %v4871
        %v4873 = vmul.f32 %v4872, %v4865
        %v4874 = vmul.f32 %v4872, %v4866
        %v4875 = vmul.f32 %v4872, %v4867
        %v4876 = vmul.f32 %v4872, %v4868
        %v4877 = vadd.f32 %v4860, %v4873
        %v4878 = vadd.f32 %v4861, %v4874
        %v4879 = vadd.f32 %v4862, %v4875
        %v4880 = vadd.f32 %v4863, %v4876
        %s4881 = scalar_lea.vmem %s18, 96
        %v4882 = vld [vmem:[%s4881] sm:$0xff]
        %v4883 = vld [vmem:[%s4881 + $0x8] sm:$0xff]
        %v4884 = vld [vmem:[%s4881 + $0x10] sm:$0xff]
        %v4885 = vld [vmem:[%s4881 + $0x18] sm:$0xff]
        %v4886 = vlaneseq
        %v4887 = vshrl.u32 %v4886, 7
        %v4888 = vsub.s32 3, %v4887
        %v4889 = vrot.slane %v4817, %v4888
        %v4890 = vmul.f32 %v4889, %v4882
        %v4891 = vmul.f32 %v4889, %v4883
        %v4892 = vmul.f32 %v4889, %v4884
        %v4893 = vmul.f32 %v4889, %v4885
        %v4894 = vadd.f32 %v4877, %v4890
        %v4895 = vadd.f32 %v4878, %v4891
        %v4896 = vadd.f32 %v4879, %v4892
        %v4897 = vadd.f32 %v4880, %v4893
        %s4898 = scalar_lea.vmem %s18, 128
        %v4899 = vld [vmem:[%s4898] sm:$0xff]
        %v4900 = vld [vmem:[%s4898 + $0x8] sm:$0xff]
        %v4901 = vld [vmem:[%s4898 + $0x10] sm:$0xff]
        %v4902 = vld [vmem:[%s4898 + $0x18] sm:$0xff]
        %v4903 = vlaneseq
        %v4904 = vshrl.u32 %v4903, 7
        %v4905 = vsub.s32 4, %v4904
        %v4906 = vrot.slane %v4817, %v4905
        %v4907 = vmul.f32 %v4906, %v4899
        %v4908 = vmul.f32 %v4906, %v4900
        %v4909 = vmul.f32 %v4906, %v4901
        %v4910 = vmul.f32 %v4906, %v4902
        %v4911 = vadd.f32 %v4894, %v4907
        %v4912 = vadd.f32 %v4895, %v4908
        %v4913 = vadd.f32 %v4896, %v4909
        %v4914 = vadd.f32 %v4897, %v4910
        %s4915 = scalar_lea.vmem %s18, 160
        %v4916 = vld [vmem:[%s4915] sm:$0xff]
        %v4917 = vld [vmem:[%s4915 + $0x8] sm:$0xff]
        %v4918 = vld [vmem:[%s4915 + $0x10] sm:$0xff]
        %v4919 = vld [vmem:[%s4915 + $0x18] sm:$0xff]
        %v4920 = vlaneseq
        %v4921 = vshrl.u32 %v4920, 7
        %v4922 = vsub.s32 5, %v4921
        %v4923 = vrot.slane %v4817, %v4922
        %v4924 = vmul.f32 %v4923, %v4916
        %v4925 = vmul.f32 %v4923, %v4917
        %v4926 = vmul.f32 %v4923, %v4918
        %v4927 = vmul.f32 %v4923, %v4919
        %v4928 = vadd.f32 %v4911, %v4924
        %v4929 = vadd.f32 %v4912, %v4925
        %v4930 = vadd.f32 %v4913, %v4926
        %v4931 = vadd.f32 %v4914, %v4927
        %s4932 = scalar_lea.vmem %s18, 192
        %v4933 = vld [vmem:[%s4932] sm:$0xff]
        %v4934 = vld [vmem:[%s4932 + $0x8] sm:$0xff]
        %v4935 = vld [vmem:[%s4932 + $0x10] sm:$0xff]
        %v4936 = vld [vmem:[%s4932 + $0x18] sm:$0xff]
        %v4937 = vlaneseq
        %v4938 = vshrl.u32 %v4937, 7
        %v4939 = vsub.s32 6, %v4938
        %v4940 = vrot.slane %v4817, %v4939
        %v4941 = vmul.f32 %v4940, %v4933
        %v4942 = vmul.f32 %v4940, %v4934
        %v4943 = vmul.f32 %v4940, %v4935
        %v4944 = vmul.f32 %v4940, %v4936
        %v4945 = vadd.f32 %v4928, %v4941
        %v4946 = vadd.f32 %v4929, %v4942
        %v4947 = vadd.f32 %v4930, %v4943
        %v4948 = vadd.f32 %v4931, %v4944
        %s4949 = scalar_lea.vmem %s18, 224
        %v4950 = vld [vmem:[%s4949] sm:$0xff]
        %v4951 = vld [vmem:[%s4949 + $0x8] sm:$0xff]
        %v4952 = vld [vmem:[%s4949 + $0x10] sm:$0xff]
        %v4953 = vld [vmem:[%s4949 + $0x18] sm:$0xff]
        %v4954 = vlaneseq
        %v4955 = vshrl.u32 %v4954, 7
        %v4956 = vsub.s32 7, %v4955
        %v4957 = vrot.slane %v4817, %v4956
        %v4958 = vmul.f32 %v4957, %v4950
        %v4959 = vmul.f32 %v4957, %v4951
        %v4960 = vmul.f32 %v4957, %v4952
        %v4961 = vmul.f32 %v4957, %v4953
        %v4962 = vadd.f32 %v4945, %v4958
        %v4963 = vadd.f32 %v4946, %v4959
        %v4964 = vadd.f32 %v4947, %v4960
        %v4965 = vadd.f32 %v4948, %v4961
        %s4966 = scalar_lea.vmem %s18, 256
        %v4967 = vld [vmem:[%s4966] sm:$0xff]
        %v4968 = vld [vmem:[%s4966 + $0x8] sm:$0xff]
        %v4969 = vld [vmem:[%s4966 + $0x10] sm:$0xff]
        %v4970 = vld [vmem:[%s4966 + $0x18] sm:$0xff]
        %v4971 = vlaneseq
        %v4972 = vshrl.u32 %v4971, 7
        %v4973 = vsub.s32 0, %v4972
        %v4974 = vrot.slane %v4822, %v4973
        %v4975 = vmul.f32 %v4974, %v4967
        %v4976 = vmul.f32 %v4974, %v4968
        %v4977 = vmul.f32 %v4974, %v4969
        %v4978 = vmul.f32 %v4974, %v4970
        %v4979 = vadd.f32 %v4962, %v4975
        %v4980 = vadd.f32 %v4963, %v4976
        %v4981 = vadd.f32 %v4964, %v4977
        %v4982 = vadd.f32 %v4965, %v4978
        %s4983 = scalar_lea.vmem %s18, 288
        %v4984 = vld [vmem:[%s4983] sm:$0xff]
        %v4985 = vld [vmem:[%s4983 + $0x8] sm:$0xff]
        %v4986 = vld [vmem:[%s4983 + $0x10] sm:$0xff]
        %v4987 = vld [vmem:[%s4983 + $0x18] sm:$0xff]
        %v4988 = vlaneseq
        %v4989 = vshrl.u32 %v4988, 7
        %v4990 = vsub.s32 1, %v4989
        %v4991 = vrot.slane %v4822, %v4990
        %v4992 = vmul.f32 %v4991, %v4984
        %v4993 = vmul.f32 %v4991, %v4985
        %v4994 = vmul.f32 %v4991, %v4986
        %v4995 = vmul.f32 %v4991, %v4987
        %v4996 = vadd.f32 %v4979, %v4992
        %v4997 = vadd.f32 %v4980, %v4993
        %v4998 = vadd.f32 %v4981, %v4994
        %v4999 = vadd.f32 %v4982, %v4995
        %s5000 = scalar_lea.vmem %s18, 320
        %v5001 = vld [vmem:[%s5000] sm:$0xff]
        %v5002 = vld [vmem:[%s5000 + $0x8] sm:$0xff]
        %v5003 = vld [vmem:[%s5000 + $0x10] sm:$0xff]
        %v5004 = vld [vmem:[%s5000 + $0x18] sm:$0xff]
        %v5005 = vlaneseq
        %v5006 = vshrl.u32 %v5005, 7
        %v5007 = vsub.s32 2, %v5006
        %v5008 = vrot.slane %v4822, %v5007
        %v5009 = vmul.f32 %v5008, %v5001
        %v5010 = vmul.f32 %v5008, %v5002
        %v5011 = vmul.f32 %v5008, %v5003
        %v5012 = vmul.f32 %v5008, %v5004
        %v5013 = vadd.f32 %v4996, %v5009
        %v5014 = vadd.f32 %v4997, %v5010
        %v5015 = vadd.f32 %v4998, %v5011
        %v5016 = vadd.f32 %v4999, %v5012
        %s5017 = scalar_lea.vmem %s18, 352
        %v5018 = vld [vmem:[%s5017] sm:$0xff]
        %v5019 = vld [vmem:[%s5017 + $0x8] sm:$0xff]
        %v5020 = vld [vmem:[%s5017 + $0x10] sm:$0xff]
        %v5021 = vld [vmem:[%s5017 + $0x18] sm:$0xff]
        %v5022 = vlaneseq
        %v5023 = vshrl.u32 %v5022, 7
        %v5024 = vsub.s32 3, %v5023
        %v5025 = vrot.slane %v4822, %v5024
        %v5026 = vmul.f32 %v5025, %v5018
        %v5027 = vmul.f32 %v5025, %v5019
        %v5028 = vmul.f32 %v5025, %v5020
        %v5029 = vmul.f32 %v5025, %v5021
        %v5030 = vadd.f32 %v5013, %v5026
        %v5031 = vadd.f32 %v5014, %v5027
        %v5032 = vadd.f32 %v5015, %v5028
        %v5033 = vadd.f32 %v5016, %v5029
        %s5034 = scalar_lea.vmem %s18, 384
        %v5035 = vld [vmem:[%s5034] sm:$0xff]
        %v5036 = vld [vmem:[%s5034 + $0x8] sm:$0xff]
        %v5037 = vld [vmem:[%s5034 + $0x10] sm:$0xff]
        %v5038 = vld [vmem:[%s5034 + $0x18] sm:$0xff]
        %v5039 = vlaneseq
        %v5040 = vshrl.u32 %v5039, 7
        %v5041 = vsub.s32 4, %v5040
        %v5042 = vrot.slane %v4822, %v5041
        %v5043 = vmul.f32 %v5042, %v5035
        %v5044 = vmul.f32 %v5042, %v5036
        %v5045 = vmul.f32 %v5042, %v5037
        %v5046 = vmul.f32 %v5042, %v5038
        %v5047 = vadd.f32 %v5030, %v5043
        %v5048 = vadd.f32 %v5031, %v5044
        %v5049 = vadd.f32 %v5032, %v5045
        %v5050 = vadd.f32 %v5033, %v5046
        %s5051 = scalar_lea.vmem %s18, 416
        %v5052 = vld [vmem:[%s5051] sm:$0xff]
        %v5053 = vld [vmem:[%s5051 + $0x8] sm:$0xff]
        %v5054 = vld [vmem:[%s5051 + $0x10] sm:$0xff]
        %v5055 = vld [vmem:[%s5051 + $0x18] sm:$0xff]
        %v5056 = vlaneseq
        %v5057 = vshrl.u32 %v5056, 7
        %v5058 = vsub.s32 5, %v5057
        %v5059 = vrot.slane %v4822, %v5058
        %v5060 = vmul.f32 %v5059, %v5052
        %v5061 = vmul.f32 %v5059, %v5053
        %v5062 = vmul.f32 %v5059, %v5054
        %v5063 = vmul.f32 %v5059, %v5055
        %v5064 = vadd.f32 %v5047, %v5060
        %v5065 = vadd.f32 %v5048, %v5061
        %v5066 = vadd.f32 %v5049, %v5062
        %v5067 = vadd.f32 %v5050, %v5063
        %s5068 = scalar_lea.vmem %s18, 448
        %v5069 = vld [vmem:[%s5068] sm:$0xff]
        %v5070 = vld [vmem:[%s5068 + $0x8] sm:$0xff]
        %v5071 = vld [vmem:[%s5068 + $0x10] sm:$0xff]
        %v5072 = vld [vmem:[%s5068 + $0x18] sm:$0xff]
        %v5073 = vlaneseq
        %v5074 = vshrl.u32 %v5073, 7
        %v5075 = vsub.s32 6, %v5074
        %v5076 = vrot.slane %v4822, %v5075
        %v5077 = vmul.f32 %v5076, %v5069
        %v5078 = vmul.f32 %v5076, %v5070
        %v5079 = vmul.f32 %v5076, %v5071
        %v5080 = vmul.f32 %v5076, %v5072
        %v5081 = vadd.f32 %v5064, %v5077
        %v5082 = vadd.f32 %v5065, %v5078
        %v5083 = vadd.f32 %v5066, %v5079
        %v5084 = vadd.f32 %v5067, %v5080
        %s5085 = scalar_lea.vmem %s18, 480
        %v5086 = vld [vmem:[%s5085] sm:$0xff]
        %v5087 = vld [vmem:[%s5085 + $0x8] sm:$0xff]
        %v5088 = vld [vmem:[%s5085 + $0x10] sm:$0xff]
        %v5089 = vld [vmem:[%s5085 + $0x18] sm:$0xff]
        %v5090 = vlaneseq
        %v5091 = vshrl.u32 %v5090, 7
        %v5092 = vsub.s32 7, %v5091
        %v5093 = vrot.slane %v4822, %v5092
        %v5094 = vmul.f32 %v5093, %v5086
        %v5095 = vmul.f32 %v5093, %v5087
        %v5096 = vmul.f32 %v5093, %v5088
        %v5097 = vmul.f32 %v5093, %v5089
        %v5098 = vadd.f32 %v5081, %v5094
        %v5099 = vadd.f32 %v5082, %v5095
        %v5100 = vadd.f32 %v5083, %v5096
        %v5101 = vadd.f32 %v5084, %v5097
        %s5102 = scalar_lea.vmem %s18, 512
        %v5103 = vld [vmem:[%s5102] sm:$0xff]
        %v5104 = vld [vmem:[%s5102 + $0x8] sm:$0xff]
        %v5105 = vld [vmem:[%s5102 + $0x10] sm:$0xff]
        %v5106 = vld [vmem:[%s5102 + $0x18] sm:$0xff]
        %v5107 = vlaneseq
        %v5108 = vshrl.u32 %v5107, 7
        %v5109 = vsub.s32 0, %v5108
        %v5110 = vrot.slane %v4827, %v5109
        %v5111 = vmul.f32 %v5110, %v5103
        %v5112 = vmul.f32 %v5110, %v5104
        %v5113 = vmul.f32 %v5110, %v5105
        %v5114 = vmul.f32 %v5110, %v5106
        %v5115 = vadd.f32 %v5098, %v5111
        %v5116 = vadd.f32 %v5099, %v5112
        %v5117 = vadd.f32 %v5100, %v5113
        %v5118 = vadd.f32 %v5101, %v5114
        %s5119 = scalar_lea.vmem %s18, 544
        %v5120 = vld [vmem:[%s5119] sm:$0xff]
        %v5121 = vld [vmem:[%s5119 + $0x8] sm:$0xff]
        %v5122 = vld [vmem:[%s5119 + $0x10] sm:$0xff]
        %v5123 = vld [vmem:[%s5119 + $0x18] sm:$0xff]
        %v5124 = vlaneseq
        %v5125 = vshrl.u32 %v5124, 7
        %v5126 = vsub.s32 1, %v5125
        %v5127 = vrot.slane %v4827, %v5126
        %v5128 = vmul.f32 %v5127, %v5120
        %v5129 = vmul.f32 %v5127, %v5121
        %v5130 = vmul.f32 %v5127, %v5122
        %v5131 = vmul.f32 %v5127, %v5123
        %v5132 = vadd.f32 %v5115, %v5128
        %v5133 = vadd.f32 %v5116, %v5129
        %v5134 = vadd.f32 %v5117, %v5130
        %v5135 = vadd.f32 %v5118, %v5131
        %s5136 = scalar_lea.vmem %s18, 576
        %v5137 = vld [vmem:[%s5136] sm:$0xff]
        %v5138 = vld [vmem:[%s5136 + $0x8] sm:$0xff]
        %v5139 = vld [vmem:[%s5136 + $0x10] sm:$0xff]
        %v5140 = vld [vmem:[%s5136 + $0x18] sm:$0xff]
        %v5141 = vlaneseq
        %v5142 = vshrl.u32 %v5141, 7
        %v5143 = vsub.s32 2, %v5142
        %v5144 = vrot.slane %v4827, %v5143
        %v5145 = vmul.f32 %v5144, %v5137
        %v5146 = vmul.f32 %v5144, %v5138
        %v5147 = vmul.f32 %v5144, %v5139
        %v5148 = vmul.f32 %v5144, %v5140
        %v5149 = vadd.f32 %v5132, %v5145
        %v5150 = vadd.f32 %v5133, %v5146
        %v5151 = vadd.f32 %v5134, %v5147
        %v5152 = vadd.f32 %v5135, %v5148
        %s5153 = scalar_lea.vmem %s18, 608
        %v5154 = vld [vmem:[%s5153] sm:$0xff]
        %v5155 = vld [vmem:[%s5153 + $0x8] sm:$0xff]
        %v5156 = vld [vmem:[%s5153 + $0x10] sm:$0xff]
        %v5157 = vld [vmem:[%s5153 + $0x18] sm:$0xff]
        %v5158 = vlaneseq
        %v5159 = vshrl.u32 %v5158, 7
        %v5160 = vsub.s32 3, %v5159
        %v5161 = vrot.slane %v4827, %v5160
        %v5162 = vmul.f32 %v5161, %v5154
        %v5163 = vmul.f32 %v5161, %v5155
        %v5164 = vmul.f32 %v5161, %v5156
        %v5165 = vmul.f32 %v5161, %v5157
        %v5166 = vadd.f32 %v5149, %v5162
        %v5167 = vadd.f32 %v5150, %v5163
        %v5168 = vadd.f32 %v5151, %v5164
        %v5169 = vadd.f32 %v5152, %v5165
        %s5170 = scalar_lea.vmem %s18, 640
        %v5171 = vld [vmem:[%s5170] sm:$0xff]
        %v5172 = vld [vmem:[%s5170 + $0x8] sm:$0xff]
        %v5173 = vld [vmem:[%s5170 + $0x10] sm:$0xff]
        %v5174 = vld [vmem:[%s5170 + $0x18] sm:$0xff]
        %v5175 = vlaneseq
        %v5176 = vshrl.u32 %v5175, 7
        %v5177 = vsub.s32 4, %v5176
        %v5178 = vrot.slane %v4827, %v5177
        %v5179 = vmul.f32 %v5178, %v5171
        %v5180 = vmul.f32 %v5178, %v5172
        %v5181 = vmul.f32 %v5178, %v5173
        %v5182 = vmul.f32 %v5178, %v5174
        %v5183 = vadd.f32 %v5166, %v5179
        %v5184 = vadd.f32 %v5167, %v5180
        %v5185 = vadd.f32 %v5168, %v5181
        %v5186 = vadd.f32 %v5169, %v5182
        %s5187 = scalar_lea.vmem %s18, 672
        %v5188 = vld [vmem:[%s5187] sm:$0xff]
        %v5189 = vld [vmem:[%s5187 + $0x8] sm:$0xff]
        %v5190 = vld [vmem:[%s5187 + $0x10] sm:$0xff]
        %v5191 = vld [vmem:[%s5187 + $0x18] sm:$0xff]
        %v5192 = vlaneseq
        %v5193 = vshrl.u32 %v5192, 7
        %v5194 = vsub.s32 5, %v5193
        %v5195 = vrot.slane %v4827, %v5194
        %v5196 = vmul.f32 %v5195, %v5188
        %v5197 = vmul.f32 %v5195, %v5189
        %v5198 = vmul.f32 %v5195, %v5190
        %v5199 = vmul.f32 %v5195, %v5191
        %v5200 = vadd.f32 %v5183, %v5196
        %v5201 = vadd.f32 %v5184, %v5197
        %v5202 = vadd.f32 %v5185, %v5198
        %v5203 = vadd.f32 %v5186, %v5199
        %s5204 = scalar_lea.vmem %s18, 704
        %v5205 = vld [vmem:[%s5204] sm:$0xff]
        %v5206 = vld [vmem:[%s5204 + $0x8] sm:$0xff]
        %v5207 = vld [vmem:[%s5204 + $0x10] sm:$0xff]
        %v5208 = vld [vmem:[%s5204 + $0x18] sm:$0xff]
        %v5209 = vlaneseq
        %v5210 = vshrl.u32 %v5209, 7
        %v5211 = vsub.s32 6, %v5210
        %v5212 = vrot.slane %v4827, %v5211
        %v5213 = vmul.f32 %v5212, %v5205
        %v5214 = vmul.f32 %v5212, %v5206
        %v5215 = vmul.f32 %v5212, %v5207
        %v5216 = vmul.f32 %v5212, %v5208
        %v5217 = vadd.f32 %v5200, %v5213
        %v5218 = vadd.f32 %v5201, %v5214
        %v5219 = vadd.f32 %v5202, %v5215
        %v5220 = vadd.f32 %v5203, %v5216
        %s5221 = scalar_lea.vmem %s18, 736
        %v5222 = vld [vmem:[%s5221] sm:$0xff]
        %v5223 = vld [vmem:[%s5221 + $0x8] sm:$0xff]
        %v5224 = vld [vmem:[%s5221 + $0x10] sm:$0xff]
        %v5225 = vld [vmem:[%s5221 + $0x18] sm:$0xff]
        %v5226 = vlaneseq
        %v5227 = vshrl.u32 %v5226, 7
        %v5228 = vsub.s32 7, %v5227
        %v5229 = vrot.slane %v4827, %v5228
        %v5230 = vmul.f32 %v5229, %v5222
        %v5231 = vmul.f32 %v5229, %v5223
        %v5232 = vmul.f32 %v5229, %v5224
        %v5233 = vmul.f32 %v5229, %v5225
        %v5234 = vadd.f32 %v5217, %v5230
        %v5235 = vadd.f32 %v5218, %v5231
        %v5236 = vadd.f32 %v5219, %v5232
        %v5237 = vadd.f32 %v5220, %v5233
        %s5238 = scalar_lea.vmem %s18, 768
        %v5239 = vld [vmem:[%s5238] sm:$0xff]
        %v5240 = vld [vmem:[%s5238 + $0x8] sm:$0xff]
        %v5241 = vld [vmem:[%s5238 + $0x10] sm:$0xff]
        %v5242 = vld [vmem:[%s5238 + $0x18] sm:$0xff]
        %v5243 = vlaneseq
        %v5244 = vshrl.u32 %v5243, 7
        %v5245 = vsub.s32 0, %v5244
        %v5246 = vrot.slane %v4832, %v5245
        %v5247 = vmul.f32 %v5246, %v5239
        %v5248 = vmul.f32 %v5246, %v5240
        %v5249 = vmul.f32 %v5246, %v5241
        %v5250 = vmul.f32 %v5246, %v5242
        %v5251 = vadd.f32 %v5234, %v5247
        %v5252 = vadd.f32 %v5235, %v5248
        %v5253 = vadd.f32 %v5236, %v5249
        %v5254 = vadd.f32 %v5237, %v5250
        %s5255 = scalar_lea.vmem %s18, 800
        %v5256 = vld [vmem:[%s5255] sm:$0xff]
        %v5257 = vld [vmem:[%s5255 + $0x8] sm:$0xff]
        %v5258 = vld [vmem:[%s5255 + $0x10] sm:$0xff]
        %v5259 = vld [vmem:[%s5255 + $0x18] sm:$0xff]
        %v5260 = vlaneseq
        %v5261 = vshrl.u32 %v5260, 7
        %v5262 = vsub.s32 1, %v5261
        %v5263 = vrot.slane %v4832, %v5262
        %v5264 = vmul.f32 %v5263, %v5256
        %v5265 = vmul.f32 %v5263, %v5257
        %v5266 = vmul.f32 %v5263, %v5258
        %v5267 = vmul.f32 %v5263, %v5259
        %v5268 = vadd.f32 %v5251, %v5264
        %v5269 = vadd.f32 %v5252, %v5265
        %v5270 = vadd.f32 %v5253, %v5266
        %v5271 = vadd.f32 %v5254, %v5267
        %s5272 = scalar_lea.vmem %s18, 832
        %v5273 = vld [vmem:[%s5272] sm:$0xff]
        %v5274 = vld [vmem:[%s5272 + $0x8] sm:$0xff]
        %v5275 = vld [vmem:[%s5272 + $0x10] sm:$0xff]
        %v5276 = vld [vmem:[%s5272 + $0x18] sm:$0xff]
        %v5277 = vlaneseq
        %v5278 = vshrl.u32 %v5277, 7
        %v5279 = vsub.s32 2, %v5278
        %v5280 = vrot.slane %v4832, %v5279
        %v5281 = vmul.f32 %v5280, %v5273
        %v5282 = vmul.f32 %v5280, %v5274
        %v5283 = vmul.f32 %v5280, %v5275
        %v5284 = vmul.f32 %v5280, %v5276
        %v5285 = vadd.f32 %v5268, %v5281
        %v5286 = vadd.f32 %v5269, %v5282
        %v5287 = vadd.f32 %v5270, %v5283
        %v5288 = vadd.f32 %v5271, %v5284
        %s5289 = scalar_lea.vmem %s18, 864
        %v5290 = vld [vmem:[%s5289] sm:$0xff]
        %v5291 = vld [vmem:[%s5289 + $0x8] sm:$0xff]
        %v5292 = vld [vmem:[%s5289 + $0x10] sm:$0xff]
        %v5293 = vld [vmem:[%s5289 + $0x18] sm:$0xff]
        %v5294 = vlaneseq
        %v5295 = vshrl.u32 %v5294, 7
        %v5296 = vsub.s32 3, %v5295
        %v5297 = vrot.slane %v4832, %v5296
        %v5298 = vmul.f32 %v5297, %v5290
        %v5299 = vmul.f32 %v5297, %v5291
        %v5300 = vmul.f32 %v5297, %v5292
        %v5301 = vmul.f32 %v5297, %v5293
        %v5302 = vadd.f32 %v5285, %v5298
        %v5303 = vadd.f32 %v5286, %v5299
        %v5304 = vadd.f32 %v5287, %v5300
        %v5305 = vadd.f32 %v5288, %v5301
        %s5306 = scalar_lea.vmem %s18, 896
        %v5307 = vld [vmem:[%s5306] sm:$0xff]
        %v5308 = vld [vmem:[%s5306 + $0x8] sm:$0xff]
        %v5309 = vld [vmem:[%s5306 + $0x10] sm:$0xff]
        %v5310 = vld [vmem:[%s5306 + $0x18] sm:$0xff]
        %v5311 = vlaneseq
        %v5312 = vshrl.u32 %v5311, 7
        %v5313 = vsub.s32 4, %v5312
        %v5314 = vrot.slane %v4832, %v5313
        %v5315 = vmul.f32 %v5314, %v5307
        %v5316 = vmul.f32 %v5314, %v5308
        %v5317 = vmul.f32 %v5314, %v5309
        %v5318 = vmul.f32 %v5314, %v5310
        %v5319 = vadd.f32 %v5302, %v5315
        %v5320 = vadd.f32 %v5303, %v5316
        %v5321 = vadd.f32 %v5304, %v5317
        %v5322 = vadd.f32 %v5305, %v5318
        %s5323 = scalar_lea.vmem %s18, 928
        %v5324 = vld [vmem:[%s5323] sm:$0xff]
        %v5325 = vld [vmem:[%s5323 + $0x8] sm:$0xff]
        %v5326 = vld [vmem:[%s5323 + $0x10] sm:$0xff]
        %v5327 = vld [vmem:[%s5323 + $0x18] sm:$0xff]
        %v5328 = vlaneseq
        %v5329 = vshrl.u32 %v5328, 7
        %v5330 = vsub.s32 5, %v5329
        %v5331 = vrot.slane %v4832, %v5330
        %v5332 = vmul.f32 %v5331, %v5324
        %v5333 = vmul.f32 %v5331, %v5325
        %v5334 = vmul.f32 %v5331, %v5326
        %v5335 = vmul.f32 %v5331, %v5327
        %v5336 = vadd.f32 %v5319, %v5332
        %v5337 = vadd.f32 %v5320, %v5333
        %v5338 = vadd.f32 %v5321, %v5334
        %v5339 = vadd.f32 %v5322, %v5335
        %s5340 = scalar_lea.vmem %s18, 960
        %v5341 = vld [vmem:[%s5340] sm:$0xff]
        %v5342 = vld [vmem:[%s5340 + $0x8] sm:$0xff]
        %v5343 = vld [vmem:[%s5340 + $0x10] sm:$0xff]
        %v5344 = vld [vmem:[%s5340 + $0x18] sm:$0xff]
        %v5345 = vlaneseq
        %v5346 = vshrl.u32 %v5345, 7
        %v5347 = vsub.s32 6, %v5346
        %v5348 = vrot.slane %v4832, %v5347
        %v5349 = vmul.f32 %v5348, %v5341
        %v5350 = vmul.f32 %v5348, %v5342
        %v5351 = vmul.f32 %v5348, %v5343
        %v5352 = vmul.f32 %v5348, %v5344
        %v5353 = vadd.f32 %v5336, %v5349
        %v5354 = vadd.f32 %v5337, %v5350
        %v5355 = vadd.f32 %v5338, %v5351
        %v5356 = vadd.f32 %v5339, %v5352
        %s5357 = scalar_lea.vmem %s18, 992
        %v5358 = vld [vmem:[%s5357] sm:$0xff]
        %v5359 = vld [vmem:[%s5357 + $0x8] sm:$0xff]
        %v5360 = vld [vmem:[%s5357 + $0x10] sm:$0xff]
        %v5361 = vld [vmem:[%s5357 + $0x18] sm:$0xff]
        %v5362 = vlaneseq
        %v5363 = vshrl.u32 %v5362, 7
        %v5364 = vsub.s32 7, %v5363
        %v5365 = vrot.slane %v4832, %v5364
        %v5366 = vmul.f32 %v5365, %v5358
        %v5367 = vmul.f32 %v5365, %v5359
        %v5368 = vmul.f32 %v5365, %v5360
        %v5369 = vmul.f32 %v5365, %v5361
        %v5370 = vadd.f32 %v5353, %v5366
        %v5371 = vadd.f32 %v5354, %v5367
        %v5372 = vadd.f32 %v5355, %v5368
        %v5373 = vadd.f32 %v5356, %v5369
        %v5374 = vld [vmem:[%s19] sm:$0xff]
        %v5375 = vld [vmem:[%s19 + $0x8] sm:$0xff]
        %v5376 = vld [vmem:[%s19 + $0x10] sm:$0xff]
        %v5377 = vld [vmem:[%s19 + $0x18] sm:$0xff]
        %v5378 = vld [vmem:[%s20] sm:$0xff]
        %v5379 = vld [vmem:[%s20 + $0x8] sm:$0xff]
        %v5380 = vld [vmem:[%s20 + $0x10] sm:$0xff]
        %v5381 = vld [vmem:[%s20 + $0x18] sm:$0xff]
        %5383 = vset.pattern.permute.xlu0 0
        %5384 = vperm.xlu0 %5383, %v5378
        %v5385 = vpop.permute.xlu0 %5384
        %5388 = vset.pattern.permute.xlu0 0
        %5389 = vperm.xlu0 %5388, %v5379
        %v5390 = vpop.permute.xlu0 %5389
        %5393 = vset.pattern.permute.xlu0 0
        %5394 = vperm.xlu0 %5393, %v5380
        %v5395 = vpop.permute.xlu0 %5394
        %5398 = vset.pattern.permute.xlu0 0
        %5399 = vperm.xlu0 %5398, %v5381
        %v5400 = vpop.permute.xlu0 %5399
        %v5403 = vsel %vm2136, %v5374, 0
        %v5406 = vsel %vm2136, %v5375, 0
        %v5409 = vsel %vm2136, %v5376, 0
        %v5412 = vsel %vm2136, %v5377, 0
        %5414 = vmatprep.subr.mxu0 0.0
        %5415 = vmatpush1.msra.mxu0 %v4734
        %5416 = vmatprep.subr.mxu0 0.0
        %5417 = vmatpush1.msra.mxu0 %v4735
        %5418 = vmatprep.subr.mxu0 0.0
        %5419 = vmatpush1.msra.mxu0 %v4736
        %5420 = vmatprep.subr.mxu0 0.0
        %5421 = vmatpush1.msra.mxu0 %v4737
        %5422 = vmatprep.subr.mxu0 0.0
        %5423 = vmatpush1.msra.mxu0 0.0
        %5424 = vmatprep.subr.mxu0 0.0
        %5425 = vmatpush1.msra.mxu0 0.0
        %5426 = vmatprep.subr.mxu0 0.0
        %5427 = vmatpush1.msra.mxu0 0.0
        %5428 = vmatprep.subr.mxu0 0.0
        %5429 = vmatpush1.msra.mxu0 0.0
        %5430 = vmatprep.subr.mxu0 0.0
        %5431 = vmatpush1.msra.mxu0 0.0
        %5432 = vmatprep.subr.mxu0 0.0
        %5433 = vmatpush1.msra.mxu0 0.0
        %5434 = vmatprep.subr.mxu0 0.0
        %5435 = vmatpush1.msra.mxu0 0.0
        %5436 = vmatprep.subr.mxu0 0.0
        %5437 = vmatpush1.msra.mxu0 0.0
        %5438 = vmatprep.subr.mxu0 0.0
        %5439 = vmatpush1.msra.mxu0 0.0
        %5440 = vmatprep.subr.mxu0 0.0
        %5441 = vmatpush1.msra.mxu0 0.0
        %5442 = vmatprep.subr.mxu0 0.0
        %5443 = vmatpush1.msra.mxu0 0.0
        %5444 = vmatprep.subr.mxu0 0.0
        %5445 = vmatpush1.msra.mxu0 0.0
        %5446 = vmatprep.subr.mxu0 0.0
        %5447 = vmatpush1.msra.mxu0 0.0
        %5448 = vmatprep.subr.mxu0 0.0
        %5449 = vmatpush1.msra.mxu0 0.0
        %5450 = vmatprep.subr.mxu0 0.0
        %5451 = vmatpush1.msra.mxu0 0.0
        %5452 = vmatprep.subr.mxu0 0.0
        %5453 = vmatpush1.msra.mxu0 0.0
        %5454 = vmatprep.subr.mxu0 0.0
        %5455 = vmatpush1.msra.mxu0 0.0
        %5456 = vmatprep.subr.mxu0 0.0
        %5457 = vmatpush1.msra.mxu0 0.0
        %5458 = vmatprep.subr.mxu0 0.0
        %5459 = vmatpush1.msra.mxu0 0.0
        %5460 = vmatprep.subr.mxu0 0.0
        %5461 = vmatpush1.msra.mxu0 0.0
        %5462 = vmatprep.subr.mxu0 0.0
        %5463 = vmatpush1.msra.mxu0 0.0
        %5464 = vmatprep.subr.mxu0 0.0
        %5465 = vmatpush1.msra.mxu0 0.0
        %5466 = vmatprep.subr.mxu0 0.0
        %5467 = vmatpush1.msra.mxu0 0.0
        %5468 = vmatprep.subr.mxu0 0.0
        %5469 = vmatpush1.msra.mxu0 0.0
        %5470 = vmatprep.subr.mxu0 0.0
        %5471 = vmatpush1.msra.mxu0 0.0
        %5472 = vmatprep.subr.mxu0 0.0
        %5473 = vmatpush1.msra.mxu0 0.0
        %5474 = vmatprep.subr.mxu0 0.0
        %5475 = vmatpush1.msra.mxu0 0.0
        %5476 = vmatprep.subr.mxu0 0.0
        %5477 = vmatpush1.msra.mxu0 0.0
        %5478 = vmatprep.mubr.f32.mxu0 0.0
        %5479 = vmatmul.mubr.f32.gmra.mrb[0].mxu0 %v5403
        %v5480 = vpop.f32.mrb[0].mxu0
        %v5481 = vadd.f32 %v5385, %v5480
        %v5482 = vpop.f32.mrb[0].mxu0
        %5483 = vmatprep.mubr.f32.mxu0 0.0
        %5484 = vmatmul.mubr.f32.gmra.mrb[0].mxu0 %v5406
        %v5485 = vpop.f32.mrb[0].mxu0
        %v5486 = vadd.f32 %v5390, %v5485
        %v5487 = vpop.f32.mrb[0].mxu0
        %5488 = vmatprep.mubr.f32.mxu0 0.0
        %5489 = vmatmul.mubr.f32.gmra.mrb[0].mxu0 %v5409
        %v5490 = vpop.f32.mrb[0].mxu0
        %v5491 = vadd.f32 %v5395, %v5490
        %v5492 = vpop.f32.mrb[0].mxu0
        %5493 = vmatprep.mubr.f32.mxu0 0.0
        %5494 = vmatmul.mubr.f32.gmra.mrb[0].mxu0 %v5412
        %v5495 = vpop.f32.mrb[0].mxu0
        %v5496 = vadd.f32 %v5400, %v5495
        %v5497 = vpop.f32.mrb[0].mxu0
        %5498 = vdwg.mxu0
        %v5500 = vsel %vm2234, %v5370, 0
        %v5503 = vsel %vm2234, %v5371, 0
        %v5506 = vsel %vm2234, %v5372, 0
        %v5509 = vsel %vm2234, %v5373, 0
        %5511 = vmatprep.subr.mxu0 0.0
        %5512 = vmatpush1.msra.mxu0 %v3579
        %5513 = vmatprep.subr.mxu0 0.0
        %5514 = vmatpush1.msra.mxu0 0.0
        %5515 = vmatprep.subr.mxu0 0.0
        %5516 = vmatpush1.msra.mxu0 0.0
        %5517 = vmatprep.subr.mxu0 0.0
        %5518 = vmatpush1.msra.mxu0 0.0
        %5519 = vmatprep.subr.mxu0 0.0
        %5520 = vmatpush1.msra.mxu0 0.0
        %5521 = vmatprep.subr.mxu0 0.0
        %5522 = vmatpush1.msra.mxu0 0.0
        %5523 = vmatprep.subr.mxu0 0.0
        %5524 = vmatpush1.msra.mxu0 0.0
        %5525 = vmatprep.subr.mxu0 0.0
        %5526 = vmatpush1.msra.mxu0 0.0
        %5527 = vmatprep.subr.mxu0 0.0
        %5528 = vmatpush1.msra.mxu0 0.0
        %5529 = vmatprep.subr.mxu0 0.0
        %5530 = vmatpush1.msra.mxu0 0.0
        %5531 = vmatprep.subr.mxu0 0.0
        %5532 = vmatpush1.msra.mxu0 0.0
        %5533 = vmatprep.subr.mxu0 0.0
        %5534 = vmatpush1.msra.mxu0 0.0
        %5535 = vmatprep.subr.mxu0 0.0
        %5536 = vmatpush1.msra.mxu0 0.0
        %5537 = vmatprep.subr.mxu0 0.0
        %5538 = vmatpush1.msra.mxu0 0.0
        %5539 = vmatprep.subr.mxu0 0.0
        %5540 = vmatpush1.msra.mxu0 0.0
        %5541 = vmatprep.subr.mxu0 0.0
        %5542 = vmatpush1.msra.mxu0 0.0
        %5543 = vmatprep.subr.mxu0 0.0
        %5544 = vmatpush1.msra.mxu0 0.0
        %5545 = vmatprep.subr.mxu0 0.0
        %5546 = vmatpush1.msra.mxu0 0.0
        %5547 = vmatprep.subr.mxu0 0.0
        %5548 = vmatpush1.msra.mxu0 0.0
        %5549 = vmatprep.subr.mxu0 0.0
        %5550 = vmatpush1.msra.mxu0 0.0
        %5551 = vmatprep.subr.mxu0 0.0
        %5552 = vmatpush1.msra.mxu0 0.0
        %5553 = vmatprep.subr.mxu0 0.0
        %5554 = vmatpush1.msra.mxu0 0.0
        %5555 = vmatprep.subr.mxu0 0.0
        %5556 = vmatpush1.msra.mxu0 0.0
        %5557 = vmatprep.subr.mxu0 0.0
        %5558 = vmatpush1.msra.mxu0 0.0
        %5559 = vmatprep.subr.mxu0 0.0
        %5560 = vmatpush1.msra.mxu0 0.0
        %5561 = vmatprep.subr.mxu0 0.0
        %5562 = vmatpush1.msra.mxu0 0.0
        %5563 = vmatprep.subr.mxu0 0.0
        %5564 = vmatpush1.msra.mxu0 0.0
        %5565 = vmatprep.subr.mxu0 0.0
        %5566 = vmatpush1.msra.mxu0 0.0
        %5567 = vmatprep.subr.mxu0 0.0
        %5568 = vmatpush1.msra.mxu0 0.0
        %5569 = vmatprep.subr.mxu0 0.0
        %5570 = vmatpush1.msra.mxu0 0.0
        %5571 = vmatprep.subr.mxu0 0.0
        %5572 = vmatpush1.msra.mxu0 0.0
        %5573 = vmatprep.subr.mxu0 0.0
        %5574 = vmatpush1.msra.mxu0 0.0
        %5575 = vmatprep.mubr.f32.mxu0 0.0
        %5576 = vmatmul.mubr.f32.gmra.mrb[0].mxu0 %v5500
        %v5577 = vpop.f32.mrb[0].mxu0
        %v5578 = vadd.f32 %v5481, %v5577
        %v5579 = vpop.f32.mrb[0].mxu0
        %5580 = vmatprep.mubr.f32.mxu0 0.0
        %5581 = vmatmul.mubr.f32.gmra.mrb[0].mxu0 %v5503
        %v5582 = vpop.f32.mrb[0].mxu0
        %v5583 = vadd.f32 %v5486, %v5582
        %v5584 = vpop.f32.mrb[0].mxu0
        %5585 = vmatprep.mubr.f32.mxu0 0.0
        %5586 = vmatmul.mubr.f32.gmra.mrb[0].mxu0 %v5506
        %v5587 = vpop.f32.mrb[0].mxu0
        %v5588 = vadd.f32 %v5491, %v5587
        %v5589 = vpop.f32.mrb[0].mxu0
        %5590 = vmatprep.mubr.f32.mxu0 0.0
        %5591 = vmatmul.mubr.f32.gmra.mrb[0].mxu0 %v5509
        %v5592 = vpop.f32.mrb[0].mxu0
        %v5593 = vadd.f32 %v5496, %v5592
        %v5594 = vpop.f32.mrb[0].mxu0
        %5595 = vdwg.mxu0
        %v5596 = vld [vmem:[%s21] sm:$0xff]
        %v5597 = vld [vmem:[%s22] sm:$0xff]
        %5599 = vset.pattern.permute.xlu0 0
        %5600 = vperm.xlu0 %5599, %v5597
        %v5601 = vpop.permute.xlu0 %5600
        %v5604 = vsel %vm2136, %v5596, 0
        %5606 = vmatprep.subr.mxu0 0.0
        %5607 = vmatpush1.msra.mxu0 %v5578
        %5608 = vmatprep.subr.mxu0 0.0
        %5609 = vmatpush1.msra.mxu0 %v5583
        %5610 = vmatprep.subr.mxu0 0.0
        %5611 = vmatpush1.msra.mxu0 %v5588
        %5612 = vmatprep.subr.mxu0 0.0
        %5613 = vmatpush1.msra.mxu0 %v5593
        %5614 = vmatprep.subr.mxu0 0.0
        %5615 = vmatpush1.msra.mxu0 0.0
        %5616 = vmatprep.subr.mxu0 0.0
        %5617 = vmatpush1.msra.mxu0 0.0
        %5618 = vmatprep.subr.mxu0 0.0
        %5619 = vmatpush1.msra.mxu0 0.0
        %5620 = vmatprep.subr.mxu0 0.0
        %5621 = vmatpush1.msra.mxu0 0.0
        %5622 = vmatprep.subr.mxu0 0.0
        %5623 = vmatpush1.msra.mxu0 0.0
        %5624 = vmatprep.subr.mxu0 0.0
        %5625 = vmatpush1.msra.mxu0 0.0
        %5626 = vmatprep.subr.mxu0 0.0
        %5627 = vmatpush1.msra.mxu0 0.0
        %5628 = vmatprep.subr.mxu0 0.0
        %5629 = vmatpush1.msra.mxu0 0.0
        %5630 = vmatprep.subr.mxu0 0.0
        %5631 = vmatpush1.msra.mxu0 0.0
        %5632 = vmatprep.subr.mxu0 0.0
        %5633 = vmatpush1.msra.mxu0 0.0
        %5634 = vmatprep.subr.mxu0 0.0
        %5635 = vmatpush1.msra.mxu0 0.0
        %5636 = vmatprep.subr.mxu0 0.0
        %5637 = vmatpush1.msra.mxu0 0.0
        %5638 = vmatprep.subr.mxu0 0.0
        %5639 = vmatpush1.msra.mxu0 0.0
        %5640 = vmatprep.subr.mxu0 0.0
        %5641 = vmatpush1.msra.mxu0 0.0
        %5642 = vmatprep.subr.mxu0 0.0
        %5643 = vmatpush1.msra.mxu0 0.0
        %5644 = vmatprep.subr.mxu0 0.0
        %5645 = vmatpush1.msra.mxu0 0.0
        %5646 = vmatprep.subr.mxu0 0.0
        %5647 = vmatpush1.msra.mxu0 0.0
        %5648 = vmatprep.subr.mxu0 0.0
        %5649 = vmatpush1.msra.mxu0 0.0
        %5650 = vmatprep.subr.mxu0 0.0
        %5651 = vmatpush1.msra.mxu0 0.0
        %5652 = vmatprep.subr.mxu0 0.0
        %5653 = vmatpush1.msra.mxu0 0.0
        %5654 = vmatprep.subr.mxu0 0.0
        %5655 = vmatpush1.msra.mxu0 0.0
        %5656 = vmatprep.subr.mxu0 0.0
        %5657 = vmatpush1.msra.mxu0 0.0
        %5658 = vmatprep.subr.mxu0 0.0
        %5659 = vmatpush1.msra.mxu0 0.0
        %5660 = vmatprep.subr.mxu0 0.0
        %5661 = vmatpush1.msra.mxu0 0.0
        %5662 = vmatprep.subr.mxu0 0.0
        %5663 = vmatpush1.msra.mxu0 0.0
        %5664 = vmatprep.subr.mxu0 0.0
        %5665 = vmatpush1.msra.mxu0 0.0
        %5666 = vmatprep.subr.mxu0 0.0
        %5667 = vmatpush1.msra.mxu0 0.0
        %5668 = vmatprep.subr.mxu0 0.0
        %5669 = vmatpush1.msra.mxu0 0.0
        %5670 = vmatprep.mubr.f32.mxu0 0.0
        %5671 = vmatmul.mubr.f32.gmra.mrb[0].mxu0 %v5604
        %v5672 = vpop.f32.mrb[0].mxu0
        %v5673 = vadd.f32 %v5601, %v5672
        %v5674 = vpop.f32.mrb[0].mxu0
        %5675 = vdwg.mxu0
        %v5676 = vmul.f32 %v5673, 0.5
        %v5677 = vmul.f32 %v5673, 0.044715
        %v5678 = vmul.f32 %v5677, %v5673
        %v5679 = vmul.f32 %v5678, %v5673
        %v5680 = vadd.f32 %v5673, %v5679
        %v5681 = vmul.f32 %v5680, 0.7978846
        %v5682 = vtanh.pop %v5681
        %v5683 = vadd.f32 %v5682, 1.0
        %v5684 = vmul.f32 %v5676, %v5683
        %v5685 = vld [vmem:[%s23] sm:$0x1]
        %v5686 = vld [vmem:[#allocation2] sm:$0x1]
        %5688 = vset.pattern.permute.xlu0 0
        %5689 = vperm.xlu0 %5688, %v5686
        %v5690 = vpop.permute.xlu0 %5689
        %v5692 = vlaneseq
        %v5693 = vshrl.u32 %v5692, 7
        %v5694 = vsub.s32 0, %v5693
        %v5695 = vrot.slane %v5690, %v5694
        %v5697 = vsel %vm2234, %v5685, 0
        %5699 = vmatprep.subr.mxu0 0.0
        %5700 = vmatpush1.msra.mxu0 %v5684
        %5701 = vmatprep.subr.mxu0 0.0
        %5702 = vmatpush1.msra.mxu0 0.0
        %5703 = vmatprep.subr.mxu0 0.0
        %5704 = vmatpush1.msra.mxu0 0.0
        %5705 = vmatprep.subr.mxu0 0.0
        %5706 = vmatpush1.msra.mxu0 0.0
        %5707 = vmatprep.subr.mxu0 0.0
        %5708 = vmatpush1.msra.mxu0 0.0
        %5709 = vmatprep.subr.mxu0 0.0
        %5710 = vmatpush1.msra.mxu0 0.0
        %5711 = vmatprep.subr.mxu0 0.0
        %5712 = vmatpush1.msra.mxu0 0.0
        %5713 = vmatprep.subr.mxu0 0.0
        %5714 = vmatpush1.msra.mxu0 0.0
        %5715 = vmatprep.subr.mxu0 0.0
        %5716 = vmatpush1.msra.mxu0 0.0
        %5717 = vmatprep.subr.mxu0 0.0
        %5718 = vmatpush1.msra.mxu0 0.0
        %5719 = vmatprep.subr.mxu0 0.0
        %5720 = vmatpush1.msra.mxu0 0.0
        %5721 = vmatprep.subr.mxu0 0.0
        %5722 = vmatpush1.msra.mxu0 0.0
        %5723 = vmatprep.subr.mxu0 0.0
        %5724 = vmatpush1.msra.mxu0 0.0
        %5725 = vmatprep.subr.mxu0 0.0
        %5726 = vmatpush1.msra.mxu0 0.0
        %5727 = vmatprep.subr.mxu0 0.0
        %5728 = vmatpush1.msra.mxu0 0.0
        %5729 = vmatprep.subr.mxu0 0.0
        %5730 = vmatpush1.msra.mxu0 0.0
        %5731 = vmatprep.subr.mxu0 0.0
        %5732 = vmatpush1.msra.mxu0 0.0
        %5733 = vmatprep.subr.mxu0 0.0
        %5734 = vmatpush1.msra.mxu0 0.0
        %5735 = vmatprep.subr.mxu0 0.0
        %5736 = vmatpush1.msra.mxu0 0.0
        %5737 = vmatprep.subr.mxu0 0.0
        %5738 = vmatpush1.msra.mxu0 0.0
        %5739 = vmatprep.subr.mxu0 0.0
        %5740 = vmatpush1.msra.mxu0 0.0
        %5741 = vmatprep.subr.mxu0 0.0
        %5742 = vmatpush1.msra.mxu0 0.0
        %5743 = vmatprep.subr.mxu0 0.0
        %5744 = vmatpush1.msra.mxu0 0.0
        %5745 = vmatprep.subr.mxu0 0.0
        %5746 = vmatpush1.msra.mxu0 0.0
        %5747 = vmatprep.subr.mxu0 0.0
        %5748 = vmatpush1.msra.mxu0 0.0
        %5749 = vmatprep.subr.mxu0 0.0
        %5750 = vmatpush1.msra.mxu0 0.0
        %5751 = vmatprep.subr.mxu0 0.0
        %5752 = vmatpush1.msra.mxu0 0.0
        %5753 = vmatprep.subr.mxu0 0.0
        %5754 = vmatpush1.msra.mxu0 0.0
        %5755 = vmatprep.subr.mxu0 0.0
        %5756 = vmatpush1.msra.mxu0 0.0
        %5757 = vmatprep.subr.mxu0 0.0
        %5758 = vmatpush1.msra.mxu0 0.0
        %5759 = vmatprep.subr.mxu0 0.0
        %5760 = vmatpush1.msra.mxu0 0.0
        %5761 = vmatprep.subr.mxu0 0.0
        %5762 = vmatpush1.msra.mxu0 0.0
        %5763 = vmatprep.mubr.f32.mxu0 0.0
        %5764 = vmatmul.mubr.f32.gmra.mrb[0].mxu0 %v5697
        %v5765 = vpop.f32.mrb[0].mxu0
        %v5766 = vadd.f32 %v5695, %v5765
        %v5767 = vpop.f32.mrb[0].mxu0
        %5768 = vdwg.mxu0
        %vm5769 = vcmask 122880
        %5770 = vst.msk [vmem:[%s756] sm:$0x1] %vm5769, %v5766
        %s5771 = sand.u32 %s579, 1
        %s5772 = scalar_lea.sflag [#allocation4], %s5771
        %s5773 = sand.u32 %s579, 1
        %s5774 = scalar_lea.vmem [#allocation3], %s5773
        // Predicated region
        $region121: #{tpu_custom_call.1} parent=119 // pred_check
          %p5775 = pneg %p589
        $region122: #{tpu_custom_call.1} parent=119 // pred_check_branch
          %5777 = sbr.rel (%p5775) target = $region124
        $region123: #{tpu_custom_call.1} parent=119 // pred_region
          %s5779 = ssub.s32 16, 16
          %5780 = vsyncadd %s5772, %s5779
          %s5781 = smul.addr %s41, 16
          %s5782 = scalar_lea.hbm %s25, %s5781
          %s5784 = sshll.u32 %s5774, 4
          %s5785 = int_to_ptr.vmem [resolvable:$true] %s5784
          %5787 = dma.vmem_to_hbm [thread:$0]  %s5785, 16, %s5782, %s5772
        $region124: #{tpu_custom_call.1} parent=119 // pred_fallthru
          _
      $region120: #{tpu_custom_call.1} parent=5 // pred_fallthru
        _
      %p5788 = scmp.le.s32.totalorder 2, %s36
      // Predicated region
      $region125: #{tpu_custom_call.1} parent=5 // pred_check
        %p5789 = pneg %p5788
      $region126: #{tpu_custom_call.1} parent=5 // pred_check_branch
        %5791 = sbr.rel (%p5789) target = $region128
      $region127: #{tpu_custom_call.1} parent=5 // pred_region
        %s5792 = ssub.s32 %s36, 2
        // Predicated region
        $region129: #{tpu_custom_call.1} parent=127 // pred_check
          %p5793 = pneg %p595
        $region130: #{tpu_custom_call.1} parent=127 // pred_check_branch
          %5795 = sbr.rel (%p5793) target = $region132
        $region131: #{tpu_custom_call.1} parent=127 // pred_region
          %s5796 = sand.u32 %s580, 1
          %s5797 = scalar_lea.sflag [#allocation4], %s5796
          %s5798 = sand.u32 %s580, 1
          %s5799 = scalar_lea.vmem [#allocation3], %s5798
          %5800 = dma.done %s5797, 16
        $region132: #{tpu_custom_call.1} parent=127 // pred_fallthru
          _
      $region128: #{tpu_custom_call.1} parent=5 // pred_fallthru
        _
    $region6: #{tpu_custom_call.1} parent=1 // loop_footer
      %s40 = sadd.s32 1, %s36
    $region7: #{tpu_custom_call.1} parent=1 // loop_footer_branch
      %35 = sbr.rel target = $region3
    $region8: #{tpu_custom_call.1} parent=1 // loop_exit
      _
    %5801 = vsyncpa [#allocation4], 1
    %s5802 = scalar_lea.sflag [#allocation4], 1
    %5803 = vsyncpa %s5802, 1

</llo_original>
